<compile_context>
chip_gen: v7x
topology: tpu7x:2x2x1
jax: 0.10.0
libtpu: 0.0.40
codegen_flags: <defaults>
</compile_context>

<pallas_src>
import functools

import jax
import jax.numpy as jnp
from jax.experimental import pallas as pl
from jax.experimental.pallas import tpu as pltpu

_EPS = 1e-6                     # T5LayerNorm eps
_GELU_C = 0.7978845608028654    # sqrt(2/pi), HF "gelu_new"


def _rms_norm(x, w):
    # T5LayerNorm: RMS norm in f32, no mean subtraction, no bias.
    var = jnp.mean(x * x, axis=-1, keepdims=True)
    return x * jax.lax.rsqrt(var + _EPS) * w


# ----------------------------- Pallas kernel ------------------------------ #

def _t5_block0_kernel(x_ref, pb_ref, ln1_ref, wqkv_ref, wo_ref,
                      ln2_ref, wi_ref, wof_ref, o_ref,
                      q_cache, kt_cache, v_cache, *, num_heads, d_kv, q_tile):
    H = num_heads
    inner = H * d_kv
    qi = pl.program_id(1)

    # ---- per-batch Q/K/V cache: full-sequence RMSNorm + fused QKV projection
    # ---- runs once per batch (first query tile), not once per tile.
    @pl.when(qi == 0)
    def _():
        x_f = x_ref[0].astype(jnp.float32)                               # (S, D)
        nf = _rms_norm(x_f, ln1_ref[0].astype(jnp.float32)).astype(jnp.bfloat16)
        qkv = jnp.dot(nf, wqkv_ref[...],
                      preferred_element_type=jnp.float32)                # (S, 3*inner)
        # Head-major caches; K pre-transposed so the per-tile score matmul
        # needs no relayout or implicit transpose.
        for h in range(H):
            q_cache[h] = qkv[:, h * d_kv:(h + 1) * d_kv].astype(jnp.bfloat16)
            kt_cache[h] = qkv[:, inner + h * d_kv:
                              inner + (h + 1) * d_kv].T.astype(jnp.bfloat16)
            v_cache[h] = qkv[:, 2 * inner + h * d_kv:
                             2 * inner + (h + 1) * d_kv].astype(jnp.bfloat16)

    row0 = pl.multiple_of(qi * q_tile, q_tile)
    x_q = x_ref[0, pl.ds(row0, q_tile), :].astype(jnp.float32)           # (TQ, D) residual

    # ---------------- self-attention sub-layer --------------------------- #
    attn = jnp.zeros(x_q.shape, jnp.float32)     # (TQ, D) output-proj accumulator
    for h in range(H):
        # TODO(synk): at real-model H=64 switch to lax.fori_loop(unroll=4..8)
        # so vreg live ranges stay bounded (a 64-way static unroll spills).
        q_h = q_cache[h, pl.ds(row0, q_tile), :]                         # (TQ, d_kv) bf16
        # scores = q_h @ k_h^T  (T5 does NOT scale by 1/sqrt(d_kv))
        s = jnp.dot(q_h, kt_cache[h], preferred_element_type=jnp.float32)   # (TQ, S)
        s = s + pb_ref[0, h]                                             # position bias (f32)
        s = s - jnp.max(s, axis=-1, keepdims=True)
        p = jnp.exp(s)
        inv_l = pl.reciprocal(jnp.sum(p, axis=-1, keepdims=True), approx=True)
        # probs -> bf16 right after exp; normalization folded after the AV
        # matmul (scales a (TQ, d_kv) tile instead of (TQ, S)).
        ctx = jnp.dot(p.astype(jnp.bfloat16), v_cache[h],
                      preferred_element_type=jnp.float32) * inv_l        # (TQ, d_kv)
        # accumulate output projection per head -> no concatenate / relayout
        attn = attn + jnp.dot(ctx.astype(jnp.bfloat16),
                              wo_ref[h * d_kv:(h + 1) * d_kv, :],
                              preferred_element_type=jnp.float32)        # (TQ, D)

    h_attn = x_q + attn                          # residual (f32)

    # ---------------- feed-forward sub-layer (gated GELU) ---------------- #
    ln2 = ln2_ref[0].astype(jnp.float32)
    n2 = _rms_norm(h_attn, ln2).astype(jnp.bfloat16)
    hh = jnp.dot(n2, wi_ref[...], preferred_element_type=jnp.float32)    # (TQ, 2*F)
    d_ff = hh.shape[-1] // 2
    h0 = hh[:, :d_ff]
    h1 = hh[:, d_ff:]
    # NewGELU (tanh approximation) — HF "gelu_new", used by T5 v1.1 gated FF.
    g = 0.5 * h0 * (1.0 + jnp.tanh(_GELU_C * (h0 + 0.044715 * h0 * h0 * h0)))
    ff = jnp.dot((g * h1).astype(jnp.bfloat16), wof_ref[...],
                 preferred_element_type=jnp.float32)                     # (TQ, D)

    o_ref[0] = (h_attn + ff).astype(o_ref.dtype)          # residual


# ------------------------------- wrapper ----------------------------------- #

def prepare_t5block0_weights(params):
    """One-time (model-load) weight fusion + bf16 casts, hoisted out of the
    per-forward path so each call pays only for the fused kernel itself."""
    bf = jnp.bfloat16
    return {
        'ln1': params['attn_ln'].astype(jnp.float32),
        'wqkv': jnp.concatenate([params['wq'], params['wk'], params['wv']],
                                axis=1).astype(bf),
        'wo': params['wo'].astype(bf),
        'ln2': params['ff_ln'].astype(jnp.float32),
        'wi': jnp.concatenate([params['wi0'], params['wi1']], axis=1).astype(bf),
        'wo_ff': params['wo_ff'].astype(bf),
    }


def t5block0_forward(test_input, t_mask, temp_value, weights, *,
                     num_heads, d_kv, q_tile=128):
    # mirrors: out = block0[0](test_input, t, temp_value)[0]; out = block0[-1](out)
    # TODO(synk): attention_mask `t` is dropped — HF T5Attention ignores it when
    # position_bias is supplied; padding masks must already be folded into the bias.
    del t_mask
    x = test_input
    B, S, D = x.shape
    H = num_heads
    inner = H * d_kv
    TQ = min(q_tile, S)
    assert S % TQ == 0, "sequence length must be divisible by the query tile"

    wqkv, wo, wi, wo_ff = weights['wqkv'], weights['wo'], weights['wi'], weights['wo_ff']
    F2 = wi.shape[1]
    d_ff = F2 // 2
    pb = temp_value.astype(jnp.float32)   # keep position bias f32 (accuracy)

    # Grid-invariant operands: single-buffered (no wasted 2nd VMEM buffer).
    def _const(shape):
        return pl.BlockSpec(shape, lambda b, q: (0,) * len(shape),
                            pipeline_mode=pl.Buffered(1))

    # Advisory cost so XLA can schedule surrounding ops around this custom call.
    flops = 2 * B * S * (D * 3 * inner      # QKV projection
                         + 2 * S * inner    # QK^T + AV
                         + inner * D        # output projection
                         + D * F2           # Wi0|Wi1
                         + d_ff * D)        # Wo_ff
    cost = pl.CostEstimate(
        flops=flops,
        transcendentals=B * S * (H * S + d_ff),
        bytes_accessed=(2 * x.size * 4 + pb.size * 4
                        + 2 * (wqkv.size + wo.size + wi.size + wo_ff.size)))

    # TODO(synk): at real-model shapes (D=4096, d_ff=10240, H=64, S=512) wqkv /
    # wi no longer fit VMEM — add K/N tiling grid axes (reduction last,
    # "arbitrary") with f32 accumulator scratch, and move the position bias to
    # HBM (memory_space=pl.ANY) with per-head manually double-buffered DMA.
    kern = functools.partial(_t5_block0_kernel, num_heads=H, d_kv=d_kv, q_tile=TQ)
    return pl.pallas_call(
        kern,
        out_shape=jax.ShapeDtypeStruct((B, S, D), x.dtype),
        grid=(B, S // TQ),
        in_specs=[
            pl.BlockSpec((1, S, D), lambda b, q: (b, 0, 0)),         # full sequence (per batch)
            pl.BlockSpec((1, H, TQ, S), lambda b, q: (0, 0, q, 0)),  # position-bias q-tile
            _const((1, D)),                                          # attn layer-norm w
            _const((D, 3 * inner)),                                  # fused Wq|Wk|Wv
            _const((inner, D)),                                      # Wo
            _const((1, D)),                                          # ff layer-norm w
            _const((D, F2)),                                         # fused Wi0|Wi1
            _const((d_ff, D)),                                       # Wo_ff
        ],
        out_specs=pl.BlockSpec((1, TQ, D), lambda b, q: (b, q, 0)),
        scratch_shapes=[
            pltpu.VMEM((H, S, d_kv), jnp.bfloat16),   # Q cache   (head-major)
            pltpu.VMEM((H, d_kv, S), jnp.bfloat16),   # K^T cache (head-major)
            pltpu.VMEM((H, S, d_kv), jnp.bfloat16),   # V cache   (head-major)
        ],
        compiler_params=pltpu.CompilerParams(
            # batch stays "parallel" (v7x megacore splits over B); the q axis
            # must be "arbitrary" because the Q/K/V cache persists across tiles.
            dimension_semantics=("parallel", "arbitrary"),
            vmem_limit_bytes=32 * 1024 * 1024),
        cost_estimate=cost,
    )(x, pb, weights['ln1'], wqkv, wo, weights['ln2'], wi, wo_ff)


# ------------------------- pure-JAX reference ------------------------------ #

def _reference(x, pb, p, num_heads, d_kv):
    B, S, D = x.shape
    n = _rms_norm(x, p['attn_ln'][0])
    q = (n @ p['wq']).reshape(B, S, num_heads, d_kv)
    k = (n @ p['wk']).reshape(B, S, num_heads, d_kv)
    v = (n @ p['wv']).reshape(B, S, num_heads, d_kv)
    scores = jnp.einsum('bqhd,bkhd->bhqk', q, k) + pb
    w = jax.nn.softmax(scores, axis=-1)
    ctx = jnp.einsum('bhqk,bkhd->bqhd', w, v).reshape(B, S, num_heads * d_kv)
    x = x + ctx @ p['wo']
    n = _rms_norm(x, p['ff_ln'][0])
    h0 = n @ p['wi0']
    h1 = n @ p['wi1']
    g = 0.5 * h0 * (1.0 + jnp.tanh(_GELU_C * (h0 + 0.044715 * h0 ** 3)))
    return x + (g * h1) @ p['wo_ff']


# --------------------------------- main ------------------------------------ #

if __name__ == "__main__":
    # Small, TPU-friendly shapes consistent with a T5 block (real model:
    # d_model=3072/4096, H=64, d_kv=64, d_ff=10240, S=512).
    B, S, D = 2, 256, 256
    H, DKV = 4, 64
    DFF = 512
    INNER = H * DKV

    key = jax.random.PRNGKey(0)
    ks = jax.random.split(key, 12)
    scale = 0.02
    params = {
        'attn_ln': 1.0 + 0.1 * jax.random.normal(ks[0], (1, D), jnp.float32),
        'wq': scale * jax.random.normal(ks[1], (D, INNER), jnp.float32),
        'wk': scale * jax.random.normal(ks[2], (D, INNER), jnp.float32),
        'wv': scale * jax.random.normal(ks[3], (D, INNER), jnp.float32),
        'wo': scale * jax.random.normal(ks[4], (INNER, D), jnp.float32),
        'ff_ln': 1.0 + 0.1 * jax.random.normal(ks[5], (1, D), jnp.float32),
        'wi0': scale * jax.random.normal(ks[6], (D, DFF), jnp.float32),
        'wi1': scale * jax.random.normal(ks[7], (D, DFF), jnp.float32),
        'wo_ff': scale * jax.random.normal(ks[8], (DFF, D), jnp.float32),
    }

    hidden_states = jax.random.normal(ks[9], (B, S, D), jnp.float32)         # test_input
    temp_value = 0.5 * jax.random.normal(ks[10], (1, H, S, S), jnp.float32)  # position bias
    t_mask = jnp.zeros((1, 1, 1, S), jnp.float32)  # `t` (unused when bias given)

    # One-time (model-load) weight fusion + casts, hoisted out of the forward.
    weights = jax.tree_util.tree_map(jax.block_until_ready,
                                     prepare_t5block0_weights(params))

    out = t5block0_forward(hidden_states, t_mask, temp_value, weights,
                           num_heads=H, d_kv=DKV, q_tile=128)
    out = jax.block_until_ready(out)

    ref = jax.block_until_ready(_reference(hidden_states, temp_value, params, H, DKV))
    max_err = float(jnp.max(jnp.abs(out - ref)))
    assert out.shape == (B, S, D) and out.dtype == jnp.float32
    assert max_err < 5e-2, f"mismatch vs reference: {max_err}"

    print("KERNEL_OK")
</pallas_src>

<mosaic_0001>
module attributes {stable_mosaic.version = 11 : i64} {
  func.func @_t5_block0_kernel(%arg0: i32, %arg1: i32, %arg2: memref<1x256x256xf32, #tpu.memory_space<vmem>>, %arg3: memref<1x4x128x256xf32, #tpu.memory_space<vmem>>, %arg4: memref<1x256xf32, #tpu.memory_space<vmem>>, %arg5: memref<256x768xbf16, #tpu.memory_space<vmem>>, %arg6: memref<256x256xbf16, #tpu.memory_space<vmem>>, %arg7: memref<1x256xf32, #tpu.memory_space<vmem>>, %arg8: memref<256x1024xbf16, #tpu.memory_space<vmem>>, %arg9: memref<512x256xbf16, #tpu.memory_space<vmem>>, %arg10: memref<1x128x256xf32, #tpu.memory_space<vmem>>, %arg11: memref<4x256x64xbf16, #tpu.memory_space<vmem>>, %arg12: memref<4x64x256xbf16, #tpu.memory_space<vmem>>, %arg13: memref<4x256x64xbf16, #tpu.memory_space<vmem>>) attributes {dimension_semantics = [#tpu.dimension_semantics<parallel>, #tpu.dimension_semantics<arbitrary>], iteration_bounds = array<i64: 2, 2>, scalar_prefetch = 0 : i64, scratch_operands = 3 : i64, tpu.core_type = #tpu.core_type<tc>, window_params = [{transform_indices = @transform_0, window_bounds = array<i64: 1, 256, 256>}, {transform_indices = @transform_1, window_bounds = array<i64: 1, 4, 128, 256>}, {pipeline_mode = #tpu.pipeline_mode<synchronous>, transform_indices = @transform_2, window_bounds = array<i64: 1, 256>}, {pipeline_mode = #tpu.pipeline_mode<synchronous>, transform_indices = @transform_3, window_bounds = array<i64: 256, 768>}, {pipeline_mode = #tpu.pipeline_mode<synchronous>, transform_indices = @transform_4, window_bounds = array<i64: 256, 256>}, {pipeline_mode = #tpu.pipeline_mode<synchronous>, transform_indices = @transform_5, window_bounds = array<i64: 1, 256>}, {pipeline_mode = #tpu.pipeline_mode<synchronous>, transform_indices = @transform_6, window_bounds = array<i64: 256, 1024>}, {pipeline_mode = #tpu.pipeline_mode<synchronous>, transform_indices = @transform_7, window_bounds = array<i64: 512, 256>}, {transform_indices = @transform_8, window_bounds = array<i64: 1, 128, 256>}]} {
    %c0_i32 = arith.constant 0 : i32
    %0 = arith.cmpi eq, %arg1, %c0_i32 : i32
    %1 = arith.extui %0 : i1 to i32
    %c0_i32_0 = arith.constant 0 : i32
    %2 = arith.cmpi ne, %1, %c0_i32_0 : i32
    scf.if %2 {
      %c0_90 = arith.constant 0 : index
      %c0_91 = arith.constant 0 : index
      %c0_92 = arith.constant 0 : index
      %159 = vector.load %arg2[%c0_90, %c0_91, %c0_92] : memref<1x256x256xf32, #tpu.memory_space<vmem>>, vector<1x256x256xf32>
      %160 = vector.shape_cast %159 : vector<1x256x256xf32> to vector<256x256xf32>
      %c0_93 = arith.constant 0 : index
      %c0_94 = arith.constant 0 : index
      %161 = vector.load %arg4[%c0_93, %c0_94] : memref<1x256xf32, #tpu.memory_space<vmem>>, vector<1x256xf32>
      %162 = vector.shape_cast %161 : vector<1x256xf32> to vector<256xf32>
      %163 = arith.mulf %160, %160 : vector<256x256xf32>
      %cst_95 = arith.constant dense<0.000000e+00> : vector<256xf32>
      %164 = vector.multi_reduction <add>, %163, %cst_95 [1] : vector<256x256xf32> to vector<256xf32>
      %165 = vector.shape_cast %164 : vector<256xf32> to vector<256x1xf32>
      %cst_96 = arith.constant 2.560000e+02 : f32
      %166 = vector.broadcast %cst_96 : f32 to vector<256x1xf32>
      %167 = arith.divf %165, %166 : vector<256x1xf32>
      %cst_97 = arith.constant 9.99999997E-7 : f32
      %168 = vector.broadcast %cst_97 : f32 to vector<256x1xf32>
      %169 = arith.addf %167, %168 : vector<256x1xf32>
      %170 = math.rsqrt %169 : vector<256x1xf32>
      %171 = vector.broadcast %170 : vector<256x1xf32> to vector<256x256xf32>
      %172 = arith.mulf %160, %171 : vector<256x256xf32>
      %173 = vector.shape_cast %162 : vector<256xf32> to vector<1x256xf32>
      %174 = vector.broadcast %173 : vector<1x256xf32> to vector<256x256xf32>
      %175 = arith.mulf %172, %174 : vector<256x256xf32>
      %176 = arith.truncf %175 : vector<256x256xf32> to vector<256x256xbf16>
      %c0_98 = arith.constant 0 : index
      %c0_99 = arith.constant 0 : index
      %177 = vector.load %arg5[%c0_98, %c0_99] : memref<256x768xbf16, #tpu.memory_space<vmem>>, vector<256x768xbf16>
      %cst_100 = arith.constant dense<0.000000e+00> : vector<256x768xf32>
      %178 = tpu.matmul %176, %177, %cst_100 {dimension_numbers = #tpu.dot_dimension_numbers<[1], [0], [0], [1], [0, 0, 1, 1], [], []>} : vector<256x256xbf16>, vector<256x768xbf16>, vector<256x768xf32> -> vector<256x768xf32>
      %179 = vector.extract_strided_slice %178 {offsets = [0, 0], sizes = [256, 64], strides = [1, 1]} : vector<256x768xf32> to vector<256x64xf32>
      %180 = arith.truncf %179 : vector<256x64xf32> to vector<256x64xbf16>
      %c0_101 = arith.constant 0 : index
      %c0_102 = arith.constant 0 : index
      %c0_103 = arith.constant 0 : index
      %181 = vector.load %arg11[%c0_101, %c0_102, %c0_103] : memref<4x256x64xbf16, #tpu.memory_space<vmem>>, vector<1x256x64xbf16>
      %182 = vector.shape_cast %181 : vector<1x256x64xbf16> to vector<256x64xbf16>
      %183 = vector.shape_cast %180 : vector<256x64xbf16> to vector<1x256x64xbf16>
      tpu.vector_store %arg11[%c0_101, %c0_102, %c0_103], %183 {strides = array<i32>} : memref<4x256x64xbf16, #tpu.memory_space<vmem>>, vector<1x256x64xbf16>,
      %184 = vector.extract_strided_slice %178 {offsets = [0, 256], sizes = [256, 64], strides = [1, 1]} : vector<256x768xf32> to vector<256x64xf32>
      %185 = tpu.transpose %184, [1, 0] : vector<256x64xf32> -> vector<64x256xf32>
      %186 = arith.truncf %185 : vector<64x256xf32> to vector<64x256xbf16>
      %c0_104 = arith.constant 0 : index
      %c0_105 = arith.constant 0 : index
      %c0_106 = arith.constant 0 : index
      %187 = vector.load %arg12[%c0_104, %c0_105, %c0_106] : memref<4x64x256xbf16, #tpu.memory_space<vmem>>, vector<1x64x256xbf16>
      %188 = vector.shape_cast %187 : vector<1x64x256xbf16> to vector<64x256xbf16>
      %189 = vector.shape_cast %186 : vector<64x256xbf16> to vector<1x64x256xbf16>
      tpu.vector_store %arg12[%c0_104, %c0_105, %c0_106], %189 {strides = array<i32>} : memref<4x64x256xbf16, #tpu.memory_space<vmem>>, vector<1x64x256xbf16>,
      %190 = vector.extract_strided_slice %178 {offsets = [0, 512], sizes = [256, 64], strides = [1, 1]} : vector<256x768xf32> to vector<256x64xf32>
      %191 = arith.truncf %190 : vector<256x64xf32> to vector<256x64xbf16>
      %c0_107 = arith.constant 0 : index
      %c0_108 = arith.constant 0 : index
      %c0_109 = arith.constant 0 : index
      %192 = vector.load %arg13[%c0_107, %c0_108, %c0_109] : memref<4x256x64xbf16, #tpu.memory_space<vmem>>, vector<1x256x64xbf16>
      %193 = vector.shape_cast %192 : vector<1x256x64xbf16> to vector<256x64xbf16>
      %194 = vector.shape_cast %191 : vector<256x64xbf16> to vector<1x256x64xbf16>
      tpu.vector_store %arg13[%c0_107, %c0_108, %c0_109], %194 {strides = array<i32>} : memref<4x256x64xbf16, #tpu.memory_space<vmem>>, vector<1x256x64xbf16>,
      %195 = vector.extract_strided_slice %178 {offsets = [0, 64], sizes = [256, 64], strides = [1, 1]} : vector<256x768xf32> to vector<256x64xf32>
      %196 = arith.truncf %195 : vector<256x64xf32> to vector<256x64xbf16>
      %c1_110 = arith.constant 1 : index
      %c0_111 = arith.constant 0 : index
      %c0_112 = arith.constant 0 : index
      %197 = vector.load %arg11[%c1_110, %c0_111, %c0_112] : memref<4x256x64xbf16, #tpu.memory_space<vmem>>, vector<1x256x64xbf16>
      %198 = vector.shape_cast %197 : vector<1x256x64xbf16> to vector<256x64xbf16>
      %199 = vector.shape_cast %196 : vector<256x64xbf16> to vector<1x256x64xbf16>
      tpu.vector_store %arg11[%c1_110, %c0_111, %c0_112], %199 {strides = array<i32>} : memref<4x256x64xbf16, #tpu.memory_space<vmem>>, vector<1x256x64xbf16>,
      %200 = vector.extract_strided_slice %178 {offsets = [0, 320], sizes = [256, 64], strides = [1, 1]} : vector<256x768xf32> to vector<256x64xf32>
      %201 = tpu.transpose %200, [1, 0] : vector<256x64xf32> -> vector<64x256xf32>
      %202 = arith.truncf %201 : vector<64x256xf32> to vector<64x256xbf16>
      %c1_113 = arith.constant 1 : index
      %c0_114 = arith.constant 0 : index
      %c0_115 = arith.constant 0 : index
      %203 = vector.load %arg12[%c1_113, %c0_114, %c0_115] : memref<4x64x256xbf16, #tpu.memory_space<vmem>>, vector<1x64x256xbf16>
      %204 = vector.shape_cast %203 : vector<1x64x256xbf16> to vector<64x256xbf16>
      %205 = vector.shape_cast %202 : vector<64x256xbf16> to vector<1x64x256xbf16>
      tpu.vector_store %arg12[%c1_113, %c0_114, %c0_115], %205 {strides = array<i32>} : memref<4x64x256xbf16, #tpu.memory_space<vmem>>, vector<1x64x256xbf16>,
      %206 = vector.extract_strided_slice %178 {offsets = [0, 576], sizes = [256, 64], strides = [1, 1]} : vector<256x768xf32> to vector<256x64xf32>
      %207 = arith.truncf %206 : vector<256x64xf32> to vector<256x64xbf16>
      %c1_116 = arith.constant 1 : index
      %c0_117 = arith.constant 0 : index
      %c0_118 = arith.constant 0 : index
      %208 = vector.load %arg13[%c1_116, %c0_117, %c0_118] : memref<4x256x64xbf16, #tpu.memory_space<vmem>>, vector<1x256x64xbf16>
      %209 = vector.shape_cast %208 : vector<1x256x64xbf16> to vector<256x64xbf16>
      %210 = vector.shape_cast %207 : vector<256x64xbf16> to vector<1x256x64xbf16>
      tpu.vector_store %arg13[%c1_116, %c0_117, %c0_118], %210 {strides = array<i32>} : memref<4x256x64xbf16, #tpu.memory_space<vmem>>, vector<1x256x64xbf16>,
      %211 = vector.extract_strided_slice %178 {offsets = [0, 128], sizes = [256, 64], strides = [1, 1]} : vector<256x768xf32> to vector<256x64xf32>
      %212 = arith.truncf %211 : vector<256x64xf32> to vector<256x64xbf16>
      %c2_119 = arith.constant 2 : index
      %c0_120 = arith.constant 0 : index
      %c0_121 = arith.constant 0 : index
      %213 = vector.load %arg11[%c2_119, %c0_120, %c0_121] : memref<4x256x64xbf16, #tpu.memory_space<vmem>>, vector<1x256x64xbf16>
      %214 = vector.shape_cast %213 : vector<1x256x64xbf16> to vector<256x64xbf16>
      %215 = vector.shape_cast %212 : vector<256x64xbf16> to vector<1x256x64xbf16>
      tpu.vector_store %arg11[%c2_119, %c0_120, %c0_121], %215 {strides = array<i32>} : memref<4x256x64xbf16, #tpu.memory_space<vmem>>, vector<1x256x64xbf16>,
      %216 = vector.extract_strided_slice %178 {offsets = [0, 384], sizes = [256, 64], strides = [1, 1]} : vector<256x768xf32> to vector<256x64xf32>
      %217 = tpu.transpose %216, [1, 0] : vector<256x64xf32> -> vector<64x256xf32>
      %218 = arith.truncf %217 : vector<64x256xf32> to vector<64x256xbf16>
      %c2_122 = arith.constant 2 : index
      %c0_123 = arith.constant 0 : index
      %c0_124 = arith.constant 0 : index
      %219 = vector.load %arg12[%c2_122, %c0_123, %c0_124] : memref<4x64x256xbf16, #tpu.memory_space<vmem>>, vector<1x64x256xbf16>
      %220 = vector.shape_cast %219 : vector<1x64x256xbf16> to vector<64x256xbf16>
      %221 = vector.shape_cast %218 : vector<64x256xbf16> to vector<1x64x256xbf16>
      tpu.vector_store %arg12[%c2_122, %c0_123, %c0_124], %221 {strides = array<i32>} : memref<4x64x256xbf16, #tpu.memory_space<vmem>>, vector<1x64x256xbf16>,
      %222 = vector.extract_strided_slice %178 {offsets = [0, 640], sizes = [256, 64], strides = [1, 1]} : vector<256x768xf32> to vector<256x64xf32>
      %223 = arith.truncf %222 : vector<256x64xf32> to vector<256x64xbf16>
      %c2_125 = arith.constant 2 : index
      %c0_126 = arith.constant 0 : index
      %c0_127 = arith.constant 0 : index
      %224 = vector.load %arg13[%c2_125, %c0_126, %c0_127] : memref<4x256x64xbf16, #tpu.memory_space<vmem>>, vector<1x256x64xbf16>
      %225 = vector.shape_cast %224 : vector<1x256x64xbf16> to vector<256x64xbf16>
      %226 = vector.shape_cast %223 : vector<256x64xbf16> to vector<1x256x64xbf16>
      tpu.vector_store %arg13[%c2_125, %c0_126, %c0_127], %226 {strides = array<i32>} : memref<4x256x64xbf16, #tpu.memory_space<vmem>>, vector<1x256x64xbf16>,
      %227 = vector.extract_strided_slice %178 {offsets = [0, 192], sizes = [256, 64], strides = [1, 1]} : vector<256x768xf32> to vector<256x64xf32>
      %228 = arith.truncf %227 : vector<256x64xf32> to vector<256x64xbf16>
      %c3_128 = arith.constant 3 : index
      %c0_129 = arith.constant 0 : index
      %c0_130 = arith.constant 0 : index
      %229 = vector.load %arg11[%c3_128, %c0_129, %c0_130] : memref<4x256x64xbf16, #tpu.memory_space<vmem>>, vector<1x256x64xbf16>
      %230 = vector.shape_cast %229 : vector<1x256x64xbf16> to vector<256x64xbf16>
      %231 = vector.shape_cast %228 : vector<256x64xbf16> to vector<1x256x64xbf16>
      tpu.vector_store %arg11[%c3_128, %c0_129, %c0_130], %231 {strides = array<i32>} : memref<4x256x64xbf16, #tpu.memory_space<vmem>>, vector<1x256x64xbf16>,
      %232 = vector.extract_strided_slice %178 {offsets = [0, 448], sizes = [256, 64], strides = [1, 1]} : vector<256x768xf32> to vector<256x64xf32>
      %233 = tpu.transpose %232, [1, 0] : vector<256x64xf32> -> vector<64x256xf32>
      %234 = arith.truncf %233 : vector<64x256xf32> to vector<64x256xbf16>
      %c3_131 = arith.constant 3 : index
      %c0_132 = arith.constant 0 : index
      %c0_133 = arith.constant 0 : index
      %235 = vector.load %arg12[%c3_131, %c0_132, %c0_133] : memref<4x64x256xbf16, #tpu.memory_space<vmem>>, vector<1x64x256xbf16>
      %236 = vector.shape_cast %235 : vector<1x64x256xbf16> to vector<64x256xbf16>
      %237 = vector.shape_cast %234 : vector<64x256xbf16> to vector<1x64x256xbf16>
      tpu.vector_store %arg12[%c3_131, %c0_132, %c0_133], %237 {strides = array<i32>} : memref<4x64x256xbf16, #tpu.memory_space<vmem>>, vector<1x64x256xbf16>,
      %238 = vector.extract_strided_slice %178 {offsets = [0, 704], sizes = [256, 64], strides = [1, 1]} : vector<256x768xf32> to vector<256x64xf32>
      %239 = arith.truncf %238 : vector<256x64xf32> to vector<256x64xbf16>
      %c3_134 = arith.constant 3 : index
      %c0_135 = arith.constant 0 : index
      %c0_136 = arith.constant 0 : index
      %240 = vector.load %arg13[%c3_134, %c0_135, %c0_136] : memref<4x256x64xbf16, #tpu.memory_space<vmem>>, vector<1x256x64xbf16>
      %241 = vector.shape_cast %240 : vector<1x256x64xbf16> to vector<256x64xbf16>
      %242 = vector.shape_cast %239 : vector<256x64xbf16> to vector<1x256x64xbf16>
      tpu.vector_store %arg13[%c3_134, %c0_135, %c0_136], %242 {strides = array<i32>} : memref<4x256x64xbf16, #tpu.memory_space<vmem>>, vector<1x256x64xbf16>,
    } else {
    }
    %c128_i32 = arith.constant 128 : i32
    %3 = arith.muli %arg1, %c128_i32 : i32
    %4 = tpu.assume_multiple %3, 128 : i32
    %c0 = arith.constant 0 : index
    %5 = arith.index_cast %4 : i32 to index
    %c0_1 = arith.constant 0 : index
    %6 = vector.load %arg2[%c0, %5, %c0_1] : memref<1x256x256xf32, #tpu.memory_space<vmem>>, vector<1x128x256xf32>
    %7 = vector.shape_cast %6 : vector<1x128x256xf32> to vector<128x256xf32>
    %cst = arith.constant 0.000000e+00 : f32
    %8 = vector.broadcast %cst : f32 to vector<128x256xf32>
    %c0_2 = arith.constant 0 : index
    %9 = arith.index_cast %4 : i32 to index
    %c0_3 = arith.constant 0 : index
    %10 = vector.load %arg11[%c0_2, %9, %c0_3] : memref<4x256x64xbf16, #tpu.memory_space<vmem>>, vector<1x128x64xbf16>
    %11 = vector.shape_cast %10 : vector<1x128x64xbf16> to vector<128x64xbf16>
    %c0_4 = arith.constant 0 : index
    %c0_5 = arith.constant 0 : index
    %c0_6 = arith.constant 0 : index
    %12 = vector.load %arg12[%c0_4, %c0_5, %c0_6] : memref<4x64x256xbf16, #tpu.memory_space<vmem>>, vector<1x64x256xbf16>
    %13 = vector.shape_cast %12 : vector<1x64x256xbf16> to vector<64x256xbf16>
    %cst_7 = arith.constant dense<0.000000e+00> : vector<128x256xf32>
    %14 = tpu.matmul %11, %13, %cst_7 {dimension_numbers = #tpu.dot_dimension_numbers<[1], [0], [0], [1], [0, 0, 1, 1], [], []>} : vector<128x64xbf16>, vector<64x256xbf16>, vector<128x256xf32> -> vector<128x256xf32>
    %c0_8 = arith.constant 0 : index
    %c0_9 = arith.constant 0 : index
    %c0_10 = arith.constant 0 : index
    %c0_11 = arith.constant 0 : index
    %15 = vector.load %arg3[%c0_8, %c0_9, %c0_10, %c0_11] : memref<1x4x128x256xf32, #tpu.memory_space<vmem>>, vector<1x1x128x256xf32>
    %16 = vector.shape_cast %15 : vector<1x1x128x256xf32> to vector<128x256xf32>
    %17 = arith.addf %14, %16 : vector<128x256xf32>
    %cst_12 = arith.constant dense<0xFF800000> : vector<128xf32>
    %18 = vector.multi_reduction <maximumf>, %17, %cst_12 [1] : vector<128x256xf32> to vector<128xf32>
    %19 = vector.shape_cast %18 : vector<128xf32> to vector<128x1xf32>
    %20 = vector.broadcast %19 : vector<128x1xf32> to vector<128x256xf32>
    %21 = arith.subf %17, %20 : vector<128x256xf32>
    %22 = math.exp %21 : vector<128x256xf32>
    %cst_13 = arith.constant dense<0.000000e+00> : vector<128xf32>
    %23 = vector.multi_reduction <add>, %22, %cst_13 [1] : vector<128x256xf32> to vector<128xf32>
    %24 = vector.shape_cast %23 : vector<128xf32> to vector<128x1xf32>
    %25 = tpu.reciprocal %24 {approx = true} : vector<128x1xf32> -> vector<128x1xf32>
    %26 = arith.truncf %22 : vector<128x256xf32> to vector<128x256xbf16>
    %c0_14 = arith.constant 0 : index
    %c0_15 = arith.constant 0 : index
    %c0_16 = arith.constant 0 : index
    %27 = vector.load %arg13[%c0_14, %c0_15, %c0_16] : memref<4x256x64xbf16, #tpu.memory_space<vmem>>, vector<1x256x64xbf16>
    %28 = vector.shape_cast %27 : vector<1x256x64xbf16> to vector<256x64xbf16>
    %cst_17 = arith.constant dense<0.000000e+00> : vector<128x64xf32>
    %29 = tpu.matmul %26, %28, %cst_17 {dimension_numbers = #tpu.dot_dimension_numbers<[1], [0], [0], [1], [0, 0, 1, 1], [], []>} : vector<128x256xbf16>, vector<256x64xbf16>, vector<128x64xf32> -> vector<128x64xf32>
    %30 = vector.broadcast %25 : vector<128x1xf32> to vector<128x64xf32>
    %31 = arith.mulf %29, %30 : vector<128x64xf32>
    %32 = arith.truncf %31 : vector<128x64xf32> to vector<128x64xbf16>
    %c0_18 = arith.constant 0 : index
    %c0_19 = arith.constant 0 : index
    %33 = vector.load %arg6[%c0_18, %c0_19] : memref<256x256xbf16, #tpu.memory_space<vmem>>, vector<64x256xbf16>
    %cst_20 = arith.constant dense<0.000000e+00> : vector<128x256xf32>
    %34 = tpu.matmul %32, %33, %cst_20 {dimension_numbers = #tpu.dot_dimension_numbers<[1], [0], [0], [1], [0, 0, 1, 1], [], []>} : vector<128x64xbf16>, vector<64x256xbf16>, vector<128x256xf32> -> vector<128x256xf32>
    %35 = arith.addf %8, %34 : vector<128x256xf32>
    %c1 = arith.constant 1 : index
    %36 = arith.index_cast %4 : i32 to index
    %c0_21 = arith.constant 0 : index
    %37 = vector.load %arg11[%c1, %36, %c0_21] : memref<4x256x64xbf16, #tpu.memory_space<vmem>>, vector<1x128x64xbf16>
    %38 = vector.shape_cast %37 : vector<1x128x64xbf16> to vector<128x64xbf16>
    %c1_22 = arith.constant 1 : index
    %c0_23 = arith.constant 0 : index
    %c0_24 = arith.constant 0 : index
    %39 = vector.load %arg12[%c1_22, %c0_23, %c0_24] : memref<4x64x256xbf16, #tpu.memory_space<vmem>>, vector<1x64x256xbf16>
    %40 = vector.shape_cast %39 : vector<1x64x256xbf16> to vector<64x256xbf16>
    %cst_25 = arith.constant dense<0.000000e+00> : vector<128x256xf32>
    %41 = tpu.matmul %38, %40, %cst_25 {dimension_numbers = #tpu.dot_dimension_numbers<[1], [0], [0], [1], [0, 0, 1, 1], [], []>} : vector<128x64xbf16>, vector<64x256xbf16>, vector<128x256xf32> -> vector<128x256xf32>
    %c0_26 = arith.constant 0 : index
    %c1_27 = arith.constant 1 : index
    %c0_28 = arith.constant 0 : index
    %c0_29 = arith.constant 0 : index
    %42 = vector.load %arg3[%c0_26, %c1_27, %c0_28, %c0_29] : memref<1x4x128x256xf32, #tpu.memory_space<vmem>>, vector<1x1x128x256xf32>
    %43 = vector.shape_cast %42 : vector<1x1x128x256xf32> to vector<128x256xf32>
    %44 = arith.addf %41, %43 : vector<128x256xf32>
    %cst_30 = arith.constant dense<0xFF800000> : vector<128xf32>
    %45 = vector.multi_reduction <maximumf>, %44, %cst_30 [1] : vector<128x256xf32> to vector<128xf32>
    %46 = vector.shape_cast %45 : vector<128xf32> to vector<128x1xf32>
    %47 = vector.broadcast %46 : vector<128x1xf32> to vector<128x256xf32>
    %48 = arith.subf %44, %47 : vector<128x256xf32>
    %49 = math.exp %48 : vector<128x256xf32>
    %cst_31 = arith.constant dense<0.000000e+00> : vector<128xf32>
    %50 = vector.multi_reduction <add>, %49, %cst_31 [1] : vector<128x256xf32> to vector<128xf32>
    %51 = vector.shape_cast %50 : vector<128xf32> to vector<128x1xf32>
    %52 = tpu.reciprocal %51 {approx = true} : vector<128x1xf32> -> vector<128x1xf32>
    %53 = arith.truncf %49 : vector<128x256xf32> to vector<128x256xbf16>
    %c1_32 = arith.constant 1 : index
    %c0_33 = arith.constant 0 : index
    %c0_34 = arith.constant 0 : index
    %54 = vector.load %arg13[%c1_32, %c0_33, %c0_34] : memref<4x256x64xbf16, #tpu.memory_space<vmem>>, vector<1x256x64xbf16>
    %55 = vector.shape_cast %54 : vector<1x256x64xbf16> to vector<256x64xbf16>
    %cst_35 = arith.constant dense<0.000000e+00> : vector<128x64xf32>
    %56 = tpu.matmul %53, %55, %cst_35 {dimension_numbers = #tpu.dot_dimension_numbers<[1], [0], [0], [1], [0, 0, 1, 1], [], []>} : vector<128x256xbf16>, vector<256x64xbf16>, vector<128x64xf32> -> vector<128x64xf32>
    %57 = vector.broadcast %52 : vector<128x1xf32> to vector<128x64xf32>
    %58 = arith.mulf %56, %57 : vector<128x64xf32>
    %59 = arith.truncf %58 : vector<128x64xf32> to vector<128x64xbf16>
    %c64 = arith.constant 64 : index
    %c0_36 = arith.constant 0 : index
    %60 = vector.load %arg6[%c64, %c0_36] : memref<256x256xbf16, #tpu.memory_space<vmem>>, vector<64x256xbf16>
    %cst_37 = arith.constant dense<0.000000e+00> : vector<128x256xf32>
    %61 = tpu.matmul %59, %60, %cst_37 {dimension_numbers = #tpu.dot_dimension_numbers<[1], [0], [0], [1], [0, 0, 1, 1], [], []>} : vector<128x64xbf16>, vector<64x256xbf16>, vector<128x256xf32> -> vector<128x256xf32>
    %62 = arith.addf %35, %61 : vector<128x256xf32>
    %c2 = arith.constant 2 : index
    %63 = arith.index_cast %4 : i32 to index
    %c0_38 = arith.constant 0 : index
    %64 = vector.load %arg11[%c2, %63, %c0_38] : memref<4x256x64xbf16, #tpu.memory_space<vmem>>, vector<1x128x64xbf16>
    %65 = vector.shape_cast %64 : vector<1x128x64xbf16> to vector<128x64xbf16>
    %c2_39 = arith.constant 2 : index
    %c0_40 = arith.constant 0 : index
    %c0_41 = arith.constant 0 : index
    %66 = vector.load %arg12[%c2_39, %c0_40, %c0_41] : memref<4x64x256xbf16, #tpu.memory_space<vmem>>, vector<1x64x256xbf16>
    %67 = vector.shape_cast %66 : vector<1x64x256xbf16> to vector<64x256xbf16>
    %cst_42 = arith.constant dense<0.000000e+00> : vector<128x256xf32>
    %68 = tpu.matmul %65, %67, %cst_42 {dimension_numbers = #tpu.dot_dimension_numbers<[1], [0], [0], [1], [0, 0, 1, 1], [], []>} : vector<128x64xbf16>, vector<64x256xbf16>, vector<128x256xf32> -> vector<128x256xf32>
    %c0_43 = arith.constant 0 : index
    %c2_44 = arith.constant 2 : index
    %c0_45 = arith.constant 0 : index
    %c0_46 = arith.constant 0 : index
    %69 = vector.load %arg3[%c0_43, %c2_44, %c0_45, %c0_46] : memref<1x4x128x256xf32, #tpu.memory_space<vmem>>, vector<1x1x128x256xf32>
    %70 = vector.shape_cast %69 : vector<1x1x128x256xf32> to vector<128x256xf32>
    %71 = arith.addf %68, %70 : vector<128x256xf32>
    %cst_47 = arith.constant dense<0xFF800000> : vector<128xf32>
    %72 = vector.multi_reduction <maximumf>, %71, %cst_47 [1] : vector<128x256xf32> to vector<128xf32>
    %73 = vector.shape_cast %72 : vector<128xf32> to vector<128x1xf32>
    %74 = vector.broadcast %73 : vector<128x1xf32> to vector<128x256xf32>
    %75 = arith.subf %71, %74 : vector<128x256xf32>
    %76 = math.exp %75 : vector<128x256xf32>
    %cst_48 = arith.constant dense<0.000000e+00> : vector<128xf32>
    %77 = vector.multi_reduction <add>, %76, %cst_48 [1] : vector<128x256xf32> to vector<128xf32>
    %78 = vector.shape_cast %77 : vector<128xf32> to vector<128x1xf32>
    %79 = tpu.reciprocal %78 {approx = true} : vector<128x1xf32> -> vector<128x1xf32>
    %80 = arith.truncf %76 : vector<128x256xf32> to vector<128x256xbf16>
    %c2_49 = arith.constant 2 : index
    %c0_50 = arith.constant 0 : index
    %c0_51 = arith.constant 0 : index
    %81 = vector.load %arg13[%c2_49, %c0_50, %c0_51] : memref<4x256x64xbf16, #tpu.memory_space<vmem>>, vector<1x256x64xbf16>
    %82 = vector.shape_cast %81 : vector<1x256x64xbf16> to vector<256x64xbf16>
    %cst_52 = arith.constant dense<0.000000e+00> : vector<128x64xf32>
    %83 = tpu.matmul %80, %82, %cst_52 {dimension_numbers = #tpu.dot_dimension_numbers<[1], [0], [0], [1], [0, 0, 1, 1], [], []>} : vector<128x256xbf16>, vector<256x64xbf16>, vector<128x64xf32> -> vector<128x64xf32>
    %84 = vector.broadcast %79 : vector<128x1xf32> to vector<128x64xf32>
    %85 = arith.mulf %83, %84 : vector<128x64xf32>
    %86 = arith.truncf %85 : vector<128x64xf32> to vector<128x64xbf16>
    %c128 = arith.constant 128 : index
    %c0_53 = arith.constant 0 : index
    %87 = vector.load %arg6[%c128, %c0_53] : memref<256x256xbf16, #tpu.memory_space<vmem>>, vector<64x256xbf16>
    %cst_54 = arith.constant dense<0.000000e+00> : vector<128x256xf32>
    %88 = tpu.matmul %86, %87, %cst_54 {dimension_numbers = #tpu.dot_dimension_numbers<[1], [0], [0], [1], [0, 0, 1, 1], [], []>} : vector<128x64xbf16>, vector<64x256xbf16>, vector<128x256xf32> -> vector<128x256xf32>
    %89 = arith.addf %62, %88 : vector<128x256xf32>
    %c3 = arith.constant 3 : index
    %90 = arith.index_cast %4 : i32 to index
    %c0_55 = arith.constant 0 : index
    %91 = vector.load %arg11[%c3, %90, %c0_55] : memref<4x256x64xbf16, #tpu.memory_space<vmem>>, vector<1x128x64xbf16>
    %92 = vector.shape_cast %91 : vector<1x128x64xbf16> to vector<128x64xbf16>
    %c3_56 = arith.constant 3 : index
    %c0_57 = arith.constant 0 : index
    %c0_58 = arith.constant 0 : index
    %93 = vector.load %arg12[%c3_56, %c0_57, %c0_58] : memref<4x64x256xbf16, #tpu.memory_space<vmem>>, vector<1x64x256xbf16>
    %94 = vector.shape_cast %93 : vector<1x64x256xbf16> to vector<64x256xbf16>
    %cst_59 = arith.constant dense<0.000000e+00> : vector<128x256xf32>
    %95 = tpu.matmul %92, %94, %cst_59 {dimension_numbers = #tpu.dot_dimension_numbers<[1], [0], [0], [1], [0, 0, 1, 1], [], []>} : vector<128x64xbf16>, vector<64x256xbf16>, vector<128x256xf32> -> vector<128x256xf32>
    %c0_60 = arith.constant 0 : index
    %c3_61 = arith.constant 3 : index
    %c0_62 = arith.constant 0 : index
    %c0_63 = arith.constant 0 : index
    %96 = vector.load %arg3[%c0_60, %c3_61, %c0_62, %c0_63] : memref<1x4x128x256xf32, #tpu.memory_space<vmem>>, vector<1x1x128x256xf32>
    %97 = vector.shape_cast %96 : vector<1x1x128x256xf32> to vector<128x256xf32>
    %98 = arith.addf %95, %97 : vector<128x256xf32>
    %cst_64 = arith.constant dense<0xFF800000> : vector<128xf32>
    %99 = vector.multi_reduction <maximumf>, %98, %cst_64 [1] : vector<128x256xf32> to vector<128xf32>
    %100 = vector.shape_cast %99 : vector<128xf32> to vector<128x1xf32>
    %101 = vector.broadcast %100 : vector<128x1xf32> to vector<128x256xf32>
    %102 = arith.subf %98, %101 : vector<128x256xf32>
    %103 = math.exp %102 : vector<128x256xf32>
    %cst_65 = arith.constant dense<0.000000e+00> : vector<128xf32>
    %104 = vector.multi_reduction <add>, %103, %cst_65 [1] : vector<128x256xf32> to vector<128xf32>
    %105 = vector.shape_cast %104 : vector<128xf32> to vector<128x1xf32>
    %106 = tpu.reciprocal %105 {approx = true} : vector<128x1xf32> -> vector<128x1xf32>
    %107 = arith.truncf %103 : vector<128x256xf32> to vector<128x256xbf16>
    %c3_66 = arith.constant 3 : index
    %c0_67 = arith.constant 0 : index
    %c0_68 = arith.constant 0 : index
    %108 = vector.load %arg13[%c3_66, %c0_67, %c0_68] : memref<4x256x64xbf16, #tpu.memory_space<vmem>>, vector<1x256x64xbf16>
    %109 = vector.shape_cast %108 : vector<1x256x64xbf16> to vector<256x64xbf16>
    %cst_69 = arith.constant dense<0.000000e+00> : vector<128x64xf32>
    %110 = tpu.matmul %107, %109, %cst_69 {dimension_numbers = #tpu.dot_dimension_numbers<[1], [0], [0], [1], [0, 0, 1, 1], [], []>} : vector<128x256xbf16>, vector<256x64xbf16>, vector<128x64xf32> -> vector<128x64xf32>
    %111 = vector.broadcast %106 : vector<128x1xf32> to vector<128x64xf32>
    %112 = arith.mulf %110, %111 : vector<128x64xf32>
    %113 = arith.truncf %112 : vector<128x64xf32> to vector<128x64xbf16>
    %c192 = arith.constant 192 : index
    %c0_70 = arith.constant 0 : index
    %114 = vector.load %arg6[%c192, %c0_70] : memref<256x256xbf16, #tpu.memory_space<vmem>>, vector<64x256xbf16>
    %cst_71 = arith.constant dense<0.000000e+00> : vector<128x256xf32>
    %115 = tpu.matmul %113, %114, %cst_71 {dimension_numbers = #tpu.dot_dimension_numbers<[1], [0], [0], [1], [0, 0, 1, 1], [], []>} : vector<128x64xbf16>, vector<64x256xbf16>, vector<128x256xf32> -> vector<128x256xf32>
    %116 = arith.addf %89, %115 : vector<128x256xf32>
    %117 = arith.addf %7, %116 : vector<128x256xf32>
    %c0_72 = arith.constant 0 : index
    %c0_73 = arith.constant 0 : index
    %118 = vector.load %arg7[%c0_72, %c0_73] : memref<1x256xf32, #tpu.memory_space<vmem>>, vector<1x256xf32>
    %119 = vector.shape_cast %118 : vector<1x256xf32> to vector<256xf32>
    %120 = arith.mulf %117, %117 : vector<128x256xf32>
    %cst_74 = arith.constant dense<0.000000e+00> : vector<128xf32>
    %121 = vector.multi_reduction <add>, %120, %cst_74 [1] : vector<128x256xf32> to vector<128xf32>
    %122 = vector.shape_cast %121 : vector<128xf32> to vector<128x1xf32>
    %cst_75 = arith.constant 2.560000e+02 : f32
    %123 = vector.broadcast %cst_75 : f32 to vector<128x1xf32>
    %124 = arith.divf %122, %123 : vector<128x1xf32>
    %cst_76 = arith.constant 9.99999997E-7 : f32
    %125 = vector.broadcast %cst_76 : f32 to vector<128x1xf32>
    %126 = arith.addf %124, %125 : vector<128x1xf32>
    %127 = math.rsqrt %126 : vector<128x1xf32>
    %128 = vector.broadcast %127 : vector<128x1xf32> to vector<128x256xf32>
    %129 = arith.mulf %117, %128 : vector<128x256xf32>
    %130 = vector.shape_cast %119 : vector<256xf32> to vector<1x256xf32>
    %131 = vector.broadcast %130 : vector<1x256xf32> to vector<128x256xf32>
    %132 = arith.mulf %129, %131 : vector<128x256xf32>
    %133 = arith.truncf %132 : vector<128x256xf32> to vector<128x256xbf16>
    %c0_77 = arith.constant 0 : index
    %c0_78 = arith.constant 0 : index
    %134 = vector.load %arg8[%c0_77, %c0_78] : memref<256x1024xbf16, #tpu.memory_space<vmem>>, vector<256x1024xbf16>
    %cst_79 = arith.constant dense<0.000000e+00> : vector<128x1024xf32>
    %135 = tpu.matmul %133, %134, %cst_79 {dimension_numbers = #tpu.dot_dimension_numbers<[1], [0], [0], [1], [0, 0, 1, 1], [], []>} : vector<128x256xbf16>, vector<256x1024xbf16>, vector<128x1024xf32> -> vector<128x1024xf32>
    %136 = vector.extract_strided_slice %135 {offsets = [0, 0], sizes = [128, 512], strides = [1, 1]} : vector<128x1024xf32> to vector<128x512xf32>
    %137 = vector.extract_strided_slice %135 {offsets = [0, 512], sizes = [128, 512], strides = [1, 1]} : vector<128x1024xf32> to vector<128x512xf32>
    %cst_80 = arith.constant 5.000000e-01 : f32
    %138 = vector.broadcast %cst_80 : f32 to vector<128x512xf32>
    %139 = arith.mulf %138, %136 : vector<128x512xf32>
    %cst_81 = arith.constant 4.471500e-02 : f32
    %140 = vector.broadcast %cst_81 : f32 to vector<128x512xf32>
    %141 = arith.mulf %140, %136 : vector<128x512xf32>
    %142 = arith.mulf %141, %136 : vector<128x512xf32>
    %143 = arith.mulf %142, %136 : vector<128x512xf32>
    %144 = arith.addf %136, %143 : vector<128x512xf32>
    %cst_82 = arith.constant 0.797884583 : f32
    %145 = vector.broadcast %cst_82 : f32 to vector<128x512xf32>
    %146 = arith.mulf %145, %144 : vector<128x512xf32>
    %147 = math.tanh %146 : vector<128x512xf32>
    %cst_83 = arith.constant 1.000000e+00 : f32
    %148 = vector.broadcast %cst_83 : f32 to vector<128x512xf32>
    %149 = arith.addf %148, %147 : vector<128x512xf32>
    %150 = arith.mulf %139, %149 : vector<128x512xf32>
    %151 = arith.mulf %150, %137 : vector<128x512xf32>
    %152 = arith.truncf %151 : vector<128x512xf32> to vector<128x512xbf16>
    %c0_84 = arith.constant 0 : index
    %c0_85 = arith.constant 0 : index
    %153 = vector.load %arg9[%c0_84, %c0_85] : memref<512x256xbf16, #tpu.memory_space<vmem>>, vector<512x256xbf16>
    %cst_86 = arith.constant dense<0.000000e+00> : vector<128x256xf32>
    %154 = tpu.matmul %152, %153, %cst_86 {dimension_numbers = #tpu.dot_dimension_numbers<[1], [0], [0], [1], [0, 0, 1, 1], [], []>} : vector<128x512xbf16>, vector<512x256xbf16>, vector<128x256xf32> -> vector<128x256xf32>
    %155 = arith.addf %117, %154 : vector<128x256xf32>
    %c0_87 = arith.constant 0 : index
    %c0_88 = arith.constant 0 : index
    %c0_89 = arith.constant 0 : index
    %156 = vector.load %arg10[%c0_87, %c0_88, %c0_89] : memref<1x128x256xf32, #tpu.memory_space<vmem>>, vector<1x128x256xf32>
    %157 = vector.shape_cast %156 : vector<1x128x256xf32> to vector<128x256xf32>
    %158 = vector.shape_cast %155 : vector<128x256xf32> to vector<1x128x256xf32>
    tpu.vector_store %arg10[%c0_87, %c0_88, %c0_89], %158 {strides = array<i32>} : memref<1x128x256xf32, #tpu.memory_space<vmem>>, vector<1x128x256xf32>,
    return
  }
  func.func @transform_0(%arg0: i32, %arg1: i32) -> (i32, i32, i32) {
    %c0_i32 = arith.constant 0 : i32
    %c0_i32_0 = arith.constant 0 : i32
    %c0_i32_1 = arith.constant 0 : i32
    return %arg0, %c0_i32, %c0_i32_0 : i32, i32, i32
  }
  func.func @transform_1(%arg0: i32, %arg1: i32) -> (i32, i32, i32, i32) {
    %c0_i32 = arith.constant 0 : i32
    %c0_i32_0 = arith.constant 0 : i32
    %c0_i32_1 = arith.constant 0 : i32
    %c0_i32_2 = arith.constant 0 : i32
    return %c0_i32, %c0_i32_0, %arg1, %c0_i32_1 : i32, i32, i32, i32
  }
  func.func @transform_2(%arg0: i32, %arg1: i32) -> (i32, i32) {
    %c0_i32 = arith.constant 0 : i32
    %c0_i32_0 = arith.constant 0 : i32
    %c0_i32_1 = arith.constant 0 : i32
    return %c0_i32, %c0_i32_0 : i32, i32
  }
  func.func @transform_3(%arg0: i32, %arg1: i32) -> (i32, i32) {
    %c0_i32 = arith.constant 0 : i32
    %c0_i32_0 = arith.constant 0 : i32
    %c0_i32_1 = arith.constant 0 : i32
    return %c0_i32, %c0_i32_0 : i32, i32
  }
  func.func @transform_4(%arg0: i32, %arg1: i32) -> (i32, i32) {
    %c0_i32 = arith.constant 0 : i32
    %c0_i32_0 = arith.constant 0 : i32
    %c0_i32_1 = arith.constant 0 : i32
    return %c0_i32, %c0_i32_0 : i32, i32
  }
  func.func @transform_5(%arg0: i32, %arg1: i32) -> (i32, i32) {
    %c0_i32 = arith.constant 0 : i32
    %c0_i32_0 = arith.constant 0 : i32
    %c0_i32_1 = arith.constant 0 : i32
    return %c0_i32, %c0_i32_0 : i32, i32
  }
  func.func @transform_6(%arg0: i32, %arg1: i32) -> (i32, i32) {
    %c0_i32 = arith.constant 0 : i32
    %c0_i32_0 = arith.constant 0 : i32
    %c0_i32_1 = arith.constant 0 : i32
    return %c0_i32, %c0_i32_0 : i32, i32
  }
  func.func @transform_7(%arg0: i32, %arg1: i32) -> (i32, i32) {
    %c0_i32 = arith.constant 0 : i32
    %c0_i32_0 = arith.constant 0 : i32
    %c0_i32_1 = arith.constant 0 : i32
    return %c0_i32, %c0_i32_0 : i32, i32
  }
  func.func @transform_8(%arg0: i32, %arg1: i32) -> (i32, i32, i32) {
    %c0_i32 = arith.constant 0 : i32
    %c0_i32_0 = arith.constant 0 : i32
    return %arg0, %arg1, %c0_i32 : i32, i32, i32
  }
}

</mosaic_0001>

<llo_original>
// kernel: tpu_custom_call.1
$region0: #{tpu_custom_call.1}
  #allocation0 [shape = 'u32[]', space=smem, size = 0x4, offset = 0x4, fixed_abs, tag = 'smem constant byte address 0x4 - core index']
  #allocation1 [shape = 'u32[144,128]{1,0:T(1,128)}', space=vmem, size = 0x12000, scoped, tag = 'internal scratch']
  #allocation2 [shape = 'bf16[4,256,64]{2,1,0:T(16,128)(2,1)}', space=vmem, size = 0x40000, scoped, tag = 'scratch operand']
  #allocation3 [shape = 'bf16[4,64,256]{2,1,0:T(16,128)(2,1)}', space=vmem, size = 0x20000, scoped, tag = 'scratch operand']
  #allocation4 [shape = 'bf16[4,256,64]{2,1,0:T(16,128)(2,1)}', space=vmem, size = 0x40000, scoped, tag = 'scratch operand']
  #allocation17 [shape = 's32[]', space=sflag, size = 0x4, offset = 0, fixed_abs, tag = 'sflag constant byte address 0x0 - dummy sync flag']
  %s0 = inlined_call_operand.hbm [shape: f32[2,256,256], index: 0, kind: input, shape index: {}]
  %s1 = inlined_call_operand.hbm [shape: f32[1,4,256,256], index: 1, kind: input, shape index: {}]
  %s2 = inlined_call_operand.vmem [shape: f32[1,256], index: 2, kind: input, shape index: {}]
  %s3 = inlined_call_operand.hbm [shape: bf16[256,768], index: 3, kind: input, shape index: {}]
  %s4 = inlined_call_operand.hbm [shape: bf16[256,256], index: 4, kind: input, shape index: {}]
  %s5 = inlined_call_operand.vmem [shape: f32[1,256], index: 5, kind: input, shape index: {}]
  %s6 = inlined_call_operand.hbm [shape: bf16[256,1024], index: 6, kind: input, shape index: {}]
  %s7 = inlined_call_operand.hbm [shape: bf16[512,256], index: 7, kind: input, shape index: {}]
  %s8 = inlined_call_operand.hbm [shape: f32[2,256,256], index: 8, kind: output, shape index: {}]
  %s9 = sld [smem:[#allocation0]]
  $region93: #{tpu_custom_call.1} parent=0
    _
  %s11 = ssub.s32 1, %s9
  %s12 = scalar_select 0, %s11, %s9
  $region1: #{tpu_custom_call.1} parent=0
    #allocation5 [shape = 'u8[524288]{0}', space=vmem, size = 0x80000, scoped, tag = 'input window, operand 0']
    #allocation6 [shape = 's32[2]{0}', space=sflag, size = 0x8, scoped, tag = 'scoped memory for tpu_custom_call.1']
    #allocation7 [shape = 's32[2]{0}', space=sflag, size = 0x8, scoped, tag = 'scoped memory for tpu_custom_call.1']
    #allocation8 [shape = 'u8[1048576]{0}', space=vmem, size = 0x100000, scoped, tag = 'input window, operand 1']
    #allocation9 [shape = 's32[2]{0}', space=sflag, size = 0x8, scoped, tag = 'scoped memory for tpu_custom_call.1']
    #allocation10 [shape = 'u8[393216]{0}', space=vmem, size = 0x60000, scoped, tag = 'input window, operand 3, single buffered']
    #allocation11 [shape = 'u8[131072]{0}', space=vmem, size = 0x20000, scoped, tag = 'input window, operand 4, single buffered']
    #allocation12 [shape = 's32[1]{0}', space=sflag, size = 0x4, scoped, tag = 'scoped memory for tpu_custom_call.1']
    #allocation13 [shape = 'u8[524288]{0}', space=vmem, size = 0x80000, scoped, tag = 'input window, operand 6, single buffered']
    #allocation14 [shape = 'u8[262144]{0}', space=vmem, size = 0x40000, scoped, tag = 'input window, operand 7, single buffered']
    #allocation15 [shape = 's32[1]{0}', space=sflag, size = 0x4, scoped, tag = 'scoped memory for tpu_custom_call.1']
    #allocation16 [shape = 'u8[262144]{0}', space=vmem, size = 0x40000, scoped, tag = 'output window, operand 0']
    %13 = vsyncpa [#allocation6], 0
    %s14 = scalar_lea.sflag [#allocation6], 1
    %15 = vsyncpa %s14, 0
    %16 = vsyncpa [#allocation9], 0
    %s17 = scalar_lea.sflag [#allocation9], 1
    %18 = vsyncpa %s17, 0
    %19 = vsyncpa [#allocation12], 0
    %20 = vsyncpa [#allocation15], 0
    %21 = vsyncpa [#allocation7], 0
    %s22 = scalar_lea.sflag [#allocation7], 1
    %23 = vsyncpa %s22, 0
    loop: start=0, step=1, limit=6
    $region2: #{tpu_custom_call.1} parent=1 // loop_pre_header
      _
    $region3: #{tpu_custom_call.1} parent=1 // loop_header
      %s25 = sphi 0, %s29
      %p26 = scmp.ge.s32.totalorder %s25, 6
      %s32 = sphi 0, %s44
      %s33 = sphi 0, %s40
      %s34 = sphi 0, %s32
      %s35 = sphi 0, %s33
      %s36 = sphi 0, %s34
      %s37 = sphi 0, %s35
      %s47 = sphi 0, %s49
      %s50 = sphi 0, %s47
      %s51 = sphi 0, %s50
      %s67 = sphi 0, %s51
      %s73 = sphi 0, %s75
      %s76 = sphi 0, %s73
      %s77 = sphi 0, %s76
      %s93 = sphi 0, %s77
      %s97 = sphi 0, %s97
      %s99 = sphi 0, %s97
      %s100 = sphi 0, %s99
      %s114 = sphi 0, %s100
      %s118 = sphi 0, %s118
      %s120 = sphi 0, %s118
      %s121 = sphi 0, %s120
      %s135 = sphi 0, %s121
      %s139 = sphi 0, %s139
      %s141 = sphi 0, %s139
      %s142 = sphi 0, %s141
      %s156 = sphi 0, %s142
      %s160 = sphi 0, %s160
      %s162 = sphi 0, %s160
      %s163 = sphi 0, %s162
      %s177 = sphi 0, %s163
      %s181 = sphi 0, %s181
      %s183 = sphi 0, %s181
      %s184 = sphi 0, %s183
      %s198 = sphi 0, %s184
      %s202 = sphi 0, %s202
      %s204 = sphi 0, %s202
      %s205 = sphi 0, %s204
      %s219 = sphi 0, %s205
      %s227 = sphi 0, %s229
      %s230 = sphi 0, %s227
      %s231 = sphi 0, %s230
      %s247 = sphi 0, %s231
    $region4: #{tpu_custom_call.1} parent=1 // loop_header_branch
      %28 = sbr.rel (%p26) target = $region8
    $region5: #{tpu_custom_call.1} parent=1 // loop_body
      %s30 = ssub.s32 %s25, 1
      %s31 = ssub.s32 %s25, 2
      %s38 = sadd.s32 1, %s33
      %p39 = scmp.ge.s32.totalorder %s38, 2
      %s40 = scalar_select %p39, 0, %s38
      %s41 = sadd.s32 1, %s32
      %s42 = scalar_select %p39, %s41, %s32
      %p43 = scmp.ge.s32.totalorder %s42, 2
      %s44 = scalar_select %p43, 0, %s42
      %s45 = ssub.s32 %s32, %s44
      %p46 = scmp.eq.s32.totalorder %s45, 0
      %s48 = sadd.s32 %s47, 1
      %s49 = scalar_select %p46, %s47, %s48
      %p52 = pneg %p46
      %p53 = scmp.eq.s32.totalorder %s25, 3
      %p54 = por %p52, %p53
      %p55 = scmp.ne.s32.totalorder %s47, %s50
      %p56 = scmp.eq.s32.totalorder %s25, 0
      %p57 = por %p55, %p56
      %p58 = scmp.ne.s32.totalorder %s47, %s50
      %p59 = scmp.eq.s32.totalorder %s30, 3
      %p60 = por %p58, %p59
      %p61 = scmp.ne.s32.totalorder %s50, %s51
      %p62 = scmp.eq.s32.totalorder %s30, 0
      %p63 = por %p61, %p62
      %p64 = scmp.ne.s32.totalorder %s50, %s51
      %p65 = scmp.eq.s32.totalorder %s31, 3
      %p66 = por %p64, %p65
      %p68 = scmp.ne.s32.totalorder %s51, %s67
      %p69 = scmp.eq.s32.totalorder %s31, 0
      %p70 = por %p68, %p69
      %s71 = ssub.s32 %s33, %s40
      %p72 = scmp.eq.s32.totalorder %s71, 0
      %s74 = sadd.s32 %s73, 1
      %s75 = scalar_select %p72, %s73, %s74
      %p78 = pneg %p72
      %p79 = scmp.eq.s32.totalorder %s25, 3
      %p80 = por %p78, %p79
      %p81 = scmp.ne.s32.totalorder %s73, %s76
      %p82 = scmp.eq.s32.totalorder %s25, 0
      %p83 = por %p81, %p82
      %p84 = scmp.ne.s32.totalorder %s73, %s76
      %p85 = scmp.eq.s32.totalorder %s30, 3
      %p86 = por %p84, %p85
      %p87 = scmp.ne.s32.totalorder %s76, %s77
      %p88 = scmp.eq.s32.totalorder %s30, 0
      %p89 = por %p87, %p88
      %p90 = scmp.ne.s32.totalorder %s76, %s77
      %p91 = scmp.eq.s32.totalorder %s31, 3
      %p92 = por %p90, %p91
      %p94 = scmp.ne.s32.totalorder %s77, %s93
      %p95 = scmp.eq.s32.totalorder %s31, 0
      %p96 = por %p94, %p95
      %s98 = sadd.s32 %s97, 1
      %p101 = scmp.eq.s32.totalorder %s25, 3
      %p102 = scmp.ne.s32.totalorder %s97, %s99
      %p103 = scmp.eq.s32.totalorder %s25, 0
      %p104 = por %p102, %p103
      %p105 = scmp.ne.s32.totalorder %s97, %s99
      %p106 = scmp.eq.s32.totalorder %s30, 3
      %p107 = por %p105, %p106
      %p108 = scmp.ne.s32.totalorder %s99, %s100
      %p109 = scmp.eq.s32.totalorder %s30, 0
      %p110 = por %p108, %p109
      %p111 = scmp.ne.s32.totalorder %s99, %s100
      %p112 = scmp.eq.s32.totalorder %s31, 3
      %p113 = por %p111, %p112
      %p115 = scmp.ne.s32.totalorder %s100, %s114
      %p116 = scmp.eq.s32.totalorder %s31, 0
      %p117 = por %p115, %p116
      %s119 = sadd.s32 %s118, 1
      %p122 = scmp.eq.s32.totalorder %s25, 3
      %p123 = scmp.ne.s32.totalorder %s118, %s120
      %p124 = scmp.eq.s32.totalorder %s25, 0
      %p125 = por %p123, %p124
      %p126 = scmp.ne.s32.totalorder %s118, %s120
      %p127 = scmp.eq.s32.totalorder %s30, 3
      %p128 = por %p126, %p127
      %p129 = scmp.ne.s32.totalorder %s120, %s121
      %p130 = scmp.eq.s32.totalorder %s30, 0
      %p131 = por %p129, %p130
      %p132 = scmp.ne.s32.totalorder %s120, %s121
      %p133 = scmp.eq.s32.totalorder %s31, 3
      %p134 = por %p132, %p133
      %p136 = scmp.ne.s32.totalorder %s121, %s135
      %p137 = scmp.eq.s32.totalorder %s31, 0
      %p138 = por %p136, %p137
      %s140 = sadd.s32 %s139, 1
      %p143 = scmp.eq.s32.totalorder %s25, 3
      %p144 = scmp.ne.s32.totalorder %s139, %s141
      %p145 = scmp.eq.s32.totalorder %s25, 0
      %p146 = por %p144, %p145
      %p147 = scmp.ne.s32.totalorder %s139, %s141
      %p148 = scmp.eq.s32.totalorder %s30, 3
      %p149 = por %p147, %p148
      %p150 = scmp.ne.s32.totalorder %s141, %s142
      %p151 = scmp.eq.s32.totalorder %s30, 0
      %p152 = por %p150, %p151
      %p153 = scmp.ne.s32.totalorder %s141, %s142
      %p154 = scmp.eq.s32.totalorder %s31, 3
      %p155 = por %p153, %p154
      %p157 = scmp.ne.s32.totalorder %s142, %s156
      %p158 = scmp.eq.s32.totalorder %s31, 0
      %p159 = por %p157, %p158
      %s161 = sadd.s32 %s160, 1
      %p164 = scmp.eq.s32.totalorder %s25, 3
      %p165 = scmp.ne.s32.totalorder %s160, %s162
      %p166 = scmp.eq.s32.totalorder %s25, 0
      %p167 = por %p165, %p166
      %p168 = scmp.ne.s32.totalorder %s160, %s162
      %p169 = scmp.eq.s32.totalorder %s30, 3
      %p170 = por %p168, %p169
      %p171 = scmp.ne.s32.totalorder %s162, %s163
      %p172 = scmp.eq.s32.totalorder %s30, 0
      %p173 = por %p171, %p172
      %p174 = scmp.ne.s32.totalorder %s162, %s163
      %p175 = scmp.eq.s32.totalorder %s31, 3
      %p176 = por %p174, %p175
      %p178 = scmp.ne.s32.totalorder %s163, %s177
      %p179 = scmp.eq.s32.totalorder %s31, 0
      %p180 = por %p178, %p179
      %s182 = sadd.s32 %s181, 1
      %p185 = scmp.eq.s32.totalorder %s25, 3
      %p186 = scmp.ne.s32.totalorder %s181, %s183
      %p187 = scmp.eq.s32.totalorder %s25, 0
      %p188 = por %p186, %p187
      %p189 = scmp.ne.s32.totalorder %s181, %s183
      %p190 = scmp.eq.s32.totalorder %s30, 3
      %p191 = por %p189, %p190
      %p192 = scmp.ne.s32.totalorder %s183, %s184
      %p193 = scmp.eq.s32.totalorder %s30, 0
      %p194 = por %p192, %p193
      %p195 = scmp.ne.s32.totalorder %s183, %s184
      %p196 = scmp.eq.s32.totalorder %s31, 3
      %p197 = por %p195, %p196
      %p199 = scmp.ne.s32.totalorder %s184, %s198
      %p200 = scmp.eq.s32.totalorder %s31, 0
      %p201 = por %p199, %p200
      %s203 = sadd.s32 %s202, 1
      %p206 = scmp.eq.s32.totalorder %s25, 3
      %p207 = scmp.ne.s32.totalorder %s202, %s204
      %p208 = scmp.eq.s32.totalorder %s25, 0
      %p209 = por %p207, %p208
      %p210 = scmp.ne.s32.totalorder %s202, %s204
      %p211 = scmp.eq.s32.totalorder %s30, 3
      %p212 = por %p210, %p211
      %p213 = scmp.ne.s32.totalorder %s204, %s205
      %p214 = scmp.eq.s32.totalorder %s30, 0
      %p215 = por %p213, %p214
      %p216 = scmp.ne.s32.totalorder %s204, %s205
      %p217 = scmp.eq.s32.totalorder %s31, 3
      %p218 = por %p216, %p217
      %p220 = scmp.ne.s32.totalorder %s205, %s219
      %p221 = scmp.eq.s32.totalorder %s31, 0
      %p222 = por %p220, %p221
      %s223 = ssub.s32 %s32, %s44
      %s224 = ssub.s32 %s33, %s40
      %s225 = sor.u32 %s223, %s224
      %p226 = scmp.eq.s32.totalorder %s225, 0
      %s228 = sadd.s32 %s227, 1
      %s229 = scalar_select %p226, %s227, %s228
      %p232 = pneg %p226
      %p233 = scmp.eq.s32.totalorder %s25, 3
      %p234 = por %p232, %p233
      %p235 = scmp.ne.s32.totalorder %s227, %s230
      %p236 = scmp.eq.s32.totalorder %s25, 0
      %p237 = por %p235, %p236
      %p238 = scmp.ne.s32.totalorder %s227, %s230
      %p239 = scmp.eq.s32.totalorder %s30, 3
      %p240 = por %p238, %p239
      %p241 = scmp.ne.s32.totalorder %s230, %s231
      %p242 = scmp.eq.s32.totalorder %s30, 0
      %p243 = por %p241, %p242
      %p244 = scmp.ne.s32.totalorder %s230, %s231
      %p245 = scmp.eq.s32.totalorder %s31, 3
      %p246 = por %p244, %p245
      %p248 = scmp.ne.s32.totalorder %s231, %s247
      %p249 = scmp.eq.s32.totalorder %s31, 0
      %p250 = por %p248, %p249
      %p251 = scmp.le.s32.totalorder 1, %s25
      %p252 = scmp.lt.s32.totalorder %s25, 5
      %p253 = pnand %p251, %p252
      %p254 = pneg %p253
      // Predicated region
      $region9: #{tpu_custom_call.1} parent=5 // pred_check
        _
      $region10: #{tpu_custom_call.1} parent=5 // pred_check_branch
        %256 = sbr.rel (%p253) target = $region12
      $region11: #{tpu_custom_call.1} parent=5 // pred_region
        %s257 = ssub.s32 %s25, 1
        // Predicated region
        $region13: #{tpu_custom_call.1} parent=11 // pred_check
          %p258 = pneg %p110
        $region14: #{tpu_custom_call.1} parent=11 // pred_check_branch
          %260 = sbr.rel (%p258) target = $region16
        $region15: #{tpu_custom_call.1} parent=11 // pred_region
          _
        $region16: #{tpu_custom_call.1} parent=11 // pred_fallthru
          _
        // Predicated region
        $region17: #{tpu_custom_call.1} parent=11 // pred_check
          %p261 = pneg %p131
        $region18: #{tpu_custom_call.1} parent=11 // pred_check_branch
          %263 = sbr.rel (%p261) target = $region20
        $region19: #{tpu_custom_call.1} parent=11 // pred_region
          %s265 = ssub.s32 12288, 12288
          %266 = vsyncadd [#allocation9], %s265
          %s267 = sshll.u32 [#allocation10], 4
          %s268 = int_to_ptr.vmem [resolvable:$true] %s267
          %273 = dma.hbm_to_vmem [thread:$0]  %s3, 12288, %s268, [#allocation9], 384, 384, 24
        $region20: #{tpu_custom_call.1} parent=11 // pred_fallthru
          _
        // Predicated region
        $region21: #{tpu_custom_call.1} parent=11 // pred_check
          %p274 = pneg %p152
        $region22: #{tpu_custom_call.1} parent=11 // pred_check_branch
          %276 = sbr.rel (%p274) target = $region24
        $region23: #{tpu_custom_call.1} parent=11 // pred_region
          %s278 = ssub.s32 4096, 4096
          %279 = vsyncadd [#allocation12], %s278
          %s280 = sshll.u32 [#allocation11], 4
          %s281 = int_to_ptr.vmem [resolvable:$true] %s280
          %286 = dma.hbm_to_vmem [thread:$0]  %s4, 4096, %s281, [#allocation12], 128, 128, 8
        $region24: #{tpu_custom_call.1} parent=11 // pred_fallthru
          _
        // Predicated region
        $region25: #{tpu_custom_call.1} parent=11 // pred_check
          %p287 = pneg %p173
        $region26: #{tpu_custom_call.1} parent=11 // pred_check_branch
          %289 = sbr.rel (%p287) target = $region28
        $region27: #{tpu_custom_call.1} parent=11 // pred_region
          _
        $region28: #{tpu_custom_call.1} parent=11 // pred_fallthru
          _
        // Predicated region
        $region29: #{tpu_custom_call.1} parent=11 // pred_check
          %p290 = pneg %p194
        $region30: #{tpu_custom_call.1} parent=11 // pred_check_branch
          %292 = sbr.rel (%p290) target = $region32
        $region31: #{tpu_custom_call.1} parent=11 // pred_region
          %s294 = ssub.s32 16384, 16384
          %295 = vsyncadd [#allocation12], %s294
          %s296 = sshll.u32 [#allocation13], 4
          %s297 = int_to_ptr.vmem [resolvable:$true] %s296
          %302 = dma.hbm_to_vmem [thread:$0]  %s6, 16384, %s297, [#allocation12], 512, 512, 32
        $region32: #{tpu_custom_call.1} parent=11 // pred_fallthru
          _
        // Predicated region
        $region33: #{tpu_custom_call.1} parent=11 // pred_check
          %p303 = pneg %p215
        $region34: #{tpu_custom_call.1} parent=11 // pred_check_branch
          %305 = sbr.rel (%p303) target = $region36
        $region35: #{tpu_custom_call.1} parent=11 // pred_region
          %s307 = ssub.s32 8192, 8192
          %308 = vsyncadd [#allocation15], %s307
          %s309 = sshll.u32 [#allocation14], 4
          %s310 = int_to_ptr.vmem [resolvable:$true] %s309
          %315 = dma.hbm_to_vmem [thread:$0]  %s7, 8192, %s310, [#allocation15], 128, 128, 8
        $region36: #{tpu_custom_call.1} parent=11 // pred_fallthru
          _
      $region12: #{tpu_custom_call.1} parent=5 // pred_fallthru
        _
      %p316 = scmp.lt.s32.totalorder %s25, 4
      // Predicated region
      $region37: #{tpu_custom_call.1} parent=5 // pred_check
        %p317 = pneg %p316
      $region38: #{tpu_custom_call.1} parent=5 // pred_check_branch
        %319 = sbr.rel (%p317) target = $region40
      $region39: #{tpu_custom_call.1} parent=5 // pred_region
        // Predicated region
        $region41: #{tpu_custom_call.1} parent=39 // pred_check
          %p320 = pneg %p57
        $region42: #{tpu_custom_call.1} parent=39 // pred_check_branch
          %322 = sbr.rel (%p320) target = $region44
        $region43: #{tpu_custom_call.1} parent=39 // pred_region
          %s323 = sand.u32 %s47, 1
          %s324 = scalar_lea.sflag [#allocation6], %s323
          %s325 = sand.u32 %s47, 1
          %s326 = smul.addr %s325, 512
          %s327 = scalar_lea.vmem [#allocation5], %s326
          %s329 = ssub.s32 8192, 8192
          %330 = vsyncadd %s324, %s329
          %s331 = smul.addr %s32, 64
          %s332 = smul.addr %s331, 128
          %s333 = scalar_lea.hbm %s0, %s332
          %s334 = sshll.u32 %s327, 4
          %s335 = int_to_ptr.vmem [resolvable:$true] %s334
          %340 = dma.hbm_to_vmem [thread:$0]  %s333, 8192, %s335, %s324, 256, 256, 16
        $region44: #{tpu_custom_call.1} parent=39 // pred_fallthru
          _
        // Predicated region
        $region45: #{tpu_custom_call.1} parent=39 // pred_check
          %p341 = pneg %p83
        $region46: #{tpu_custom_call.1} parent=39 // pred_check_branch
          %343 = sbr.rel (%p341) target = $region48
        $region47: #{tpu_custom_call.1} parent=39 // pred_region
          #allocation18 [shape = 'u32[6]{0}', space=smem, size = 0x18, scoped, tag = 'DMA stride descriptor']
          %s344 = sand.u32 %s25, 1
          %s345 = scalar_lea.sflag [#allocation9], %s344
          %s346 = sand.u32 %s73, 1
          %s347 = smul.addr %s346, 1024
          %s348 = scalar_lea.vmem [#allocation8], %s347
          %s349 = smul.u32 16, %s33
          %s351 = ssub.s32 16384, 16384
          %352 = vsyncadd %s345, %s351
          %s353 = smul.addr %s349, 2
          %s354 = smul.addr %s353, 128
          %s355 = scalar_lea.hbm %s1, %s354
          %s357 = sshll.u32 1, 14
          %s358 = sxor.u32 4294967295, %s357
          %s360 = sld [smem:[#allocation0]]
          %s361 = sadd.s32 2, %s360
          %s363 = sshll.u32 7, 26
          %s364 = sxor.u32 4294967295, %s363
          %s365 = sand.u32 0, %s364
          %s366 = sshll.u32 %s361, 26
          %s367 = sor.u32 %s365, %s366
          %s368 = sshll.u32 %s348, 4
          %s369 = int_to_ptr.vmem [resolvable:$true] %s368
          %375 = sst [smem:[#allocation18]] 8192
          %s376 = scalar_lea.smem [#allocation18], 1
          %377 = sst [smem:[%s376]] 4096
          %s378 = scalar_lea.smem [#allocation18], 2
          %379 = sst [smem:[%s378]] 16
          %s380 = scalar_lea.smem [#allocation18], 3
          %381 = sst [smem:[%s380]] 256
          %s382 = scalar_lea.smem [#allocation18], 4
          %383 = sst [smem:[%s382]] 256
          %s384 = scalar_lea.smem [#allocation18], 5
          %385 = sst [smem:[%s384]] 16
          %387 = dma.general %s355, 16384, %s369, %s345, [#allocation17], [#allocation18], %s367, 0
        $region48: #{tpu_custom_call.1} parent=39 // pred_fallthru
          _
      $region40: #{tpu_custom_call.1} parent=5 // pred_fallthru
        _
      %p388 = scmp.le.s32.totalorder 1, %s25
      %p389 = scmp.lt.s32.totalorder %s25, 5
      %p390 = pnand %p388, %p389
      %p391 = pneg %p390
      // Predicated region
      $region49: #{tpu_custom_call.1} parent=5 // pred_check
        _
      $region50: #{tpu_custom_call.1} parent=5 // pred_check_branch
        %393 = sbr.rel (%p390) target = $region52
      $region51: #{tpu_custom_call.1} parent=5 // pred_region
        %s394 = ssub.s32 %s25, 1
        %s395 = sand.u32 %s50, 1
        %s396 = scalar_lea.sflag [#allocation6], %s395
        %s397 = sand.u32 %s50, 1
        %s398 = smul.addr %s397, 512
        %s399 = scalar_lea.vmem [#allocation5], %s398
        // Predicated region
        $region53: #{tpu_custom_call.1} parent=51 // pred_check
          %p400 = pneg %p63
        $region54: #{tpu_custom_call.1} parent=51 // pred_check_branch
          %402 = sbr.rel (%p400) target = $region56
        $region55: #{tpu_custom_call.1} parent=51 // pred_region
          %403 = dma.done %s396, 8192
        $region56: #{tpu_custom_call.1} parent=51 // pred_fallthru
          _
        %s404 = sand.u32 %s30, 1
        %s405 = scalar_lea.sflag [#allocation9], %s404
        %s406 = sand.u32 %s76, 1
        %s407 = smul.addr %s406, 1024
        %s408 = scalar_lea.vmem [#allocation8], %s407
        // Predicated region
        $region57: #{tpu_custom_call.1} parent=51 // pred_check
          %p409 = pneg %p89
        $region58: #{tpu_custom_call.1} parent=51 // pred_check_branch
          %411 = sbr.rel (%p409) target = $region60
        $region59: #{tpu_custom_call.1} parent=51 // pred_region
          %412 = dma.done %s405, 16384
        $region60: #{tpu_custom_call.1} parent=51 // pred_fallthru
          _
        // Predicated region
        $region61: #{tpu_custom_call.1} parent=51 // pred_check
          %p413 = pneg %p131
        $region62: #{tpu_custom_call.1} parent=51 // pred_check_branch
          %415 = sbr.rel (%p413) target = $region64
        $region63: #{tpu_custom_call.1} parent=51 // pred_region
          %416 = dma.done [#allocation9], 12288
        $region64: #{tpu_custom_call.1} parent=51 // pred_fallthru
          _
        // Predicated region
        $region65: #{tpu_custom_call.1} parent=51 // pred_check
          %p417 = pneg %p152
        $region66: #{tpu_custom_call.1} parent=51 // pred_check_branch
          %419 = sbr.rel (%p417) target = $region68
        $region67: #{tpu_custom_call.1} parent=51 // pred_region
          %420 = dma.done [#allocation12], 4096
        $region68: #{tpu_custom_call.1} parent=51 // pred_fallthru
          _
        // Predicated region
        $region69: #{tpu_custom_call.1} parent=51 // pred_check
          %p421 = pneg %p194
        $region70: #{tpu_custom_call.1} parent=51 // pred_check_branch
          %423 = sbr.rel (%p421) target = $region72
        $region71: #{tpu_custom_call.1} parent=51 // pred_region
          %424 = dma.done [#allocation12], 16384
        $region72: #{tpu_custom_call.1} parent=51 // pred_fallthru
          _
        // Predicated region
        $region73: #{tpu_custom_call.1} parent=51 // pred_check
          %p425 = pneg %p215
        $region74: #{tpu_custom_call.1} parent=51 // pred_check_branch
          %427 = sbr.rel (%p425) target = $region76
        $region75: #{tpu_custom_call.1} parent=51 // pred_region
          %428 = dma.done [#allocation15], 8192
        $region76: #{tpu_custom_call.1} parent=51 // pred_fallthru
          _
        %s429 = sand.u32 %s50, 1
        %s430 = scalar_lea.sflag [#allocation6], %s429
        %s431 = sand.u32 %s50, 1
        %s432 = smul.addr %s431, 512
        %s433 = scalar_lea.vmem [#allocation5], %s432
        %p434 = pneg %p63
        %p435 = pneg %p60
        %s436 = sand.u32 %s30, 1
        %s437 = scalar_lea.sflag [#allocation9], %s436
        %s438 = sand.u32 %s76, 1
        %s439 = smul.addr %s438, 1024
        %s440 = scalar_lea.vmem [#allocation8], %s439
        %p441 = pneg %p89
        %p442 = pneg %p86
        %p443 = pneg %p110
        %p444 = pneg %p107
        %p445 = pneg %p131
        %p446 = pneg %p128
        %p447 = pneg %p152
        %p448 = pneg %p149
        %p449 = pneg %p173
        %p450 = pneg %p170
        %p451 = pneg %p194
        %p452 = pneg %p191
        %p453 = pneg %p215
        %p454 = pneg %p212
        %p455 = pneg %p243
        %p456 = pneg %p240
        %s457 = sand.u32 %s230, 1
        %s458 = scalar_lea.sflag [#allocation7], %s457
        %s459 = sand.u32 %s230, 1
        %s460 = smul.addr %s459, 256
        %s461 = scalar_lea.vmem [#allocation16], %s460
        %s462 = smul.u32 16, %s35
        %s463 = smul.u32 16, %s35
        %p465 = scmp.eq.s32.totalorder %s35, 0
        // Predicated region
        $region77: #{tpu_custom_call.1} parent=51 // pred_check
          %p466 = pneg %p465
        $region78: #{tpu_custom_call.1} parent=51 // pred_check_branch
          %468 = sbr.rel (%p466) target = $region80
        $region79: #{tpu_custom_call.1} parent=51 // pred_region
          %v469 = vld [vmem:[%s399] sm:$0xff]
          %v470 = vld [vmem:[%s399 + $0x8] sm:$0xff]
          %v471 = vld [vmem:[%s399 + $0x10] sm:$0xff]
          %v472 = vld [vmem:[%s399 + $0x18] sm:$0xff]
          %v473 = vld [vmem:[%s399 + $0x20] sm:$0xff]
          %v474 = vld [vmem:[%s399 + $0x28] sm:$0xff]
          %v475 = vld [vmem:[%s399 + $0x30] sm:$0xff]
          %v476 = vld [vmem:[%s399 + $0x38] sm:$0xff]
          %v477 = vld [vmem:[%s399 + $0x40] sm:$0xff]
          %v478 = vld [vmem:[%s399 + $0x48] sm:$0xff]
          %v479 = vld [vmem:[%s399 + $0x50] sm:$0xff]
          %v480 = vld [vmem:[%s399 + $0x58] sm:$0xff]
          %v481 = vld [vmem:[%s399 + $0x60] sm:$0xff]
          %v482 = vld [vmem:[%s399 + $0x68] sm:$0xff]
          %v483 = vld [vmem:[%s399 + $0x70] sm:$0xff]
          %v484 = vld [vmem:[%s399 + $0x78] sm:$0xff]
          %v485 = vld [vmem:[%s399 + $0x80] sm:$0xff]
          %v486 = vld [vmem:[%s399 + $0x88] sm:$0xff]
          %v487 = vld [vmem:[%s399 + $0x90] sm:$0xff]
          %v488 = vld [vmem:[%s399 + $0x98] sm:$0xff]
          %v489 = vld [vmem:[%s399 + $0xa0] sm:$0xff]
          %v490 = vld [vmem:[%s399 + $0xa8] sm:$0xff]
          %v491 = vld [vmem:[%s399 + $0xb0] sm:$0xff]
          %v492 = vld [vmem:[%s399 + $0xb8] sm:$0xff]
          %v493 = vld [vmem:[%s399 + $0xc0] sm:$0xff]
          %v494 = vld [vmem:[%s399 + $0xc8] sm:$0xff]
          %v495 = vld [vmem:[%s399 + $0xd0] sm:$0xff]
          %v496 = vld [vmem:[%s399 + $0xd8] sm:$0xff]
          %v497 = vld [vmem:[%s399 + $0xe0] sm:$0xff]
          %v498 = vld [vmem:[%s399 + $0xe8] sm:$0xff]
          %v499 = vld [vmem:[%s399 + $0xf0] sm:$0xff]
          %v500 = vld [vmem:[%s399 + $0xf8] sm:$0xff]
          %v501 = vld [vmem:[%s399 + $0x100] sm:$0xff]
          %v502 = vld [vmem:[%s399 + $0x108] sm:$0xff]
          %v503 = vld [vmem:[%s399 + $0x110] sm:$0xff]
          %v504 = vld [vmem:[%s399 + $0x118] sm:$0xff]
          %v505 = vld [vmem:[%s399 + $0x120] sm:$0xff]
          %v506 = vld [vmem:[%s399 + $0x128] sm:$0xff]
          %v507 = vld [vmem:[%s399 + $0x130] sm:$0xff]
          %v508 = vld [vmem:[%s399 + $0x138] sm:$0xff]
          %v509 = vld [vmem:[%s399 + $0x140] sm:$0xff]
          %v510 = vld [vmem:[%s399 + $0x148] sm:$0xff]
          %v511 = vld [vmem:[%s399 + $0x150] sm:$0xff]
          %v512 = vld [vmem:[%s399 + $0x158] sm:$0xff]
          %v513 = vld [vmem:[%s399 + $0x160] sm:$0xff]
          %v514 = vld [vmem:[%s399 + $0x168] sm:$0xff]
          %v515 = vld [vmem:[%s399 + $0x170] sm:$0xff]
          %v516 = vld [vmem:[%s399 + $0x178] sm:$0xff]
          %v517 = vld [vmem:[%s399 + $0x180] sm:$0xff]
          %v518 = vld [vmem:[%s399 + $0x188] sm:$0xff]
          %v519 = vld [vmem:[%s399 + $0x190] sm:$0xff]
          %v520 = vld [vmem:[%s399 + $0x198] sm:$0xff]
          %v521 = vld [vmem:[%s399 + $0x1a0] sm:$0xff]
          %v522 = vld [vmem:[%s399 + $0x1a8] sm:$0xff]
          %v523 = vld [vmem:[%s399 + $0x1b0] sm:$0xff]
          %v524 = vld [vmem:[%s399 + $0x1b8] sm:$0xff]
          %v525 = vld [vmem:[%s399 + $0x1c0] sm:$0xff]
          %v526 = vld [vmem:[%s399 + $0x1c8] sm:$0xff]
          %v527 = vld [vmem:[%s399 + $0x1d0] sm:$0xff]
          %v528 = vld [vmem:[%s399 + $0x1d8] sm:$0xff]
          %v529 = vld [vmem:[%s399 + $0x1e0] sm:$0xff]
          %v530 = vld [vmem:[%s399 + $0x1e8] sm:$0xff]
          %v531 = vld [vmem:[%s399 + $0x1f0] sm:$0xff]
          %v532 = vld [vmem:[%s399 + $0x1f8] sm:$0xff]
          %v533 = vld [vmem:[%s2] sm:$0x3]
          %v534 = vmul.f32 %v469, %v469
          %v535 = vmul.f32 %v470, %v470
          %v536 = vmul.f32 %v471, %v471
          %v537 = vmul.f32 %v472, %v472
          %v538 = vmul.f32 %v473, %v473
          %v539 = vmul.f32 %v474, %v474
          %v540 = vmul.f32 %v475, %v475
          %v541 = vmul.f32 %v476, %v476
          %v542 = vmul.f32 %v477, %v477
          %v543 = vmul.f32 %v478, %v478
          %v544 = vmul.f32 %v479, %v479
          %v545 = vmul.f32 %v480, %v480
          %v546 = vmul.f32 %v481, %v481
          %v547 = vmul.f32 %v482, %v482
          %v548 = vmul.f32 %v483, %v483
          %v549 = vmul.f32 %v484, %v484
          %v550 = vmul.f32 %v485, %v485
          %v551 = vmul.f32 %v486, %v486
          %v552 = vmul.f32 %v487, %v487
          %v553 = vmul.f32 %v488, %v488
          %v554 = vmul.f32 %v489, %v489
          %v555 = vmul.f32 %v490, %v490
          %v556 = vmul.f32 %v491, %v491
          %v557 = vmul.f32 %v492, %v492
          %v558 = vmul.f32 %v493, %v493
          %v559 = vmul.f32 %v494, %v494
          %v560 = vmul.f32 %v495, %v495
          %v561 = vmul.f32 %v496, %v496
          %v562 = vmul.f32 %v497, %v497
          %v563 = vmul.f32 %v498, %v498
          %v564 = vmul.f32 %v499, %v499
          %v565 = vmul.f32 %v500, %v500
          %v566 = vmul.f32 %v501, %v501
          %v567 = vmul.f32 %v502, %v502
          %v568 = vmul.f32 %v503, %v503
          %v569 = vmul.f32 %v504, %v504
          %v570 = vmul.f32 %v505, %v505
          %v571 = vmul.f32 %v506, %v506
          %v572 = vmul.f32 %v507, %v507
          %v573 = vmul.f32 %v508, %v508
          %v574 = vmul.f32 %v509, %v509
          %v575 = vmul.f32 %v510, %v510
          %v576 = vmul.f32 %v511, %v511
          %v577 = vmul.f32 %v512, %v512
          %v578 = vmul.f32 %v513, %v513
          %v579 = vmul.f32 %v514, %v514
          %v580 = vmul.f32 %v515, %v515
          %v581 = vmul.f32 %v516, %v516
          %v582 = vmul.f32 %v517, %v517
          %v583 = vmul.f32 %v518, %v518
          %v584 = vmul.f32 %v519, %v519
          %v585 = vmul.f32 %v520, %v520
          %v586 = vmul.f32 %v521, %v521
          %v587 = vmul.f32 %v522, %v522
          %v588 = vmul.f32 %v523, %v523
          %v589 = vmul.f32 %v524, %v524
          %v590 = vmul.f32 %v525, %v525
          %v591 = vmul.f32 %v526, %v526
          %v592 = vmul.f32 %v527, %v527
          %v593 = vmul.f32 %v528, %v528
          %v594 = vmul.f32 %v529, %v529
          %v595 = vmul.f32 %v530, %v530
          %v596 = vmul.f32 %v531, %v531
          %v597 = vmul.f32 %v532, %v532
          %v598 = vadd.f32 %v534, %v535
          %599 = vadd.xlane.f32.xlu0 %v598
          %v600 = vpop.xlane.xlu0 %599
          %v601 = vadd.f32 %v536, %v537
          %602 = vadd.xlane.f32.xlu0 %v601
          %v603 = vpop.xlane.xlu0 %602
          %v604 = vadd.f32 %v538, %v539
          %605 = vadd.xlane.f32.xlu0 %v604
          %v606 = vpop.xlane.xlu0 %605
          %v607 = vadd.f32 %v540, %v541
          %608 = vadd.xlane.f32.xlu0 %v607
          %v609 = vpop.xlane.xlu0 %608
          %v610 = vadd.f32 %v542, %v543
          %611 = vadd.xlane.f32.xlu0 %v610
          %v612 = vpop.xlane.xlu0 %611
          %v613 = vadd.f32 %v544, %v545
          %614 = vadd.xlane.f32.xlu0 %v613
          %v615 = vpop.xlane.xlu0 %614
          %v616 = vadd.f32 %v546, %v547
          %617 = vadd.xlane.f32.xlu0 %v616
          %v618 = vpop.xlane.xlu0 %617
          %v619 = vadd.f32 %v548, %v549
          %620 = vadd.xlane.f32.xlu0 %v619
          %v621 = vpop.xlane.xlu0 %620
          %v622 = vadd.f32 %v550, %v551
          %623 = vadd.xlane.f32.xlu0 %v622
          %v624 = vpop.xlane.xlu0 %623
          %v625 = vadd.f32 %v552, %v553
          %626 = vadd.xlane.f32.xlu0 %v625
          %v627 = vpop.xlane.xlu0 %626
          %v628 = vadd.f32 %v554, %v555
          %629 = vadd.xlane.f32.xlu0 %v628
          %v630 = vpop.xlane.xlu0 %629
          %v631 = vadd.f32 %v556, %v557
          %632 = vadd.xlane.f32.xlu0 %v631
          %v633 = vpop.xlane.xlu0 %632
          %v634 = vadd.f32 %v558, %v559
          %635 = vadd.xlane.f32.xlu0 %v634
          %v636 = vpop.xlane.xlu0 %635
          %v637 = vadd.f32 %v560, %v561
          %638 = vadd.xlane.f32.xlu0 %v637
          %v639 = vpop.xlane.xlu0 %638
          %v640 = vadd.f32 %v562, %v563
          %641 = vadd.xlane.f32.xlu0 %v640
          %v642 = vpop.xlane.xlu0 %641
          %v643 = vadd.f32 %v564, %v565
          %644 = vadd.xlane.f32.xlu0 %v643
          %v645 = vpop.xlane.xlu0 %644
          %v646 = vadd.f32 %v566, %v567
          %647 = vadd.xlane.f32.xlu0 %v646
          %v648 = vpop.xlane.xlu0 %647
          %v649 = vadd.f32 %v568, %v569
          %650 = vadd.xlane.f32.xlu0 %v649
          %v651 = vpop.xlane.xlu0 %650
          %v652 = vadd.f32 %v570, %v571
          %653 = vadd.xlane.f32.xlu0 %v652
          %v654 = vpop.xlane.xlu0 %653
          %v655 = vadd.f32 %v572, %v573
          %656 = vadd.xlane.f32.xlu0 %v655
          %v657 = vpop.xlane.xlu0 %656
          %v658 = vadd.f32 %v574, %v575
          %659 = vadd.xlane.f32.xlu0 %v658
          %v660 = vpop.xlane.xlu0 %659
          %v661 = vadd.f32 %v576, %v577
          %662 = vadd.xlane.f32.xlu0 %v661
          %v663 = vpop.xlane.xlu0 %662
          %v664 = vadd.f32 %v578, %v579
          %665 = vadd.xlane.f32.xlu0 %v664
          %v666 = vpop.xlane.xlu0 %665
          %v667 = vadd.f32 %v580, %v581
          %668 = vadd.xlane.f32.xlu0 %v667
          %v669 = vpop.xlane.xlu0 %668
          %v670 = vadd.f32 %v582, %v583
          %671 = vadd.xlane.f32.xlu0 %v670
          %v672 = vpop.xlane.xlu0 %671
          %v673 = vadd.f32 %v584, %v585
          %674 = vadd.xlane.f32.xlu0 %v673
          %v675 = vpop.xlane.xlu0 %674
          %v676 = vadd.f32 %v586, %v587
          %677 = vadd.xlane.f32.xlu0 %v676
          %v678 = vpop.xlane.xlu0 %677
          %v679 = vadd.f32 %v588, %v589
          %680 = vadd.xlane.f32.xlu0 %v679
          %v681 = vpop.xlane.xlu0 %680
          %v682 = vadd.f32 %v590, %v591
          %683 = vadd.xlane.f32.xlu0 %v682
          %v684 = vpop.xlane.xlu0 %683
          %v685 = vadd.f32 %v592, %v593
          %686 = vadd.xlane.f32.xlu0 %v685
          %v687 = vpop.xlane.xlu0 %686
          %v688 = vadd.f32 %v594, %v595
          %689 = vadd.xlane.f32.xlu0 %v688
          %v690 = vpop.xlane.xlu0 %689
          %v691 = vadd.f32 %v596, %v597
          %692 = vadd.xlane.f32.xlu0 %v691
          %v693 = vpop.xlane.xlu0 %692
          %v694 = vrcp.pop 256.0
          %v695 = vmul.f32 %v600, %v694
          %v696 = vmul.f32 %v603, %v694
          %v697 = vmul.f32 %v606, %v694
          %v698 = vmul.f32 %v609, %v694
          %v699 = vmul.f32 %v612, %v694
          %v700 = vmul.f32 %v615, %v694
          %v701 = vmul.f32 %v618, %v694
          %v702 = vmul.f32 %v621, %v694
          %v703 = vmul.f32 %v624, %v694
          %v704 = vmul.f32 %v627, %v694
          %v705 = vmul.f32 %v630, %v694
          %v706 = vmul.f32 %v633, %v694
          %v707 = vmul.f32 %v636, %v694
          %v708 = vmul.f32 %v639, %v694
          %v709 = vmul.f32 %v642, %v694
          %v710 = vmul.f32 %v645, %v694
          %v711 = vmul.f32 %v648, %v694
          %v712 = vmul.f32 %v651, %v694
          %v713 = vmul.f32 %v654, %v694
          %v714 = vmul.f32 %v657, %v694
          %v715 = vmul.f32 %v660, %v694
          %v716 = vmul.f32 %v663, %v694
          %v717 = vmul.f32 %v666, %v694
          %v718 = vmul.f32 %v669, %v694
          %v719 = vmul.f32 %v672, %v694
          %v720 = vmul.f32 %v675, %v694
          %v721 = vmul.f32 %v678, %v694
          %v722 = vmul.f32 %v681, %v694
          %v723 = vmul.f32 %v684, %v694
          %v724 = vmul.f32 %v687, %v694
          %v725 = vmul.f32 %v690, %v694
          %v726 = vmul.f32 %v693, %v694
          %v727 = vadd.f32 %v695, 1e-06
          %v728 = vadd.f32 %v696, 1e-06
          %v729 = vadd.f32 %v697, 1e-06
          %v730 = vadd.f32 %v698, 1e-06
          %v731 = vadd.f32 %v699, 1e-06
          %v732 = vadd.f32 %v700, 1e-06
          %v733 = vadd.f32 %v701, 1e-06
          %v734 = vadd.f32 %v702, 1e-06
          %v735 = vadd.f32 %v703, 1e-06
          %v736 = vadd.f32 %v704, 1e-06
          %v737 = vadd.f32 %v705, 1e-06
          %v738 = vadd.f32 %v706, 1e-06
          %v739 = vadd.f32 %v707, 1e-06
          %v740 = vadd.f32 %v708, 1e-06
          %v741 = vadd.f32 %v709, 1e-06
          %v742 = vadd.f32 %v710, 1e-06
          %v743 = vadd.f32 %v711, 1e-06
          %v744 = vadd.f32 %v712, 1e-06
          %v745 = vadd.f32 %v713, 1e-06
          %v746 = vadd.f32 %v714, 1e-06
          %v747 = vadd.f32 %v715, 1e-06
          %v748 = vadd.f32 %v716, 1e-06
          %v749 = vadd.f32 %v717, 1e-06
          %v750 = vadd.f32 %v718, 1e-06
          %v751 = vadd.f32 %v719, 1e-06
          %v752 = vadd.f32 %v720, 1e-06
          %v753 = vadd.f32 %v721, 1e-06
          %v754 = vadd.f32 %v722, 1e-06
          %v755 = vadd.f32 %v723, 1e-06
          %v756 = vadd.f32 %v724, 1e-06
          %v757 = vadd.f32 %v725, 1e-06
          %v758 = vadd.f32 %v726, 1e-06
          %v759 = vrsqrt.pop %v727
          %v760 = vrsqrt.pop %v728
          %v761 = vrsqrt.pop %v729
          %v762 = vrsqrt.pop %v730
          %v763 = vrsqrt.pop %v731
          %v764 = vrsqrt.pop %v732
          %v765 = vrsqrt.pop %v733
          %v766 = vrsqrt.pop %v734
          %v767 = vrsqrt.pop %v735
          %v768 = vrsqrt.pop %v736
          %v769 = vrsqrt.pop %v737
          %v770 = vrsqrt.pop %v738
          %v771 = vrsqrt.pop %v739
          %v772 = vrsqrt.pop %v740
          %v773 = vrsqrt.pop %v741
          %v774 = vrsqrt.pop %v742
          %v775 = vrsqrt.pop %v743
          %v776 = vrsqrt.pop %v744
          %v777 = vrsqrt.pop %v745
          %v778 = vrsqrt.pop %v746
          %v779 = vrsqrt.pop %v747
          %v780 = vrsqrt.pop %v748
          %v781 = vrsqrt.pop %v749
          %v782 = vrsqrt.pop %v750
          %v783 = vrsqrt.pop %v751
          %v784 = vrsqrt.pop %v752
          %v785 = vrsqrt.pop %v753
          %v786 = vrsqrt.pop %v754
          %v787 = vrsqrt.pop %v755
          %v788 = vrsqrt.pop %v756
          %v789 = vrsqrt.pop %v757
          %v790 = vrsqrt.pop %v758
          %v791 = vmul.f32 %v469, %v759
          %v792 = vmul.f32 %v470, %v759
          %v793 = vmul.f32 %v471, %v760
          %v794 = vmul.f32 %v472, %v760
          %v795 = vmul.f32 %v473, %v761
          %v796 = vmul.f32 %v474, %v761
          %v797 = vmul.f32 %v475, %v762
          %v798 = vmul.f32 %v476, %v762
          %v799 = vmul.f32 %v477, %v763
          %v800 = vmul.f32 %v478, %v763
          %v801 = vmul.f32 %v479, %v764
          %v802 = vmul.f32 %v480, %v764
          %v803 = vmul.f32 %v481, %v765
          %v804 = vmul.f32 %v482, %v765
          %v805 = vmul.f32 %v483, %v766
          %v806 = vmul.f32 %v484, %v766
          %v807 = vmul.f32 %v485, %v767
          %v808 = vmul.f32 %v486, %v767
          %v809 = vmul.f32 %v487, %v768
          %v810 = vmul.f32 %v488, %v768
          %v811 = vmul.f32 %v489, %v769
          %v812 = vmul.f32 %v490, %v769
          %v813 = vmul.f32 %v491, %v770
          %v814 = vmul.f32 %v492, %v770
          %v815 = vmul.f32 %v493, %v771
          %v816 = vmul.f32 %v494, %v771
          %v817 = vmul.f32 %v495, %v772
          %v818 = vmul.f32 %v496, %v772
          %v819 = vmul.f32 %v497, %v773
          %v820 = vmul.f32 %v498, %v773
          %v821 = vmul.f32 %v499, %v774
          %v822 = vmul.f32 %v500, %v774
          %v823 = vmul.f32 %v501, %v775
          %v824 = vmul.f32 %v502, %v775
          %v825 = vmul.f32 %v503, %v776
          %v826 = vmul.f32 %v504, %v776
          %v827 = vmul.f32 %v505, %v777
          %v828 = vmul.f32 %v506, %v777
          %v829 = vmul.f32 %v507, %v778
          %v830 = vmul.f32 %v508, %v778
          %v831 = vmul.f32 %v509, %v779
          %v832 = vmul.f32 %v510, %v779
          %v833 = vmul.f32 %v511, %v780
          %v834 = vmul.f32 %v512, %v780
          %v835 = vmul.f32 %v513, %v781
          %v836 = vmul.f32 %v514, %v781
          %v837 = vmul.f32 %v515, %v782
          %v838 = vmul.f32 %v516, %v782
          %v839 = vmul.f32 %v517, %v783
          %v840 = vmul.f32 %v518, %v783
          %v841 = vmul.f32 %v519, %v784
          %v842 = vmul.f32 %v520, %v784
          %v843 = vmul.f32 %v521, %v785
          %v844 = vmul.f32 %v522, %v785
          %v845 = vmul.f32 %v523, %v786
          %v846 = vmul.f32 %v524, %v786
          %v847 = vmul.f32 %v525, %v787
          %v848 = vmul.f32 %v526, %v787
          %v849 = vmul.f32 %v527, %v788
          %v850 = vmul.f32 %v528, %v788
          %v851 = vmul.f32 %v529, %v789
          %v852 = vmul.f32 %v530, %v789
          %v853 = vmul.f32 %v531, %v790
          %v854 = vmul.f32 %v532, %v790
          %v856 = vlaneseq
          %v857 = vshrl.u32 %v856, 7
          %v858 = vsub.s32 0, %v857
          %v859 = vrot.slane %v533, %v858
          %v860 = vlaneseq
          %v861 = vshrl.u32 %v860, 7
          %v862 = vsub.s32 1, %v861
          %v863 = vrot.slane %v533, %v862
          %v866 = vmul.f32 %v791, %v859
          %v867 = vmul.f32 %v792, %v863
          %v868 = vmul.f32 %v793, %v859
          %v869 = vmul.f32 %v794, %v863
          %v870 = vmul.f32 %v795, %v859
          %v871 = vmul.f32 %v796, %v863
          %v872 = vmul.f32 %v797, %v859
          %v873 = vmul.f32 %v798, %v863
          %v874 = vmul.f32 %v799, %v859
          %v875 = vmul.f32 %v800, %v863
          %v876 = vmul.f32 %v801, %v859
          %v877 = vmul.f32 %v802, %v863
          %v878 = vmul.f32 %v803, %v859
          %v879 = vmul.f32 %v804, %v863
          %v880 = vmul.f32 %v805, %v859
          %v881 = vmul.f32 %v806, %v863
          %v882 = vmul.f32 %v807, %v859
          %v883 = vmul.f32 %v808, %v863
          %v884 = vmul.f32 %v809, %v859
          %v885 = vmul.f32 %v810, %v863
          %v886 = vmul.f32 %v811, %v859
          %v887 = vmul.f32 %v812, %v863
          %v888 = vmul.f32 %v813, %v859
          %v889 = vmul.f32 %v814, %v863
          %v890 = vmul.f32 %v815, %v859
          %v891 = vmul.f32 %v816, %v863
          %v892 = vmul.f32 %v817, %v859
          %v893 = vmul.f32 %v818, %v863
          %v894 = vmul.f32 %v819, %v859
          %v895 = vmul.f32 %v820, %v863
          %v896 = vmul.f32 %v821, %v859
          %v897 = vmul.f32 %v822, %v863
          %v898 = vmul.f32 %v823, %v859
          %v899 = vmul.f32 %v824, %v863
          %v900 = vmul.f32 %v825, %v859
          %v901 = vmul.f32 %v826, %v863
          %v902 = vmul.f32 %v827, %v859
          %v903 = vmul.f32 %v828, %v863
          %v904 = vmul.f32 %v829, %v859
          %v905 = vmul.f32 %v830, %v863
          %v906 = vmul.f32 %v831, %v859
          %v907 = vmul.f32 %v832, %v863
          %v908 = vmul.f32 %v833, %v859
          %v909 = vmul.f32 %v834, %v863
          %v910 = vmul.f32 %v835, %v859
          %v911 = vmul.f32 %v836, %v863
          %v912 = vmul.f32 %v837, %v859
          %v913 = vmul.f32 %v838, %v863
          %v914 = vmul.f32 %v839, %v859
          %v915 = vmul.f32 %v840, %v863
          %v916 = vmul.f32 %v841, %v859
          %v917 = vmul.f32 %v842, %v863
          %v918 = vmul.f32 %v843, %v859
          %v919 = vmul.f32 %v844, %v863
          %v920 = vmul.f32 %v845, %v859
          %v921 = vmul.f32 %v846, %v863
          %v922 = vmul.f32 %v847, %v859
          %v923 = vmul.f32 %v848, %v863
          %v924 = vmul.f32 %v849, %v859
          %v925 = vmul.f32 %v850, %v863
          %v926 = vmul.f32 %v851, %v859
          %v927 = vmul.f32 %v852, %v863
          %v928 = vmul.f32 %v853, %v859
          %v929 = vmul.f32 %v854, %v863
          %v930 = vpack.c.bf16 %v868, %v866
          %v931 = vpack.c.bf16 %v869, %v867
          %v932 = vpack.c.bf16 %v872, %v870
          %v933 = vpack.c.bf16 %v873, %v871
          %v934 = vpack.c.bf16 %v876, %v874
          %v935 = vpack.c.bf16 %v877, %v875
          %v936 = vpack.c.bf16 %v880, %v878
          %v937 = vpack.c.bf16 %v881, %v879
          %v938 = vpack.c.bf16 %v884, %v882
          %v939 = vpack.c.bf16 %v885, %v883
          %v940 = vpack.c.bf16 %v888, %v886
          %v941 = vpack.c.bf16 %v889, %v887
          %v942 = vpack.c.bf16 %v892, %v890
          %v943 = vpack.c.bf16 %v893, %v891
          %v944 = vpack.c.bf16 %v896, %v894
          %v945 = vpack.c.bf16 %v897, %v895
          %v946 = vpack.c.bf16 %v900, %v898
          %v947 = vpack.c.bf16 %v901, %v899
          %v948 = vpack.c.bf16 %v904, %v902
          %v949 = vpack.c.bf16 %v905, %v903
          %v950 = vpack.c.bf16 %v908, %v906
          %v951 = vpack.c.bf16 %v909, %v907
          %v952 = vpack.c.bf16 %v912, %v910
          %v953 = vpack.c.bf16 %v913, %v911
          %v954 = vpack.c.bf16 %v916, %v914
          %v955 = vpack.c.bf16 %v917, %v915
          %v956 = vpack.c.bf16 %v920, %v918
          %v957 = vpack.c.bf16 %v921, %v919
          %v958 = vpack.c.bf16 %v924, %v922
          %v959 = vpack.c.bf16 %v925, %v923
          %v960 = vpack.c.bf16 %v928, %v926
          %v961 = vpack.c.bf16 %v929, %v927
          %v962 = vld [vmem:[#allocation10] sm:$0xff]
          %v963 = vld [vmem:[#allocation10 + $0x8] sm:$0xff]
          %v964 = vld [vmem:[#allocation10 + $0x10] sm:$0xff]
          %v965 = vld [vmem:[#allocation10 + $0x18] sm:$0xff]
          %v966 = vld [vmem:[#allocation10 + $0x20] sm:$0xff]
          %v967 = vld [vmem:[#allocation10 + $0x28] sm:$0xff]
          %v968 = vld [vmem:[#allocation10 + $0x30] sm:$0xff]
          %v969 = vld [vmem:[#allocation10 + $0x38] sm:$0xff]
          %v970 = vld [vmem:[#allocation10 + $0x40] sm:$0xff]
          %v971 = vld [vmem:[#allocation10 + $0x48] sm:$0xff]
          %v972 = vld [vmem:[#allocation10 + $0x50] sm:$0xff]
          %v973 = vld [vmem:[#allocation10 + $0x58] sm:$0xff]
          %v974 = vld [vmem:[#allocation10 + $0x60] sm:$0xff]
          %v975 = vld [vmem:[#allocation10 + $0x68] sm:$0xff]
          %v976 = vld [vmem:[#allocation10 + $0x70] sm:$0xff]
          %v977 = vld [vmem:[#allocation10 + $0x78] sm:$0xff]
          %v978 = vld [vmem:[#allocation10 + $0x80] sm:$0xff]
          %v979 = vld [vmem:[#allocation10 + $0x88] sm:$0xff]
          %v980 = vld [vmem:[#allocation10 + $0x90] sm:$0xff]
          %v981 = vld [vmem:[#allocation10 + $0x98] sm:$0xff]
          %v982 = vld [vmem:[#allocation10 + $0xa0] sm:$0xff]
          %v983 = vld [vmem:[#allocation10 + $0xa8] sm:$0xff]
          %v984 = vld [vmem:[#allocation10 + $0xb0] sm:$0xff]
          %v985 = vld [vmem:[#allocation10 + $0xb8] sm:$0xff]
          %v986 = vld [vmem:[#allocation10 + $0xc0] sm:$0xff]
          %v987 = vld [vmem:[#allocation10 + $0xc8] sm:$0xff]
          %v988 = vld [vmem:[#allocation10 + $0xd0] sm:$0xff]
          %v989 = vld [vmem:[#allocation10 + $0xd8] sm:$0xff]
          %v990 = vld [vmem:[#allocation10 + $0xe0] sm:$0xff]
          %v991 = vld [vmem:[#allocation10 + $0xe8] sm:$0xff]
          %v992 = vld [vmem:[#allocation10 + $0xf0] sm:$0xff]
          %v993 = vld [vmem:[#allocation10 + $0xf8] sm:$0xff]
          %v994 = vld [vmem:[#allocation10 + $0x100] sm:$0xff]
          %v995 = vld [vmem:[#allocation10 + $0x108] sm:$0xff]
          %v996 = vld [vmem:[#allocation10 + $0x110] sm:$0xff]
          %v997 = vld [vmem:[#allocation10 + $0x118] sm:$0xff]
          %v998 = vld [vmem:[#allocation10 + $0x120] sm:$0xff]
          %v999 = vld [vmem:[#allocation10 + $0x128] sm:$0xff]
          %v1000 = vld [vmem:[#allocation10 + $0x130] sm:$0xff]
          %v1001 = vld [vmem:[#allocation10 + $0x138] sm:$0xff]
          %v1002 = vld [vmem:[#allocation10 + $0x140] sm:$0xff]
          %v1003 = vld [vmem:[#allocation10 + $0x148] sm:$0xff]
          %v1004 = vld [vmem:[#allocation10 + $0x150] sm:$0xff]
          %v1005 = vld [vmem:[#allocation10 + $0x158] sm:$0xff]
          %v1006 = vld [vmem:[#allocation10 + $0x160] sm:$0xff]
          %v1007 = vld [vmem:[#allocation10 + $0x168] sm:$0xff]
          %v1008 = vld [vmem:[#allocation10 + $0x170] sm:$0xff]
          %v1009 = vld [vmem:[#allocation10 + $0x178] sm:$0xff]
          %v1010 = vld [vmem:[#allocation10 + $0x180] sm:$0xff]
          %v1011 = vld [vmem:[#allocation10 + $0x188] sm:$0xff]
          %v1012 = vld [vmem:[#allocation10 + $0x190] sm:$0xff]
          %v1013 = vld [vmem:[#allocation10 + $0x198] sm:$0xff]
          %v1014 = vld [vmem:[#allocation10 + $0x1a0] sm:$0xff]
          %v1015 = vld [vmem:[#allocation10 + $0x1a8] sm:$0xff]
          %v1016 = vld [vmem:[#allocation10 + $0x1b0] sm:$0xff]
          %v1017 = vld [vmem:[#allocation10 + $0x1b8] sm:$0xff]
          %v1018 = vld [vmem:[#allocation10 + $0x1c0] sm:$0xff]
          %v1019 = vld [vmem:[#allocation10 + $0x1c8] sm:$0xff]
          %v1020 = vld [vmem:[#allocation10 + $0x1d0] sm:$0xff]
          %v1021 = vld [vmem:[#allocation10 + $0x1d8] sm:$0xff]
          %v1022 = vld [vmem:[#allocation10 + $0x1e0] sm:$0xff]
          %v1023 = vld [vmem:[#allocation10 + $0x1e8] sm:$0xff]
          %v1024 = vld [vmem:[#allocation10 + $0x1f0] sm:$0xff]
          %v1025 = vld [vmem:[#allocation10 + $0x1f8] sm:$0xff]
          %v1026 = vld [vmem:[#allocation10 + $0x200] sm:$0xff]
          %v1027 = vld [vmem:[#allocation10 + $0x208] sm:$0xff]
          %v1028 = vld [vmem:[#allocation10 + $0x210] sm:$0xff]
          %v1029 = vld [vmem:[#allocation10 + $0x218] sm:$0xff]
          %v1030 = vld [vmem:[#allocation10 + $0x220] sm:$0xff]
          %v1031 = vld [vmem:[#allocation10 + $0x228] sm:$0xff]
          %v1032 = vld [vmem:[#allocation10 + $0x230] sm:$0xff]
          %v1033 = vld [vmem:[#allocation10 + $0x238] sm:$0xff]
          %v1034 = vld [vmem:[#allocation10 + $0x240] sm:$0xff]
          %v1035 = vld [vmem:[#allocation10 + $0x248] sm:$0xff]
          %v1036 = vld [vmem:[#allocation10 + $0x250] sm:$0xff]
          %v1037 = vld [vmem:[#allocation10 + $0x258] sm:$0xff]
          %v1038 = vld [vmem:[#allocation10 + $0x260] sm:$0xff]
          %v1039 = vld [vmem:[#allocation10 + $0x268] sm:$0xff]
          %v1040 = vld [vmem:[#allocation10 + $0x270] sm:$0xff]
          %v1041 = vld [vmem:[#allocation10 + $0x278] sm:$0xff]
          %v1042 = vld [vmem:[#allocation10 + $0x280] sm:$0xff]
          %v1043 = vld [vmem:[#allocation10 + $0x288] sm:$0xff]
          %v1044 = vld [vmem:[#allocation10 + $0x290] sm:$0xff]
          %v1045 = vld [vmem:[#allocation10 + $0x298] sm:$0xff]
          %v1046 = vld [vmem:[#allocation10 + $0x2a0] sm:$0xff]
          %v1047 = vld [vmem:[#allocation10 + $0x2a8] sm:$0xff]
          %v1048 = vld [vmem:[#allocation10 + $0x2b0] sm:$0xff]
          %v1049 = vld [vmem:[#allocation10 + $0x2b8] sm:$0xff]
          %v1050 = vld [vmem:[#allocation10 + $0x2c0] sm:$0xff]
          %v1051 = vld [vmem:[#allocation10 + $0x2c8] sm:$0xff]
          %v1052 = vld [vmem:[#allocation10 + $0x2d0] sm:$0xff]
          %v1053 = vld [vmem:[#allocation10 + $0x2d8] sm:$0xff]
          %v1054 = vld [vmem:[#allocation10 + $0x2e0] sm:$0xff]
          %v1055 = vld [vmem:[#allocation10 + $0x2e8] sm:$0xff]
          %v1056 = vld [vmem:[#allocation10 + $0x2f0] sm:$0xff]
          %v1057 = vld [vmem:[#allocation10 + $0x2f8] sm:$0xff]
          %v1154 = vunpack.c.l.b16 %v962
          %v1155 = vunpack.c.h.b16 %v962
          %v1156 = vunpack.c.l.b16 %v963
          %v1157 = vunpack.c.h.b16 %v963
          %v1158 = vunpack.c.l.b16 %v964
          %v1159 = vunpack.c.h.b16 %v964
          %v1160 = vunpack.c.l.b16 %v965
          %v1161 = vunpack.c.h.b16 %v965
          %v1162 = vunpack.c.l.b16 %v966
          %v1163 = vunpack.c.h.b16 %v966
          %v1164 = vunpack.c.l.b16 %v967
          %v1165 = vunpack.c.h.b16 %v967
          %v1166 = vunpack.c.l.b16 %v968
          %v1167 = vunpack.c.h.b16 %v968
          %v1168 = vunpack.c.l.b16 %v969
          %v1169 = vunpack.c.h.b16 %v969
          %v1170 = vunpack.c.l.b16 %v970
          %v1171 = vunpack.c.h.b16 %v970
          %v1172 = vunpack.c.l.b16 %v971
          %v1173 = vunpack.c.h.b16 %v971
          %v1174 = vunpack.c.l.b16 %v972
          %v1175 = vunpack.c.h.b16 %v972
          %v1176 = vunpack.c.l.b16 %v973
          %v1177 = vunpack.c.h.b16 %v973
          %v1178 = vunpack.c.l.b16 %v974
          %v1179 = vunpack.c.h.b16 %v974
          %v1180 = vunpack.c.l.b16 %v975
          %v1181 = vunpack.c.h.b16 %v975
          %v1182 = vunpack.c.l.b16 %v976
          %v1183 = vunpack.c.h.b16 %v976
          %v1184 = vunpack.c.l.b16 %v977
          %v1185 = vunpack.c.h.b16 %v977
          %v1186 = vunpack.c.l.b16 %v978
          %v1187 = vunpack.c.h.b16 %v978
          %v1188 = vunpack.c.l.b16 %v979
          %v1189 = vunpack.c.h.b16 %v979
          %v1190 = vunpack.c.l.b16 %v980
          %v1191 = vunpack.c.h.b16 %v980
          %v1192 = vunpack.c.l.b16 %v981
          %v1193 = vunpack.c.h.b16 %v981
          %v1194 = vunpack.c.l.b16 %v982
          %v1195 = vunpack.c.h.b16 %v982
          %v1196 = vunpack.c.l.b16 %v983
          %v1197 = vunpack.c.h.b16 %v983
          %v1198 = vunpack.c.l.b16 %v984
          %v1199 = vunpack.c.h.b16 %v984
          %v1200 = vunpack.c.l.b16 %v985
          %v1201 = vunpack.c.h.b16 %v985
          %v1202 = vunpack.c.l.b16 %v986
          %v1203 = vunpack.c.h.b16 %v986
          %v1204 = vunpack.c.l.b16 %v987
          %v1205 = vunpack.c.h.b16 %v987
          %v1206 = vunpack.c.l.b16 %v988
          %v1207 = vunpack.c.h.b16 %v988
          %v1208 = vunpack.c.l.b16 %v989
          %v1209 = vunpack.c.h.b16 %v989
          %v1210 = vunpack.c.l.b16 %v990
          %v1211 = vunpack.c.h.b16 %v990
          %v1212 = vunpack.c.l.b16 %v991
          %v1213 = vunpack.c.h.b16 %v991
          %v1214 = vunpack.c.l.b16 %v992
          %v1215 = vunpack.c.h.b16 %v992
          %v1216 = vunpack.c.l.b16 %v993
          %v1217 = vunpack.c.h.b16 %v993
          %v1218 = vunpack.c.l.b16 %v994
          %v1219 = vunpack.c.h.b16 %v994
          %v1220 = vunpack.c.l.b16 %v995
          %v1221 = vunpack.c.h.b16 %v995
          %v1222 = vunpack.c.l.b16 %v996
          %v1223 = vunpack.c.h.b16 %v996
          %v1224 = vunpack.c.l.b16 %v997
          %v1225 = vunpack.c.h.b16 %v997
          %v1226 = vunpack.c.l.b16 %v998
          %v1227 = vunpack.c.h.b16 %v998
          %v1228 = vunpack.c.l.b16 %v999
          %v1229 = vunpack.c.h.b16 %v999
          %v1230 = vunpack.c.l.b16 %v1000
          %v1231 = vunpack.c.h.b16 %v1000
          %v1232 = vunpack.c.l.b16 %v1001
          %v1233 = vunpack.c.h.b16 %v1001
          %v1234 = vunpack.c.l.b16 %v1002
          %v1235 = vunpack.c.h.b16 %v1002
          %v1236 = vunpack.c.l.b16 %v1003
          %v1237 = vunpack.c.h.b16 %v1003
          %v1238 = vunpack.c.l.b16 %v1004
          %v1239 = vunpack.c.h.b16 %v1004
          %v1240 = vunpack.c.l.b16 %v1005
          %v1241 = vunpack.c.h.b16 %v1005
          %v1242 = vunpack.c.l.b16 %v1006
          %v1243 = vunpack.c.h.b16 %v1006
          %v1244 = vunpack.c.l.b16 %v1007
          %v1245 = vunpack.c.h.b16 %v1007
          %v1246 = vunpack.c.l.b16 %v1008
          %v1247 = vunpack.c.h.b16 %v1008
          %v1248 = vunpack.c.l.b16 %v1009
          %v1249 = vunpack.c.h.b16 %v1009
          %v1250 = vunpack.c.l.b16 %v1010
          %v1251 = vunpack.c.h.b16 %v1010
          %v1252 = vunpack.c.l.b16 %v1011
          %v1253 = vunpack.c.h.b16 %v1011
          %v1254 = vunpack.c.l.b16 %v1012
          %v1255 = vunpack.c.h.b16 %v1012
          %v1256 = vunpack.c.l.b16 %v1013
          %v1257 = vunpack.c.h.b16 %v1013
          %v1258 = vunpack.c.l.b16 %v1014
          %v1259 = vunpack.c.h.b16 %v1014
          %v1260 = vunpack.c.l.b16 %v1015
          %v1261 = vunpack.c.h.b16 %v1015
          %v1262 = vunpack.c.l.b16 %v1016
          %v1263 = vunpack.c.h.b16 %v1016
          %v1264 = vunpack.c.l.b16 %v1017
          %v1265 = vunpack.c.h.b16 %v1017
          %v1266 = vunpack.c.l.b16 %v1018
          %v1267 = vunpack.c.h.b16 %v1018
          %v1268 = vunpack.c.l.b16 %v1019
          %v1269 = vunpack.c.h.b16 %v1019
          %v1270 = vunpack.c.l.b16 %v1020
          %v1271 = vunpack.c.h.b16 %v1020
          %v1272 = vunpack.c.l.b16 %v1021
          %v1273 = vunpack.c.h.b16 %v1021
          %v1274 = vunpack.c.l.b16 %v1022
          %v1275 = vunpack.c.h.b16 %v1022
          %v1276 = vunpack.c.l.b16 %v1023
          %v1277 = vunpack.c.h.b16 %v1023
          %v1278 = vunpack.c.l.b16 %v1024
          %v1279 = vunpack.c.h.b16 %v1024
          %v1280 = vunpack.c.l.b16 %v1025
          %v1281 = vunpack.c.h.b16 %v1025
          %v1282 = vunpack.c.l.b16 %v1026
          %v1283 = vunpack.c.h.b16 %v1026
          %v1284 = vunpack.c.l.b16 %v1027
          %v1285 = vunpack.c.h.b16 %v1027
          %v1286 = vunpack.c.l.b16 %v1028
          %v1287 = vunpack.c.h.b16 %v1028
          %v1288 = vunpack.c.l.b16 %v1029
          %v1289 = vunpack.c.h.b16 %v1029
          %v1290 = vunpack.c.l.b16 %v1030
          %v1291 = vunpack.c.h.b16 %v1030
          %v1292 = vunpack.c.l.b16 %v1031
          %v1293 = vunpack.c.h.b16 %v1031
          %v1294 = vunpack.c.l.b16 %v1032
          %v1295 = vunpack.c.h.b16 %v1032
          %v1296 = vunpack.c.l.b16 %v1033
          %v1297 = vunpack.c.h.b16 %v1033
          %v1298 = vunpack.c.l.b16 %v1034
          %v1299 = vunpack.c.h.b16 %v1034
          %v1300 = vunpack.c.l.b16 %v1035
          %v1301 = vunpack.c.h.b16 %v1035
          %v1302 = vunpack.c.l.b16 %v1036
          %v1303 = vunpack.c.h.b16 %v1036
          %v1304 = vunpack.c.l.b16 %v1037
          %v1305 = vunpack.c.h.b16 %v1037
          %v1306 = vunpack.c.l.b16 %v1038
          %v1307 = vunpack.c.h.b16 %v1038
          %v1308 = vunpack.c.l.b16 %v1039
          %v1309 = vunpack.c.h.b16 %v1039
          %v1310 = vunpack.c.l.b16 %v1040
          %v1311 = vunpack.c.h.b16 %v1040
          %v1312 = vunpack.c.l.b16 %v1041
          %v1313 = vunpack.c.h.b16 %v1041
          %v1314 = vunpack.c.l.b16 %v1042
          %v1315 = vunpack.c.h.b16 %v1042
          %v1316 = vunpack.c.l.b16 %v1043
          %v1317 = vunpack.c.h.b16 %v1043
          %v1318 = vunpack.c.l.b16 %v1044
          %v1319 = vunpack.c.h.b16 %v1044
          %v1320 = vunpack.c.l.b16 %v1045
          %v1321 = vunpack.c.h.b16 %v1045
          %v1322 = vunpack.c.l.b16 %v1046
          %v1323 = vunpack.c.h.b16 %v1046
          %v1324 = vunpack.c.l.b16 %v1047
          %v1325 = vunpack.c.h.b16 %v1047
          %v1326 = vunpack.c.l.b16 %v1048
          %v1327 = vunpack.c.h.b16 %v1048
          %v1328 = vunpack.c.l.b16 %v1049
          %v1329 = vunpack.c.h.b16 %v1049
          %v1330 = vunpack.c.l.b16 %v1050
          %v1331 = vunpack.c.h.b16 %v1050
          %v1332 = vunpack.c.l.b16 %v1051
          %v1333 = vunpack.c.h.b16 %v1051
          %v1334 = vunpack.c.l.b16 %v1052
          %v1335 = vunpack.c.h.b16 %v1052
          %v1336 = vunpack.c.l.b16 %v1053
          %v1337 = vunpack.c.h.b16 %v1053
          %v1338 = vunpack.c.l.b16 %v1054
          %v1339 = vunpack.c.h.b16 %v1054
          %v1340 = vunpack.c.l.b16 %v1055
          %v1341 = vunpack.c.h.b16 %v1055
          %v1342 = vunpack.c.l.b16 %v1056
          %v1343 = vunpack.c.h.b16 %v1056
          %v1344 = vunpack.c.l.b16 %v1057
          %v1345 = vunpack.c.h.b16 %v1057
          %v1346 = vpack.c.b16 %v1160, %v1154
          %v1347 = vpack.c.b16 %v1161, %v1155
          %v1348 = vpack.c.b16 %v1162, %v1156
          %v1349 = vpack.c.b16 %v1163, %v1157
          %v1350 = vpack.c.b16 %v1164, %v1158
          %v1351 = vpack.c.b16 %v1165, %v1159
          %v1352 = vpack.c.b16 %v1172, %v1166
          %v1353 = vpack.c.b16 %v1173, %v1167
          %v1354 = vpack.c.b16 %v1174, %v1168
          %v1355 = vpack.c.b16 %v1175, %v1169
          %v1356 = vpack.c.b16 %v1176, %v1170
          %v1357 = vpack.c.b16 %v1177, %v1171
          %v1358 = vpack.c.b16 %v1184, %v1178
          %v1359 = vpack.c.b16 %v1185, %v1179
          %v1360 = vpack.c.b16 %v1186, %v1180
          %v1361 = vpack.c.b16 %v1187, %v1181
          %v1362 = vpack.c.b16 %v1188, %v1182
          %v1363 = vpack.c.b16 %v1189, %v1183
          %v1364 = vpack.c.b16 %v1196, %v1190
          %v1365 = vpack.c.b16 %v1197, %v1191
          %v1366 = vpack.c.b16 %v1198, %v1192
          %v1367 = vpack.c.b16 %v1199, %v1193
          %v1368 = vpack.c.b16 %v1200, %v1194
          %v1369 = vpack.c.b16 %v1201, %v1195
          %v1370 = vpack.c.b16 %v1208, %v1202
          %v1371 = vpack.c.b16 %v1209, %v1203
          %v1372 = vpack.c.b16 %v1210, %v1204
          %v1373 = vpack.c.b16 %v1211, %v1205
          %v1374 = vpack.c.b16 %v1212, %v1206
          %v1375 = vpack.c.b16 %v1213, %v1207
          %v1376 = vpack.c.b16 %v1220, %v1214
          %v1377 = vpack.c.b16 %v1221, %v1215
          %v1378 = vpack.c.b16 %v1222, %v1216
          %v1379 = vpack.c.b16 %v1223, %v1217
          %v1380 = vpack.c.b16 %v1224, %v1218
          %v1381 = vpack.c.b16 %v1225, %v1219
          %v1382 = vpack.c.b16 %v1232, %v1226
          %v1383 = vpack.c.b16 %v1233, %v1227
          %v1384 = vpack.c.b16 %v1234, %v1228
          %v1385 = vpack.c.b16 %v1235, %v1229
          %v1386 = vpack.c.b16 %v1236, %v1230
          %v1387 = vpack.c.b16 %v1237, %v1231
          %v1388 = vpack.c.b16 %v1244, %v1238
          %v1389 = vpack.c.b16 %v1245, %v1239
          %v1390 = vpack.c.b16 %v1246, %v1240
          %v1391 = vpack.c.b16 %v1247, %v1241
          %v1392 = vpack.c.b16 %v1248, %v1242
          %v1393 = vpack.c.b16 %v1249, %v1243
          %v1394 = vpack.c.b16 %v1256, %v1250
          %v1395 = vpack.c.b16 %v1257, %v1251
          %v1396 = vpack.c.b16 %v1258, %v1252
          %v1397 = vpack.c.b16 %v1259, %v1253
          %v1398 = vpack.c.b16 %v1260, %v1254
          %v1399 = vpack.c.b16 %v1261, %v1255
          %v1400 = vpack.c.b16 %v1268, %v1262
          %v1401 = vpack.c.b16 %v1269, %v1263
          %v1402 = vpack.c.b16 %v1270, %v1264
          %v1403 = vpack.c.b16 %v1271, %v1265
          %v1404 = vpack.c.b16 %v1272, %v1266
          %v1405 = vpack.c.b16 %v1273, %v1267
          %v1406 = vpack.c.b16 %v1280, %v1274
          %v1407 = vpack.c.b16 %v1281, %v1275
          %v1408 = vpack.c.b16 %v1282, %v1276
          %v1409 = vpack.c.b16 %v1283, %v1277
          %v1410 = vpack.c.b16 %v1284, %v1278
          %v1411 = vpack.c.b16 %v1285, %v1279
          %v1412 = vpack.c.b16 %v1292, %v1286
          %v1413 = vpack.c.b16 %v1293, %v1287
          %v1414 = vpack.c.b16 %v1294, %v1288
          %v1415 = vpack.c.b16 %v1295, %v1289
          %v1416 = vpack.c.b16 %v1296, %v1290
          %v1417 = vpack.c.b16 %v1297, %v1291
          %v1418 = vpack.c.b16 %v1304, %v1298
          %v1419 = vpack.c.b16 %v1305, %v1299
          %v1420 = vpack.c.b16 %v1306, %v1300
          %v1421 = vpack.c.b16 %v1307, %v1301
          %v1422 = vpack.c.b16 %v1308, %v1302
          %v1423 = vpack.c.b16 %v1309, %v1303
          %v1424 = vpack.c.b16 %v1316, %v1310
          %v1425 = vpack.c.b16 %v1317, %v1311
          %v1426 = vpack.c.b16 %v1318, %v1312
          %v1427 = vpack.c.b16 %v1319, %v1313
          %v1428 = vpack.c.b16 %v1320, %v1314
          %v1429 = vpack.c.b16 %v1321, %v1315
          %v1430 = vpack.c.b16 %v1328, %v1322
          %v1431 = vpack.c.b16 %v1329, %v1323
          %v1432 = vpack.c.b16 %v1330, %v1324
          %v1433 = vpack.c.b16 %v1331, %v1325
          %v1434 = vpack.c.b16 %v1332, %v1326
          %v1435 = vpack.c.b16 %v1333, %v1327
          %v1436 = vpack.c.b16 %v1340, %v1334
          %v1437 = vpack.c.b16 %v1341, %v1335
          %v1438 = vpack.c.b16 %v1342, %v1336
          %v1439 = vpack.c.b16 %v1343, %v1337
          %v1440 = vpack.c.b16 %v1344, %v1338
          %v1441 = vpack.c.b16 %v1345, %v1339
          %1538 = vmatprep.subr.bf16.mxu0 %v1347
          %1539 = vmatpush1.bf16.msra.mxu0 %v1346
          %1540 = vmatprep.subr.bf16.mxu0 %v1353
          %1541 = vmatpush1.bf16.msra.mxu0 %v1352
          %1542 = vmatprep.subr.bf16.mxu0 %v1359
          %1543 = vmatpush1.bf16.msra.mxu0 %v1358
          %1544 = vmatprep.subr.bf16.mxu0 %v1365
          %1545 = vmatpush1.bf16.msra.mxu0 %v1364
          %1546 = vmatprep.subr.bf16.mxu0 %v1371
          %1547 = vmatpush1.bf16.msra.mxu0 %v1370
          %1548 = vmatprep.subr.bf16.mxu0 %v1377
          %1549 = vmatpush1.bf16.msra.mxu0 %v1376
          %1550 = vmatprep.subr.bf16.mxu0 %v1383
          %1551 = vmatpush1.bf16.msra.mxu0 %v1382
          %1552 = vmatprep.subr.bf16.mxu0 %v1389
          %1553 = vmatpush1.bf16.msra.mxu0 %v1388
          %1554 = vmatprep.subr.bf16.mxu0 %v1395
          %1555 = vmatpush1.bf16.msra.mxu0 %v1394
          %1556 = vmatprep.subr.bf16.mxu0 %v1401
          %1557 = vmatpush1.bf16.msra.mxu0 %v1400
          %1558 = vmatprep.subr.bf16.mxu0 %v1407
          %1559 = vmatpush1.bf16.msra.mxu0 %v1406
          %1560 = vmatprep.subr.bf16.mxu0 %v1413
          %1561 = vmatpush1.bf16.msra.mxu0 %v1412
          %1562 = vmatprep.subr.bf16.mxu0 %v1419
          %1563 = vmatpush1.bf16.msra.mxu0 %v1418
          %1564 = vmatprep.subr.bf16.mxu0 %v1425
          %1565 = vmatpush1.bf16.msra.mxu0 %v1424
          %1566 = vmatprep.subr.bf16.mxu0 %v1431
          %1567 = vmatpush1.bf16.msra.mxu0 %v1430
          %1568 = vmatprep.subr.bf16.mxu0 %v1437
          %1569 = vmatpush1.bf16.msra.mxu0 %v1436
          %1570 = vmatprep.mubr.bf16.mxu0 %v931
          %1571 = vmatmul.mubr.bf16.gmra.mrb[0].mxu0 %v930
          %v1572 = vpop.f32.mrb[0].mxu0
          %v1573 = vadd.f32 0.0, %v1572
          %v1574 = vpop.f32.mrb[0].mxu0
          %v1575 = vadd.f32 0.0, %v1574
          %v1576 = vpop.f32.mrb[0].mxu0
          %v1577 = vadd.f32 0.0, %v1576
          %v1578 = vpop.f32.mrb[0].mxu0
          %v1579 = vadd.f32 0.0, %v1578
          %1580 = vmatprep.mubr.bf16.mxu0 %v933
          %1581 = vmatmul.mubr.bf16.gmra.mrb[0].mxu0 %v932
          %v1582 = vpop.f32.mrb[0].mxu0
          %v1583 = vadd.f32 0.0, %v1582
          %v1584 = vpop.f32.mrb[0].mxu0
          %v1585 = vadd.f32 0.0, %v1584
          %v1586 = vpop.f32.mrb[0].mxu0
          %v1587 = vadd.f32 0.0, %v1586
          %v1588 = vpop.f32.mrb[0].mxu0
          %v1589 = vadd.f32 0.0, %v1588
          %1590 = vmatprep.mubr.bf16.mxu0 %v935
          %1591 = vmatmul.mubr.bf16.gmra.mrb[0].mxu0 %v934
          %v1592 = vpop.f32.mrb[0].mxu0
          %v1593 = vadd.f32 0.0, %v1592
          %v1594 = vpop.f32.mrb[0].mxu0
          %v1595 = vadd.f32 0.0, %v1594
          %v1596 = vpop.f32.mrb[0].mxu0
          %v1597 = vadd.f32 0.0, %v1596
          %v1598 = vpop.f32.mrb[0].mxu0
          %v1599 = vadd.f32 0.0, %v1598
          %1600 = vmatprep.mubr.bf16.mxu0 %v937
          %1601 = vmatmul.mubr.bf16.gmra.mrb[0].mxu0 %v936
          %v1602 = vpop.f32.mrb[0].mxu0
          %v1603 = vadd.f32 0.0, %v1602
          %v1604 = vpop.f32.mrb[0].mxu0
          %v1605 = vadd.f32 0.0, %v1604
          %v1606 = vpop.f32.mrb[0].mxu0
          %v1607 = vadd.f32 0.0, %v1606
          %v1608 = vpop.f32.mrb[0].mxu0
          %v1609 = vadd.f32 0.0, %v1608
          %1610 = vmatprep.mubr.bf16.mxu0 %v939
          %1611 = vmatmul.mubr.bf16.gmra.mrb[0].mxu0 %v938
          %v1612 = vpop.f32.mrb[0].mxu0
          %v1613 = vadd.f32 0.0, %v1612
          %v1614 = vpop.f32.mrb[0].mxu0
          %v1615 = vadd.f32 0.0, %v1614
          %v1616 = vpop.f32.mrb[0].mxu0
          %v1617 = vadd.f32 0.0, %v1616
          %v1618 = vpop.f32.mrb[0].mxu0
          %v1619 = vadd.f32 0.0, %v1618
          %1620 = vmatprep.mubr.bf16.mxu0 %v941
          %1621 = vmatmul.mubr.bf16.gmra.mrb[0].mxu0 %v940
          %v1622 = vpop.f32.mrb[0].mxu0
          %v1623 = vadd.f32 0.0, %v1622
          %v1624 = vpop.f32.mrb[0].mxu0
          %v1625 = vadd.f32 0.0, %v1624
          %v1626 = vpop.f32.mrb[0].mxu0
          %v1627 = vadd.f32 0.0, %v1626
          %v1628 = vpop.f32.mrb[0].mxu0
          %v1629 = vadd.f32 0.0, %v1628
          %1630 = vmatprep.mubr.bf16.mxu0 %v943
          %1631 = vmatmul.mubr.bf16.gmra.mrb[0].mxu0 %v942
          %v1632 = vpop.f32.mrb[0].mxu0
          %v1633 = vadd.f32 0.0, %v1632
          %v1634 = vpop.f32.mrb[0].mxu0
          %v1635 = vadd.f32 0.0, %v1634
          %v1636 = vpop.f32.mrb[0].mxu0
          %v1637 = vadd.f32 0.0, %v1636
          %v1638 = vpop.f32.mrb[0].mxu0
          %v1639 = vadd.f32 0.0, %v1638
          %1640 = vmatprep.mubr.bf16.mxu0 %v945
          %1641 = vmatmul.mubr.bf16.gmra.mrb[0].mxu0 %v944
          %v1642 = vpop.f32.mrb[0].mxu0
          %v1643 = vadd.f32 0.0, %v1642
          %v1644 = vpop.f32.mrb[0].mxu0
          %v1645 = vadd.f32 0.0, %v1644
          %v1646 = vpop.f32.mrb[0].mxu0
          %v1647 = vadd.f32 0.0, %v1646
          %v1648 = vpop.f32.mrb[0].mxu0
          %v1649 = vadd.f32 0.0, %v1648
          %1650 = vmatprep.mubr.bf16.mxu0 %v947
          %1651 = vmatmul.mubr.bf16.gmra.mrb[0].mxu0 %v946
          %v1652 = vpop.f32.mrb[0].mxu0
          %v1653 = vadd.f32 0.0, %v1652
          %v1654 = vpop.f32.mrb[0].mxu0
          %v1655 = vadd.f32 0.0, %v1654
          %v1656 = vpop.f32.mrb[0].mxu0
          %v1657 = vadd.f32 0.0, %v1656
          %v1658 = vpop.f32.mrb[0].mxu0
          %v1659 = vadd.f32 0.0, %v1658
          %1660 = vmatprep.mubr.bf16.mxu0 %v949
          %1661 = vmatmul.mubr.bf16.gmra.mrb[0].mxu0 %v948
          %v1662 = vpop.f32.mrb[0].mxu0
          %v1663 = vadd.f32 0.0, %v1662
          %v1664 = vpop.f32.mrb[0].mxu0
          %v1665 = vadd.f32 0.0, %v1664
          %v1666 = vpop.f32.mrb[0].mxu0
          %v1667 = vadd.f32 0.0, %v1666
          %v1668 = vpop.f32.mrb[0].mxu0
          %v1669 = vadd.f32 0.0, %v1668
          %1670 = vmatprep.mubr.bf16.mxu0 %v951
          %1671 = vmatmul.mubr.bf16.gmra.mrb[0].mxu0 %v950
          %v1672 = vpop.f32.mrb[0].mxu0
          %v1673 = vadd.f32 0.0, %v1672
          %v1674 = vpop.f32.mrb[0].mxu0
          %v1675 = vadd.f32 0.0, %v1674
          %v1676 = vpop.f32.mrb[0].mxu0
          %v1677 = vadd.f32 0.0, %v1676
          %v1678 = vpop.f32.mrb[0].mxu0
          %v1679 = vadd.f32 0.0, %v1678
          %1680 = vmatprep.mubr.bf16.mxu0 %v953
          %1681 = vmatmul.mubr.bf16.gmra.mrb[0].mxu0 %v952
          %v1682 = vpop.f32.mrb[0].mxu0
          %v1683 = vadd.f32 0.0, %v1682
          %v1684 = vpop.f32.mrb[0].mxu0
          %v1685 = vadd.f32 0.0, %v1684
          %v1686 = vpop.f32.mrb[0].mxu0
          %v1687 = vadd.f32 0.0, %v1686
          %v1688 = vpop.f32.mrb[0].mxu0
          %v1689 = vadd.f32 0.0, %v1688
          %1690 = vmatprep.mubr.bf16.mxu0 %v955
          %1691 = vmatmul.mubr.bf16.gmra.mrb[0].mxu0 %v954
          %v1692 = vpop.f32.mrb[0].mxu0
          %v1693 = vadd.f32 0.0, %v1692
          %v1694 = vpop.f32.mrb[0].mxu0
          %v1695 = vadd.f32 0.0, %v1694
          %v1696 = vpop.f32.mrb[0].mxu0
          %v1697 = vadd.f32 0.0, %v1696
          %v1698 = vpop.f32.mrb[0].mxu0
          %v1699 = vadd.f32 0.0, %v1698
          %1700 = vmatprep.mubr.bf16.mxu0 %v957
          %1701 = vmatmul.mubr.bf16.gmra.mrb[0].mxu0 %v956
          %v1702 = vpop.f32.mrb[0].mxu0
          %v1703 = vadd.f32 0.0, %v1702
          %v1704 = vpop.f32.mrb[0].mxu0
          %v1705 = vadd.f32 0.0, %v1704
          %v1706 = vpop.f32.mrb[0].mxu0
          %v1707 = vadd.f32 0.0, %v1706
          %v1708 = vpop.f32.mrb[0].mxu0
          %v1709 = vadd.f32 0.0, %v1708
          %1710 = vmatprep.mubr.bf16.mxu0 %v959
          %1711 = vmatmul.mubr.bf16.gmra.mrb[0].mxu0 %v958
          %v1712 = vpop.f32.mrb[0].mxu0
          %v1713 = vadd.f32 0.0, %v1712
          %v1714 = vpop.f32.mrb[0].mxu0
          %v1715 = vadd.f32 0.0, %v1714
          %v1716 = vpop.f32.mrb[0].mxu0
          %v1717 = vadd.f32 0.0, %v1716
          %v1718 = vpop.f32.mrb[0].mxu0
          %v1719 = vadd.f32 0.0, %v1718
          %1720 = vmatprep.mubr.bf16.mxu0 %v961
          %1721 = vmatmul.mubr.bf16.gmra.mrb[0].mxu0 %v960
          %v1722 = vpop.f32.mrb[0].mxu0
          %v1723 = vadd.f32 0.0, %v1722
          %v1724 = vpop.f32.mrb[0].mxu0
          %v1725 = vadd.f32 0.0, %v1724
          %v1726 = vpop.f32.mrb[0].mxu0
          %v1727 = vadd.f32 0.0, %v1726
          %v1728 = vpop.f32.mrb[0].mxu0
          %v1729 = vadd.f32 0.0, %v1728
          %1730 = vdwg.mxu0
          %1731 = vmatprep.subr.bf16.mxu0 %v1349
          %1732 = vmatpush1.bf16.msra.mxu0 %v1348
          %1733 = vmatprep.subr.bf16.mxu0 %v1355
          %1734 = vmatpush1.bf16.msra.mxu0 %v1354
          %1735 = vmatprep.subr.bf16.mxu0 %v1361
          %1736 = vmatpush1.bf16.msra.mxu0 %v1360
          %1737 = vmatprep.subr.bf16.mxu0 %v1367
          %1738 = vmatpush1.bf16.msra.mxu0 %v1366
          %1739 = vmatprep.subr.bf16.mxu0 %v1373
          %1740 = vmatpush1.bf16.msra.mxu0 %v1372
          %1741 = vmatprep.subr.bf16.mxu0 %v1379
          %1742 = vmatpush1.bf16.msra.mxu0 %v1378
          %1743 = vmatprep.subr.bf16.mxu0 %v1385
          %1744 = vmatpush1.bf16.msra.mxu0 %v1384
          %1745 = vmatprep.subr.bf16.mxu0 %v1391
          %1746 = vmatpush1.bf16.msra.mxu0 %v1390
          %1747 = vmatprep.subr.bf16.mxu0 %v1397
          %1748 = vmatpush1.bf16.msra.mxu0 %v1396
          %1749 = vmatprep.subr.bf16.mxu0 %v1403
          %1750 = vmatpush1.bf16.msra.mxu0 %v1402
          %1751 = vmatprep.subr.bf16.mxu0 %v1409
          %1752 = vmatpush1.bf16.msra.mxu0 %v1408
          %1753 = vmatprep.subr.bf16.mxu0 %v1415
          %1754 = vmatpush1.bf16.msra.mxu0 %v1414
          %1755 = vmatprep.subr.bf16.mxu0 %v1421
          %1756 = vmatpush1.bf16.msra.mxu0 %v1420
          %1757 = vmatprep.subr.bf16.mxu0 %v1427
          %1758 = vmatpush1.bf16.msra.mxu0 %v1426
          %1759 = vmatprep.subr.bf16.mxu0 %v1433
          %1760 = vmatpush1.bf16.msra.mxu0 %v1432
          %1761 = vmatprep.subr.bf16.mxu0 %v1439
          %1762 = vmatpush1.bf16.msra.mxu0 %v1438
          %1763 = vmatprep.mubr.bf16.mxu0 %v931
          %1764 = vmatmul.mubr.bf16.gmra.mrb[0].mxu0 %v930
          %v1765 = vpop.f32.mrb[0].mxu0
          %v1766 = vadd.f32 0.0, %v1765
          %v1767 = vpop.f32.mrb[0].mxu0
          %v1768 = vadd.f32 0.0, %v1767
          %v1769 = vpop.f32.mrb[0].mxu0
          %v1770 = vadd.f32 0.0, %v1769
          %v1771 = vpop.f32.mrb[0].mxu0
          %v1772 = vadd.f32 0.0, %v1771
          %1773 = vmatprep.mubr.bf16.mxu0 %v933
          %1774 = vmatmul.mubr.bf16.gmra.mrb[0].mxu0 %v932
          %v1775 = vpop.f32.mrb[0].mxu0
          %v1776 = vadd.f32 0.0, %v1775
          %v1777 = vpop.f32.mrb[0].mxu0
          %v1778 = vadd.f32 0.0, %v1777
          %v1779 = vpop.f32.mrb[0].mxu0
          %v1780 = vadd.f32 0.0, %v1779
          %v1781 = vpop.f32.mrb[0].mxu0
          %v1782 = vadd.f32 0.0, %v1781
          %1783 = vmatprep.mubr.bf16.mxu0 %v935
          %1784 = vmatmul.mubr.bf16.gmra.mrb[0].mxu0 %v934
          %v1785 = vpop.f32.mrb[0].mxu0
          %v1786 = vadd.f32 0.0, %v1785
          %v1787 = vpop.f32.mrb[0].mxu0
          %v1788 = vadd.f32 0.0, %v1787
          %v1789 = vpop.f32.mrb[0].mxu0
          %v1790 = vadd.f32 0.0, %v1789
          %v1791 = vpop.f32.mrb[0].mxu0
          %v1792 = vadd.f32 0.0, %v1791
          %1793 = vmatprep.mubr.bf16.mxu0 %v937
          %1794 = vmatmul.mubr.bf16.gmra.mrb[0].mxu0 %v936
          %v1795 = vpop.f32.mrb[0].mxu0
          %v1796 = vadd.f32 0.0, %v1795
          %v1797 = vpop.f32.mrb[0].mxu0
          %v1798 = vadd.f32 0.0, %v1797
          %v1799 = vpop.f32.mrb[0].mxu0
          %v1800 = vadd.f32 0.0, %v1799
          %v1801 = vpop.f32.mrb[0].mxu0
          %v1802 = vadd.f32 0.0, %v1801
          %1803 = vmatprep.mubr.bf16.mxu0 %v939
          %1804 = vmatmul.mubr.bf16.gmra.mrb[0].mxu0 %v938
          %v1805 = vpop.f32.mrb[0].mxu0
          %v1806 = vadd.f32 0.0, %v1805
          %v1807 = vpop.f32.mrb[0].mxu0
          %v1808 = vadd.f32 0.0, %v1807
          %v1809 = vpop.f32.mrb[0].mxu0
          %v1810 = vadd.f32 0.0, %v1809
          %v1811 = vpop.f32.mrb[0].mxu0
          %v1812 = vadd.f32 0.0, %v1811
          %1813 = vmatprep.mubr.bf16.mxu0 %v941
          %1814 = vmatmul.mubr.bf16.gmra.mrb[0].mxu0 %v940
          %v1815 = vpop.f32.mrb[0].mxu0
          %v1816 = vadd.f32 0.0, %v1815
          %v1817 = vpop.f32.mrb[0].mxu0
          %v1818 = vadd.f32 0.0, %v1817
          %v1819 = vpop.f32.mrb[0].mxu0
          %v1820 = vadd.f32 0.0, %v1819
          %v1821 = vpop.f32.mrb[0].mxu0
          %v1822 = vadd.f32 0.0, %v1821
          %1823 = vmatprep.mubr.bf16.mxu0 %v943
          %1824 = vmatmul.mubr.bf16.gmra.mrb[0].mxu0 %v942
          %v1825 = vpop.f32.mrb[0].mxu0
          %v1826 = vadd.f32 0.0, %v1825
          %v1827 = vpop.f32.mrb[0].mxu0
          %v1828 = vadd.f32 0.0, %v1827
          %v1829 = vpop.f32.mrb[0].mxu0
          %v1830 = vadd.f32 0.0, %v1829
          %v1831 = vpop.f32.mrb[0].mxu0
          %v1832 = vadd.f32 0.0, %v1831
          %1833 = vmatprep.mubr.bf16.mxu0 %v945
          %1834 = vmatmul.mubr.bf16.gmra.mrb[0].mxu0 %v944
          %v1835 = vpop.f32.mrb[0].mxu0
          %v1836 = vadd.f32 0.0, %v1835
          %v1837 = vpop.f32.mrb[0].mxu0
          %v1838 = vadd.f32 0.0, %v1837
          %v1839 = vpop.f32.mrb[0].mxu0
          %v1840 = vadd.f32 0.0, %v1839
          %v1841 = vpop.f32.mrb[0].mxu0
          %v1842 = vadd.f32 0.0, %v1841
          %1843 = vmatprep.mubr.bf16.mxu0 %v947
          %1844 = vmatmul.mubr.bf16.gmra.mrb[0].mxu0 %v946
          %v1845 = vpop.f32.mrb[0].mxu0
          %v1846 = vadd.f32 0.0, %v1845
          %v1847 = vpop.f32.mrb[0].mxu0
          %v1848 = vadd.f32 0.0, %v1847
          %v1849 = vpop.f32.mrb[0].mxu0
          %v1850 = vadd.f32 0.0, %v1849
          %v1851 = vpop.f32.mrb[0].mxu0
          %v1852 = vadd.f32 0.0, %v1851
          %1853 = vmatprep.mubr.bf16.mxu0 %v949
          %1854 = vmatmul.mubr.bf16.gmra.mrb[0].mxu0 %v948
          %v1855 = vpop.f32.mrb[0].mxu0
          %v1856 = vadd.f32 0.0, %v1855
          %v1857 = vpop.f32.mrb[0].mxu0
          %v1858 = vadd.f32 0.0, %v1857
          %v1859 = vpop.f32.mrb[0].mxu0
          %v1860 = vadd.f32 0.0, %v1859
          %v1861 = vpop.f32.mrb[0].mxu0
          %v1862 = vadd.f32 0.0, %v1861
          %1863 = vmatprep.mubr.bf16.mxu0 %v951
          %1864 = vmatmul.mubr.bf16.gmra.mrb[0].mxu0 %v950
          %v1865 = vpop.f32.mrb[0].mxu0
          %v1866 = vadd.f32 0.0, %v1865
          %v1867 = vpop.f32.mrb[0].mxu0
          %v1868 = vadd.f32 0.0, %v1867
          %v1869 = vpop.f32.mrb[0].mxu0
          %v1870 = vadd.f32 0.0, %v1869
          %v1871 = vpop.f32.mrb[0].mxu0
          %v1872 = vadd.f32 0.0, %v1871
          %1873 = vmatprep.mubr.bf16.mxu0 %v953
          %1874 = vmatmul.mubr.bf16.gmra.mrb[0].mxu0 %v952
          %v1875 = vpop.f32.mrb[0].mxu0
          %v1876 = vadd.f32 0.0, %v1875
          %v1877 = vpop.f32.mrb[0].mxu0
          %v1878 = vadd.f32 0.0, %v1877
          %v1879 = vpop.f32.mrb[0].mxu0
          %v1880 = vadd.f32 0.0, %v1879
          %v1881 = vpop.f32.mrb[0].mxu0
          %v1882 = vadd.f32 0.0, %v1881
          %1883 = vmatprep.mubr.bf16.mxu0 %v955
          %1884 = vmatmul.mubr.bf16.gmra.mrb[0].mxu0 %v954
          %v1885 = vpop.f32.mrb[0].mxu0
          %v1886 = vadd.f32 0.0, %v1885
          %v1887 = vpop.f32.mrb[0].mxu0
          %v1888 = vadd.f32 0.0, %v1887
          %v1889 = vpop.f32.mrb[0].mxu0
          %v1890 = vadd.f32 0.0, %v1889
          %v1891 = vpop.f32.mrb[0].mxu0
          %v1892 = vadd.f32 0.0, %v1891
          %1893 = vmatprep.mubr.bf16.mxu0 %v957
          %1894 = vmatmul.mubr.bf16.gmra.mrb[0].mxu0 %v956
          %v1895 = vpop.f32.mrb[0].mxu0
          %v1896 = vadd.f32 0.0, %v1895
          %v1897 = vpop.f32.mrb[0].mxu0
          %v1898 = vadd.f32 0.0, %v1897
          %v1899 = vpop.f32.mrb[0].mxu0
          %v1900 = vadd.f32 0.0, %v1899
          %v1901 = vpop.f32.mrb[0].mxu0
          %v1902 = vadd.f32 0.0, %v1901
          %1903 = vmatprep.mubr.bf16.mxu0 %v959
          %1904 = vmatmul.mubr.bf16.gmra.mrb[0].mxu0 %v958
          %v1905 = vpop.f32.mrb[0].mxu0
          %v1906 = vadd.f32 0.0, %v1905
          %v1907 = vpop.f32.mrb[0].mxu0
          %v1908 = vadd.f32 0.0, %v1907
          %v1909 = vpop.f32.mrb[0].mxu0
          %v1910 = vadd.f32 0.0, %v1909
          %v1911 = vpop.f32.mrb[0].mxu0
          %v1912 = vadd.f32 0.0, %v1911
          %1913 = vmatprep.mubr.bf16.mxu0 %v961
          %1914 = vmatmul.mubr.bf16.gmra.mrb[0].mxu0 %v960
          %v1915 = vpop.f32.mrb[0].mxu0
          %v1916 = vadd.f32 0.0, %v1915
          %v1917 = vpop.f32.mrb[0].mxu0
          %v1918 = vadd.f32 0.0, %v1917
          %v1919 = vpop.f32.mrb[0].mxu0
          %v1920 = vadd.f32 0.0, %v1919
          %v1921 = vpop.f32.mrb[0].mxu0
          %v1922 = vadd.f32 0.0, %v1921
          %1923 = vdwg.mxu0
          %1924 = vmatprep.subr.bf16.mxu0 %v1351
          %1925 = vmatpush1.bf16.msra.mxu0 %v1350
          %1926 = vmatprep.subr.bf16.mxu0 %v1357
          %1927 = vmatpush1.bf16.msra.mxu0 %v1356
          %1928 = vmatprep.subr.bf16.mxu0 %v1363
          %1929 = vmatpush1.bf16.msra.mxu0 %v1362
          %1930 = vmatprep.subr.bf16.mxu0 %v1369
          %1931 = vmatpush1.bf16.msra.mxu0 %v1368
          %1932 = vmatprep.subr.bf16.mxu0 %v1375
          %1933 = vmatpush1.bf16.msra.mxu0 %v1374
          %1934 = vmatprep.subr.bf16.mxu0 %v1381
          %1935 = vmatpush1.bf16.msra.mxu0 %v1380
          %1936 = vmatprep.subr.bf16.mxu0 %v1387
          %1937 = vmatpush1.bf16.msra.mxu0 %v1386
          %1938 = vmatprep.subr.bf16.mxu0 %v1393
          %1939 = vmatpush1.bf16.msra.mxu0 %v1392
          %1940 = vmatprep.subr.bf16.mxu0 %v1399
          %1941 = vmatpush1.bf16.msra.mxu0 %v1398
          %1942 = vmatprep.subr.bf16.mxu0 %v1405
          %1943 = vmatpush1.bf16.msra.mxu0 %v1404
          %1944 = vmatprep.subr.bf16.mxu0 %v1411
          %1945 = vmatpush1.bf16.msra.mxu0 %v1410
          %1946 = vmatprep.subr.bf16.mxu0 %v1417
          %1947 = vmatpush1.bf16.msra.mxu0 %v1416
          %1948 = vmatprep.subr.bf16.mxu0 %v1423
          %1949 = vmatpush1.bf16.msra.mxu0 %v1422
          %1950 = vmatprep.subr.bf16.mxu0 %v1429
          %1951 = vmatpush1.bf16.msra.mxu0 %v1428
          %1952 = vmatprep.subr.bf16.mxu0 %v1435
          %1953 = vmatpush1.bf16.msra.mxu0 %v1434
          %1954 = vmatprep.subr.bf16.mxu0 %v1441
          %1955 = vmatpush1.bf16.msra.mxu0 %v1440
          %1956 = vmatprep.mubr.bf16.mxu0 %v931
          %1957 = vmatmul.mubr.bf16.gmra.mrb[0].mxu0 %v930
          %v1958 = vpop.f32.mrb[0].mxu0
          %v1959 = vadd.f32 0.0, %v1958
          %v1960 = vpop.f32.mrb[0].mxu0
          %v1961 = vadd.f32 0.0, %v1960
          %v1962 = vpop.f32.mrb[0].mxu0
          %v1963 = vadd.f32 0.0, %v1962
          %v1964 = vpop.f32.mrb[0].mxu0
          %v1965 = vadd.f32 0.0, %v1964
          %1966 = vmatprep.mubr.bf16.mxu0 %v933
          %1967 = vmatmul.mubr.bf16.gmra.mrb[0].mxu0 %v932
          %v1968 = vpop.f32.mrb[0].mxu0
          %v1969 = vadd.f32 0.0, %v1968
          %v1970 = vpop.f32.mrb[0].mxu0
          %v1971 = vadd.f32 0.0, %v1970
          %v1972 = vpop.f32.mrb[0].mxu0
          %v1973 = vadd.f32 0.0, %v1972
          %v1974 = vpop.f32.mrb[0].mxu0
          %v1975 = vadd.f32 0.0, %v1974
          %1976 = vmatprep.mubr.bf16.mxu0 %v935
          %1977 = vmatmul.mubr.bf16.gmra.mrb[0].mxu0 %v934
          %v1978 = vpop.f32.mrb[0].mxu0
          %v1979 = vadd.f32 0.0, %v1978
          %v1980 = vpop.f32.mrb[0].mxu0
          %v1981 = vadd.f32 0.0, %v1980
          %v1982 = vpop.f32.mrb[0].mxu0
          %v1983 = vadd.f32 0.0, %v1982
          %v1984 = vpop.f32.mrb[0].mxu0
          %v1985 = vadd.f32 0.0, %v1984
          %1986 = vmatprep.mubr.bf16.mxu0 %v937
          %1987 = vmatmul.mubr.bf16.gmra.mrb[0].mxu0 %v936
          %v1988 = vpop.f32.mrb[0].mxu0
          %v1989 = vadd.f32 0.0, %v1988
          %v1990 = vpop.f32.mrb[0].mxu0
          %v1991 = vadd.f32 0.0, %v1990
          %v1992 = vpop.f32.mrb[0].mxu0
          %v1993 = vadd.f32 0.0, %v1992
          %v1994 = vpop.f32.mrb[0].mxu0
          %v1995 = vadd.f32 0.0, %v1994
          %1996 = vmatprep.mubr.bf16.mxu0 %v939
          %1997 = vmatmul.mubr.bf16.gmra.mrb[0].mxu0 %v938
          %v1998 = vpop.f32.mrb[0].mxu0
          %v1999 = vadd.f32 0.0, %v1998
          %v2000 = vpop.f32.mrb[0].mxu0
          %v2001 = vadd.f32 0.0, %v2000
          %v2002 = vpop.f32.mrb[0].mxu0
          %v2003 = vadd.f32 0.0, %v2002
          %v2004 = vpop.f32.mrb[0].mxu0
          %v2005 = vadd.f32 0.0, %v2004
          %2006 = vmatprep.mubr.bf16.mxu0 %v941
          %2007 = vmatmul.mubr.bf16.gmra.mrb[0].mxu0 %v940
          %v2008 = vpop.f32.mrb[0].mxu0
          %v2009 = vadd.f32 0.0, %v2008
          %v2010 = vpop.f32.mrb[0].mxu0
          %v2011 = vadd.f32 0.0, %v2010
          %v2012 = vpop.f32.mrb[0].mxu0
          %v2013 = vadd.f32 0.0, %v2012
          %v2014 = vpop.f32.mrb[0].mxu0
          %v2015 = vadd.f32 0.0, %v2014
          %2016 = vmatprep.mubr.bf16.mxu0 %v943
          %2017 = vmatmul.mubr.bf16.gmra.mrb[0].mxu0 %v942
          %v2018 = vpop.f32.mrb[0].mxu0
          %v2019 = vadd.f32 0.0, %v2018
          %v2020 = vpop.f32.mrb[0].mxu0
          %v2021 = vadd.f32 0.0, %v2020
          %v2022 = vpop.f32.mrb[0].mxu0
          %v2023 = vadd.f32 0.0, %v2022
          %v2024 = vpop.f32.mrb[0].mxu0
          %v2025 = vadd.f32 0.0, %v2024
          %2026 = vmatprep.mubr.bf16.mxu0 %v945
          %2027 = vmatmul.mubr.bf16.gmra.mrb[0].mxu0 %v944
          %v2028 = vpop.f32.mrb[0].mxu0
          %v2029 = vadd.f32 0.0, %v2028
          %v2030 = vpop.f32.mrb[0].mxu0
          %v2031 = vadd.f32 0.0, %v2030
          %v2032 = vpop.f32.mrb[0].mxu0
          %v2033 = vadd.f32 0.0, %v2032
          %v2034 = vpop.f32.mrb[0].mxu0
          %v2035 = vadd.f32 0.0, %v2034
          %2036 = vmatprep.mubr.bf16.mxu0 %v947
          %2037 = vmatmul.mubr.bf16.gmra.mrb[0].mxu0 %v946
          %v2038 = vpop.f32.mrb[0].mxu0
          %v2039 = vadd.f32 0.0, %v2038
          %v2040 = vpop.f32.mrb[0].mxu0
          %v2041 = vadd.f32 0.0, %v2040
          %v2042 = vpop.f32.mrb[0].mxu0
          %v2043 = vadd.f32 0.0, %v2042
          %v2044 = vpop.f32.mrb[0].mxu0
          %v2045 = vadd.f32 0.0, %v2044
          %2046 = vmatprep.mubr.bf16.mxu0 %v949
          %2047 = vmatmul.mubr.bf16.gmra.mrb[0].mxu0 %v948
          %v2048 = vpop.f32.mrb[0].mxu0
          %v2049 = vadd.f32 0.0, %v2048
          %v2050 = vpop.f32.mrb[0].mxu0
          %v2051 = vadd.f32 0.0, %v2050
          %v2052 = vpop.f32.mrb[0].mxu0
          %v2053 = vadd.f32 0.0, %v2052
          %v2054 = vpop.f32.mrb[0].mxu0
          %v2055 = vadd.f32 0.0, %v2054
          %2056 = vmatprep.mubr.bf16.mxu0 %v951
          %2057 = vmatmul.mubr.bf16.gmra.mrb[0].mxu0 %v950
          %v2058 = vpop.f32.mrb[0].mxu0
          %v2059 = vadd.f32 0.0, %v2058
          %v2060 = vpop.f32.mrb[0].mxu0
          %v2061 = vadd.f32 0.0, %v2060
          %v2062 = vpop.f32.mrb[0].mxu0
          %v2063 = vadd.f32 0.0, %v2062
          %v2064 = vpop.f32.mrb[0].mxu0
          %v2065 = vadd.f32 0.0, %v2064
          %2066 = vmatprep.mubr.bf16.mxu0 %v953
          %2067 = vmatmul.mubr.bf16.gmra.mrb[0].mxu0 %v952
          %v2068 = vpop.f32.mrb[0].mxu0
          %v2069 = vadd.f32 0.0, %v2068
          %v2070 = vpop.f32.mrb[0].mxu0
          %v2071 = vadd.f32 0.0, %v2070
          %v2072 = vpop.f32.mrb[0].mxu0
          %v2073 = vadd.f32 0.0, %v2072
          %v2074 = vpop.f32.mrb[0].mxu0
          %v2075 = vadd.f32 0.0, %v2074
          %2076 = vmatprep.mubr.bf16.mxu0 %v955
          %2077 = vmatmul.mubr.bf16.gmra.mrb[0].mxu0 %v954
          %v2078 = vpop.f32.mrb[0].mxu0
          %v2079 = vadd.f32 0.0, %v2078
          %v2080 = vpop.f32.mrb[0].mxu0
          %v2081 = vadd.f32 0.0, %v2080
          %v2082 = vpop.f32.mrb[0].mxu0
          %v2083 = vadd.f32 0.0, %v2082
          %v2084 = vpop.f32.mrb[0].mxu0
          %v2085 = vadd.f32 0.0, %v2084
          %2086 = vmatprep.mubr.bf16.mxu0 %v957
          %2087 = vmatmul.mubr.bf16.gmra.mrb[0].mxu0 %v956
          %v2088 = vpop.f32.mrb[0].mxu0
          %v2089 = vadd.f32 0.0, %v2088
          %v2090 = vpop.f32.mrb[0].mxu0
          %v2091 = vadd.f32 0.0, %v2090
          %v2092 = vpop.f32.mrb[0].mxu0
          %v2093 = vadd.f32 0.0, %v2092
          %v2094 = vpop.f32.mrb[0].mxu0
          %v2095 = vadd.f32 0.0, %v2094
          %2096 = vmatprep.mubr.bf16.mxu0 %v959
          %2097 = vmatmul.mubr.bf16.gmra.mrb[0].mxu0 %v958
          %v2098 = vpop.f32.mrb[0].mxu0
          %v2099 = vadd.f32 0.0, %v2098
          %v2100 = vpop.f32.mrb[0].mxu0
          %v2101 = vadd.f32 0.0, %v2100
          %v2102 = vpop.f32.mrb[0].mxu0
          %v2103 = vadd.f32 0.0, %v2102
          %v2104 = vpop.f32.mrb[0].mxu0
          %v2105 = vadd.f32 0.0, %v2104
          %2106 = vmatprep.mubr.bf16.mxu0 %v961
          %2107 = vmatmul.mubr.bf16.gmra.mrb[0].mxu0 %v960
          %v2108 = vpop.f32.mrb[0].mxu0
          %v2109 = vadd.f32 0.0, %v2108
          %v2110 = vpop.f32.mrb[0].mxu0
          %v2111 = vadd.f32 0.0, %v2110
          %v2112 = vpop.f32.mrb[0].mxu0
          %v2113 = vadd.f32 0.0, %v2112
          %v2114 = vpop.f32.mrb[0].mxu0
          %v2115 = vadd.f32 0.0, %v2114
          %2116 = vdwg.mxu0
          %v2117 = vpack.c.bf16 %v1577, %v1573
          %v2118 = vpack.c.bf16 %v1587, %v1583
          %v2119 = vpack.c.bf16 %v1597, %v1593
          %v2120 = vpack.c.bf16 %v1607, %v1603
          %v2121 = vpack.c.bf16 %v1617, %v1613
          %v2122 = vpack.c.bf16 %v1627, %v1623
          %v2123 = vpack.c.bf16 %v1637, %v1633
          %v2124 = vpack.c.bf16 %v1647, %v1643
          %v2125 = vpack.c.bf16 %v1657, %v1653
          %v2126 = vpack.c.bf16 %v1667, %v1663
          %v2127 = vpack.c.bf16 %v1677, %v1673
          %v2128 = vpack.c.bf16 %v1687, %v1683
          %v2129 = vpack.c.bf16 %v1697, %v1693
          %v2130 = vpack.c.bf16 %v1707, %v1703
          %v2131 = vpack.c.bf16 %v1717, %v1713
          %v2132 = vpack.c.bf16 %v1727, %v1723
          %vm2133 = vcmask 523264
          %2134 = vst.msk [vmem:[#allocation2] sm:$0xff] %vm2133, %v2117
          %2135 = vst.msk [vmem:[#allocation2 + $0x8] sm:$0xff] %vm2133, %v2118
          %2136 = vst.msk [vmem:[#allocation2 + $0x10] sm:$0xff] %vm2133, %v2119
          %2137 = vst.msk [vmem:[#allocation2 + $0x18] sm:$0xff] %vm2133, %v2120
          %2138 = vst.msk [vmem:[#allocation2 + $0x20] sm:$0xff] %vm2133, %v2121
          %2139 = vst.msk [vmem:[#allocation2 + $0x28] sm:$0xff] %vm2133, %v2122
          %2140 = vst.msk [vmem:[#allocation2 + $0x30] sm:$0xff] %vm2133, %v2123
          %2141 = vst.msk [vmem:[#allocation2 + $0x38] sm:$0xff] %vm2133, %v2124
          %2142 = vst.msk [vmem:[#allocation2 + $0x40] sm:$0xff] %vm2133, %v2125
          %2143 = vst.msk [vmem:[#allocation2 + $0x48] sm:$0xff] %vm2133, %v2126
          %2144 = vst.msk [vmem:[#allocation2 + $0x50] sm:$0xff] %vm2133, %v2127
          %2145 = vst.msk [vmem:[#allocation2 + $0x58] sm:$0xff] %vm2133, %v2128
          %2146 = vst.msk [vmem:[#allocation2 + $0x60] sm:$0xff] %vm2133, %v2129
          %2147 = vst.msk [vmem:[#allocation2 + $0x68] sm:$0xff] %vm2133, %v2130
          %2148 = vst.msk [vmem:[#allocation2 + $0x70] sm:$0xff] %vm2133, %v2131
          %2149 = vst.msk [vmem:[#allocation2 + $0x78] sm:$0xff] %vm2133, %v2132
          %2150 = vxpose.xlu0.b32.start [1/16] %v1766, 128
          %2151 = vxpose.xlu0.b32.cont [2/16] %v1770, 128
          %2152 = vxpose.xlu0.b32.cont [3/16] %v1776, 128
          %2153 = vxpose.xlu0.b32.cont [4/16] %v1780, 128
          %2154 = vxpose.xlu0.b32.cont [5/16] %v1786, 128
          %2155 = vxpose.xlu0.b32.cont [6/16] %v1790, 128
          %2156 = vxpose.xlu0.b32.cont [7/16] %v1796, 128
          %2157 = vxpose.xlu0.b32.cont [8/16] %v1800, 128
          %2158 = vxpose.xlu0.b32.cont [9/16] %v1806, 128
          %2159 = vxpose.xlu0.b32.cont [10/16] %v1810, 128
          %2160 = vxpose.xlu0.b32.cont [11/16] %v1816, 128
          %2161 = vxpose.xlu0.b32.cont [12/16] %v1820, 128
          %2162 = vxpose.xlu0.b32.cont [13/16] %v1826, 128
          %2163 = vxpose.xlu0.b32.cont [14/16] %v1830, 128
          %2164 = vxpose.xlu0.b32.cont [15/16] %v1836, 128
          %2165 = vxpose.xlu0.b32.end [16/16] %v1840, 128
          %v2166 = vpop.trf.xlu0
          %v2167 = vpop.trf.xlu0
          %v2168 = vpop.trf.xlu0
          %v2169 = vpop.trf.xlu0
          %v2170 = vpop.trf.xlu0
          %v2171 = vpop.trf.xlu0
          %v2172 = vpop.trf.xlu0
          %v2173 = vpop.trf.xlu0
          %v2174 = vpop.trf.xlu0
          %v2175 = vpop.trf.xlu0
          %v2176 = vpop.trf.xlu0
          %v2177 = vpop.trf.xlu0
          %v2178 = vpop.trf.xlu0
          %v2179 = vpop.trf.xlu0
          %v2180 = vpop.trf.xlu0
          %v2181 = vpop.trf.xlu0
          %2182 = vxpose.xlu0.b32.start [1/16] %v1846, 128
          %2183 = vxpose.xlu0.b32.cont [2/16] %v1850, 128
          %2184 = vxpose.xlu0.b32.cont [3/16] %v1856, 128
          %2185 = vxpose.xlu0.b32.cont [4/16] %v1860, 128
          %2186 = vxpose.xlu0.b32.cont [5/16] %v1866, 128
          %2187 = vxpose.xlu0.b32.cont [6/16] %v1870, 128
          %2188 = vxpose.xlu0.b32.cont [7/16] %v1876, 128
          %2189 = vxpose.xlu0.b32.cont [8/16] %v1880, 128
          %2190 = vxpose.xlu0.b32.cont [9/16] %v1886, 128
          %2191 = vxpose.xlu0.b32.cont [10/16] %v1890, 128
          %2192 = vxpose.xlu0.b32.cont [11/16] %v1896, 128
          %2193 = vxpose.xlu0.b32.cont [12/16] %v1900, 128
          %2194 = vxpose.xlu0.b32.cont [13/16] %v1906, 128
          %2195 = vxpose.xlu0.b32.cont [14/16] %v1910, 128
          %2196 = vxpose.xlu0.b32.cont [15/16] %v1916, 128
          %2197 = vxpose.xlu0.b32.end [16/16] %v1920, 128
          %v2198 = vpop.trf.xlu0
          %v2199 = vpop.trf.xlu0
          %v2200 = vpop.trf.xlu0
          %v2201 = vpop.trf.xlu0
          %v2202 = vpop.trf.xlu0
          %v2203 = vpop.trf.xlu0
          %v2204 = vpop.trf.xlu0
          %v2205 = vpop.trf.xlu0
          %v2206 = vpop.trf.xlu0
          %v2207 = vpop.trf.xlu0
          %v2208 = vpop.trf.xlu0
          %v2209 = vpop.trf.xlu0
          %v2210 = vpop.trf.xlu0
          %v2211 = vpop.trf.xlu0
          %v2212 = vpop.trf.xlu0
          %v2213 = vpop.trf.xlu0
          %v2214 = vpack.c.bf16 %v2167, %v2166
          %v2215 = vpack.c.bf16 %v2199, %v2198
          %v2216 = vpack.c.bf16 %v2169, %v2168
          %v2217 = vpack.c.bf16 %v2201, %v2200
          %v2218 = vpack.c.bf16 %v2171, %v2170
          %v2219 = vpack.c.bf16 %v2203, %v2202
          %v2220 = vpack.c.bf16 %v2173, %v2172
          %v2221 = vpack.c.bf16 %v2205, %v2204
          %2222 = vst [vmem:[#allocation3] sm:$0xff] %v2214
          %2223 = vst [vmem:[#allocation3 + $0x8] sm:$0xff] %v2215
          %2224 = vst [vmem:[#allocation3 + $0x10] sm:$0xff] %v2216
          %2225 = vst [vmem:[#allocation3 + $0x18] sm:$0xff] %v2217
          %2226 = vst [vmem:[#allocation3 + $0x20] sm:$0xff] %v2218
          %2227 = vst [vmem:[#allocation3 + $0x28] sm:$0xff] %v2219
          %2228 = vst [vmem:[#allocation3 + $0x30] sm:$0xff] %v2220
          %2229 = vst [vmem:[#allocation3 + $0x38] sm:$0xff] %v2221
          %v2230 = vpack.c.bf16 %v1963, %v1959
          %v2231 = vpack.c.bf16 %v1973, %v1969
          %v2232 = vpack.c.bf16 %v1983, %v1979
          %v2233 = vpack.c.bf16 %v1993, %v1989
          %v2234 = vpack.c.bf16 %v2003, %v1999
          %v2235 = vpack.c.bf16 %v2013, %v2009
          %v2236 = vpack.c.bf16 %v2023, %v2019
          %v2237 = vpack.c.bf16 %v2033, %v2029
          %v2238 = vpack.c.bf16 %v2043, %v2039
          %v2239 = vpack.c.bf16 %v2053, %v2049
          %v2240 = vpack.c.bf16 %v2063, %v2059
          %v2241 = vpack.c.bf16 %v2073, %v2069
          %v2242 = vpack.c.bf16 %v2083, %v2079
          %v2243 = vpack.c.bf16 %v2093, %v2089
          %v2244 = vpack.c.bf16 %v2103, %v2099
          %v2245 = vpack.c.bf16 %v2113, %v2109
          %2246 = vst.msk [vmem:[#allocation4] sm:$0xff] %vm2133, %v2230
          %2247 = vst.msk [vmem:[#allocation4 + $0x8] sm:$0xff] %vm2133, %v2231
          %2248 = vst.msk [vmem:[#allocation4 + $0x10] sm:$0xff] %vm2133, %v2232
          %2249 = vst.msk [vmem:[#allocation4 + $0x18] sm:$0xff] %vm2133, %v2233
          %2250 = vst.msk [vmem:[#allocation4 + $0x20] sm:$0xff] %vm2133, %v2234
          %2251 = vst.msk [vmem:[#allocation4 + $0x28] sm:$0xff] %vm2133, %v2235
          %2252 = vst.msk [vmem:[#allocation4 + $0x30] sm:$0xff] %vm2133, %v2236
          %2253 = vst.msk [vmem:[#allocation4 + $0x38] sm:$0xff] %vm2133, %v2237
          %2254 = vst.msk [vmem:[#allocation4 + $0x40] sm:$0xff] %vm2133, %v2238
          %2255 = vst.msk [vmem:[#allocation4 + $0x48] sm:$0xff] %vm2133, %v2239
          %2256 = vst.msk [vmem:[#allocation4 + $0x50] sm:$0xff] %vm2133, %v2240
          %2257 = vst.msk [vmem:[#allocation4 + $0x58] sm:$0xff] %vm2133, %v2241
          %2258 = vst.msk [vmem:[#allocation4 + $0x60] sm:$0xff] %vm2133, %v2242
          %2259 = vst.msk [vmem:[#allocation4 + $0x68] sm:$0xff] %vm2133, %v2243
          %2260 = vst.msk [vmem:[#allocation4 + $0x70] sm:$0xff] %vm2133, %v2244
          %2261 = vst.msk [vmem:[#allocation4 + $0x78] sm:$0xff] %vm2133, %v2245
          %2278 = vrot.lane.b32.xlu0 %v2117, 64
          %v2279 = vpop.permute.xlu0 %2278
          %2280 = vrot.lane.b32.xlu0 %v2118, 64
          %v2281 = vpop.permute.xlu0 %2280
          %2282 = vrot.lane.b32.xlu0 %v2119, 64
          %v2283 = vpop.permute.xlu0 %2282
          %2284 = vrot.lane.b32.xlu0 %v2120, 64
          %v2285 = vpop.permute.xlu0 %2284
          %2286 = vrot.lane.b32.xlu0 %v2121, 64
          %v2287 = vpop.permute.xlu0 %2286
          %2288 = vrot.lane.b32.xlu0 %v2122, 64
          %v2289 = vpop.permute.xlu0 %2288
          %2290 = vrot.lane.b32.xlu0 %v2123, 64
          %v2291 = vpop.permute.xlu0 %2290
          %2292 = vrot.lane.b32.xlu0 %v2124, 64
          %v2293 = vpop.permute.xlu0 %2292
          %2294 = vrot.lane.b32.xlu0 %v2125, 64
          %v2295 = vpop.permute.xlu0 %2294
          %2296 = vrot.lane.b32.xlu0 %v2126, 64
          %v2297 = vpop.permute.xlu0 %2296
          %2298 = vrot.lane.b32.xlu0 %v2127, 64
          %v2299 = vpop.permute.xlu0 %2298
          %2300 = vrot.lane.b32.xlu0 %v2128, 64
          %v2301 = vpop.permute.xlu0 %2300
          %2302 = vrot.lane.b32.xlu0 %v2129, 64
          %v2303 = vpop.permute.xlu0 %2302
          %2304 = vrot.lane.b32.xlu0 %v2130, 64
          %v2305 = vpop.permute.xlu0 %2304
          %2306 = vrot.lane.b32.xlu0 %v2131, 64
          %v2307 = vpop.permute.xlu0 %2306
          %2308 = vrot.lane.b32.xlu0 %v2132, 64
          %v2309 = vpop.permute.xlu0 %2308
          %s2326 = scalar_lea.vmem [#allocation2], 128
          %2327 = vst.msk [vmem:[%s2326] sm:$0xff] %vm2133, %v2279
          %2328 = vst.msk [vmem:[%s2326 + $0x8] sm:$0xff] %vm2133, %v2281
          %2329 = vst.msk [vmem:[%s2326 + $0x10] sm:$0xff] %vm2133, %v2283
          %2330 = vst.msk [vmem:[%s2326 + $0x18] sm:$0xff] %vm2133, %v2285
          %2331 = vst.msk [vmem:[%s2326 + $0x20] sm:$0xff] %vm2133, %v2287
          %2332 = vst.msk [vmem:[%s2326 + $0x28] sm:$0xff] %vm2133, %v2289
          %2333 = vst.msk [vmem:[%s2326 + $0x30] sm:$0xff] %vm2133, %v2291
          %2334 = vst.msk [vmem:[%s2326 + $0x38] sm:$0xff] %vm2133, %v2293
          %2335 = vst.msk [vmem:[%s2326 + $0x40] sm:$0xff] %vm2133, %v2295
          %2336 = vst.msk [vmem:[%s2326 + $0x48] sm:$0xff] %vm2133, %v2297
          %2337 = vst.msk [vmem:[%s2326 + $0x50] sm:$0xff] %vm2133, %v2299
          %2338 = vst.msk [vmem:[%s2326 + $0x58] sm:$0xff] %vm2133, %v2301
          %2339 = vst.msk [vmem:[%s2326 + $0x60] sm:$0xff] %vm2133, %v2303
          %2340 = vst.msk [vmem:[%s2326 + $0x68] sm:$0xff] %vm2133, %v2305
          %2341 = vst.msk [vmem:[%s2326 + $0x70] sm:$0xff] %vm2133, %v2307
          %2342 = vst.msk [vmem:[%s2326 + $0x78] sm:$0xff] %vm2133, %v2309
          %2375 = vrot.lane.b32.xlu0 %v1766, 64
          %v2376 = vpop.permute.xlu0 %2375
          %2377 = vrot.lane.b32.xlu0 %v1770, 64
          %v2378 = vpop.permute.xlu0 %2377
          %2379 = vrot.lane.b32.xlu0 %v1776, 64
          %v2380 = vpop.permute.xlu0 %2379
          %2381 = vrot.lane.b32.xlu0 %v1780, 64
          %v2382 = vpop.permute.xlu0 %2381
          %2383 = vrot.lane.b32.xlu0 %v1786, 64
          %v2384 = vpop.permute.xlu0 %2383
          %2385 = vrot.lane.b32.xlu0 %v1790, 64
          %v2386 = vpop.permute.xlu0 %2385
          %2387 = vrot.lane.b32.xlu0 %v1796, 64
          %v2388 = vpop.permute.xlu0 %2387
          %2389 = vrot.lane.b32.xlu0 %v1800, 64
          %v2390 = vpop.permute.xlu0 %2389
          %2391 = vrot.lane.b32.xlu0 %v1806, 64
          %v2392 = vpop.permute.xlu0 %2391
          %2393 = vrot.lane.b32.xlu0 %v1810, 64
          %v2394 = vpop.permute.xlu0 %2393
          %2395 = vrot.lane.b32.xlu0 %v1816, 64
          %v2396 = vpop.permute.xlu0 %2395
          %2397 = vrot.lane.b32.xlu0 %v1820, 64
          %v2398 = vpop.permute.xlu0 %2397
          %2399 = vrot.lane.b32.xlu0 %v1826, 64
          %v2400 = vpop.permute.xlu0 %2399
          %2401 = vrot.lane.b32.xlu0 %v1830, 64
          %v2402 = vpop.permute.xlu0 %2401
          %2403 = vrot.lane.b32.xlu0 %v1836, 64
          %v2404 = vpop.permute.xlu0 %2403
          %2405 = vrot.lane.b32.xlu0 %v1840, 64
          %v2406 = vpop.permute.xlu0 %2405
          %2407 = vrot.lane.b32.xlu0 %v1846, 64
          %v2408 = vpop.permute.xlu0 %2407
          %2409 = vrot.lane.b32.xlu0 %v1850, 64
          %v2410 = vpop.permute.xlu0 %2409
          %2411 = vrot.lane.b32.xlu0 %v1856, 64
          %v2412 = vpop.permute.xlu0 %2411
          %2413 = vrot.lane.b32.xlu0 %v1860, 64
          %v2414 = vpop.permute.xlu0 %2413
          %2415 = vrot.lane.b32.xlu0 %v1866, 64
          %v2416 = vpop.permute.xlu0 %2415
          %2417 = vrot.lane.b32.xlu0 %v1870, 64
          %v2418 = vpop.permute.xlu0 %2417
          %2419 = vrot.lane.b32.xlu0 %v1876, 64
          %v2420 = vpop.permute.xlu0 %2419
          %2421 = vrot.lane.b32.xlu0 %v1880, 64
          %v2422 = vpop.permute.xlu0 %2421
          %2423 = vrot.lane.b32.xlu0 %v1886, 64
          %v2424 = vpop.permute.xlu0 %2423
          %2425 = vrot.lane.b32.xlu0 %v1890, 64
          %v2426 = vpop.permute.xlu0 %2425
          %2427 = vrot.lane.b32.xlu0 %v1896, 64
          %v2428 = vpop.permute.xlu0 %2427
          %2429 = vrot.lane.b32.xlu0 %v1900, 64
          %v2430 = vpop.permute.xlu0 %2429
          %2431 = vrot.lane.b32.xlu0 %v1906, 64
          %v2432 = vpop.permute.xlu0 %2431
          %2433 = vrot.lane.b32.xlu0 %v1910, 64
          %v2434 = vpop.permute.xlu0 %2433
          %2435 = vrot.lane.b32.xlu0 %v1916, 64
          %v2436 = vpop.permute.xlu0 %2435
          %2437 = vrot.lane.b32.xlu0 %v1920, 64
          %v2438 = vpop.permute.xlu0 %2437
          %2471 = vxpose.xlu0.b32.start [1/16] %v2376, 128
          %2472 = vxpose.xlu0.b32.cont [2/16] %v2378, 128
          %2473 = vxpose.xlu0.b32.cont [3/16] %v2380, 128
          %2474 = vxpose.xlu0.b32.cont [4/16] %v2382, 128
          %2475 = vxpose.xlu0.b32.cont [5/16] %v2384, 128
          %2476 = vxpose.xlu0.b32.cont [6/16] %v2386, 128
          %2477 = vxpose.xlu0.b32.cont [7/16] %v2388, 128
          %2478 = vxpose.xlu0.b32.cont [8/16] %v2390, 128
          %2479 = vxpose.xlu0.b32.cont [9/16] %v2392, 128
          %2480 = vxpose.xlu0.b32.cont [10/16] %v2394, 128
          %2481 = vxpose.xlu0.b32.cont [11/16] %v2396, 128
          %2482 = vxpose.xlu0.b32.cont [12/16] %v2398, 128
          %2483 = vxpose.xlu0.b32.cont [13/16] %v2400, 128
          %2484 = vxpose.xlu0.b32.cont [14/16] %v2402, 128
          %2485 = vxpose.xlu0.b32.cont [15/16] %v2404, 128
          %2486 = vxpose.xlu0.b32.end [16/16] %v2406, 128
          %v2487 = vpop.trf.xlu0
          %v2488 = vpop.trf.xlu0
          %v2489 = vpop.trf.xlu0
          %v2490 = vpop.trf.xlu0
          %v2491 = vpop.trf.xlu0
          %v2492 = vpop.trf.xlu0
          %v2493 = vpop.trf.xlu0
          %v2494 = vpop.trf.xlu0
          %v2495 = vpop.trf.xlu0
          %v2496 = vpop.trf.xlu0
          %v2497 = vpop.trf.xlu0
          %v2498 = vpop.trf.xlu0
          %v2499 = vpop.trf.xlu0
          %v2500 = vpop.trf.xlu0
          %v2501 = vpop.trf.xlu0
          %v2502 = vpop.trf.xlu0
          %2503 = vxpose.xlu0.b32.start [1/16] %v2408, 128
          %2504 = vxpose.xlu0.b32.cont [2/16] %v2410, 128
          %2505 = vxpose.xlu0.b32.cont [3/16] %v2412, 128
          %2506 = vxpose.xlu0.b32.cont [4/16] %v2414, 128
          %2507 = vxpose.xlu0.b32.cont [5/16] %v2416, 128
          %2508 = vxpose.xlu0.b32.cont [6/16] %v2418, 128
          %2509 = vxpose.xlu0.b32.cont [7/16] %v2420, 128
          %2510 = vxpose.xlu0.b32.cont [8/16] %v2422, 128
          %2511 = vxpose.xlu0.b32.cont [9/16] %v2424, 128
          %2512 = vxpose.xlu0.b32.cont [10/16] %v2426, 128
          %2513 = vxpose.xlu0.b32.cont [11/16] %v2428, 128
          %2514 = vxpose.xlu0.b32.cont [12/16] %v2430, 128
          %2515 = vxpose.xlu0.b32.cont [13/16] %v2432, 128
          %2516 = vxpose.xlu0.b32.cont [14/16] %v2434, 128
          %2517 = vxpose.xlu0.b32.cont [15/16] %v2436, 128
          %2518 = vxpose.xlu0.b32.end [16/16] %v2438, 128
          %v2519 = vpop.trf.xlu0
          %v2520 = vpop.trf.xlu0
          %v2521 = vpop.trf.xlu0
          %v2522 = vpop.trf.xlu0
          %v2523 = vpop.trf.xlu0
          %v2524 = vpop.trf.xlu0
          %v2525 = vpop.trf.xlu0
          %v2526 = vpop.trf.xlu0
          %v2527 = vpop.trf.xlu0
          %v2528 = vpop.trf.xlu0
          %v2529 = vpop.trf.xlu0
          %v2530 = vpop.trf.xlu0
          %v2531 = vpop.trf.xlu0
          %v2532 = vpop.trf.xlu0
          %v2533 = vpop.trf.xlu0
          %v2534 = vpop.trf.xlu0
          %v2535 = vpack.c.bf16 %v2488, %v2487
          %v2536 = vpack.c.bf16 %v2520, %v2519
          %v2537 = vpack.c.bf16 %v2490, %v2489
          %v2538 = vpack.c.bf16 %v2522, %v2521
          %v2539 = vpack.c.bf16 %v2492, %v2491
          %v2540 = vpack.c.bf16 %v2524, %v2523
          %v2541 = vpack.c.bf16 %v2494, %v2493
          %v2542 = vpack.c.bf16 %v2526, %v2525
          %s2543 = scalar_lea.vmem [#allocation3], 64
          %2544 = vst [vmem:[%s2543] sm:$0xff] %v2535
          %2545 = vst [vmem:[%s2543 + $0x8] sm:$0xff] %v2536
          %2546 = vst [vmem:[%s2543 + $0x10] sm:$0xff] %v2537
          %2547 = vst [vmem:[%s2543 + $0x18] sm:$0xff] %v2538
          %2548 = vst [vmem:[%s2543 + $0x20] sm:$0xff] %v2539
          %2549 = vst [vmem:[%s2543 + $0x28] sm:$0xff] %v2540
          %2550 = vst [vmem:[%s2543 + $0x30] sm:$0xff] %v2541
          %2551 = vst [vmem:[%s2543 + $0x38] sm:$0xff] %v2542
          %2568 = vrot.lane.b32.xlu0 %v2230, 64
          %v2569 = vpop.permute.xlu0 %2568
          %2570 = vrot.lane.b32.xlu0 %v2231, 64
          %v2571 = vpop.permute.xlu0 %2570
          %2572 = vrot.lane.b32.xlu0 %v2232, 64
          %v2573 = vpop.permute.xlu0 %2572
          %2574 = vrot.lane.b32.xlu0 %v2233, 64
          %v2575 = vpop.permute.xlu0 %2574
          %2576 = vrot.lane.b32.xlu0 %v2234, 64
          %v2577 = vpop.permute.xlu0 %2576
          %2578 = vrot.lane.b32.xlu0 %v2235, 64
          %v2579 = vpop.permute.xlu0 %2578
          %2580 = vrot.lane.b32.xlu0 %v2236, 64
          %v2581 = vpop.permute.xlu0 %2580
          %2582 = vrot.lane.b32.xlu0 %v2237, 64
          %v2583 = vpop.permute.xlu0 %2582
          %2584 = vrot.lane.b32.xlu0 %v2238, 64
          %v2585 = vpop.permute.xlu0 %2584
          %2586 = vrot.lane.b32.xlu0 %v2239, 64
          %v2587 = vpop.permute.xlu0 %2586
          %2588 = vrot.lane.b32.xlu0 %v2240, 64
          %v2589 = vpop.permute.xlu0 %2588
          %2590 = vrot.lane.b32.xlu0 %v2241, 64
          %v2591 = vpop.permute.xlu0 %2590
          %2592 = vrot.lane.b32.xlu0 %v2242, 64
          %v2593 = vpop.permute.xlu0 %2592
          %2594 = vrot.lane.b32.xlu0 %v2243, 64
          %v2595 = vpop.permute.xlu0 %2594
          %2596 = vrot.lane.b32.xlu0 %v2244, 64
          %v2597 = vpop.permute.xlu0 %2596
          %2598 = vrot.lane.b32.xlu0 %v2245, 64
          %v2599 = vpop.permute.xlu0 %2598
          %s2616 = scalar_lea.vmem [#allocation4], 128
          %2617 = vst.msk [vmem:[%s2616] sm:$0xff] %vm2133, %v2569
          %2618 = vst.msk [vmem:[%s2616 + $0x8] sm:$0xff] %vm2133, %v2571
          %2619 = vst.msk [vmem:[%s2616 + $0x10] sm:$0xff] %vm2133, %v2573
          %2620 = vst.msk [vmem:[%s2616 + $0x18] sm:$0xff] %vm2133, %v2575
          %2621 = vst.msk [vmem:[%s2616 + $0x20] sm:$0xff] %vm2133, %v2577
          %2622 = vst.msk [vmem:[%s2616 + $0x28] sm:$0xff] %vm2133, %v2579
          %2623 = vst.msk [vmem:[%s2616 + $0x30] sm:$0xff] %vm2133, %v2581
          %2624 = vst.msk [vmem:[%s2616 + $0x38] sm:$0xff] %vm2133, %v2583
          %2625 = vst.msk [vmem:[%s2616 + $0x40] sm:$0xff] %vm2133, %v2585
          %2626 = vst.msk [vmem:[%s2616 + $0x48] sm:$0xff] %vm2133, %v2587
          %2627 = vst.msk [vmem:[%s2616 + $0x50] sm:$0xff] %vm2133, %v2589
          %2628 = vst.msk [vmem:[%s2616 + $0x58] sm:$0xff] %vm2133, %v2591
          %2629 = vst.msk [vmem:[%s2616 + $0x60] sm:$0xff] %vm2133, %v2593
          %2630 = vst.msk [vmem:[%s2616 + $0x68] sm:$0xff] %vm2133, %v2595
          %2631 = vst.msk [vmem:[%s2616 + $0x70] sm:$0xff] %vm2133, %v2597
          %2632 = vst.msk [vmem:[%s2616 + $0x78] sm:$0xff] %vm2133, %v2599
          %v2633 = vpack.c.bf16 %v1579, %v1575
          %v2634 = vpack.c.bf16 %v1589, %v1585
          %v2635 = vpack.c.bf16 %v1599, %v1595
          %v2636 = vpack.c.bf16 %v1609, %v1605
          %v2637 = vpack.c.bf16 %v1619, %v1615
          %v2638 = vpack.c.bf16 %v1629, %v1625
          %v2639 = vpack.c.bf16 %v1639, %v1635
          %v2640 = vpack.c.bf16 %v1649, %v1645
          %v2641 = vpack.c.bf16 %v1659, %v1655
          %v2642 = vpack.c.bf16 %v1669, %v1665
          %v2643 = vpack.c.bf16 %v1679, %v1675
          %v2644 = vpack.c.bf16 %v1689, %v1685
          %v2645 = vpack.c.bf16 %v1699, %v1695
          %v2646 = vpack.c.bf16 %v1709, %v1705
          %v2647 = vpack.c.bf16 %v1719, %v1715
          %v2648 = vpack.c.bf16 %v1729, %v1725
          %s2649 = scalar_lea.vmem [#allocation2], 256
          %2650 = vst.msk [vmem:[%s2649] sm:$0xff] %vm2133, %v2633
          %2651 = vst.msk [vmem:[%s2649 + $0x8] sm:$0xff] %vm2133, %v2634
          %2652 = vst.msk [vmem:[%s2649 + $0x10] sm:$0xff] %vm2133, %v2635
          %2653 = vst.msk [vmem:[%s2649 + $0x18] sm:$0xff] %vm2133, %v2636
          %2654 = vst.msk [vmem:[%s2649 + $0x20] sm:$0xff] %vm2133, %v2637
          %2655 = vst.msk [vmem:[%s2649 + $0x28] sm:$0xff] %vm2133, %v2638
          %2656 = vst.msk [vmem:[%s2649 + $0x30] sm:$0xff] %vm2133, %v2639
          %2657 = vst.msk [vmem:[%s2649 + $0x38] sm:$0xff] %vm2133, %v2640
          %2658 = vst.msk [vmem:[%s2649 + $0x40] sm:$0xff] %vm2133, %v2641
          %2659 = vst.msk [vmem:[%s2649 + $0x48] sm:$0xff] %vm2133, %v2642
          %2660 = vst.msk [vmem:[%s2649 + $0x50] sm:$0xff] %vm2133, %v2643
          %2661 = vst.msk [vmem:[%s2649 + $0x58] sm:$0xff] %vm2133, %v2644
          %2662 = vst.msk [vmem:[%s2649 + $0x60] sm:$0xff] %vm2133, %v2645
          %2663 = vst.msk [vmem:[%s2649 + $0x68] sm:$0xff] %vm2133, %v2646
          %2664 = vst.msk [vmem:[%s2649 + $0x70] sm:$0xff] %vm2133, %v2647
          %2665 = vst.msk [vmem:[%s2649 + $0x78] sm:$0xff] %vm2133, %v2648
          %2666 = vxpose.xlu0.b32.start [1/16] %v1768, 128
          %2667 = vxpose.xlu0.b32.cont [2/16] %v1772, 128
          %2668 = vxpose.xlu0.b32.cont [3/16] %v1778, 128
          %2669 = vxpose.xlu0.b32.cont [4/16] %v1782, 128
          %2670 = vxpose.xlu0.b32.cont [5/16] %v1788, 128
          %2671 = vxpose.xlu0.b32.cont [6/16] %v1792, 128
          %2672 = vxpose.xlu0.b32.cont [7/16] %v1798, 128
          %2673 = vxpose.xlu0.b32.cont [8/16] %v1802, 128
          %2674 = vxpose.xlu0.b32.cont [9/16] %v1808, 128
          %2675 = vxpose.xlu0.b32.cont [10/16] %v1812, 128
          %2676 = vxpose.xlu0.b32.cont [11/16] %v1818, 128
          %2677 = vxpose.xlu0.b32.cont [12/16] %v1822, 128
          %2678 = vxpose.xlu0.b32.cont [13/16] %v1828, 128
          %2679 = vxpose.xlu0.b32.cont [14/16] %v1832, 128
          %2680 = vxpose.xlu0.b32.cont [15/16] %v1838, 128
          %2681 = vxpose.xlu0.b32.end [16/16] %v1842, 128
          %v2682 = vpop.trf.xlu0
          %v2683 = vpop.trf.xlu0
          %v2684 = vpop.trf.xlu0
          %v2685 = vpop.trf.xlu0
          %v2686 = vpop.trf.xlu0
          %v2687 = vpop.trf.xlu0
          %v2688 = vpop.trf.xlu0
          %v2689 = vpop.trf.xlu0
          %v2690 = vpop.trf.xlu0
          %v2691 = vpop.trf.xlu0
          %v2692 = vpop.trf.xlu0
          %v2693 = vpop.trf.xlu0
          %v2694 = vpop.trf.xlu0
          %v2695 = vpop.trf.xlu0
          %v2696 = vpop.trf.xlu0
          %v2697 = vpop.trf.xlu0
          %2698 = vxpose.xlu0.b32.start [1/16] %v1848, 128
          %2699 = vxpose.xlu0.b32.cont [2/16] %v1852, 128
          %2700 = vxpose.xlu0.b32.cont [3/16] %v1858, 128
          %2701 = vxpose.xlu0.b32.cont [4/16] %v1862, 128
          %2702 = vxpose.xlu0.b32.cont [5/16] %v1868, 128
          %2703 = vxpose.xlu0.b32.cont [6/16] %v1872, 128
          %2704 = vxpose.xlu0.b32.cont [7/16] %v1878, 128
          %2705 = vxpose.xlu0.b32.cont [8/16] %v1882, 128
          %2706 = vxpose.xlu0.b32.cont [9/16] %v1888, 128
          %2707 = vxpose.xlu0.b32.cont [10/16] %v1892, 128
          %2708 = vxpose.xlu0.b32.cont [11/16] %v1898, 128
          %2709 = vxpose.xlu0.b32.cont [12/16] %v1902, 128
          %2710 = vxpose.xlu0.b32.cont [13/16] %v1908, 128
          %2711 = vxpose.xlu0.b32.cont [14/16] %v1912, 128
          %2712 = vxpose.xlu0.b32.cont [15/16] %v1918, 128
          %2713 = vxpose.xlu0.b32.end [16/16] %v1922, 128
          %v2714 = vpop.trf.xlu0
          %v2715 = vpop.trf.xlu0
          %v2716 = vpop.trf.xlu0
          %v2717 = vpop.trf.xlu0
          %v2718 = vpop.trf.xlu0
          %v2719 = vpop.trf.xlu0
          %v2720 = vpop.trf.xlu0
          %v2721 = vpop.trf.xlu0
          %v2722 = vpop.trf.xlu0
          %v2723 = vpop.trf.xlu0
          %v2724 = vpop.trf.xlu0
          %v2725 = vpop.trf.xlu0
          %v2726 = vpop.trf.xlu0
          %v2727 = vpop.trf.xlu0
          %v2728 = vpop.trf.xlu0
          %v2729 = vpop.trf.xlu0
          %v2730 = vpack.c.bf16 %v2683, %v2682
          %v2731 = vpack.c.bf16 %v2715, %v2714
          %v2732 = vpack.c.bf16 %v2685, %v2684
          %v2733 = vpack.c.bf16 %v2717, %v2716
          %v2734 = vpack.c.bf16 %v2687, %v2686
          %v2735 = vpack.c.bf16 %v2719, %v2718
          %v2736 = vpack.c.bf16 %v2689, %v2688
          %v2737 = vpack.c.bf16 %v2721, %v2720
          %s2738 = scalar_lea.vmem [#allocation3], 128
          %2739 = vst [vmem:[%s2738] sm:$0xff] %v2730
          %2740 = vst [vmem:[%s2738 + $0x8] sm:$0xff] %v2731
          %2741 = vst [vmem:[%s2738 + $0x10] sm:$0xff] %v2732
          %2742 = vst [vmem:[%s2738 + $0x18] sm:$0xff] %v2733
          %2743 = vst [vmem:[%s2738 + $0x20] sm:$0xff] %v2734
          %2744 = vst [vmem:[%s2738 + $0x28] sm:$0xff] %v2735
          %2745 = vst [vmem:[%s2738 + $0x30] sm:$0xff] %v2736
          %2746 = vst [vmem:[%s2738 + $0x38] sm:$0xff] %v2737
          %v2747 = vpack.c.bf16 %v1965, %v1961
          %v2748 = vpack.c.bf16 %v1975, %v1971
          %v2749 = vpack.c.bf16 %v1985, %v1981
          %v2750 = vpack.c.bf16 %v1995, %v1991
          %v2751 = vpack.c.bf16 %v2005, %v2001
          %v2752 = vpack.c.bf16 %v2015, %v2011
          %v2753 = vpack.c.bf16 %v2025, %v2021
          %v2754 = vpack.c.bf16 %v2035, %v2031
          %v2755 = vpack.c.bf16 %v2045, %v2041
          %v2756 = vpack.c.bf16 %v2055, %v2051
          %v2757 = vpack.c.bf16 %v2065, %v2061
          %v2758 = vpack.c.bf16 %v2075, %v2071
          %v2759 = vpack.c.bf16 %v2085, %v2081
          %v2760 = vpack.c.bf16 %v2095, %v2091
          %v2761 = vpack.c.bf16 %v2105, %v2101
          %v2762 = vpack.c.bf16 %v2115, %v2111
          %s2763 = scalar_lea.vmem [#allocation4], 256
          %2764 = vst.msk [vmem:[%s2763] sm:$0xff] %vm2133, %v2747
          %2765 = vst.msk [vmem:[%s2763 + $0x8] sm:$0xff] %vm2133, %v2748
          %2766 = vst.msk [vmem:[%s2763 + $0x10] sm:$0xff] %vm2133, %v2749
          %2767 = vst.msk [vmem:[%s2763 + $0x18] sm:$0xff] %vm2133, %v2750
          %2768 = vst.msk [vmem:[%s2763 + $0x20] sm:$0xff] %vm2133, %v2751
          %2769 = vst.msk [vmem:[%s2763 + $0x28] sm:$0xff] %vm2133, %v2752
          %2770 = vst.msk [vmem:[%s2763 + $0x30] sm:$0xff] %vm2133, %v2753
          %2771 = vst.msk [vmem:[%s2763 + $0x38] sm:$0xff] %vm2133, %v2754
          %2772 = vst.msk [vmem:[%s2763 + $0x40] sm:$0xff] %vm2133, %v2755
          %2773 = vst.msk [vmem:[%s2763 + $0x48] sm:$0xff] %vm2133, %v2756
          %2774 = vst.msk [vmem:[%s2763 + $0x50] sm:$0xff] %vm2133, %v2757
          %2775 = vst.msk [vmem:[%s2763 + $0x58] sm:$0xff] %vm2133, %v2758
          %2776 = vst.msk [vmem:[%s2763 + $0x60] sm:$0xff] %vm2133, %v2759
          %2777 = vst.msk [vmem:[%s2763 + $0x68] sm:$0xff] %vm2133, %v2760
          %2778 = vst.msk [vmem:[%s2763 + $0x70] sm:$0xff] %vm2133, %v2761
          %2779 = vst.msk [vmem:[%s2763 + $0x78] sm:$0xff] %vm2133, %v2762
          %2796 = vrot.lane.b32.xlu0 %v2633, 64
          %v2797 = vpop.permute.xlu0 %2796
          %2798 = vrot.lane.b32.xlu0 %v2634, 64
          %v2799 = vpop.permute.xlu0 %2798
          %2800 = vrot.lane.b32.xlu0 %v2635, 64
          %v2801 = vpop.permute.xlu0 %2800
          %2802 = vrot.lane.b32.xlu0 %v2636, 64
          %v2803 = vpop.permute.xlu0 %2802
          %2804 = vrot.lane.b32.xlu0 %v2637, 64
          %v2805 = vpop.permute.xlu0 %2804
          %2806 = vrot.lane.b32.xlu0 %v2638, 64
          %v2807 = vpop.permute.xlu0 %2806
          %2808 = vrot.lane.b32.xlu0 %v2639, 64
          %v2809 = vpop.permute.xlu0 %2808
          %2810 = vrot.lane.b32.xlu0 %v2640, 64
          %v2811 = vpop.permute.xlu0 %2810
          %2812 = vrot.lane.b32.xlu0 %v2641, 64
          %v2813 = vpop.permute.xlu0 %2812
          %2814 = vrot.lane.b32.xlu0 %v2642, 64
          %v2815 = vpop.permute.xlu0 %2814
          %2816 = vrot.lane.b32.xlu0 %v2643, 64
          %v2817 = vpop.permute.xlu0 %2816
          %2818 = vrot.lane.b32.xlu0 %v2644, 64
          %v2819 = vpop.permute.xlu0 %2818
          %2820 = vrot.lane.b32.xlu0 %v2645, 64
          %v2821 = vpop.permute.xlu0 %2820
          %2822 = vrot.lane.b32.xlu0 %v2646, 64
          %v2823 = vpop.permute.xlu0 %2822
          %2824 = vrot.lane.b32.xlu0 %v2647, 64
          %v2825 = vpop.permute.xlu0 %2824
          %2826 = vrot.lane.b32.xlu0 %v2648, 64
          %v2827 = vpop.permute.xlu0 %2826
          %s2844 = scalar_lea.vmem [#allocation2], 384
          %2845 = vst.msk [vmem:[%s2844] sm:$0xff] %vm2133, %v2797
          %2846 = vst.msk [vmem:[%s2844 + $0x8] sm:$0xff] %vm2133, %v2799
          %2847 = vst.msk [vmem:[%s2844 + $0x10] sm:$0xff] %vm2133, %v2801
          %2848 = vst.msk [vmem:[%s2844 + $0x18] sm:$0xff] %vm2133, %v2803
          %2849 = vst.msk [vmem:[%s2844 + $0x20] sm:$0xff] %vm2133, %v2805
          %2850 = vst.msk [vmem:[%s2844 + $0x28] sm:$0xff] %vm2133, %v2807
          %2851 = vst.msk [vmem:[%s2844 + $0x30] sm:$0xff] %vm2133, %v2809
          %2852 = vst.msk [vmem:[%s2844 + $0x38] sm:$0xff] %vm2133, %v2811
          %2853 = vst.msk [vmem:[%s2844 + $0x40] sm:$0xff] %vm2133, %v2813
          %2854 = vst.msk [vmem:[%s2844 + $0x48] sm:$0xff] %vm2133, %v2815
          %2855 = vst.msk [vmem:[%s2844 + $0x50] sm:$0xff] %vm2133, %v2817
          %2856 = vst.msk [vmem:[%s2844 + $0x58] sm:$0xff] %vm2133, %v2819
          %2857 = vst.msk [vmem:[%s2844 + $0x60] sm:$0xff] %vm2133, %v2821
          %2858 = vst.msk [vmem:[%s2844 + $0x68] sm:$0xff] %vm2133, %v2823
          %2859 = vst.msk [vmem:[%s2844 + $0x70] sm:$0xff] %vm2133, %v2825
          %2860 = vst.msk [vmem:[%s2844 + $0x78] sm:$0xff] %vm2133, %v2827
          %2893 = vrot.lane.b32.xlu0 %v1768, 64
          %v2894 = vpop.permute.xlu0 %2893
          %2895 = vrot.lane.b32.xlu0 %v1772, 64
          %v2896 = vpop.permute.xlu0 %2895
          %2897 = vrot.lane.b32.xlu0 %v1778, 64
          %v2898 = vpop.permute.xlu0 %2897
          %2899 = vrot.lane.b32.xlu0 %v1782, 64
          %v2900 = vpop.permute.xlu0 %2899
          %2901 = vrot.lane.b32.xlu0 %v1788, 64
          %v2902 = vpop.permute.xlu0 %2901
          %2903 = vrot.lane.b32.xlu0 %v1792, 64
          %v2904 = vpop.permute.xlu0 %2903
          %2905 = vrot.lane.b32.xlu0 %v1798, 64
          %v2906 = vpop.permute.xlu0 %2905
          %2907 = vrot.lane.b32.xlu0 %v1802, 64
          %v2908 = vpop.permute.xlu0 %2907
          %2909 = vrot.lane.b32.xlu0 %v1808, 64
          %v2910 = vpop.permute.xlu0 %2909
          %2911 = vrot.lane.b32.xlu0 %v1812, 64
          %v2912 = vpop.permute.xlu0 %2911
          %2913 = vrot.lane.b32.xlu0 %v1818, 64
          %v2914 = vpop.permute.xlu0 %2913
          %2915 = vrot.lane.b32.xlu0 %v1822, 64
          %v2916 = vpop.permute.xlu0 %2915
          %2917 = vrot.lane.b32.xlu0 %v1828, 64
          %v2918 = vpop.permute.xlu0 %2917
          %2919 = vrot.lane.b32.xlu0 %v1832, 64
          %v2920 = vpop.permute.xlu0 %2919
          %2921 = vrot.lane.b32.xlu0 %v1838, 64
          %v2922 = vpop.permute.xlu0 %2921
          %2923 = vrot.lane.b32.xlu0 %v1842, 64
          %v2924 = vpop.permute.xlu0 %2923
          %2925 = vrot.lane.b32.xlu0 %v1848, 64
          %v2926 = vpop.permute.xlu0 %2925
          %2927 = vrot.lane.b32.xlu0 %v1852, 64
          %v2928 = vpop.permute.xlu0 %2927
          %2929 = vrot.lane.b32.xlu0 %v1858, 64
          %v2930 = vpop.permute.xlu0 %2929
          %2931 = vrot.lane.b32.xlu0 %v1862, 64
          %v2932 = vpop.permute.xlu0 %2931
          %2933 = vrot.lane.b32.xlu0 %v1868, 64
          %v2934 = vpop.permute.xlu0 %2933
          %2935 = vrot.lane.b32.xlu0 %v1872, 64
          %v2936 = vpop.permute.xlu0 %2935
          %2937 = vrot.lane.b32.xlu0 %v1878, 64
          %v2938 = vpop.permute.xlu0 %2937
          %2939 = vrot.lane.b32.xlu0 %v1882, 64
          %v2940 = vpop.permute.xlu0 %2939
          %2941 = vrot.lane.b32.xlu0 %v1888, 64
          %v2942 = vpop.permute.xlu0 %2941
          %2943 = vrot.lane.b32.xlu0 %v1892, 64
          %v2944 = vpop.permute.xlu0 %2943
          %2945 = vrot.lane.b32.xlu0 %v1898, 64
          %v2946 = vpop.permute.xlu0 %2945
          %2947 = vrot.lane.b32.xlu0 %v1902, 64
          %v2948 = vpop.permute.xlu0 %2947
          %2949 = vrot.lane.b32.xlu0 %v1908, 64
          %v2950 = vpop.permute.xlu0 %2949
          %2951 = vrot.lane.b32.xlu0 %v1912, 64
          %v2952 = vpop.permute.xlu0 %2951
          %2953 = vrot.lane.b32.xlu0 %v1918, 64
          %v2954 = vpop.permute.xlu0 %2953
          %2955 = vrot.lane.b32.xlu0 %v1922, 64
          %v2956 = vpop.permute.xlu0 %2955
          %2989 = vxpose.xlu0.b32.start [1/16] %v2894, 128
          %2990 = vxpose.xlu0.b32.cont [2/16] %v2896, 128
          %2991 = vxpose.xlu0.b32.cont [3/16] %v2898, 128
          %2992 = vxpose.xlu0.b32.cont [4/16] %v2900, 128
          %2993 = vxpose.xlu0.b32.cont [5/16] %v2902, 128
          %2994 = vxpose.xlu0.b32.cont [6/16] %v2904, 128
          %2995 = vxpose.xlu0.b32.cont [7/16] %v2906, 128
          %2996 = vxpose.xlu0.b32.cont [8/16] %v2908, 128
          %2997 = vxpose.xlu0.b32.cont [9/16] %v2910, 128
          %2998 = vxpose.xlu0.b32.cont [10/16] %v2912, 128
          %2999 = vxpose.xlu0.b32.cont [11/16] %v2914, 128
          %3000 = vxpose.xlu0.b32.cont [12/16] %v2916, 128
          %3001 = vxpose.xlu0.b32.cont [13/16] %v2918, 128
          %3002 = vxpose.xlu0.b32.cont [14/16] %v2920, 128
          %3003 = vxpose.xlu0.b32.cont [15/16] %v2922, 128
          %3004 = vxpose.xlu0.b32.end [16/16] %v2924, 128
          %v3005 = vpop.trf.xlu0
          %v3006 = vpop.trf.xlu0
          %v3007 = vpop.trf.xlu0
          %v3008 = vpop.trf.xlu0
          %v3009 = vpop.trf.xlu0
          %v3010 = vpop.trf.xlu0
          %v3011 = vpop.trf.xlu0
          %v3012 = vpop.trf.xlu0
          %v3013 = vpop.trf.xlu0
          %v3014 = vpop.trf.xlu0
          %v3015 = vpop.trf.xlu0
          %v3016 = vpop.trf.xlu0
          %v3017 = vpop.trf.xlu0
          %v3018 = vpop.trf.xlu0
          %v3019 = vpop.trf.xlu0
          %v3020 = vpop.trf.xlu0
          %3021 = vxpose.xlu0.b32.start [1/16] %v2926, 128
          %3022 = vxpose.xlu0.b32.cont [2/16] %v2928, 128
          %3023 = vxpose.xlu0.b32.cont [3/16] %v2930, 128
          %3024 = vxpose.xlu0.b32.cont [4/16] %v2932, 128
          %3025 = vxpose.xlu0.b32.cont [5/16] %v2934, 128
          %3026 = vxpose.xlu0.b32.cont [6/16] %v2936, 128
          %3027 = vxpose.xlu0.b32.cont [7/16] %v2938, 128
          %3028 = vxpose.xlu0.b32.cont [8/16] %v2940, 128
          %3029 = vxpose.xlu0.b32.cont [9/16] %v2942, 128
          %3030 = vxpose.xlu0.b32.cont [10/16] %v2944, 128
          %3031 = vxpose.xlu0.b32.cont [11/16] %v2946, 128
          %3032 = vxpose.xlu0.b32.cont [12/16] %v2948, 128
          %3033 = vxpose.xlu0.b32.cont [13/16] %v2950, 128
          %3034 = vxpose.xlu0.b32.cont [14/16] %v2952, 128
          %3035 = vxpose.xlu0.b32.cont [15/16] %v2954, 128
          %3036 = vxpose.xlu0.b32.end [16/16] %v2956, 128
          %v3037 = vpop.trf.xlu0
          %v3038 = vpop.trf.xlu0
          %v3039 = vpop.trf.xlu0
          %v3040 = vpop.trf.xlu0
          %v3041 = vpop.trf.xlu0
          %v3042 = vpop.trf.xlu0
          %v3043 = vpop.trf.xlu0
          %v3044 = vpop.trf.xlu0
          %v3045 = vpop.trf.xlu0
          %v3046 = vpop.trf.xlu0
          %v3047 = vpop.trf.xlu0
          %v3048 = vpop.trf.xlu0
          %v3049 = vpop.trf.xlu0
          %v3050 = vpop.trf.xlu0
          %v3051 = vpop.trf.xlu0
          %v3052 = vpop.trf.xlu0
          %v3053 = vpack.c.bf16 %v3006, %v3005
          %v3054 = vpack.c.bf16 %v3038, %v3037
          %v3055 = vpack.c.bf16 %v3008, %v3007
          %v3056 = vpack.c.bf16 %v3040, %v3039
          %v3057 = vpack.c.bf16 %v3010, %v3009
          %v3058 = vpack.c.bf16 %v3042, %v3041
          %v3059 = vpack.c.bf16 %v3012, %v3011
          %v3060 = vpack.c.bf16 %v3044, %v3043
          %s3061 = scalar_lea.vmem [#allocation3], 192
          %3062 = vst [vmem:[%s3061] sm:$0xff] %v3053
          %3063 = vst [vmem:[%s3061 + $0x8] sm:$0xff] %v3054
          %3064 = vst [vmem:[%s3061 + $0x10] sm:$0xff] %v3055
          %3065 = vst [vmem:[%s3061 + $0x18] sm:$0xff] %v3056
          %3066 = vst [vmem:[%s3061 + $0x20] sm:$0xff] %v3057
          %3067 = vst [vmem:[%s3061 + $0x28] sm:$0xff] %v3058
          %3068 = vst [vmem:[%s3061 + $0x30] sm:$0xff] %v3059
          %3069 = vst [vmem:[%s3061 + $0x38] sm:$0xff] %v3060
          %3086 = vrot.lane.b32.xlu0 %v2747, 64
          %v3087 = vpop.permute.xlu0 %3086
          %3088 = vrot.lane.b32.xlu0 %v2748, 64
          %v3089 = vpop.permute.xlu0 %3088
          %3090 = vrot.lane.b32.xlu0 %v2749, 64
          %v3091 = vpop.permute.xlu0 %3090
          %3092 = vrot.lane.b32.xlu0 %v2750, 64
          %v3093 = vpop.permute.xlu0 %3092
          %3094 = vrot.lane.b32.xlu0 %v2751, 64
          %v3095 = vpop.permute.xlu0 %3094
          %3096 = vrot.lane.b32.xlu0 %v2752, 64
          %v3097 = vpop.permute.xlu0 %3096
          %3098 = vrot.lane.b32.xlu0 %v2753, 64
          %v3099 = vpop.permute.xlu0 %3098
          %3100 = vrot.lane.b32.xlu0 %v2754, 64
          %v3101 = vpop.permute.xlu0 %3100
          %3102 = vrot.lane.b32.xlu0 %v2755, 64
          %v3103 = vpop.permute.xlu0 %3102
          %3104 = vrot.lane.b32.xlu0 %v2756, 64
          %v3105 = vpop.permute.xlu0 %3104
          %3106 = vrot.lane.b32.xlu0 %v2757, 64
          %v3107 = vpop.permute.xlu0 %3106
          %3108 = vrot.lane.b32.xlu0 %v2758, 64
          %v3109 = vpop.permute.xlu0 %3108
          %3110 = vrot.lane.b32.xlu0 %v2759, 64
          %v3111 = vpop.permute.xlu0 %3110
          %3112 = vrot.lane.b32.xlu0 %v2760, 64
          %v3113 = vpop.permute.xlu0 %3112
          %3114 = vrot.lane.b32.xlu0 %v2761, 64
          %v3115 = vpop.permute.xlu0 %3114
          %3116 = vrot.lane.b32.xlu0 %v2762, 64
          %v3117 = vpop.permute.xlu0 %3116
          %s3134 = scalar_lea.vmem [#allocation4], 384
          %3135 = vst.msk [vmem:[%s3134] sm:$0xff] %vm2133, %v3087
          %3136 = vst.msk [vmem:[%s3134 + $0x8] sm:$0xff] %vm2133, %v3089
          %3137 = vst.msk [vmem:[%s3134 + $0x10] sm:$0xff] %vm2133, %v3091
          %3138 = vst.msk [vmem:[%s3134 + $0x18] sm:$0xff] %vm2133, %v3093
          %3139 = vst.msk [vmem:[%s3134 + $0x20] sm:$0xff] %vm2133, %v3095
          %3140 = vst.msk [vmem:[%s3134 + $0x28] sm:$0xff] %vm2133, %v3097
          %3141 = vst.msk [vmem:[%s3134 + $0x30] sm:$0xff] %vm2133, %v3099
          %3142 = vst.msk [vmem:[%s3134 + $0x38] sm:$0xff] %vm2133, %v3101
          %3143 = vst.msk [vmem:[%s3134 + $0x40] sm:$0xff] %vm2133, %v3103
          %3144 = vst.msk [vmem:[%s3134 + $0x48] sm:$0xff] %vm2133, %v3105
          %3145 = vst.msk [vmem:[%s3134 + $0x50] sm:$0xff] %vm2133, %v3107
          %3146 = vst.msk [vmem:[%s3134 + $0x58] sm:$0xff] %vm2133, %v3109
          %3147 = vst.msk [vmem:[%s3134 + $0x60] sm:$0xff] %vm2133, %v3111
          %3148 = vst.msk [vmem:[%s3134 + $0x68] sm:$0xff] %vm2133, %v3113
          %3149 = vst.msk [vmem:[%s3134 + $0x70] sm:$0xff] %vm2133, %v3115
          %3150 = vst.msk [vmem:[%s3134 + $0x78] sm:$0xff] %vm2133, %v3117
        $region80: #{tpu_custom_call.1} parent=51 // pred_fallthru
          _
        %s3151 = smul.u32 %s35, 128
        %s3152 = sshra.s32 %s3151, 3
        %s3153 = sand.u32 %s3151, 7
        %s3154 = smul.u32 %s3152, 2
        %s3155 = smul.addr %s3154, 8
        %s3156 = scalar_lea.vmem %s399, %s3155 [#allocation5]
        %v3157 = vld [vmem:[%s3156] sm:$0xff]
        %v3158 = vld [vmem:[%s3156 + $0x8] sm:$0xff]
        %v3159 = vld [vmem:[%s3156 + $0x10] sm:$0xff]
        %v3160 = vld [vmem:[%s3156 + $0x18] sm:$0xff]
        %v3161 = vld [vmem:[%s3156 + $0x20] sm:$0xff]
        %v3162 = vld [vmem:[%s3156 + $0x28] sm:$0xff]
        %v3163 = vld [vmem:[%s3156 + $0x30] sm:$0xff]
        %v3164 = vld [vmem:[%s3156 + $0x38] sm:$0xff]
        %v3165 = vld [vmem:[%s3156 + $0x40] sm:$0xff]
        %v3166 = vld [vmem:[%s3156 + $0x48] sm:$0xff]
        %v3167 = vld [vmem:[%s3156 + $0x50] sm:$0xff]
        %v3168 = vld [vmem:[%s3156 + $0x58] sm:$0xff]
        %v3169 = vld [vmem:[%s3156 + $0x60] sm:$0xff]
        %v3170 = vld [vmem:[%s3156 + $0x68] sm:$0xff]
        %v3171 = vld [vmem:[%s3156 + $0x70] sm:$0xff]
        %v3172 = vld [vmem:[%s3156 + $0x78] sm:$0xff]
        %v3173 = vld [vmem:[%s3156 + $0x80] sm:$0xff]
        %v3174 = vld [vmem:[%s3156 + $0x88] sm:$0xff]
        %v3175 = vld [vmem:[%s3156 + $0x90] sm:$0xff]
        %v3176 = vld [vmem:[%s3156 + $0x98] sm:$0xff]
        %v3177 = vld [vmem:[%s3156 + $0xa0] sm:$0xff]
        %v3178 = vld [vmem:[%s3156 + $0xa8] sm:$0xff]
        %v3179 = vld [vmem:[%s3156 + $0xb0] sm:$0xff]
        %v3180 = vld [vmem:[%s3156 + $0xb8] sm:$0xff]
        %v3181 = vld [vmem:[%s3156 + $0xc0] sm:$0xff]
        %v3182 = vld [vmem:[%s3156 + $0xc8] sm:$0xff]
        %v3183 = vld [vmem:[%s3156 + $0xd0] sm:$0xff]
        %v3184 = vld [vmem:[%s3156 + $0xd8] sm:$0xff]
        %v3185 = vld [vmem:[%s3156 + $0xe0] sm:$0xff]
        %v3186 = vld [vmem:[%s3156 + $0xe8] sm:$0xff]
        %v3187 = vld [vmem:[%s3156 + $0xf0] sm:$0xff]
        %v3188 = vld [vmem:[%s3156 + $0xf8] sm:$0xff]
        %s3189 = sshra.s32 %s3151, 4
        %s3190 = sand.u32 %s3151, 15
        %s3191 = smul.addr %s3189, 8
        %s3192 = scalar_lea.vmem [#allocation2], %s3191
        %v3193 = vld [vmem:[%s3192] sm:$0xff]
        %v3194 = vld [vmem:[%s3192 + $0x8] sm:$0xff]
        %v3195 = vld [vmem:[%s3192 + $0x10] sm:$0xff]
        %v3196 = vld [vmem:[%s3192 + $0x18] sm:$0xff]
        %v3197 = vld [vmem:[%s3192 + $0x20] sm:$0xff]
        %v3198 = vld [vmem:[%s3192 + $0x28] sm:$0xff]
        %v3199 = vld [vmem:[%s3192 + $0x30] sm:$0xff]
        %v3200 = vld [vmem:[%s3192 + $0x38] sm:$0xff]
        %v3201 = vld [vmem:[#allocation3] sm:$0xff]
        %v3202 = vld [vmem:[#allocation3 + $0x8] sm:$0xff]
        %v3203 = vld [vmem:[#allocation3 + $0x10] sm:$0xff]
        %v3204 = vld [vmem:[#allocation3 + $0x18] sm:$0xff]
        %v3205 = vld [vmem:[#allocation3 + $0x20] sm:$0xff]
        %v3206 = vld [vmem:[#allocation3 + $0x28] sm:$0xff]
        %v3207 = vld [vmem:[#allocation3 + $0x30] sm:$0xff]
        %v3208 = vld [vmem:[#allocation3 + $0x38] sm:$0xff]
        %v3209 = vld [vmem:[%s408] sm:$0xff]
        %v3210 = vld [vmem:[%s408 + $0x8] sm:$0xff]
        %v3211 = vld [vmem:[%s408 + $0x10] sm:$0xff]
        %v3212 = vld [vmem:[%s408 + $0x18] sm:$0xff]
        %v3213 = vld [vmem:[%s408 + $0x20] sm:$0xff]
        %v3214 = vld [vmem:[%s408 + $0x28] sm:$0xff]
        %v3215 = vld [vmem:[%s408 + $0x30] sm:$0xff]
        %v3216 = vld [vmem:[%s408 + $0x38] sm:$0xff]
        %v3217 = vld [vmem:[%s408 + $0x40] sm:$0xff]
        %v3218 = vld [vmem:[%s408 + $0x48] sm:$0xff]
        %v3219 = vld [vmem:[%s408 + $0x50] sm:$0xff]
        %v3220 = vld [vmem:[%s408 + $0x58] sm:$0xff]
        %v3221 = vld [vmem:[%s408 + $0x60] sm:$0xff]
        %v3222 = vld [vmem:[%s408 + $0x68] sm:$0xff]
        %v3223 = vld [vmem:[%s408 + $0x70] sm:$0xff]
        %v3224 = vld [vmem:[%s408 + $0x78] sm:$0xff]
        %v3225 = vld [vmem:[%s408 + $0x80] sm:$0xff]
        %v3226 = vld [vmem:[%s408 + $0x88] sm:$0xff]
        %v3227 = vld [vmem:[%s408 + $0x90] sm:$0xff]
        %v3228 = vld [vmem:[%s408 + $0x98] sm:$0xff]
        %v3229 = vld [vmem:[%s408 + $0xa0] sm:$0xff]
        %v3230 = vld [vmem:[%s408 + $0xa8] sm:$0xff]
        %v3231 = vld [vmem:[%s408 + $0xb0] sm:$0xff]
        %v3232 = vld [vmem:[%s408 + $0xb8] sm:$0xff]
        %v3233 = vld [vmem:[%s408 + $0xc0] sm:$0xff]
        %v3234 = vld [vmem:[%s408 + $0xc8] sm:$0xff]
        %v3235 = vld [vmem:[%s408 + $0xd0] sm:$0xff]
        %v3236 = vld [vmem:[%s408 + $0xd8] sm:$0xff]
        %v3237 = vld [vmem:[%s408 + $0xe0] sm:$0xff]
        %v3238 = vld [vmem:[%s408 + $0xe8] sm:$0xff]
        %v3239 = vld [vmem:[%s408 + $0xf0] sm:$0xff]
        %v3240 = vld [vmem:[%s408 + $0xf8] sm:$0xff]
        %vm3241 = vcmask 523264
        %v3243 = vsel %vm3241, %v3193, 0
        %v3246 = vsel %vm3241, %v3194, 0
        %v3249 = vsel %vm3241, %v3195, 0
        %v3252 = vsel %vm3241, %v3196, 0
        %v3255 = vsel %vm3241, %v3197, 0
        %v3258 = vsel %vm3241, %v3198, 0
        %v3261 = vsel %vm3241, %v3199, 0
        %v3264 = vsel %vm3241, %v3200, 0
        %3266 = vmatprep.subr.bf16.mxu0 %v3202
        %3267 = vmatpush1.bf16.msra.mxu0 %v3201
        %3268 = vmatprep.subr.bf16.mxu0 %v3204
        %3269 = vmatpush1.bf16.msra.mxu0 %v3203
        %3270 = vmatprep.subr.bf16.mxu0 %v3206
        %3271 = vmatpush1.bf16.msra.mxu0 %v3205
        %3272 = vmatprep.subr.bf16.mxu0 %v3208
        %3273 = vmatpush1.bf16.msra.mxu0 %v3207
        %3274 = vmatprep.subr.bf16.mxu0 0
        %3275 = vmatpush1.bf16.msra.mxu0 0
        %3276 = vmatprep.subr.bf16.mxu0 0
        %3277 = vmatpush1.bf16.msra.mxu0 0
        %3278 = vmatprep.subr.bf16.mxu0 0
        %3279 = vmatpush1.bf16.msra.mxu0 0
        %3280 = vmatprep.subr.bf16.mxu0 0
        %3281 = vmatpush1.bf16.msra.mxu0 0
        %3282 = vmatprep.subr.bf16.mxu0 0
        %3283 = vmatpush1.bf16.msra.mxu0 0
        %3284 = vmatprep.subr.bf16.mxu0 0
        %3285 = vmatpush1.bf16.msra.mxu0 0
        %3286 = vmatprep.subr.bf16.mxu0 0
        %3287 = vmatpush1.bf16.msra.mxu0 0
        %3288 = vmatprep.subr.bf16.mxu0 0
        %3289 = vmatpush1.bf16.msra.mxu0 0
        %3290 = vmatprep.subr.bf16.mxu0 0
        %3291 = vmatpush1.bf16.msra.mxu0 0
        %3292 = vmatprep.subr.bf16.mxu0 0
        %3293 = vmatpush1.bf16.msra.mxu0 0
        %3294 = vmatprep.subr.bf16.mxu0 0
        %3295 = vmatpush1.bf16.msra.mxu0 0
        %3296 = vmatprep.subr.bf16.mxu0 0
        %3297 = vmatpush1.bf16.msra.mxu0 0
        %3298 = vmatprep.mubr.bf16.mxu0 0
        %3299 = vmatmul.mubr.bf16.gmra.mrb[0].mxu0 %v3243
        %v3300 = vpop.f32.mrb[0].mxu0
        %v3301 = vadd.f32 %v3209, %v3300
        %v3302 = vpop.f32.mrb[0].mxu0
        %v3303 = vadd.f32 %v3210, %v3302
        %v3304 = vpop.f32.mrb[0].mxu0
        %v3305 = vadd.f32 %v3211, %v3304
        %v3306 = vpop.f32.mrb[0].mxu0
        %v3307 = vadd.f32 %v3212, %v3306
        %3308 = vmatprep.mubr.bf16.mxu0 0
        %3309 = vmatmul.mubr.bf16.gmra.mrb[0].mxu0 %v3246
        %v3310 = vpop.f32.mrb[0].mxu0
        %v3311 = vadd.f32 %v3213, %v3310
        %v3312 = vpop.f32.mrb[0].mxu0
        %v3313 = vadd.f32 %v3214, %v3312
        %v3314 = vpop.f32.mrb[0].mxu0
        %v3315 = vadd.f32 %v3215, %v3314
        %v3316 = vpop.f32.mrb[0].mxu0
        %v3317 = vadd.f32 %v3216, %v3316
        %3318 = vmatprep.mubr.bf16.mxu0 0
        %3319 = vmatmul.mubr.bf16.gmra.mrb[0].mxu0 %v3249
        %v3320 = vpop.f32.mrb[0].mxu0
        %v3321 = vadd.f32 %v3217, %v3320
        %v3322 = vpop.f32.mrb[0].mxu0
        %v3323 = vadd.f32 %v3218, %v3322
        %v3324 = vpop.f32.mrb[0].mxu0
        %v3325 = vadd.f32 %v3219, %v3324
        %v3326 = vpop.f32.mrb[0].mxu0
        %v3327 = vadd.f32 %v3220, %v3326
        %3328 = vmatprep.mubr.bf16.mxu0 0
        %3329 = vmatmul.mubr.bf16.gmra.mrb[0].mxu0 %v3252
        %v3330 = vpop.f32.mrb[0].mxu0
        %v3331 = vadd.f32 %v3221, %v3330
        %v3332 = vpop.f32.mrb[0].mxu0
        %v3333 = vadd.f32 %v3222, %v3332
        %v3334 = vpop.f32.mrb[0].mxu0
        %v3335 = vadd.f32 %v3223, %v3334
        %v3336 = vpop.f32.mrb[0].mxu0
        %v3337 = vadd.f32 %v3224, %v3336
        %3338 = vmatprep.mubr.bf16.mxu0 0
        %3339 = vmatmul.mubr.bf16.gmra.mrb[0].mxu0 %v3255
        %v3340 = vpop.f32.mrb[0].mxu0
        %v3341 = vadd.f32 %v3225, %v3340
        %v3342 = vpop.f32.mrb[0].mxu0
        %v3343 = vadd.f32 %v3226, %v3342
        %v3344 = vpop.f32.mrb[0].mxu0
        %v3345 = vadd.f32 %v3227, %v3344
        %v3346 = vpop.f32.mrb[0].mxu0
        %v3347 = vadd.f32 %v3228, %v3346
        %3348 = vmatprep.mubr.bf16.mxu0 0
        %3349 = vmatmul.mubr.bf16.gmra.mrb[0].mxu0 %v3258
        %v3350 = vpop.f32.mrb[0].mxu0
        %v3351 = vadd.f32 %v3229, %v3350
        %v3352 = vpop.f32.mrb[0].mxu0
        %v3353 = vadd.f32 %v3230, %v3352
        %v3354 = vpop.f32.mrb[0].mxu0
        %v3355 = vadd.f32 %v3231, %v3354
        %v3356 = vpop.f32.mrb[0].mxu0
        %v3357 = vadd.f32 %v3232, %v3356
        %3358 = vmatprep.mubr.bf16.mxu0 0
        %3359 = vmatmul.mubr.bf16.gmra.mrb[0].mxu0 %v3261
        %v3360 = vpop.f32.mrb[0].mxu0
        %v3361 = vadd.f32 %v3233, %v3360
        %v3362 = vpop.f32.mrb[0].mxu0
        %v3363 = vadd.f32 %v3234, %v3362
        %v3364 = vpop.f32.mrb[0].mxu0
        %v3365 = vadd.f32 %v3235, %v3364
        %v3366 = vpop.f32.mrb[0].mxu0
        %v3367 = vadd.f32 %v3236, %v3366
        %3368 = vmatprep.mubr.bf16.mxu0 0
        %3369 = vmatmul.mubr.bf16.gmra.mrb[0].mxu0 %v3264
        %v3370 = vpop.f32.mrb[0].mxu0
        %v3371 = vadd.f32 %v3237, %v3370
        %v3372 = vpop.f32.mrb[0].mxu0
        %v3373 = vadd.f32 %v3238, %v3372
        %v3374 = vpop.f32.mrb[0].mxu0
        %v3375 = vadd.f32 %v3239, %v3374
        %v3376 = vpop.f32.mrb[0].mxu0
        %v3377 = vadd.f32 %v3240, %v3376
        %3378 = vdwg.mxu0
        %v3379 = vmax.f32 %v3301, %v3303
        %3380 = vmax.xlane.f32.xlu0 %v3379
        %v3381 = vpop.xlane.xlu0 %3380
        %v3382 = vmax.f32 %v3305, %v3307
        %3383 = vmax.xlane.f32.xlu0 %v3382
        %v3384 = vpop.xlane.xlu0 %3383
        %v3385 = vmax.f32 %v3311, %v3313
        %3386 = vmax.xlane.f32.xlu0 %v3385
        %v3387 = vpop.xlane.xlu0 %3386
        %v3388 = vmax.f32 %v3315, %v3317
        %3389 = vmax.xlane.f32.xlu0 %v3388
        %v3390 = vpop.xlane.xlu0 %3389
        %v3391 = vmax.f32 %v3321, %v3323
        %3392 = vmax.xlane.f32.xlu0 %v3391
        %v3393 = vpop.xlane.xlu0 %3392
        %v3394 = vmax.f32 %v3325, %v3327
        %3395 = vmax.xlane.f32.xlu0 %v3394
        %v3396 = vpop.xlane.xlu0 %3395
        %v3397 = vmax.f32 %v3331, %v3333
        %3398 = vmax.xlane.f32.xlu0 %v3397
        %v3399 = vpop.xlane.xlu0 %3398
        %v3400 = vmax.f32 %v3335, %v3337
        %3401 = vmax.xlane.f32.xlu0 %v3400
        %v3402 = vpop.xlane.xlu0 %3401
        %v3403 = vmax.f32 %v3341, %v3343
        %3404 = vmax.xlane.f32.xlu0 %v3403
        %v3405 = vpop.xlane.xlu0 %3404
        %v3406 = vmax.f32 %v3345, %v3347
        %3407 = vmax.xlane.f32.xlu0 %v3406
        %v3408 = vpop.xlane.xlu0 %3407
        %v3409 = vmax.f32 %v3351, %v3353
        %3410 = vmax.xlane.f32.xlu0 %v3409
        %v3411 = vpop.xlane.xlu0 %3410
        %v3412 = vmax.f32 %v3355, %v3357
        %3413 = vmax.xlane.f32.xlu0 %v3412
        %v3414 = vpop.xlane.xlu0 %3413
        %v3415 = vmax.f32 %v3361, %v3363
        %3416 = vmax.xlane.f32.xlu0 %v3415
        %v3417 = vpop.xlane.xlu0 %3416
        %v3418 = vmax.f32 %v3365, %v3367
        %3419 = vmax.xlane.f32.xlu0 %v3418
        %v3420 = vpop.xlane.xlu0 %3419
        %v3421 = vmax.f32 %v3371, %v3373
        %3422 = vmax.xlane.f32.xlu0 %v3421
        %v3423 = vpop.xlane.xlu0 %3422
        %v3424 = vmax.f32 %v3375, %v3377
        %3425 = vmax.xlane.f32.xlu0 %v3424
        %v3426 = vpop.xlane.xlu0 %3425
        %v3427 = vsub.f32 %v3301, %v3381
        %v3428 = vsub.f32 %v3303, %v3381
        %v3429 = vsub.f32 %v3305, %v3384
        %v3430 = vsub.f32 %v3307, %v3384
        %v3431 = vsub.f32 %v3311, %v3387
        %v3432 = vsub.f32 %v3313, %v3387
        %v3433 = vsub.f32 %v3315, %v3390
        %v3434 = vsub.f32 %v3317, %v3390
        %v3435 = vsub.f32 %v3321, %v3393
        %v3436 = vsub.f32 %v3323, %v3393
        %v3437 = vsub.f32 %v3325, %v3396
        %v3438 = vsub.f32 %v3327, %v3396
        %v3439 = vsub.f32 %v3331, %v3399
        %v3440 = vsub.f32 %v3333, %v3399
        %v3441 = vsub.f32 %v3335, %v3402
        %v3442 = vsub.f32 %v3337, %v3402
        %v3443 = vsub.f32 %v3341, %v3405
        %v3444 = vsub.f32 %v3343, %v3405
        %v3445 = vsub.f32 %v3345, %v3408
        %v3446 = vsub.f32 %v3347, %v3408
        %v3447 = vsub.f32 %v3351, %v3411
        %v3448 = vsub.f32 %v3353, %v3411
        %v3449 = vsub.f32 %v3355, %v3414
        %v3450 = vsub.f32 %v3357, %v3414
        %v3451 = vsub.f32 %v3361, %v3417
        %v3452 = vsub.f32 %v3363, %v3417
        %v3453 = vsub.f32 %v3365, %v3420
        %v3454 = vsub.f32 %v3367, %v3420
        %v3455 = vsub.f32 %v3371, %v3423
        %v3456 = vsub.f32 %v3373, %v3423
        %v3457 = vsub.f32 %v3375, %v3426
        %v3458 = vsub.f32 %v3377, %v3426
        %v3459 = vmul.f32 %v3427, 1.442695
        %v3460 = vpow.pop %v3459
        %v3461 = vmul.f32 %v3428, 1.442695
        %v3462 = vpow.pop %v3461
        %v3463 = vmul.f32 %v3429, 1.442695
        %v3464 = vpow.pop %v3463
        %v3465 = vmul.f32 %v3430, 1.442695
        %v3466 = vpow.pop %v3465
        %v3467 = vmul.f32 %v3431, 1.442695
        %v3468 = vpow.pop %v3467
        %v3469 = vmul.f32 %v3432, 1.442695
        %v3470 = vpow.pop %v3469
        %v3471 = vmul.f32 %v3433, 1.442695
        %v3472 = vpow.pop %v3471
        %v3473 = vmul.f32 %v3434, 1.442695
        %v3474 = vpow.pop %v3473
        %v3475 = vmul.f32 %v3435, 1.442695
        %v3476 = vpow.pop %v3475
        %v3477 = vmul.f32 %v3436, 1.442695
        %v3478 = vpow.pop %v3477
        %v3479 = vmul.f32 %v3437, 1.442695
        %v3480 = vpow.pop %v3479
        %v3481 = vmul.f32 %v3438, 1.442695
        %v3482 = vpow.pop %v3481
        %v3483 = vmul.f32 %v3439, 1.442695
        %v3484 = vpow.pop %v3483
        %v3485 = vmul.f32 %v3440, 1.442695
        %v3486 = vpow.pop %v3485
        %v3487 = vmul.f32 %v3441, 1.442695
        %v3488 = vpow.pop %v3487
        %v3489 = vmul.f32 %v3442, 1.442695
        %v3490 = vpow.pop %v3489
        %v3491 = vmul.f32 %v3443, 1.442695
        %v3492 = vpow.pop %v3491
        %v3493 = vmul.f32 %v3444, 1.442695
        %v3494 = vpow.pop %v3493
        %v3495 = vmul.f32 %v3445, 1.442695
        %v3496 = vpow.pop %v3495
        %v3497 = vmul.f32 %v3446, 1.442695
        %v3498 = vpow.pop %v3497
        %v3499 = vmul.f32 %v3447, 1.442695
        %v3500 = vpow.pop %v3499
        %v3501 = vmul.f32 %v3448, 1.442695
        %v3502 = vpow.pop %v3501
        %v3503 = vmul.f32 %v3449, 1.442695
        %v3504 = vpow.pop %v3503
        %v3505 = vmul.f32 %v3450, 1.442695
        %v3506 = vpow.pop %v3505
        %v3507 = vmul.f32 %v3451, 1.442695
        %v3508 = vpow.pop %v3507
        %v3509 = vmul.f32 %v3452, 1.442695
        %v3510 = vpow.pop %v3509
        %v3511 = vmul.f32 %v3453, 1.442695
        %v3512 = vpow.pop %v3511
        %v3513 = vmul.f32 %v3454, 1.442695
        %v3514 = vpow.pop %v3513
        %v3515 = vmul.f32 %v3455, 1.442695
        %v3516 = vpow.pop %v3515
        %v3517 = vmul.f32 %v3456, 1.442695
        %v3518 = vpow.pop %v3517
        %v3519 = vmul.f32 %v3457, 1.442695
        %v3520 = vpow.pop %v3519
        %v3521 = vmul.f32 %v3458, 1.442695
        %v3522 = vpow.pop %v3521
        %v3523 = vadd.f32 %v3460, %v3462
        %3524 = vadd.xlane.f32.xlu0 %v3523
        %v3525 = vpop.xlane.xlu0 %3524
        %v3526 = vadd.f32 %v3464, %v3466
        %3527 = vadd.xlane.f32.xlu0 %v3526
        %v3528 = vpop.xlane.xlu0 %3527
        %v3529 = vadd.f32 %v3468, %v3470
        %3530 = vadd.xlane.f32.xlu0 %v3529
        %v3531 = vpop.xlane.xlu0 %3530
        %v3532 = vadd.f32 %v3472, %v3474
        %3533 = vadd.xlane.f32.xlu0 %v3532
        %v3534 = vpop.xlane.xlu0 %3533
        %v3535 = vadd.f32 %v3476, %v3478
        %3536 = vadd.xlane.f32.xlu0 %v3535
        %v3537 = vpop.xlane.xlu0 %3536
        %v3538 = vadd.f32 %v3480, %v3482
        %3539 = vadd.xlane.f32.xlu0 %v3538
        %v3540 = vpop.xlane.xlu0 %3539
        %v3541 = vadd.f32 %v3484, %v3486
        %3542 = vadd.xlane.f32.xlu0 %v3541
        %v3543 = vpop.xlane.xlu0 %3542
        %v3544 = vadd.f32 %v3488, %v3490
        %3545 = vadd.xlane.f32.xlu0 %v3544
        %v3546 = vpop.xlane.xlu0 %3545
        %v3547 = vadd.f32 %v3492, %v3494
        %3548 = vadd.xlane.f32.xlu0 %v3547
        %v3549 = vpop.xlane.xlu0 %3548
        %v3550 = vadd.f32 %v3496, %v3498
        %3551 = vadd.xlane.f32.xlu0 %v3550
        %v3552 = vpop.xlane.xlu0 %3551
        %v3553 = vadd.f32 %v3500, %v3502
        %3554 = vadd.xlane.f32.xlu0 %v3553
        %v3555 = vpop.xlane.xlu0 %3554
        %v3556 = vadd.f32 %v3504, %v3506
        %3557 = vadd.xlane.f32.xlu0 %v3556
        %v3558 = vpop.xlane.xlu0 %3557
        %v3559 = vadd.f32 %v3508, %v3510
        %3560 = vadd.xlane.f32.xlu0 %v3559
        %v3561 = vpop.xlane.xlu0 %3560
        %v3562 = vadd.f32 %v3512, %v3514
        %3563 = vadd.xlane.f32.xlu0 %v3562
        %v3564 = vpop.xlane.xlu0 %3563
        %v3565 = vadd.f32 %v3516, %v3518
        %3566 = vadd.xlane.f32.xlu0 %v3565
        %v3567 = vpop.xlane.xlu0 %3566
        %v3568 = vadd.f32 %v3520, %v3522
        %3569 = vadd.xlane.f32.xlu0 %v3568
        %v3570 = vpop.xlane.xlu0 %3569
        %v3571 = vrcp.pop %v3525
        %v3572 = vrcp.pop %v3528
        %v3573 = vrcp.pop %v3531
        %v3574 = vrcp.pop %v3534
        %v3575 = vrcp.pop %v3537
        %v3576 = vrcp.pop %v3540
        %v3577 = vrcp.pop %v3543
        %v3578 = vrcp.pop %v3546
        %v3579 = vrcp.pop %v3549
        %v3580 = vrcp.pop %v3552
        %v3581 = vrcp.pop %v3555
        %v3582 = vrcp.pop %v3558
        %v3583 = vrcp.pop %v3561
        %v3584 = vrcp.pop %v3564
        %v3585 = vrcp.pop %v3567
        %v3586 = vrcp.pop %v3570
        %v3587 = vpack.c.bf16 %v3464, %v3460
        %v3588 = vpack.c.bf16 %v3466, %v3462
        %v3589 = vpack.c.bf16 %v3472, %v3468
        %v3590 = vpack.c.bf16 %v3474, %v3470
        %v3591 = vpack.c.bf16 %v3480, %v3476
        %v3592 = vpack.c.bf16 %v3482, %v3478
        %v3593 = vpack.c.bf16 %v3488, %v3484
        %v3594 = vpack.c.bf16 %v3490, %v3486
        %v3595 = vpack.c.bf16 %v3496, %v3492
        %v3596 = vpack.c.bf16 %v3498, %v3494
        %v3597 = vpack.c.bf16 %v3504, %v3500
        %v3598 = vpack.c.bf16 %v3506, %v3502
        %v3599 = vpack.c.bf16 %v3512, %v3508
        %v3600 = vpack.c.bf16 %v3514, %v3510
        %v3601 = vpack.c.bf16 %v3520, %v3516
        %v3602 = vpack.c.bf16 %v3522, %v3518
        %v3603 = vld [vmem:[#allocation4] sm:$0xff]
        %v3604 = vld [vmem:[#allocation4 + $0x8] sm:$0xff]
        %v3605 = vld [vmem:[#allocation4 + $0x10] sm:$0xff]
        %v3606 = vld [vmem:[#allocation4 + $0x18] sm:$0xff]
        %v3607 = vld [vmem:[#allocation4 + $0x20] sm:$0xff]
        %v3608 = vld [vmem:[#allocation4 + $0x28] sm:$0xff]
        %v3609 = vld [vmem:[#allocation4 + $0x30] sm:$0xff]
        %v3610 = vld [vmem:[#allocation4 + $0x38] sm:$0xff]
        %v3611 = vld [vmem:[#allocation4 + $0x40] sm:$0xff]
        %v3612 = vld [vmem:[#allocation4 + $0x48] sm:$0xff]
        %v3613 = vld [vmem:[#allocation4 + $0x50] sm:$0xff]
        %v3614 = vld [vmem:[#allocation4 + $0x58] sm:$0xff]
        %v3615 = vld [vmem:[#allocation4 + $0x60] sm:$0xff]
        %v3616 = vld [vmem:[#allocation4 + $0x68] sm:$0xff]
        %v3617 = vld [vmem:[#allocation4 + $0x70] sm:$0xff]
        %v3618 = vld [vmem:[#allocation4 + $0x78] sm:$0xff]
        %3619 = vmatprep.subr.bf16.mxu0 0
        %3620 = vmatpush1.bf16.msra.mxu0 %v3603
        %3621 = vmatprep.subr.bf16.mxu0 0
        %3622 = vmatpush1.bf16.msra.mxu0 %v3604
        %3623 = vmatprep.subr.bf16.mxu0 0
        %3624 = vmatpush1.bf16.msra.mxu0 %v3605
        %3625 = vmatprep.subr.bf16.mxu0 0
        %3626 = vmatpush1.bf16.msra.mxu0 %v3606
        %3627 = vmatprep.subr.bf16.mxu0 0
        %3628 = vmatpush1.bf16.msra.mxu0 %v3607
        %3629 = vmatprep.subr.bf16.mxu0 0
        %3630 = vmatpush1.bf16.msra.mxu0 %v3608
        %3631 = vmatprep.subr.bf16.mxu0 0
        %3632 = vmatpush1.bf16.msra.mxu0 %v3609
        %3633 = vmatprep.subr.bf16.mxu0 0
        %3634 = vmatpush1.bf16.msra.mxu0 %v3610
        %3635 = vmatprep.subr.bf16.mxu0 0
        %3636 = vmatpush1.bf16.msra.mxu0 %v3611
        %3637 = vmatprep.subr.bf16.mxu0 0
        %3638 = vmatpush1.bf16.msra.mxu0 %v3612
        %3639 = vmatprep.subr.bf16.mxu0 0
        %3640 = vmatpush1.bf16.msra.mxu0 %v3613
        %3641 = vmatprep.subr.bf16.mxu0 0
        %3642 = vmatpush1.bf16.msra.mxu0 %v3614
        %3643 = vmatprep.subr.bf16.mxu0 0
        %3644 = vmatpush1.bf16.msra.mxu0 %v3615
        %3645 = vmatprep.subr.bf16.mxu0 0
        %3646 = vmatpush1.bf16.msra.mxu0 %v3616
        %3647 = vmatprep.subr.bf16.mxu0 0
        %3648 = vmatpush1.bf16.msra.mxu0 %v3617
        %3649 = vmatprep.subr.bf16.mxu0 0
        %3650 = vmatpush1.bf16.msra.mxu0 %v3618
        %3651 = vmatprep.mubr.bf16.mxu0 %v3588
        %3652 = vmatmul.mubr.bf16.gmra.mrb[0].mxu0 %v3587
        %v3653 = vpop.f32.mrb[0].mxu0
        %v3654 = vadd.f32 0.0, %v3653
        %v3655 = vpop.f32.mrb[0].mxu0
        %v3656 = vpop.f32.mrb[0].mxu0
        %v3657 = vadd.f32 0.0, %v3656
        %v3658 = vpop.f32.mrb[0].mxu0
        %3659 = vmatprep.mubr.bf16.mxu0 %v3590
        %3660 = vmatmul.mubr.bf16.gmra.mrb[0].mxu0 %v3589
        %v3661 = vpop.f32.mrb[0].mxu0
        %v3662 = vadd.f32 0.0, %v3661
        %v3663 = vpop.f32.mrb[0].mxu0
        %v3664 = vpop.f32.mrb[0].mxu0
        %v3665 = vadd.f32 0.0, %v3664
        %v3666 = vpop.f32.mrb[0].mxu0
        %3667 = vmatprep.mubr.bf16.mxu0 %v3592
        %3668 = vmatmul.mubr.bf16.gmra.mrb[0].mxu0 %v3591
        %v3669 = vpop.f32.mrb[0].mxu0
        %v3670 = vadd.f32 0.0, %v3669
        %v3671 = vpop.f32.mrb[0].mxu0
        %v3672 = vpop.f32.mrb[0].mxu0
        %v3673 = vadd.f32 0.0, %v3672
        %v3674 = vpop.f32.mrb[0].mxu0
        %3675 = vmatprep.mubr.bf16.mxu0 %v3594
        %3676 = vmatmul.mubr.bf16.gmra.mrb[0].mxu0 %v3593
        %v3677 = vpop.f32.mrb[0].mxu0
        %v3678 = vadd.f32 0.0, %v3677
        %v3679 = vpop.f32.mrb[0].mxu0
        %v3680 = vpop.f32.mrb[0].mxu0
        %v3681 = vadd.f32 0.0, %v3680
        %v3682 = vpop.f32.mrb[0].mxu0
        %3683 = vmatprep.mubr.bf16.mxu0 %v3596
        %3684 = vmatmul.mubr.bf16.gmra.mrb[0].mxu0 %v3595
        %v3685 = vpop.f32.mrb[0].mxu0
        %v3686 = vadd.f32 0.0, %v3685
        %v3687 = vpop.f32.mrb[0].mxu0
        %v3688 = vpop.f32.mrb[0].mxu0
        %v3689 = vadd.f32 0.0, %v3688
        %v3690 = vpop.f32.mrb[0].mxu0
        %3691 = vmatprep.mubr.bf16.mxu0 %v3598
        %3692 = vmatmul.mubr.bf16.gmra.mrb[0].mxu0 %v3597
        %v3693 = vpop.f32.mrb[0].mxu0
        %v3694 = vadd.f32 0.0, %v3693
        %v3695 = vpop.f32.mrb[0].mxu0
        %v3696 = vpop.f32.mrb[0].mxu0
        %v3697 = vadd.f32 0.0, %v3696
        %v3698 = vpop.f32.mrb[0].mxu0
        %3699 = vmatprep.mubr.bf16.mxu0 %v3600
        %3700 = vmatmul.mubr.bf16.gmra.mrb[0].mxu0 %v3599
        %v3701 = vpop.f32.mrb[0].mxu0
        %v3702 = vadd.f32 0.0, %v3701
        %v3703 = vpop.f32.mrb[0].mxu0
        %v3704 = vpop.f32.mrb[0].mxu0
        %v3705 = vadd.f32 0.0, %v3704
        %v3706 = vpop.f32.mrb[0].mxu0
        %3707 = vmatprep.mubr.bf16.mxu0 %v3602
        %3708 = vmatmul.mubr.bf16.gmra.mrb[0].mxu0 %v3601
        %v3709 = vpop.f32.mrb[0].mxu0
        %v3710 = vadd.f32 0.0, %v3709
        %v3711 = vpop.f32.mrb[0].mxu0
        %v3712 = vpop.f32.mrb[0].mxu0
        %v3713 = vadd.f32 0.0, %v3712
        %v3714 = vpop.f32.mrb[0].mxu0
        %3715 = vdwg.mxu0
        %v3716 = vmul.f32 %v3654, %v3571
        %v3717 = vmul.f32 %v3657, %v3572
        %v3718 = vmul.f32 %v3662, %v3573
        %v3719 = vmul.f32 %v3665, %v3574
        %v3720 = vmul.f32 %v3670, %v3575
        %v3721 = vmul.f32 %v3673, %v3576
        %v3722 = vmul.f32 %v3678, %v3577
        %v3723 = vmul.f32 %v3681, %v3578
        %v3724 = vmul.f32 %v3686, %v3579
        %v3725 = vmul.f32 %v3689, %v3580
        %v3726 = vmul.f32 %v3694, %v3581
        %v3727 = vmul.f32 %v3697, %v3582
        %v3728 = vmul.f32 %v3702, %v3583
        %v3729 = vmul.f32 %v3705, %v3584
        %v3730 = vmul.f32 %v3710, %v3585
        %v3731 = vmul.f32 %v3713, %v3586
        %v3732 = vpack.c.bf16 %v3717, %v3716
        %v3733 = vpack.c.bf16 %v3719, %v3718
        %v3734 = vpack.c.bf16 %v3721, %v3720
        %v3735 = vpack.c.bf16 %v3723, %v3722
        %v3736 = vpack.c.bf16 %v3725, %v3724
        %v3737 = vpack.c.bf16 %v3727, %v3726
        %v3738 = vpack.c.bf16 %v3729, %v3728
        %v3739 = vpack.c.bf16 %v3731, %v3730
        %v3740 = vld [vmem:[#allocation11] sm:$0xff]
        %v3741 = vld [vmem:[#allocation11 + $0x8] sm:$0xff]
        %v3742 = vld [vmem:[#allocation11 + $0x10] sm:$0xff]
        %v3743 = vld [vmem:[#allocation11 + $0x18] sm:$0xff]
        %v3744 = vld [vmem:[#allocation11 + $0x20] sm:$0xff]
        %v3745 = vld [vmem:[#allocation11 + $0x28] sm:$0xff]
        %v3746 = vld [vmem:[#allocation11 + $0x30] sm:$0xff]
        %v3747 = vld [vmem:[#allocation11 + $0x38] sm:$0xff]
        %s3748 = sadd.s32 %s3189, 16
        %s3749 = smul.addr %s3748, 8
        %s3750 = scalar_lea.vmem [#allocation2], %s3749
        %v3751 = vld [vmem:[%s3750] sm:$0xff]
        %v3752 = vld [vmem:[%s3750 + $0x8] sm:$0xff]
        %v3753 = vld [vmem:[%s3750 + $0x10] sm:$0xff]
        %v3754 = vld [vmem:[%s3750 + $0x18] sm:$0xff]
        %v3755 = vld [vmem:[%s3750 + $0x20] sm:$0xff]
        %v3756 = vld [vmem:[%s3750 + $0x28] sm:$0xff]
        %v3757 = vld [vmem:[%s3750 + $0x30] sm:$0xff]
        %v3758 = vld [vmem:[%s3750 + $0x38] sm:$0xff]
        %s3759 = scalar_lea.vmem [#allocation3], 64
        %v3760 = vld [vmem:[%s3759] sm:$0xff]
        %v3761 = vld [vmem:[%s3759 + $0x8] sm:$0xff]
        %v3762 = vld [vmem:[%s3759 + $0x10] sm:$0xff]
        %v3763 = vld [vmem:[%s3759 + $0x18] sm:$0xff]
        %v3764 = vld [vmem:[%s3759 + $0x20] sm:$0xff]
        %v3765 = vld [vmem:[%s3759 + $0x28] sm:$0xff]
        %v3766 = vld [vmem:[%s3759 + $0x30] sm:$0xff]
        %v3767 = vld [vmem:[%s3759 + $0x38] sm:$0xff]
        %s3768 = scalar_lea.vmem %s408, 256 [#allocation8]
        %v3769 = vld [vmem:[%s3768] sm:$0xff]
        %v3770 = vld [vmem:[%s3768 + $0x8] sm:$0xff]
        %v3771 = vld [vmem:[%s3768 + $0x10] sm:$0xff]
        %v3772 = vld [vmem:[%s3768 + $0x18] sm:$0xff]
        %v3773 = vld [vmem:[%s3768 + $0x20] sm:$0xff]
        %v3774 = vld [vmem:[%s3768 + $0x28] sm:$0xff]
        %v3775 = vld [vmem:[%s3768 + $0x30] sm:$0xff]
        %v3776 = vld [vmem:[%s3768 + $0x38] sm:$0xff]
        %v3777 = vld [vmem:[%s3768 + $0x40] sm:$0xff]
        %v3778 = vld [vmem:[%s3768 + $0x48] sm:$0xff]
        %v3779 = vld [vmem:[%s3768 + $0x50] sm:$0xff]
        %v3780 = vld [vmem:[%s3768 + $0x58] sm:$0xff]
        %v3781 = vld [vmem:[%s3768 + $0x60] sm:$0xff]
        %v3782 = vld [vmem:[%s3768 + $0x68] sm:$0xff]
        %v3783 = vld [vmem:[%s3768 + $0x70] sm:$0xff]
        %v3784 = vld [vmem:[%s3768 + $0x78] sm:$0xff]
        %v3785 = vld [vmem:[%s3768 + $0x80] sm:$0xff]
        %v3786 = vld [vmem:[%s3768 + $0x88] sm:$0xff]
        %v3787 = vld [vmem:[%s3768 + $0x90] sm:$0xff]
        %v3788 = vld [vmem:[%s3768 + $0x98] sm:$0xff]
        %v3789 = vld [vmem:[%s3768 + $0xa0] sm:$0xff]
        %v3790 = vld [vmem:[%s3768 + $0xa8] sm:$0xff]
        %v3791 = vld [vmem:[%s3768 + $0xb0] sm:$0xff]
        %v3792 = vld [vmem:[%s3768 + $0xb8] sm:$0xff]
        %v3793 = vld [vmem:[%s3768 + $0xc0] sm:$0xff]
        %v3794 = vld [vmem:[%s3768 + $0xc8] sm:$0xff]
        %v3795 = vld [vmem:[%s3768 + $0xd0] sm:$0xff]
        %v3796 = vld [vmem:[%s3768 + $0xd8] sm:$0xff]
        %v3797 = vld [vmem:[%s3768 + $0xe0] sm:$0xff]
        %v3798 = vld [vmem:[%s3768 + $0xe8] sm:$0xff]
        %v3799 = vld [vmem:[%s3768 + $0xf0] sm:$0xff]
        %v3800 = vld [vmem:[%s3768 + $0xf8] sm:$0xff]
        %v3802 = vsel %vm3241, %v3751, 0
        %v3805 = vsel %vm3241, %v3752, 0
        %v3808 = vsel %vm3241, %v3753, 0
        %v3811 = vsel %vm3241, %v3754, 0
        %v3814 = vsel %vm3241, %v3755, 0
        %v3817 = vsel %vm3241, %v3756, 0
        %v3820 = vsel %vm3241, %v3757, 0
        %v3823 = vsel %vm3241, %v3758, 0
        %3825 = vmatprep.subr.bf16.mxu0 %v3761
        %3826 = vmatpush1.bf16.msra.mxu0 %v3760
        %3827 = vmatprep.subr.bf16.mxu0 %v3763
        %3828 = vmatpush1.bf16.msra.mxu0 %v3762
        %3829 = vmatprep.subr.bf16.mxu0 %v3765
        %3830 = vmatpush1.bf16.msra.mxu0 %v3764
        %3831 = vmatprep.subr.bf16.mxu0 %v3767
        %3832 = vmatpush1.bf16.msra.mxu0 %v3766
        %3833 = vmatprep.subr.bf16.mxu0 0
        %3834 = vmatpush1.bf16.msra.mxu0 0
        %3835 = vmatprep.subr.bf16.mxu0 0
        %3836 = vmatpush1.bf16.msra.mxu0 0
        %3837 = vmatprep.subr.bf16.mxu0 0
        %3838 = vmatpush1.bf16.msra.mxu0 0
        %3839 = vmatprep.subr.bf16.mxu0 0
        %3840 = vmatpush1.bf16.msra.mxu0 0
        %3841 = vmatprep.subr.bf16.mxu0 0
        %3842 = vmatpush1.bf16.msra.mxu0 0
        %3843 = vmatprep.subr.bf16.mxu0 0
        %3844 = vmatpush1.bf16.msra.mxu0 0
        %3845 = vmatprep.subr.bf16.mxu0 0
        %3846 = vmatpush1.bf16.msra.mxu0 0
        %3847 = vmatprep.subr.bf16.mxu0 0
        %3848 = vmatpush1.bf16.msra.mxu0 0
        %3849 = vmatprep.subr.bf16.mxu0 0
        %3850 = vmatpush1.bf16.msra.mxu0 0
        %3851 = vmatprep.subr.bf16.mxu0 0
        %3852 = vmatpush1.bf16.msra.mxu0 0
        %3853 = vmatprep.subr.bf16.mxu0 0
        %3854 = vmatpush1.bf16.msra.mxu0 0
        %3855 = vmatprep.subr.bf16.mxu0 0
        %3856 = vmatpush1.bf16.msra.mxu0 0
        %3857 = vmatprep.mubr.bf16.mxu0 0
        %3858 = vmatmul.mubr.bf16.gmra.mrb[0].mxu0 %v3802
        %v3859 = vpop.f32.mrb[0].mxu0
        %v3860 = vadd.f32 %v3769, %v3859
        %v3861 = vpop.f32.mrb[0].mxu0
        %v3862 = vadd.f32 %v3770, %v3861
        %v3863 = vpop.f32.mrb[0].mxu0
        %v3864 = vadd.f32 %v3771, %v3863
        %v3865 = vpop.f32.mrb[0].mxu0
        %v3866 = vadd.f32 %v3772, %v3865
        %3867 = vmatprep.mubr.bf16.mxu0 0
        %3868 = vmatmul.mubr.bf16.gmra.mrb[0].mxu0 %v3805
        %v3869 = vpop.f32.mrb[0].mxu0
        %v3870 = vadd.f32 %v3773, %v3869
        %v3871 = vpop.f32.mrb[0].mxu0
        %v3872 = vadd.f32 %v3774, %v3871
        %v3873 = vpop.f32.mrb[0].mxu0
        %v3874 = vadd.f32 %v3775, %v3873
        %v3875 = vpop.f32.mrb[0].mxu0
        %v3876 = vadd.f32 %v3776, %v3875
        %3877 = vmatprep.mubr.bf16.mxu0 0
        %3878 = vmatmul.mubr.bf16.gmra.mrb[0].mxu0 %v3808
        %v3879 = vpop.f32.mrb[0].mxu0
        %v3880 = vadd.f32 %v3777, %v3879
        %v3881 = vpop.f32.mrb[0].mxu0
        %v3882 = vadd.f32 %v3778, %v3881
        %v3883 = vpop.f32.mrb[0].mxu0
        %v3884 = vadd.f32 %v3779, %v3883
        %v3885 = vpop.f32.mrb[0].mxu0
        %v3886 = vadd.f32 %v3780, %v3885
        %3887 = vmatprep.mubr.bf16.mxu0 0
        %3888 = vmatmul.mubr.bf16.gmra.mrb[0].mxu0 %v3811
        %v3889 = vpop.f32.mrb[0].mxu0
        %v3890 = vadd.f32 %v3781, %v3889
        %v3891 = vpop.f32.mrb[0].mxu0
        %v3892 = vadd.f32 %v3782, %v3891
        %v3893 = vpop.f32.mrb[0].mxu0
        %v3894 = vadd.f32 %v3783, %v3893
        %v3895 = vpop.f32.mrb[0].mxu0
        %v3896 = vadd.f32 %v3784, %v3895
        %3897 = vmatprep.mubr.bf16.mxu0 0
        %3898 = vmatmul.mubr.bf16.gmra.mrb[0].mxu0 %v3814
        %v3899 = vpop.f32.mrb[0].mxu0
        %v3900 = vadd.f32 %v3785, %v3899
        %v3901 = vpop.f32.mrb[0].mxu0
        %v3902 = vadd.f32 %v3786, %v3901
        %v3903 = vpop.f32.mrb[0].mxu0
        %v3904 = vadd.f32 %v3787, %v3903
        %v3905 = vpop.f32.mrb[0].mxu0
        %v3906 = vadd.f32 %v3788, %v3905
        %3907 = vmatprep.mubr.bf16.mxu0 0
        %3908 = vmatmul.mubr.bf16.gmra.mrb[0].mxu0 %v3817
        %v3909 = vpop.f32.mrb[0].mxu0
        %v3910 = vadd.f32 %v3789, %v3909
        %v3911 = vpop.f32.mrb[0].mxu0
        %v3912 = vadd.f32 %v3790, %v3911
        %v3913 = vpop.f32.mrb[0].mxu0
        %v3914 = vadd.f32 %v3791, %v3913
        %v3915 = vpop.f32.mrb[0].mxu0
        %v3916 = vadd.f32 %v3792, %v3915
        %3917 = vmatprep.mubr.bf16.mxu0 0
        %3918 = vmatmul.mubr.bf16.gmra.mrb[0].mxu0 %v3820
        %v3919 = vpop.f32.mrb[0].mxu0
        %v3920 = vadd.f32 %v3793, %v3919
        %v3921 = vpop.f32.mrb[0].mxu0
        %v3922 = vadd.f32 %v3794, %v3921
        %v3923 = vpop.f32.mrb[0].mxu0
        %v3924 = vadd.f32 %v3795, %v3923
        %v3925 = vpop.f32.mrb[0].mxu0
        %v3926 = vadd.f32 %v3796, %v3925
        %3927 = vmatprep.mubr.bf16.mxu0 0
        %3928 = vmatmul.mubr.bf16.gmra.mrb[0].mxu0 %v3823
        %v3929 = vpop.f32.mrb[0].mxu0
        %v3930 = vadd.f32 %v3797, %v3929
        %v3931 = vpop.f32.mrb[0].mxu0
        %v3932 = vadd.f32 %v3798, %v3931
        %v3933 = vpop.f32.mrb[0].mxu0
        %v3934 = vadd.f32 %v3799, %v3933
        %v3935 = vpop.f32.mrb[0].mxu0
        %v3936 = vadd.f32 %v3800, %v3935
        %3937 = vdwg.mxu0
        %v3938 = vmax.f32 %v3860, %v3862
        %3939 = vmax.xlane.f32.xlu0 %v3938
        %v3940 = vpop.xlane.xlu0 %3939
        %v3941 = vmax.f32 %v3864, %v3866
        %3942 = vmax.xlane.f32.xlu0 %v3941
        %v3943 = vpop.xlane.xlu0 %3942
        %v3944 = vmax.f32 %v3870, %v3872
        %3945 = vmax.xlane.f32.xlu0 %v3944
        %v3946 = vpop.xlane.xlu0 %3945
        %v3947 = vmax.f32 %v3874, %v3876
        %3948 = vmax.xlane.f32.xlu0 %v3947
        %v3949 = vpop.xlane.xlu0 %3948
        %v3950 = vmax.f32 %v3880, %v3882
        %3951 = vmax.xlane.f32.xlu0 %v3950
        %v3952 = vpop.xlane.xlu0 %3951
        %v3953 = vmax.f32 %v3884, %v3886
        %3954 = vmax.xlane.f32.xlu0 %v3953
        %v3955 = vpop.xlane.xlu0 %3954
        %v3956 = vmax.f32 %v3890, %v3892
        %3957 = vmax.xlane.f32.xlu0 %v3956
        %v3958 = vpop.xlane.xlu0 %3957
        %v3959 = vmax.f32 %v3894, %v3896
        %3960 = vmax.xlane.f32.xlu0 %v3959
        %v3961 = vpop.xlane.xlu0 %3960
        %v3962 = vmax.f32 %v3900, %v3902
        %3963 = vmax.xlane.f32.xlu0 %v3962
        %v3964 = vpop.xlane.xlu0 %3963
        %v3965 = vmax.f32 %v3904, %v3906
        %3966 = vmax.xlane.f32.xlu0 %v3965
        %v3967 = vpop.xlane.xlu0 %3966
        %v3968 = vmax.f32 %v3910, %v3912
        %3969 = vmax.xlane.f32.xlu0 %v3968
        %v3970 = vpop.xlane.xlu0 %3969
        %v3971 = vmax.f32 %v3914, %v3916
        %3972 = vmax.xlane.f32.xlu0 %v3971
        %v3973 = vpop.xlane.xlu0 %3972
        %v3974 = vmax.f32 %v3920, %v3922
        %3975 = vmax.xlane.f32.xlu0 %v3974
        %v3976 = vpop.xlane.xlu0 %3975
        %v3977 = vmax.f32 %v3924, %v3926
        %3978 = vmax.xlane.f32.xlu0 %v3977
        %v3979 = vpop.xlane.xlu0 %3978
        %v3980 = vmax.f32 %v3930, %v3932
        %3981 = vmax.xlane.f32.xlu0 %v3980
        %v3982 = vpop.xlane.xlu0 %3981
        %v3983 = vmax.f32 %v3934, %v3936
        %3984 = vmax.xlane.f32.xlu0 %v3983
        %v3985 = vpop.xlane.xlu0 %3984
        %v3986 = vsub.f32 %v3860, %v3940
        %v3987 = vsub.f32 %v3862, %v3940
        %v3988 = vsub.f32 %v3864, %v3943
        %v3989 = vsub.f32 %v3866, %v3943
        %v3990 = vsub.f32 %v3870, %v3946
        %v3991 = vsub.f32 %v3872, %v3946
        %v3992 = vsub.f32 %v3874, %v3949
        %v3993 = vsub.f32 %v3876, %v3949
        %v3994 = vsub.f32 %v3880, %v3952
        %v3995 = vsub.f32 %v3882, %v3952
        %v3996 = vsub.f32 %v3884, %v3955
        %v3997 = vsub.f32 %v3886, %v3955
        %v3998 = vsub.f32 %v3890, %v3958
        %v3999 = vsub.f32 %v3892, %v3958
        %v4000 = vsub.f32 %v3894, %v3961
        %v4001 = vsub.f32 %v3896, %v3961
        %v4002 = vsub.f32 %v3900, %v3964
        %v4003 = vsub.f32 %v3902, %v3964
        %v4004 = vsub.f32 %v3904, %v3967
        %v4005 = vsub.f32 %v3906, %v3967
        %v4006 = vsub.f32 %v3910, %v3970
        %v4007 = vsub.f32 %v3912, %v3970
        %v4008 = vsub.f32 %v3914, %v3973
        %v4009 = vsub.f32 %v3916, %v3973
        %v4010 = vsub.f32 %v3920, %v3976
        %v4011 = vsub.f32 %v3922, %v3976
        %v4012 = vsub.f32 %v3924, %v3979
        %v4013 = vsub.f32 %v3926, %v3979
        %v4014 = vsub.f32 %v3930, %v3982
        %v4015 = vsub.f32 %v3932, %v3982
        %v4016 = vsub.f32 %v3934, %v3985
        %v4017 = vsub.f32 %v3936, %v3985
        %v4018 = vmul.f32 %v3986, 1.442695
        %v4019 = vpow.pop %v4018
        %v4020 = vmul.f32 %v3987, 1.442695
        %v4021 = vpow.pop %v4020
        %v4022 = vmul.f32 %v3988, 1.442695
        %v4023 = vpow.pop %v4022
        %v4024 = vmul.f32 %v3989, 1.442695
        %v4025 = vpow.pop %v4024
        %v4026 = vmul.f32 %v3990, 1.442695
        %v4027 = vpow.pop %v4026
        %v4028 = vmul.f32 %v3991, 1.442695
        %v4029 = vpow.pop %v4028
        %v4030 = vmul.f32 %v3992, 1.442695
        %v4031 = vpow.pop %v4030
        %v4032 = vmul.f32 %v3993, 1.442695
        %v4033 = vpow.pop %v4032
        %v4034 = vmul.f32 %v3994, 1.442695
        %v4035 = vpow.pop %v4034
        %v4036 = vmul.f32 %v3995, 1.442695
        %v4037 = vpow.pop %v4036
        %v4038 = vmul.f32 %v3996, 1.442695
        %v4039 = vpow.pop %v4038
        %v4040 = vmul.f32 %v3997, 1.442695
        %v4041 = vpow.pop %v4040
        %v4042 = vmul.f32 %v3998, 1.442695
        %v4043 = vpow.pop %v4042
        %v4044 = vmul.f32 %v3999, 1.442695
        %v4045 = vpow.pop %v4044
        %v4046 = vmul.f32 %v4000, 1.442695
        %v4047 = vpow.pop %v4046
        %v4048 = vmul.f32 %v4001, 1.442695
        %v4049 = vpow.pop %v4048
        %v4050 = vmul.f32 %v4002, 1.442695
        %v4051 = vpow.pop %v4050
        %v4052 = vmul.f32 %v4003, 1.442695
        %v4053 = vpow.pop %v4052
        %v4054 = vmul.f32 %v4004, 1.442695
        %v4055 = vpow.pop %v4054
        %v4056 = vmul.f32 %v4005, 1.442695
        %v4057 = vpow.pop %v4056
        %v4058 = vmul.f32 %v4006, 1.442695
        %v4059 = vpow.pop %v4058
        %v4060 = vmul.f32 %v4007, 1.442695
        %v4061 = vpow.pop %v4060
        %v4062 = vmul.f32 %v4008, 1.442695
        %v4063 = vpow.pop %v4062
        %v4064 = vmul.f32 %v4009, 1.442695
        %v4065 = vpow.pop %v4064
        %v4066 = vmul.f32 %v4010, 1.442695
        %v4067 = vpow.pop %v4066
        %v4068 = vmul.f32 %v4011, 1.442695
        %v4069 = vpow.pop %v4068
        %v4070 = vmul.f32 %v4012, 1.442695
        %v4071 = vpow.pop %v4070
        %v4072 = vmul.f32 %v4013, 1.442695
        %v4073 = vpow.pop %v4072
        %v4074 = vmul.f32 %v4014, 1.442695
        %v4075 = vpow.pop %v4074
        %v4076 = vmul.f32 %v4015, 1.442695
        %v4077 = vpow.pop %v4076
        %v4078 = vmul.f32 %v4016, 1.442695
        %v4079 = vpow.pop %v4078
        %v4080 = vmul.f32 %v4017, 1.442695
        %v4081 = vpow.pop %v4080
        %v4082 = vadd.f32 %v4019, %v4021
        %4083 = vadd.xlane.f32.xlu0 %v4082
        %v4084 = vpop.xlane.xlu0 %4083
        %v4085 = vadd.f32 %v4023, %v4025
        %4086 = vadd.xlane.f32.xlu0 %v4085
        %v4087 = vpop.xlane.xlu0 %4086
        %v4088 = vadd.f32 %v4027, %v4029
        %4089 = vadd.xlane.f32.xlu0 %v4088
        %v4090 = vpop.xlane.xlu0 %4089
        %v4091 = vadd.f32 %v4031, %v4033
        %4092 = vadd.xlane.f32.xlu0 %v4091
        %v4093 = vpop.xlane.xlu0 %4092
        %v4094 = vadd.f32 %v4035, %v4037
        %4095 = vadd.xlane.f32.xlu0 %v4094
        %v4096 = vpop.xlane.xlu0 %4095
        %v4097 = vadd.f32 %v4039, %v4041
        %4098 = vadd.xlane.f32.xlu0 %v4097
        %v4099 = vpop.xlane.xlu0 %4098
        %v4100 = vadd.f32 %v4043, %v4045
        %4101 = vadd.xlane.f32.xlu0 %v4100
        %v4102 = vpop.xlane.xlu0 %4101
        %v4103 = vadd.f32 %v4047, %v4049
        %4104 = vadd.xlane.f32.xlu0 %v4103
        %v4105 = vpop.xlane.xlu0 %4104
        %v4106 = vadd.f32 %v4051, %v4053
        %4107 = vadd.xlane.f32.xlu0 %v4106
        %v4108 = vpop.xlane.xlu0 %4107
        %v4109 = vadd.f32 %v4055, %v4057
        %4110 = vadd.xlane.f32.xlu0 %v4109
        %v4111 = vpop.xlane.xlu0 %4110
        %v4112 = vadd.f32 %v4059, %v4061
        %4113 = vadd.xlane.f32.xlu0 %v4112
        %v4114 = vpop.xlane.xlu0 %4113
        %v4115 = vadd.f32 %v4063, %v4065
        %4116 = vadd.xlane.f32.xlu0 %v4115
        %v4117 = vpop.xlane.xlu0 %4116
        %v4118 = vadd.f32 %v4067, %v4069
        %4119 = vadd.xlane.f32.xlu0 %v4118
        %v4120 = vpop.xlane.xlu0 %4119
        %v4121 = vadd.f32 %v4071, %v4073
        %4122 = vadd.xlane.f32.xlu0 %v4121
        %v4123 = vpop.xlane.xlu0 %4122
        %v4124 = vadd.f32 %v4075, %v4077
        %4125 = vadd.xlane.f32.xlu0 %v4124
        %v4126 = vpop.xlane.xlu0 %4125
        %v4127 = vadd.f32 %v4079, %v4081
        %4128 = vadd.xlane.f32.xlu0 %v4127
        %v4129 = vpop.xlane.xlu0 %4128
        %v4130 = vrcp.pop %v4084
        %v4131 = vrcp.pop %v4087
        %v4132 = vrcp.pop %v4090
        %v4133 = vrcp.pop %v4093
        %v4134 = vrcp.pop %v4096
        %v4135 = vrcp.pop %v4099
        %v4136 = vrcp.pop %v4102
        %v4137 = vrcp.pop %v4105
        %v4138 = vrcp.pop %v4108
        %v4139 = vrcp.pop %v4111
        %v4140 = vrcp.pop %v4114
        %v4141 = vrcp.pop %v4117
        %v4142 = vrcp.pop %v4120
        %v4143 = vrcp.pop %v4123
        %v4144 = vrcp.pop %v4126
        %v4145 = vrcp.pop %v4129
        %v4146 = vpack.c.bf16 %v4023, %v4019
        %v4147 = vpack.c.bf16 %v4025, %v4021
        %v4148 = vpack.c.bf16 %v4031, %v4027
        %v4149 = vpack.c.bf16 %v4033, %v4029
        %v4150 = vpack.c.bf16 %v4039, %v4035
        %v4151 = vpack.c.bf16 %v4041, %v4037
        %v4152 = vpack.c.bf16 %v4047, %v4043
        %v4153 = vpack.c.bf16 %v4049, %v4045
        %v4154 = vpack.c.bf16 %v4055, %v4051
        %v4155 = vpack.c.bf16 %v4057, %v4053
        %v4156 = vpack.c.bf16 %v4063, %v4059
        %v4157 = vpack.c.bf16 %v4065, %v4061
        %v4158 = vpack.c.bf16 %v4071, %v4067
        %v4159 = vpack.c.bf16 %v4073, %v4069
        %v4160 = vpack.c.bf16 %v4079, %v4075
        %v4161 = vpack.c.bf16 %v4081, %v4077
        %s4162 = scalar_lea.vmem [#allocation4], 128
        %v4163 = vld [vmem:[%s4162] sm:$0xff]
        %v4164 = vld [vmem:[%s4162 + $0x8] sm:$0xff]
        %v4165 = vld [vmem:[%s4162 + $0x10] sm:$0xff]
        %v4166 = vld [vmem:[%s4162 + $0x18] sm:$0xff]
        %v4167 = vld [vmem:[%s4162 + $0x20] sm:$0xff]
        %v4168 = vld [vmem:[%s4162 + $0x28] sm:$0xff]
        %v4169 = vld [vmem:[%s4162 + $0x30] sm:$0xff]
        %v4170 = vld [vmem:[%s4162 + $0x38] sm:$0xff]
        %v4171 = vld [vmem:[%s4162 + $0x40] sm:$0xff]
        %v4172 = vld [vmem:[%s4162 + $0x48] sm:$0xff]
        %v4173 = vld [vmem:[%s4162 + $0x50] sm:$0xff]
        %v4174 = vld [vmem:[%s4162 + $0x58] sm:$0xff]
        %v4175 = vld [vmem:[%s4162 + $0x60] sm:$0xff]
        %v4176 = vld [vmem:[%s4162 + $0x68] sm:$0xff]
        %v4177 = vld [vmem:[%s4162 + $0x70] sm:$0xff]
        %v4178 = vld [vmem:[%s4162 + $0x78] sm:$0xff]
        %4179 = vmatprep.subr.bf16.mxu0 0
        %4180 = vmatpush1.bf16.msra.mxu0 %v4163
        %4181 = vmatprep.subr.bf16.mxu0 0
        %4182 = vmatpush1.bf16.msra.mxu0 %v4164
        %4183 = vmatprep.subr.bf16.mxu0 0
        %4184 = vmatpush1.bf16.msra.mxu0 %v4165
        %4185 = vmatprep.subr.bf16.mxu0 0
        %4186 = vmatpush1.bf16.msra.mxu0 %v4166
        %4187 = vmatprep.subr.bf16.mxu0 0
        %4188 = vmatpush1.bf16.msra.mxu0 %v4167
        %4189 = vmatprep.subr.bf16.mxu0 0
        %4190 = vmatpush1.bf16.msra.mxu0 %v4168
        %4191 = vmatprep.subr.bf16.mxu0 0
        %4192 = vmatpush1.bf16.msra.mxu0 %v4169
        %4193 = vmatprep.subr.bf16.mxu0 0
        %4194 = vmatpush1.bf16.msra.mxu0 %v4170
        %4195 = vmatprep.subr.bf16.mxu0 0
        %4196 = vmatpush1.bf16.msra.mxu0 %v4171
        %4197 = vmatprep.subr.bf16.mxu0 0
        %4198 = vmatpush1.bf16.msra.mxu0 %v4172
        %4199 = vmatprep.subr.bf16.mxu0 0
        %4200 = vmatpush1.bf16.msra.mxu0 %v4173
        %4201 = vmatprep.subr.bf16.mxu0 0
        %4202 = vmatpush1.bf16.msra.mxu0 %v4174
        %4203 = vmatprep.subr.bf16.mxu0 0
        %4204 = vmatpush1.bf16.msra.mxu0 %v4175
        %4205 = vmatprep.subr.bf16.mxu0 0
        %4206 = vmatpush1.bf16.msra.mxu0 %v4176
        %4207 = vmatprep.subr.bf16.mxu0 0
        %4208 = vmatpush1.bf16.msra.mxu0 %v4177
        %4209 = vmatprep.subr.bf16.mxu0 0
        %4210 = vmatpush1.bf16.msra.mxu0 %v4178
        %4211 = vmatprep.mubr.bf16.mxu0 %v4147
        %4212 = vmatmul.mubr.bf16.gmra.mrb[0].mxu0 %v4146
        %v4213 = vpop.f32.mrb[0].mxu0
        %v4214 = vadd.f32 0.0, %v4213
        %v4215 = vpop.f32.mrb[0].mxu0
        %v4216 = vpop.f32.mrb[0].mxu0
        %v4217 = vadd.f32 0.0, %v4216
        %v4218 = vpop.f32.mrb[0].mxu0
        %4219 = vmatprep.mubr.bf16.mxu0 %v4149
        %4220 = vmatmul.mubr.bf16.gmra.mrb[0].mxu0 %v4148
        %v4221 = vpop.f32.mrb[0].mxu0
        %v4222 = vadd.f32 0.0, %v4221
        %v4223 = vpop.f32.mrb[0].mxu0
        %v4224 = vpop.f32.mrb[0].mxu0
        %v4225 = vadd.f32 0.0, %v4224
        %v4226 = vpop.f32.mrb[0].mxu0
        %4227 = vmatprep.mubr.bf16.mxu0 %v4151
        %4228 = vmatmul.mubr.bf16.gmra.mrb[0].mxu0 %v4150
        %v4229 = vpop.f32.mrb[0].mxu0
        %v4230 = vadd.f32 0.0, %v4229
        %v4231 = vpop.f32.mrb[0].mxu0
        %v4232 = vpop.f32.mrb[0].mxu0
        %v4233 = vadd.f32 0.0, %v4232
        %v4234 = vpop.f32.mrb[0].mxu0
        %4235 = vmatprep.mubr.bf16.mxu0 %v4153
        %4236 = vmatmul.mubr.bf16.gmra.mrb[0].mxu0 %v4152
        %v4237 = vpop.f32.mrb[0].mxu0
        %v4238 = vadd.f32 0.0, %v4237
        %v4239 = vpop.f32.mrb[0].mxu0
        %v4240 = vpop.f32.mrb[0].mxu0
        %v4241 = vadd.f32 0.0, %v4240
        %v4242 = vpop.f32.mrb[0].mxu0
        %4243 = vmatprep.mubr.bf16.mxu0 %v4155
        %4244 = vmatmul.mubr.bf16.gmra.mrb[0].mxu0 %v4154
        %v4245 = vpop.f32.mrb[0].mxu0
        %v4246 = vadd.f32 0.0, %v4245
        %v4247 = vpop.f32.mrb[0].mxu0
        %v4248 = vpop.f32.mrb[0].mxu0
        %v4249 = vadd.f32 0.0, %v4248
        %v4250 = vpop.f32.mrb[0].mxu0
        %4251 = vmatprep.mubr.bf16.mxu0 %v4157
        %4252 = vmatmul.mubr.bf16.gmra.mrb[0].mxu0 %v4156
        %v4253 = vpop.f32.mrb[0].mxu0
        %v4254 = vadd.f32 0.0, %v4253
        %v4255 = vpop.f32.mrb[0].mxu0
        %v4256 = vpop.f32.mrb[0].mxu0
        %v4257 = vadd.f32 0.0, %v4256
        %v4258 = vpop.f32.mrb[0].mxu0
        %4259 = vmatprep.mubr.bf16.mxu0 %v4159
        %4260 = vmatmul.mubr.bf16.gmra.mrb[0].mxu0 %v4158
        %v4261 = vpop.f32.mrb[0].mxu0
        %v4262 = vadd.f32 0.0, %v4261
        %v4263 = vpop.f32.mrb[0].mxu0
        %v4264 = vpop.f32.mrb[0].mxu0
        %v4265 = vadd.f32 0.0, %v4264
        %v4266 = vpop.f32.mrb[0].mxu0
        %4267 = vmatprep.mubr.bf16.mxu0 %v4161
        %4268 = vmatmul.mubr.bf16.gmra.mrb[0].mxu0 %v4160
        %v4269 = vpop.f32.mrb[0].mxu0
        %v4270 = vadd.f32 0.0, %v4269
        %v4271 = vpop.f32.mrb[0].mxu0
        %v4272 = vpop.f32.mrb[0].mxu0
        %v4273 = vadd.f32 0.0, %v4272
        %v4274 = vpop.f32.mrb[0].mxu0
        %4275 = vdwg.mxu0
        %v4276 = vmul.f32 %v4214, %v4130
        %v4277 = vmul.f32 %v4217, %v4131
        %v4278 = vmul.f32 %v4222, %v4132
        %v4279 = vmul.f32 %v4225, %v4133
        %v4280 = vmul.f32 %v4230, %v4134
        %v4281 = vmul.f32 %v4233, %v4135
        %v4282 = vmul.f32 %v4238, %v4136
        %v4283 = vmul.f32 %v4241, %v4137
        %v4284 = vmul.f32 %v4246, %v4138
        %v4285 = vmul.f32 %v4249, %v4139
        %v4286 = vmul.f32 %v4254, %v4140
        %v4287 = vmul.f32 %v4257, %v4141
        %v4288 = vmul.f32 %v4262, %v4142
        %v4289 = vmul.f32 %v4265, %v4143
        %v4290 = vmul.f32 %v4270, %v4144
        %v4291 = vmul.f32 %v4273, %v4145
        %v4292 = vpack.c.bf16 %v4277, %v4276
        %v4293 = vpack.c.bf16 %v4279, %v4278
        %v4294 = vpack.c.bf16 %v4281, %v4280
        %v4295 = vpack.c.bf16 %v4283, %v4282
        %v4296 = vpack.c.bf16 %v4285, %v4284
        %v4297 = vpack.c.bf16 %v4287, %v4286
        %v4298 = vpack.c.bf16 %v4289, %v4288
        %v4299 = vpack.c.bf16 %v4291, %v4290
        %v4300 = vld [vmem:[#allocation11 + $0x40] sm:$0xff]
        %v4301 = vld [vmem:[#allocation11 + $0x48] sm:$0xff]
        %v4302 = vld [vmem:[#allocation11 + $0x50] sm:$0xff]
        %v4303 = vld [vmem:[#allocation11 + $0x58] sm:$0xff]
        %v4304 = vld [vmem:[#allocation11 + $0x60] sm:$0xff]
        %v4305 = vld [vmem:[#allocation11 + $0x68] sm:$0xff]
        %v4306 = vld [vmem:[#allocation11 + $0x70] sm:$0xff]
        %v4307 = vld [vmem:[#allocation11 + $0x78] sm:$0xff]
        %v4316 = vunpack.c.l.b16 %v4300
        %v4317 = vunpack.c.h.b16 %v4300
        %v4318 = vunpack.c.l.b16 %v4301
        %v4319 = vunpack.c.h.b16 %v4301
        %v4320 = vunpack.c.l.b16 %v4302
        %v4321 = vunpack.c.h.b16 %v4302
        %v4322 = vunpack.c.l.b16 %v4303
        %v4323 = vunpack.c.h.b16 %v4303
        %v4324 = vunpack.c.l.b16 %v4304
        %v4325 = vunpack.c.h.b16 %v4304
        %v4326 = vunpack.c.l.b16 %v4305
        %v4327 = vunpack.c.h.b16 %v4305
        %v4328 = vunpack.c.l.b16 %v4306
        %v4329 = vunpack.c.h.b16 %v4306
        %v4330 = vunpack.c.l.b16 %v4307
        %v4331 = vunpack.c.h.b16 %v4307
        %v4332 = vpack.c.b16 %v4318, %v4316
        %v4333 = vpack.c.b16 %v4319, %v4317
        %v4334 = vpack.c.b16 %v4322, %v4320
        %v4335 = vpack.c.b16 %v4323, %v4321
        %v4336 = vpack.c.b16 %v4326, %v4324
        %v4337 = vpack.c.b16 %v4327, %v4325
        %v4338 = vpack.c.b16 %v4330, %v4328
        %v4339 = vpack.c.b16 %v4331, %v4329
        %v4349 = vsel %vm3241, %v4292, 0
        %v4352 = vsel %vm3241, %v4293, 0
        %v4355 = vsel %vm3241, %v4294, 0
        %v4358 = vsel %vm3241, %v4295, 0
        %v4361 = vsel %vm3241, %v4296, 0
        %v4364 = vsel %vm3241, %v4297, 0
        %v4367 = vsel %vm3241, %v4298, 0
        %v4370 = vsel %vm3241, %v4299, 0
        %4372 = vmatprep.subr.bf16.mxu0 %v4333
        %4373 = vmatpush1.bf16.msra.mxu0 %v4332
        %4374 = vmatprep.subr.bf16.mxu0 %v4335
        %4375 = vmatpush1.bf16.msra.mxu0 %v4334
        %4376 = vmatprep.subr.bf16.mxu0 %v4337
        %4377 = vmatpush1.bf16.msra.mxu0 %v4336
        %4378 = vmatprep.subr.bf16.mxu0 %v4339
        %4379 = vmatpush1.bf16.msra.mxu0 %v4338
        %4380 = vmatprep.subr.bf16.mxu0 0
        %4381 = vmatpush1.bf16.msra.mxu0 0
        %4382 = vmatprep.subr.bf16.mxu0 0
        %4383 = vmatpush1.bf16.msra.mxu0 0
        %4384 = vmatprep.subr.bf16.mxu0 0
        %4385 = vmatpush1.bf16.msra.mxu0 0
        %4386 = vmatprep.subr.bf16.mxu0 0
        %4387 = vmatpush1.bf16.msra.mxu0 0
        %4388 = vmatprep.subr.bf16.mxu0 0
        %4389 = vmatpush1.bf16.msra.mxu0 0
        %4390 = vmatprep.subr.bf16.mxu0 0
        %4391 = vmatpush1.bf16.msra.mxu0 0
        %4392 = vmatprep.subr.bf16.mxu0 0
        %4393 = vmatpush1.bf16.msra.mxu0 0
        %4394 = vmatprep.subr.bf16.mxu0 0
        %4395 = vmatpush1.bf16.msra.mxu0 0
        %4396 = vmatprep.subr.bf16.mxu0 0
        %4397 = vmatpush1.bf16.msra.mxu0 0
        %4398 = vmatprep.subr.bf16.mxu0 0
        %4399 = vmatpush1.bf16.msra.mxu0 0
        %4400 = vmatprep.subr.bf16.mxu0 0
        %4401 = vmatpush1.bf16.msra.mxu0 0
        %4402 = vmatprep.subr.bf16.mxu0 0
        %4403 = vmatpush1.bf16.msra.mxu0 0
        %4404 = vmatprep.mubr.bf16.mxu0 0
        %4405 = vmatmul.mubr.bf16.gmra.mrb[0].mxu0 %v4349
        %v4406 = vpop.f32.mrb[0].mxu0
        %v4407 = vadd.f32 0.0, %v4406
        %v4408 = vpop.f32.mrb[0].mxu0
        %v4409 = vadd.f32 0.0, %v4408
        %v4410 = vpop.f32.mrb[0].mxu0
        %v4411 = vadd.f32 0.0, %v4410
        %v4412 = vpop.f32.mrb[0].mxu0
        %v4413 = vadd.f32 0.0, %v4412
        %4414 = vmatprep.mubr.bf16.mxu0 0
        %4415 = vmatmul.mubr.bf16.gmra.mrb[0].mxu0 %v4352
        %v4416 = vpop.f32.mrb[0].mxu0
        %v4417 = vadd.f32 0.0, %v4416
        %v4418 = vpop.f32.mrb[0].mxu0
        %v4419 = vadd.f32 0.0, %v4418
        %v4420 = vpop.f32.mrb[0].mxu0
        %v4421 = vadd.f32 0.0, %v4420
        %v4422 = vpop.f32.mrb[0].mxu0
        %v4423 = vadd.f32 0.0, %v4422
        %4424 = vmatprep.mubr.bf16.mxu0 0
        %4425 = vmatmul.mubr.bf16.gmra.mrb[0].mxu0 %v4355
        %v4426 = vpop.f32.mrb[0].mxu0
        %v4427 = vadd.f32 0.0, %v4426
        %v4428 = vpop.f32.mrb[0].mxu0
        %v4429 = vadd.f32 0.0, %v4428
        %v4430 = vpop.f32.mrb[0].mxu0
        %v4431 = vadd.f32 0.0, %v4430
        %v4432 = vpop.f32.mrb[0].mxu0
        %v4433 = vadd.f32 0.0, %v4432
        %4434 = vmatprep.mubr.bf16.mxu0 0
        %4435 = vmatmul.mubr.bf16.gmra.mrb[0].mxu0 %v4358
        %v4436 = vpop.f32.mrb[0].mxu0
        %v4437 = vadd.f32 0.0, %v4436
        %v4438 = vpop.f32.mrb[0].mxu0
        %v4439 = vadd.f32 0.0, %v4438
        %v4440 = vpop.f32.mrb[0].mxu0
        %v4441 = vadd.f32 0.0, %v4440
        %v4442 = vpop.f32.mrb[0].mxu0
        %v4443 = vadd.f32 0.0, %v4442
        %4444 = vmatprep.mubr.bf16.mxu0 0
        %4445 = vmatmul.mubr.bf16.gmra.mrb[0].mxu0 %v4361
        %v4446 = vpop.f32.mrb[0].mxu0
        %v4447 = vadd.f32 0.0, %v4446
        %v4448 = vpop.f32.mrb[0].mxu0
        %v4449 = vadd.f32 0.0, %v4448
        %v4450 = vpop.f32.mrb[0].mxu0
        %v4451 = vadd.f32 0.0, %v4450
        %v4452 = vpop.f32.mrb[0].mxu0
        %v4453 = vadd.f32 0.0, %v4452
        %4454 = vmatprep.mubr.bf16.mxu0 0
        %4455 = vmatmul.mubr.bf16.gmra.mrb[0].mxu0 %v4364
        %v4456 = vpop.f32.mrb[0].mxu0
        %v4457 = vadd.f32 0.0, %v4456
        %v4458 = vpop.f32.mrb[0].mxu0
        %v4459 = vadd.f32 0.0, %v4458
        %v4460 = vpop.f32.mrb[0].mxu0
        %v4461 = vadd.f32 0.0, %v4460
        %v4462 = vpop.f32.mrb[0].mxu0
        %v4463 = vadd.f32 0.0, %v4462
        %4464 = vmatprep.mubr.bf16.mxu0 0
        %4465 = vmatmul.mubr.bf16.gmra.mrb[0].mxu0 %v4367
        %v4466 = vpop.f32.mrb[0].mxu0
        %v4467 = vadd.f32 0.0, %v4466
        %v4468 = vpop.f32.mrb[0].mxu0
        %v4469 = vadd.f32 0.0, %v4468
        %v4470 = vpop.f32.mrb[0].mxu0
        %v4471 = vadd.f32 0.0, %v4470
        %v4472 = vpop.f32.mrb[0].mxu0
        %v4473 = vadd.f32 0.0, %v4472
        %4474 = vmatprep.mubr.bf16.mxu0 0
        %4475 = vmatmul.mubr.bf16.gmra.mrb[0].mxu0 %v4370
        %v4476 = vpop.f32.mrb[0].mxu0
        %v4477 = vadd.f32 0.0, %v4476
        %v4478 = vpop.f32.mrb[0].mxu0
        %v4479 = vadd.f32 0.0, %v4478
        %v4480 = vpop.f32.mrb[0].mxu0
        %v4481 = vadd.f32 0.0, %v4480
        %v4482 = vpop.f32.mrb[0].mxu0
        %v4483 = vadd.f32 0.0, %v4482
        %4484 = vdwg.mxu0
        %v4493 = vunpack.c.l.b16 %v3740
        %v4494 = vunpack.c.h.b16 %v3740
        %v4495 = vunpack.c.l.b16 %v3741
        %v4496 = vunpack.c.h.b16 %v3741
        %v4497 = vunpack.c.l.b16 %v3742
        %v4498 = vunpack.c.h.b16 %v3742
        %v4499 = vunpack.c.l.b16 %v3743
        %v4500 = vunpack.c.h.b16 %v3743
        %v4501 = vunpack.c.l.b16 %v3744
        %v4502 = vunpack.c.h.b16 %v3744
        %v4503 = vunpack.c.l.b16 %v3745
        %v4504 = vunpack.c.h.b16 %v3745
        %v4505 = vunpack.c.l.b16 %v3746
        %v4506 = vunpack.c.h.b16 %v3746
        %v4507 = vunpack.c.l.b16 %v3747
        %v4508 = vunpack.c.h.b16 %v3747
        %v4509 = vpack.c.b16 %v4495, %v4493
        %v4510 = vpack.c.b16 %v4496, %v4494
        %v4511 = vpack.c.b16 %v4499, %v4497
        %v4512 = vpack.c.b16 %v4500, %v4498
        %v4513 = vpack.c.b16 %v4503, %v4501
        %v4514 = vpack.c.b16 %v4504, %v4502
        %v4515 = vpack.c.b16 %v4507, %v4505
        %v4516 = vpack.c.b16 %v4508, %v4506
        %v4526 = vsel %vm3241, %v3732, 0
        %v4529 = vsel %vm3241, %v3733, 0
        %v4532 = vsel %vm3241, %v3734, 0
        %v4535 = vsel %vm3241, %v3735, 0
        %v4538 = vsel %vm3241, %v3736, 0
        %v4541 = vsel %vm3241, %v3737, 0
        %v4544 = vsel %vm3241, %v3738, 0
        %v4547 = vsel %vm3241, %v3739, 0
        %4549 = vmatprep.subr.bf16.mxu0 %v4510
        %4550 = vmatpush1.bf16.msra.mxu0 %v4509
        %4551 = vmatprep.subr.bf16.mxu0 %v4512
        %4552 = vmatpush1.bf16.msra.mxu0 %v4511
        %4553 = vmatprep.subr.bf16.mxu0 %v4514
        %4554 = vmatpush1.bf16.msra.mxu0 %v4513
        %4555 = vmatprep.subr.bf16.mxu0 %v4516
        %4556 = vmatpush1.bf16.msra.mxu0 %v4515
        %4557 = vmatprep.subr.bf16.mxu0 0
        %4558 = vmatpush1.bf16.msra.mxu0 0
        %4559 = vmatprep.subr.bf16.mxu0 0
        %4560 = vmatpush1.bf16.msra.mxu0 0
        %4561 = vmatprep.subr.bf16.mxu0 0
        %4562 = vmatpush1.bf16.msra.mxu0 0
        %4563 = vmatprep.subr.bf16.mxu0 0
        %4564 = vmatpush1.bf16.msra.mxu0 0
        %4565 = vmatprep.subr.bf16.mxu0 0
        %4566 = vmatpush1.bf16.msra.mxu0 0
        %4567 = vmatprep.subr.bf16.mxu0 0
        %4568 = vmatpush1.bf16.msra.mxu0 0
        %4569 = vmatprep.subr.bf16.mxu0 0
        %4570 = vmatpush1.bf16.msra.mxu0 0
        %4571 = vmatprep.subr.bf16.mxu0 0
        %4572 = vmatpush1.bf16.msra.mxu0 0
        %4573 = vmatprep.subr.bf16.mxu0 0
        %4574 = vmatpush1.bf16.msra.mxu0 0
        %4575 = vmatprep.subr.bf16.mxu0 0
        %4576 = vmatpush1.bf16.msra.mxu0 0
        %4577 = vmatprep.subr.bf16.mxu0 0
        %4578 = vmatpush1.bf16.msra.mxu0 0
        %4579 = vmatprep.subr.bf16.mxu0 0
        %4580 = vmatpush1.bf16.msra.mxu0 0
        %4581 = vmatprep.mubr.bf16.mxu0 0
        %4582 = vmatmul.mubr.bf16.gmra.mrb[0].mxu0 %v4526
        %v4583 = vpop.f32.mrb[0].mxu0
        %v4584 = vadd.f32 %v4407, %v4583
        %v4585 = vpop.f32.mrb[0].mxu0
        %v4586 = vadd.f32 %v4409, %v4585
        %v4587 = vpop.f32.mrb[0].mxu0
        %v4588 = vadd.f32 %v4411, %v4587
        %v4589 = vpop.f32.mrb[0].mxu0
        %v4590 = vadd.f32 %v4413, %v4589
        %4591 = vmatprep.mubr.bf16.mxu0 0
        %4592 = vmatmul.mubr.bf16.gmra.mrb[0].mxu0 %v4529
        %v4593 = vpop.f32.mrb[0].mxu0
        %v4594 = vadd.f32 %v4417, %v4593
        %v4595 = vpop.f32.mrb[0].mxu0
        %v4596 = vadd.f32 %v4419, %v4595
        %v4597 = vpop.f32.mrb[0].mxu0
        %v4598 = vadd.f32 %v4421, %v4597
        %v4599 = vpop.f32.mrb[0].mxu0
        %v4600 = vadd.f32 %v4423, %v4599
        %4601 = vmatprep.mubr.bf16.mxu0 0
        %4602 = vmatmul.mubr.bf16.gmra.mrb[0].mxu0 %v4532
        %v4603 = vpop.f32.mrb[0].mxu0
        %v4604 = vadd.f32 %v4427, %v4603
        %v4605 = vpop.f32.mrb[0].mxu0
        %v4606 = vadd.f32 %v4429, %v4605
        %v4607 = vpop.f32.mrb[0].mxu0
        %v4608 = vadd.f32 %v4431, %v4607
        %v4609 = vpop.f32.mrb[0].mxu0
        %v4610 = vadd.f32 %v4433, %v4609
        %4611 = vmatprep.mubr.bf16.mxu0 0
        %4612 = vmatmul.mubr.bf16.gmra.mrb[0].mxu0 %v4535
        %v4613 = vpop.f32.mrb[0].mxu0
        %v4614 = vadd.f32 %v4437, %v4613
        %v4615 = vpop.f32.mrb[0].mxu0
        %v4616 = vadd.f32 %v4439, %v4615
        %v4617 = vpop.f32.mrb[0].mxu0
        %v4618 = vadd.f32 %v4441, %v4617
        %v4619 = vpop.f32.mrb[0].mxu0
        %v4620 = vadd.f32 %v4443, %v4619
        %4621 = vmatprep.mubr.bf16.mxu0 0
        %4622 = vmatmul.mubr.bf16.gmra.mrb[0].mxu0 %v4538
        %v4623 = vpop.f32.mrb[0].mxu0
        %v4624 = vadd.f32 %v4447, %v4623
        %v4625 = vpop.f32.mrb[0].mxu0
        %v4626 = vadd.f32 %v4449, %v4625
        %v4627 = vpop.f32.mrb[0].mxu0
        %v4628 = vadd.f32 %v4451, %v4627
        %v4629 = vpop.f32.mrb[0].mxu0
        %v4630 = vadd.f32 %v4453, %v4629
        %4631 = vmatprep.mubr.bf16.mxu0 0
        %4632 = vmatmul.mubr.bf16.gmra.mrb[0].mxu0 %v4541
        %v4633 = vpop.f32.mrb[0].mxu0
        %v4634 = vadd.f32 %v4457, %v4633
        %v4635 = vpop.f32.mrb[0].mxu0
        %v4636 = vadd.f32 %v4459, %v4635
        %v4637 = vpop.f32.mrb[0].mxu0
        %v4638 = vadd.f32 %v4461, %v4637
        %v4639 = vpop.f32.mrb[0].mxu0
        %v4640 = vadd.f32 %v4463, %v4639
        %4641 = vmatprep.mubr.bf16.mxu0 0
        %4642 = vmatmul.mubr.bf16.gmra.mrb[0].mxu0 %v4544
        %v4643 = vpop.f32.mrb[0].mxu0
        %v4644 = vadd.f32 %v4467, %v4643
        %v4645 = vpop.f32.mrb[0].mxu0
        %v4646 = vadd.f32 %v4469, %v4645
        %v4647 = vpop.f32.mrb[0].mxu0
        %v4648 = vadd.f32 %v4471, %v4647
        %v4649 = vpop.f32.mrb[0].mxu0
        %v4650 = vadd.f32 %v4473, %v4649
        %4651 = vmatprep.mubr.bf16.mxu0 0
        %4652 = vmatmul.mubr.bf16.gmra.mrb[0].mxu0 %v4547
        %v4653 = vpop.f32.mrb[0].mxu0
        %v4654 = vadd.f32 %v4477, %v4653
        %v4655 = vpop.f32.mrb[0].mxu0
        %v4656 = vadd.f32 %v4479, %v4655
        %v4657 = vpop.f32.mrb[0].mxu0
        %v4658 = vadd.f32 %v4481, %v4657
        %v4659 = vpop.f32.mrb[0].mxu0
        %v4660 = vadd.f32 %v4483, %v4659
        %4661 = vdwg.mxu0
        %s4662 = sadd.s32 %s3189, 32
        %s4663 = smul.addr %s4662, 8
        %s4664 = scalar_lea.vmem [#allocation2], %s4663
        %v4665 = vld [vmem:[%s4664] sm:$0xff]
        %v4666 = vld [vmem:[%s4664 + $0x8] sm:$0xff]
        %v4667 = vld [vmem:[%s4664 + $0x10] sm:$0xff]
        %v4668 = vld [vmem:[%s4664 + $0x18] sm:$0xff]
        %v4669 = vld [vmem:[%s4664 + $0x20] sm:$0xff]
        %v4670 = vld [vmem:[%s4664 + $0x28] sm:$0xff]
        %v4671 = vld [vmem:[%s4664 + $0x30] sm:$0xff]
        %v4672 = vld [vmem:[%s4664 + $0x38] sm:$0xff]
        %s4673 = scalar_lea.vmem [#allocation3], 128
        %v4674 = vld [vmem:[%s4673] sm:$0xff]
        %v4675 = vld [vmem:[%s4673 + $0x8] sm:$0xff]
        %v4676 = vld [vmem:[%s4673 + $0x10] sm:$0xff]
        %v4677 = vld [vmem:[%s4673 + $0x18] sm:$0xff]
        %v4678 = vld [vmem:[%s4673 + $0x20] sm:$0xff]
        %v4679 = vld [vmem:[%s4673 + $0x28] sm:$0xff]
        %v4680 = vld [vmem:[%s4673 + $0x30] sm:$0xff]
        %v4681 = vld [vmem:[%s4673 + $0x38] sm:$0xff]
        %s4682 = scalar_lea.vmem %s408, 512 [#allocation8]
        %v4683 = vld [vmem:[%s4682] sm:$0xff]
        %v4684 = vld [vmem:[%s4682 + $0x8] sm:$0xff]
        %v4685 = vld [vmem:[%s4682 + $0x10] sm:$0xff]
        %v4686 = vld [vmem:[%s4682 + $0x18] sm:$0xff]
        %v4687 = vld [vmem:[%s4682 + $0x20] sm:$0xff]
        %v4688 = vld [vmem:[%s4682 + $0x28] sm:$0xff]
        %v4689 = vld [vmem:[%s4682 + $0x30] sm:$0xff]
        %v4690 = vld [vmem:[%s4682 + $0x38] sm:$0xff]
        %v4691 = vld [vmem:[%s4682 + $0x40] sm:$0xff]
        %v4692 = vld [vmem:[%s4682 + $0x48] sm:$0xff]
        %v4693 = vld [vmem:[%s4682 + $0x50] sm:$0xff]
        %v4694 = vld [vmem:[%s4682 + $0x58] sm:$0xff]
        %v4695 = vld [vmem:[%s4682 + $0x60] sm:$0xff]
        %v4696 = vld [vmem:[%s4682 + $0x68] sm:$0xff]
        %v4697 = vld [vmem:[%s4682 + $0x70] sm:$0xff]
        %v4698 = vld [vmem:[%s4682 + $0x78] sm:$0xff]
        %v4699 = vld [vmem:[%s4682 + $0x80] sm:$0xff]
        %v4700 = vld [vmem:[%s4682 + $0x88] sm:$0xff]
        %v4701 = vld [vmem:[%s4682 + $0x90] sm:$0xff]
        %v4702 = vld [vmem:[%s4682 + $0x98] sm:$0xff]
        %v4703 = vld [vmem:[%s4682 + $0xa0] sm:$0xff]
        %v4704 = vld [vmem:[%s4682 + $0xa8] sm:$0xff]
        %v4705 = vld [vmem:[%s4682 + $0xb0] sm:$0xff]
        %v4706 = vld [vmem:[%s4682 + $0xb8] sm:$0xff]
        %v4707 = vld [vmem:[%s4682 + $0xc0] sm:$0xff]
        %v4708 = vld [vmem:[%s4682 + $0xc8] sm:$0xff]
        %v4709 = vld [vmem:[%s4682 + $0xd0] sm:$0xff]
        %v4710 = vld [vmem:[%s4682 + $0xd8] sm:$0xff]
        %v4711 = vld [vmem:[%s4682 + $0xe0] sm:$0xff]
        %v4712 = vld [vmem:[%s4682 + $0xe8] sm:$0xff]
        %v4713 = vld [vmem:[%s4682 + $0xf0] sm:$0xff]
        %v4714 = vld [vmem:[%s4682 + $0xf8] sm:$0xff]
        %v4716 = vsel %vm3241, %v4665, 0
        %v4719 = vsel %vm3241, %v4666, 0
        %v4722 = vsel %vm3241, %v4667, 0
        %v4725 = vsel %vm3241, %v4668, 0
        %v4728 = vsel %vm3241, %v4669, 0
        %v4731 = vsel %vm3241, %v4670, 0
        %v4734 = vsel %vm3241, %v4671, 0
        %v4737 = vsel %vm3241, %v4672, 0
        %4739 = vmatprep.subr.bf16.mxu0 %v4675
        %4740 = vmatpush1.bf16.msra.mxu0 %v4674
        %4741 = vmatprep.subr.bf16.mxu0 %v4677
        %4742 = vmatpush1.bf16.msra.mxu0 %v4676
        %4743 = vmatprep.subr.bf16.mxu0 %v4679
        %4744 = vmatpush1.bf16.msra.mxu0 %v4678
        %4745 = vmatprep.subr.bf16.mxu0 %v4681
        %4746 = vmatpush1.bf16.msra.mxu0 %v4680
        %4747 = vmatprep.subr.bf16.mxu0 0
        %4748 = vmatpush1.bf16.msra.mxu0 0
        %4749 = vmatprep.subr.bf16.mxu0 0
        %4750 = vmatpush1.bf16.msra.mxu0 0
        %4751 = vmatprep.subr.bf16.mxu0 0
        %4752 = vmatpush1.bf16.msra.mxu0 0
        %4753 = vmatprep.subr.bf16.mxu0 0
        %4754 = vmatpush1.bf16.msra.mxu0 0
        %4755 = vmatprep.subr.bf16.mxu0 0
        %4756 = vmatpush1.bf16.msra.mxu0 0
        %4757 = vmatprep.subr.bf16.mxu0 0
        %4758 = vmatpush1.bf16.msra.mxu0 0
        %4759 = vmatprep.subr.bf16.mxu0 0
        %4760 = vmatpush1.bf16.msra.mxu0 0
        %4761 = vmatprep.subr.bf16.mxu0 0
        %4762 = vmatpush1.bf16.msra.mxu0 0
        %4763 = vmatprep.subr.bf16.mxu0 0
        %4764 = vmatpush1.bf16.msra.mxu0 0
        %4765 = vmatprep.subr.bf16.mxu0 0
        %4766 = vmatpush1.bf16.msra.mxu0 0
        %4767 = vmatprep.subr.bf16.mxu0 0
        %4768 = vmatpush1.bf16.msra.mxu0 0
        %4769 = vmatprep.subr.bf16.mxu0 0
        %4770 = vmatpush1.bf16.msra.mxu0 0
        %4771 = vmatprep.mubr.bf16.mxu0 0
        %4772 = vmatmul.mubr.bf16.gmra.mrb[0].mxu0 %v4716
        %v4773 = vpop.f32.mrb[0].mxu0
        %v4774 = vadd.f32 %v4683, %v4773
        %v4775 = vpop.f32.mrb[0].mxu0
        %v4776 = vadd.f32 %v4684, %v4775
        %v4777 = vpop.f32.mrb[0].mxu0
        %v4778 = vadd.f32 %v4685, %v4777
        %v4779 = vpop.f32.mrb[0].mxu0
        %v4780 = vadd.f32 %v4686, %v4779
        %4781 = vmatprep.mubr.bf16.mxu0 0
        %4782 = vmatmul.mubr.bf16.gmra.mrb[0].mxu0 %v4719
        %v4783 = vpop.f32.mrb[0].mxu0
        %v4784 = vadd.f32 %v4687, %v4783
        %v4785 = vpop.f32.mrb[0].mxu0
        %v4786 = vadd.f32 %v4688, %v4785
        %v4787 = vpop.f32.mrb[0].mxu0
        %v4788 = vadd.f32 %v4689, %v4787
        %v4789 = vpop.f32.mrb[0].mxu0
        %v4790 = vadd.f32 %v4690, %v4789
        %4791 = vmatprep.mubr.bf16.mxu0 0
        %4792 = vmatmul.mubr.bf16.gmra.mrb[0].mxu0 %v4722
        %v4793 = vpop.f32.mrb[0].mxu0
        %v4794 = vadd.f32 %v4691, %v4793
        %v4795 = vpop.f32.mrb[0].mxu0
        %v4796 = vadd.f32 %v4692, %v4795
        %v4797 = vpop.f32.mrb[0].mxu0
        %v4798 = vadd.f32 %v4693, %v4797
        %v4799 = vpop.f32.mrb[0].mxu0
        %v4800 = vadd.f32 %v4694, %v4799
        %4801 = vmatprep.mubr.bf16.mxu0 0
        %4802 = vmatmul.mubr.bf16.gmra.mrb[0].mxu0 %v4725
        %v4803 = vpop.f32.mrb[0].mxu0
        %v4804 = vadd.f32 %v4695, %v4803
        %v4805 = vpop.f32.mrb[0].mxu0
        %v4806 = vadd.f32 %v4696, %v4805
        %v4807 = vpop.f32.mrb[0].mxu0
        %v4808 = vadd.f32 %v4697, %v4807
        %v4809 = vpop.f32.mrb[0].mxu0
        %v4810 = vadd.f32 %v4698, %v4809
        %4811 = vmatprep.mubr.bf16.mxu0 0
        %4812 = vmatmul.mubr.bf16.gmra.mrb[0].mxu0 %v4728
        %v4813 = vpop.f32.mrb[0].mxu0
        %v4814 = vadd.f32 %v4699, %v4813
        %v4815 = vpop.f32.mrb[0].mxu0
        %v4816 = vadd.f32 %v4700, %v4815
        %v4817 = vpop.f32.mrb[0].mxu0
        %v4818 = vadd.f32 %v4701, %v4817
        %v4819 = vpop.f32.mrb[0].mxu0
        %v4820 = vadd.f32 %v4702, %v4819
        %4821 = vmatprep.mubr.bf16.mxu0 0
        %4822 = vmatmul.mubr.bf16.gmra.mrb[0].mxu0 %v4731
        %v4823 = vpop.f32.mrb[0].mxu0
        %v4824 = vadd.f32 %v4703, %v4823
        %v4825 = vpop.f32.mrb[0].mxu0
        %v4826 = vadd.f32 %v4704, %v4825
        %v4827 = vpop.f32.mrb[0].mxu0
        %v4828 = vadd.f32 %v4705, %v4827
        %v4829 = vpop.f32.mrb[0].mxu0
        %v4830 = vadd.f32 %v4706, %v4829
        %4831 = vmatprep.mubr.bf16.mxu0 0
        %4832 = vmatmul.mubr.bf16.gmra.mrb[0].mxu0 %v4734
        %v4833 = vpop.f32.mrb[0].mxu0
        %v4834 = vadd.f32 %v4707, %v4833
        %v4835 = vpop.f32.mrb[0].mxu0
        %v4836 = vadd.f32 %v4708, %v4835
        %v4837 = vpop.f32.mrb[0].mxu0
        %v4838 = vadd.f32 %v4709, %v4837
        %v4839 = vpop.f32.mrb[0].mxu0
        %v4840 = vadd.f32 %v4710, %v4839
        %4841 = vmatprep.mubr.bf16.mxu0 0
        %4842 = vmatmul.mubr.bf16.gmra.mrb[0].mxu0 %v4737
        %v4843 = vpop.f32.mrb[0].mxu0
        %v4844 = vadd.f32 %v4711, %v4843
        %v4845 = vpop.f32.mrb[0].mxu0
        %v4846 = vadd.f32 %v4712, %v4845
        %v4847 = vpop.f32.mrb[0].mxu0
        %v4848 = vadd.f32 %v4713, %v4847
        %v4849 = vpop.f32.mrb[0].mxu0
        %v4850 = vadd.f32 %v4714, %v4849
        %4851 = vdwg.mxu0
        %v4852 = vmax.f32 %v4774, %v4776
        %4853 = vmax.xlane.f32.xlu0 %v4852
        %v4854 = vpop.xlane.xlu0 %4853
        %v4855 = vmax.f32 %v4778, %v4780
        %4856 = vmax.xlane.f32.xlu0 %v4855
        %v4857 = vpop.xlane.xlu0 %4856
        %v4858 = vmax.f32 %v4784, %v4786
        %4859 = vmax.xlane.f32.xlu0 %v4858
        %v4860 = vpop.xlane.xlu0 %4859
        %v4861 = vmax.f32 %v4788, %v4790
        %4862 = vmax.xlane.f32.xlu0 %v4861
        %v4863 = vpop.xlane.xlu0 %4862
        %v4864 = vmax.f32 %v4794, %v4796
        %4865 = vmax.xlane.f32.xlu0 %v4864
        %v4866 = vpop.xlane.xlu0 %4865
        %v4867 = vmax.f32 %v4798, %v4800
        %4868 = vmax.xlane.f32.xlu0 %v4867
        %v4869 = vpop.xlane.xlu0 %4868
        %v4870 = vmax.f32 %v4804, %v4806
        %4871 = vmax.xlane.f32.xlu0 %v4870
        %v4872 = vpop.xlane.xlu0 %4871
        %v4873 = vmax.f32 %v4808, %v4810
        %4874 = vmax.xlane.f32.xlu0 %v4873
        %v4875 = vpop.xlane.xlu0 %4874
        %v4876 = vmax.f32 %v4814, %v4816
        %4877 = vmax.xlane.f32.xlu0 %v4876
        %v4878 = vpop.xlane.xlu0 %4877
        %v4879 = vmax.f32 %v4818, %v4820
        %4880 = vmax.xlane.f32.xlu0 %v4879
        %v4881 = vpop.xlane.xlu0 %4880
        %v4882 = vmax.f32 %v4824, %v4826
        %4883 = vmax.xlane.f32.xlu0 %v4882
        %v4884 = vpop.xlane.xlu0 %4883
        %v4885 = vmax.f32 %v4828, %v4830
        %4886 = vmax.xlane.f32.xlu0 %v4885
        %v4887 = vpop.xlane.xlu0 %4886
        %v4888 = vmax.f32 %v4834, %v4836
        %4889 = vmax.xlane.f32.xlu0 %v4888
        %v4890 = vpop.xlane.xlu0 %4889
        %v4891 = vmax.f32 %v4838, %v4840
        %4892 = vmax.xlane.f32.xlu0 %v4891
        %v4893 = vpop.xlane.xlu0 %4892
        %v4894 = vmax.f32 %v4844, %v4846
        %4895 = vmax.xlane.f32.xlu0 %v4894
        %v4896 = vpop.xlane.xlu0 %4895
        %v4897 = vmax.f32 %v4848, %v4850
        %4898 = vmax.xlane.f32.xlu0 %v4897
        %v4899 = vpop.xlane.xlu0 %4898
        %v4900 = vsub.f32 %v4774, %v4854
        %v4901 = vsub.f32 %v4776, %v4854
        %v4902 = vsub.f32 %v4778, %v4857
        %v4903 = vsub.f32 %v4780, %v4857
        %v4904 = vsub.f32 %v4784, %v4860
        %v4905 = vsub.f32 %v4786, %v4860
        %v4906 = vsub.f32 %v4788, %v4863
        %v4907 = vsub.f32 %v4790, %v4863
        %v4908 = vsub.f32 %v4794, %v4866
        %v4909 = vsub.f32 %v4796, %v4866
        %v4910 = vsub.f32 %v4798, %v4869
        %v4911 = vsub.f32 %v4800, %v4869
        %v4912 = vsub.f32 %v4804, %v4872
        %v4913 = vsub.f32 %v4806, %v4872
        %v4914 = vsub.f32 %v4808, %v4875
        %v4915 = vsub.f32 %v4810, %v4875
        %v4916 = vsub.f32 %v4814, %v4878
        %v4917 = vsub.f32 %v4816, %v4878
        %v4918 = vsub.f32 %v4818, %v4881
        %v4919 = vsub.f32 %v4820, %v4881
        %v4920 = vsub.f32 %v4824, %v4884
        %v4921 = vsub.f32 %v4826, %v4884
        %v4922 = vsub.f32 %v4828, %v4887
        %v4923 = vsub.f32 %v4830, %v4887
        %v4924 = vsub.f32 %v4834, %v4890
        %v4925 = vsub.f32 %v4836, %v4890
        %v4926 = vsub.f32 %v4838, %v4893
        %v4927 = vsub.f32 %v4840, %v4893
        %v4928 = vsub.f32 %v4844, %v4896
        %v4929 = vsub.f32 %v4846, %v4896
        %v4930 = vsub.f32 %v4848, %v4899
        %v4931 = vsub.f32 %v4850, %v4899
        %v4932 = vmul.f32 %v4900, 1.442695
        %v4933 = vpow.pop %v4932
        %v4934 = vmul.f32 %v4901, 1.442695
        %v4935 = vpow.pop %v4934
        %v4936 = vmul.f32 %v4902, 1.442695
        %v4937 = vpow.pop %v4936
        %v4938 = vmul.f32 %v4903, 1.442695
        %v4939 = vpow.pop %v4938
        %v4940 = vmul.f32 %v4904, 1.442695
        %v4941 = vpow.pop %v4940
        %v4942 = vmul.f32 %v4905, 1.442695
        %v4943 = vpow.pop %v4942
        %v4944 = vmul.f32 %v4906, 1.442695
        %v4945 = vpow.pop %v4944
        %v4946 = vmul.f32 %v4907, 1.442695
        %v4947 = vpow.pop %v4946
        %v4948 = vmul.f32 %v4908, 1.442695
        %v4949 = vpow.pop %v4948
        %v4950 = vmul.f32 %v4909, 1.442695
        %v4951 = vpow.pop %v4950
        %v4952 = vmul.f32 %v4910, 1.442695
        %v4953 = vpow.pop %v4952
        %v4954 = vmul.f32 %v4911, 1.442695
        %v4955 = vpow.pop %v4954
        %v4956 = vmul.f32 %v4912, 1.442695
        %v4957 = vpow.pop %v4956
        %v4958 = vmul.f32 %v4913, 1.442695
        %v4959 = vpow.pop %v4958
        %v4960 = vmul.f32 %v4914, 1.442695
        %v4961 = vpow.pop %v4960
        %v4962 = vmul.f32 %v4915, 1.442695
        %v4963 = vpow.pop %v4962
        %v4964 = vmul.f32 %v4916, 1.442695
        %v4965 = vpow.pop %v4964
        %v4966 = vmul.f32 %v4917, 1.442695
        %v4967 = vpow.pop %v4966
        %v4968 = vmul.f32 %v4918, 1.442695
        %v4969 = vpow.pop %v4968
        %v4970 = vmul.f32 %v4919, 1.442695
        %v4971 = vpow.pop %v4970
        %v4972 = vmul.f32 %v4920, 1.442695
        %v4973 = vpow.pop %v4972
        %v4974 = vmul.f32 %v4921, 1.442695
        %v4975 = vpow.pop %v4974
        %v4976 = vmul.f32 %v4922, 1.442695
        %v4977 = vpow.pop %v4976
        %v4978 = vmul.f32 %v4923, 1.442695
        %v4979 = vpow.pop %v4978
        %v4980 = vmul.f32 %v4924, 1.442695
        %v4981 = vpow.pop %v4980
        %v4982 = vmul.f32 %v4925, 1.442695
        %v4983 = vpow.pop %v4982
        %v4984 = vmul.f32 %v4926, 1.442695
        %v4985 = vpow.pop %v4984
        %v4986 = vmul.f32 %v4927, 1.442695
        %v4987 = vpow.pop %v4986
        %v4988 = vmul.f32 %v4928, 1.442695
        %v4989 = vpow.pop %v4988
        %v4990 = vmul.f32 %v4929, 1.442695
        %v4991 = vpow.pop %v4990
        %v4992 = vmul.f32 %v4930, 1.442695
        %v4993 = vpow.pop %v4992
        %v4994 = vmul.f32 %v4931, 1.442695
        %v4995 = vpow.pop %v4994
        %v4996 = vadd.f32 %v4933, %v4935
        %4997 = vadd.xlane.f32.xlu0 %v4996
        %v4998 = vpop.xlane.xlu0 %4997
        %v4999 = vadd.f32 %v4937, %v4939
        %5000 = vadd.xlane.f32.xlu0 %v4999
        %v5001 = vpop.xlane.xlu0 %5000
        %v5002 = vadd.f32 %v4941, %v4943
        %5003 = vadd.xlane.f32.xlu0 %v5002
        %v5004 = vpop.xlane.xlu0 %5003
        %v5005 = vadd.f32 %v4945, %v4947
        %5006 = vadd.xlane.f32.xlu0 %v5005
        %v5007 = vpop.xlane.xlu0 %5006
        %v5008 = vadd.f32 %v4949, %v4951
        %5009 = vadd.xlane.f32.xlu0 %v5008
        %v5010 = vpop.xlane.xlu0 %5009
        %v5011 = vadd.f32 %v4953, %v4955
        %5012 = vadd.xlane.f32.xlu0 %v5011
        %v5013 = vpop.xlane.xlu0 %5012
        %v5014 = vadd.f32 %v4957, %v4959
        %5015 = vadd.xlane.f32.xlu0 %v5014
        %v5016 = vpop.xlane.xlu0 %5015
        %v5017 = vadd.f32 %v4961, %v4963
        %5018 = vadd.xlane.f32.xlu0 %v5017
        %v5019 = vpop.xlane.xlu0 %5018
        %v5020 = vadd.f32 %v4965, %v4967
        %5021 = vadd.xlane.f32.xlu0 %v5020
        %v5022 = vpop.xlane.xlu0 %5021
        %v5023 = vadd.f32 %v4969, %v4971
        %5024 = vadd.xlane.f32.xlu0 %v5023
        %v5025 = vpop.xlane.xlu0 %5024
        %v5026 = vadd.f32 %v4973, %v4975
        %5027 = vadd.xlane.f32.xlu0 %v5026
        %v5028 = vpop.xlane.xlu0 %5027
        %v5029 = vadd.f32 %v4977, %v4979
        %5030 = vadd.xlane.f32.xlu0 %v5029
        %v5031 = vpop.xlane.xlu0 %5030
        %v5032 = vadd.f32 %v4981, %v4983
        %5033 = vadd.xlane.f32.xlu0 %v5032
        %v5034 = vpop.xlane.xlu0 %5033
        %v5035 = vadd.f32 %v4985, %v4987
        %5036 = vadd.xlane.f32.xlu0 %v5035
        %v5037 = vpop.xlane.xlu0 %5036
        %v5038 = vadd.f32 %v4989, %v4991
        %5039 = vadd.xlane.f32.xlu0 %v5038
        %v5040 = vpop.xlane.xlu0 %5039
        %v5041 = vadd.f32 %v4993, %v4995
        %5042 = vadd.xlane.f32.xlu0 %v5041
        %v5043 = vpop.xlane.xlu0 %5042
        %v5044 = vrcp.pop %v4998
        %v5045 = vrcp.pop %v5001
        %v5046 = vrcp.pop %v5004
        %v5047 = vrcp.pop %v5007
        %v5048 = vrcp.pop %v5010
        %v5049 = vrcp.pop %v5013
        %v5050 = vrcp.pop %v5016
        %v5051 = vrcp.pop %v5019
        %v5052 = vrcp.pop %v5022
        %v5053 = vrcp.pop %v5025
        %v5054 = vrcp.pop %v5028
        %v5055 = vrcp.pop %v5031
        %v5056 = vrcp.pop %v5034
        %v5057 = vrcp.pop %v5037
        %v5058 = vrcp.pop %v5040
        %v5059 = vrcp.pop %v5043
        %v5060 = vpack.c.bf16 %v4937, %v4933
        %v5061 = vpack.c.bf16 %v4939, %v4935
        %v5062 = vpack.c.bf16 %v4945, %v4941
        %v5063 = vpack.c.bf16 %v4947, %v4943
        %v5064 = vpack.c.bf16 %v4953, %v4949
        %v5065 = vpack.c.bf16 %v4955, %v4951
        %v5066 = vpack.c.bf16 %v4961, %v4957
        %v5067 = vpack.c.bf16 %v4963, %v4959
        %v5068 = vpack.c.bf16 %v4969, %v4965
        %v5069 = vpack.c.bf16 %v4971, %v4967
        %v5070 = vpack.c.bf16 %v4977, %v4973
        %v5071 = vpack.c.bf16 %v4979, %v4975
        %v5072 = vpack.c.bf16 %v4985, %v4981
        %v5073 = vpack.c.bf16 %v4987, %v4983
        %v5074 = vpack.c.bf16 %v4993, %v4989
        %v5075 = vpack.c.bf16 %v4995, %v4991
        %s5076 = scalar_lea.vmem [#allocation4], 256
        %v5077 = vld [vmem:[%s5076] sm:$0xff]
        %v5078 = vld [vmem:[%s5076 + $0x8] sm:$0xff]
        %v5079 = vld [vmem:[%s5076 + $0x10] sm:$0xff]
        %v5080 = vld [vmem:[%s5076 + $0x18] sm:$0xff]
        %v5081 = vld [vmem:[%s5076 + $0x20] sm:$0xff]
        %v5082 = vld [vmem:[%s5076 + $0x28] sm:$0xff]
        %v5083 = vld [vmem:[%s5076 + $0x30] sm:$0xff]
        %v5084 = vld [vmem:[%s5076 + $0x38] sm:$0xff]
        %v5085 = vld [vmem:[%s5076 + $0x40] sm:$0xff]
        %v5086 = vld [vmem:[%s5076 + $0x48] sm:$0xff]
        %v5087 = vld [vmem:[%s5076 + $0x50] sm:$0xff]
        %v5088 = vld [vmem:[%s5076 + $0x58] sm:$0xff]
        %v5089 = vld [vmem:[%s5076 + $0x60] sm:$0xff]
        %v5090 = vld [vmem:[%s5076 + $0x68] sm:$0xff]
        %v5091 = vld [vmem:[%s5076 + $0x70] sm:$0xff]
        %v5092 = vld [vmem:[%s5076 + $0x78] sm:$0xff]
        %5093 = vmatprep.subr.bf16.mxu0 0
        %5094 = vmatpush1.bf16.msra.mxu0 %v5077
        %5095 = vmatprep.subr.bf16.mxu0 0
        %5096 = vmatpush1.bf16.msra.mxu0 %v5078
        %5097 = vmatprep.subr.bf16.mxu0 0
        %5098 = vmatpush1.bf16.msra.mxu0 %v5079
        %5099 = vmatprep.subr.bf16.mxu0 0
        %5100 = vmatpush1.bf16.msra.mxu0 %v5080
        %5101 = vmatprep.subr.bf16.mxu0 0
        %5102 = vmatpush1.bf16.msra.mxu0 %v5081
        %5103 = vmatprep.subr.bf16.mxu0 0
        %5104 = vmatpush1.bf16.msra.mxu0 %v5082
        %5105 = vmatprep.subr.bf16.mxu0 0
        %5106 = vmatpush1.bf16.msra.mxu0 %v5083
        %5107 = vmatprep.subr.bf16.mxu0 0
        %5108 = vmatpush1.bf16.msra.mxu0 %v5084
        %5109 = vmatprep.subr.bf16.mxu0 0
        %5110 = vmatpush1.bf16.msra.mxu0 %v5085
        %5111 = vmatprep.subr.bf16.mxu0 0
        %5112 = vmatpush1.bf16.msra.mxu0 %v5086
        %5113 = vmatprep.subr.bf16.mxu0 0
        %5114 = vmatpush1.bf16.msra.mxu0 %v5087
        %5115 = vmatprep.subr.bf16.mxu0 0
        %5116 = vmatpush1.bf16.msra.mxu0 %v5088
        %5117 = vmatprep.subr.bf16.mxu0 0
        %5118 = vmatpush1.bf16.msra.mxu0 %v5089
        %5119 = vmatprep.subr.bf16.mxu0 0
        %5120 = vmatpush1.bf16.msra.mxu0 %v5090
        %5121 = vmatprep.subr.bf16.mxu0 0
        %5122 = vmatpush1.bf16.msra.mxu0 %v5091
        %5123 = vmatprep.subr.bf16.mxu0 0
        %5124 = vmatpush1.bf16.msra.mxu0 %v5092
        %5125 = vmatprep.mubr.bf16.mxu0 %v5061
        %5126 = vmatmul.mubr.bf16.gmra.mrb[0].mxu0 %v5060
        %v5127 = vpop.f32.mrb[0].mxu0
        %v5128 = vadd.f32 0.0, %v5127
        %v5129 = vpop.f32.mrb[0].mxu0
        %v5130 = vpop.f32.mrb[0].mxu0
        %v5131 = vadd.f32 0.0, %v5130
        %v5132 = vpop.f32.mrb[0].mxu0
        %5133 = vmatprep.mubr.bf16.mxu0 %v5063
        %5134 = vmatmul.mubr.bf16.gmra.mrb[0].mxu0 %v5062
        %v5135 = vpop.f32.mrb[0].mxu0
        %v5136 = vadd.f32 0.0, %v5135
        %v5137 = vpop.f32.mrb[0].mxu0
        %v5138 = vpop.f32.mrb[0].mxu0
        %v5139 = vadd.f32 0.0, %v5138
        %v5140 = vpop.f32.mrb[0].mxu0
        %5141 = vmatprep.mubr.bf16.mxu0 %v5065
        %5142 = vmatmul.mubr.bf16.gmra.mrb[0].mxu0 %v5064
        %v5143 = vpop.f32.mrb[0].mxu0
        %v5144 = vadd.f32 0.0, %v5143
        %v5145 = vpop.f32.mrb[0].mxu0
        %v5146 = vpop.f32.mrb[0].mxu0
        %v5147 = vadd.f32 0.0, %v5146
        %v5148 = vpop.f32.mrb[0].mxu0
        %5149 = vmatprep.mubr.bf16.mxu0 %v5067
        %5150 = vmatmul.mubr.bf16.gmra.mrb[0].mxu0 %v5066
        %v5151 = vpop.f32.mrb[0].mxu0
        %v5152 = vadd.f32 0.0, %v5151
        %v5153 = vpop.f32.mrb[0].mxu0
        %v5154 = vpop.f32.mrb[0].mxu0
        %v5155 = vadd.f32 0.0, %v5154
        %v5156 = vpop.f32.mrb[0].mxu0
        %5157 = vmatprep.mubr.bf16.mxu0 %v5069
        %5158 = vmatmul.mubr.bf16.gmra.mrb[0].mxu0 %v5068
        %v5159 = vpop.f32.mrb[0].mxu0
        %v5160 = vadd.f32 0.0, %v5159
        %v5161 = vpop.f32.mrb[0].mxu0
        %v5162 = vpop.f32.mrb[0].mxu0
        %v5163 = vadd.f32 0.0, %v5162
        %v5164 = vpop.f32.mrb[0].mxu0
        %5165 = vmatprep.mubr.bf16.mxu0 %v5071
        %5166 = vmatmul.mubr.bf16.gmra.mrb[0].mxu0 %v5070
        %v5167 = vpop.f32.mrb[0].mxu0
        %v5168 = vadd.f32 0.0, %v5167
        %v5169 = vpop.f32.mrb[0].mxu0
        %v5170 = vpop.f32.mrb[0].mxu0
        %v5171 = vadd.f32 0.0, %v5170
        %v5172 = vpop.f32.mrb[0].mxu0
        %5173 = vmatprep.mubr.bf16.mxu0 %v5073
        %5174 = vmatmul.mubr.bf16.gmra.mrb[0].mxu0 %v5072
        %v5175 = vpop.f32.mrb[0].mxu0
        %v5176 = vadd.f32 0.0, %v5175
        %v5177 = vpop.f32.mrb[0].mxu0
        %v5178 = vpop.f32.mrb[0].mxu0
        %v5179 = vadd.f32 0.0, %v5178
        %v5180 = vpop.f32.mrb[0].mxu0
        %5181 = vmatprep.mubr.bf16.mxu0 %v5075
        %5182 = vmatmul.mubr.bf16.gmra.mrb[0].mxu0 %v5074
        %v5183 = vpop.f32.mrb[0].mxu0
        %v5184 = vadd.f32 0.0, %v5183
        %v5185 = vpop.f32.mrb[0].mxu0
        %v5186 = vpop.f32.mrb[0].mxu0
        %v5187 = vadd.f32 0.0, %v5186
        %v5188 = vpop.f32.mrb[0].mxu0
        %5189 = vdwg.mxu0
        %v5190 = vmul.f32 %v5128, %v5044
        %v5191 = vmul.f32 %v5131, %v5045
        %v5192 = vmul.f32 %v5136, %v5046
        %v5193 = vmul.f32 %v5139, %v5047
        %v5194 = vmul.f32 %v5144, %v5048
        %v5195 = vmul.f32 %v5147, %v5049
        %v5196 = vmul.f32 %v5152, %v5050
        %v5197 = vmul.f32 %v5155, %v5051
        %v5198 = vmul.f32 %v5160, %v5052
        %v5199 = vmul.f32 %v5163, %v5053
        %v5200 = vmul.f32 %v5168, %v5054
        %v5201 = vmul.f32 %v5171, %v5055
        %v5202 = vmul.f32 %v5176, %v5056
        %v5203 = vmul.f32 %v5179, %v5057
        %v5204 = vmul.f32 %v5184, %v5058
        %v5205 = vmul.f32 %v5187, %v5059
        %v5206 = vpack.c.bf16 %v5191, %v5190
        %v5207 = vpack.c.bf16 %v5193, %v5192
        %v5208 = vpack.c.bf16 %v5195, %v5194
        %v5209 = vpack.c.bf16 %v5197, %v5196
        %v5210 = vpack.c.bf16 %v5199, %v5198
        %v5211 = vpack.c.bf16 %v5201, %v5200
        %v5212 = vpack.c.bf16 %v5203, %v5202
        %v5213 = vpack.c.bf16 %v5205, %v5204
        %v5214 = vld [vmem:[#allocation11 + $0x80] sm:$0xff]
        %v5215 = vld [vmem:[#allocation11 + $0x88] sm:$0xff]
        %v5216 = vld [vmem:[#allocation11 + $0x90] sm:$0xff]
        %v5217 = vld [vmem:[#allocation11 + $0x98] sm:$0xff]
        %v5218 = vld [vmem:[#allocation11 + $0xa0] sm:$0xff]
        %v5219 = vld [vmem:[#allocation11 + $0xa8] sm:$0xff]
        %v5220 = vld [vmem:[#allocation11 + $0xb0] sm:$0xff]
        %v5221 = vld [vmem:[#allocation11 + $0xb8] sm:$0xff]
        %v5230 = vunpack.c.l.b16 %v5214
        %v5231 = vunpack.c.h.b16 %v5214
        %v5232 = vunpack.c.l.b16 %v5215
        %v5233 = vunpack.c.h.b16 %v5215
        %v5234 = vunpack.c.l.b16 %v5216
        %v5235 = vunpack.c.h.b16 %v5216
        %v5236 = vunpack.c.l.b16 %v5217
        %v5237 = vunpack.c.h.b16 %v5217
        %v5238 = vunpack.c.l.b16 %v5218
        %v5239 = vunpack.c.h.b16 %v5218
        %v5240 = vunpack.c.l.b16 %v5219
        %v5241 = vunpack.c.h.b16 %v5219
        %v5242 = vunpack.c.l.b16 %v5220
        %v5243 = vunpack.c.h.b16 %v5220
        %v5244 = vunpack.c.l.b16 %v5221
        %v5245 = vunpack.c.h.b16 %v5221
        %v5246 = vpack.c.b16 %v5232, %v5230
        %v5247 = vpack.c.b16 %v5233, %v5231
        %v5248 = vpack.c.b16 %v5236, %v5234
        %v5249 = vpack.c.b16 %v5237, %v5235
        %v5250 = vpack.c.b16 %v5240, %v5238
        %v5251 = vpack.c.b16 %v5241, %v5239
        %v5252 = vpack.c.b16 %v5244, %v5242
        %v5253 = vpack.c.b16 %v5245, %v5243
        %v5263 = vsel %vm3241, %v5206, 0
        %v5266 = vsel %vm3241, %v5207, 0
        %v5269 = vsel %vm3241, %v5208, 0
        %v5272 = vsel %vm3241, %v5209, 0
        %v5275 = vsel %vm3241, %v5210, 0
        %v5278 = vsel %vm3241, %v5211, 0
        %v5281 = vsel %vm3241, %v5212, 0
        %v5284 = vsel %vm3241, %v5213, 0
        %5286 = vmatprep.subr.bf16.mxu0 %v5247
        %5287 = vmatpush1.bf16.msra.mxu0 %v5246
        %5288 = vmatprep.subr.bf16.mxu0 %v5249
        %5289 = vmatpush1.bf16.msra.mxu0 %v5248
        %5290 = vmatprep.subr.bf16.mxu0 %v5251
        %5291 = vmatpush1.bf16.msra.mxu0 %v5250
        %5292 = vmatprep.subr.bf16.mxu0 %v5253
        %5293 = vmatpush1.bf16.msra.mxu0 %v5252
        %5294 = vmatprep.subr.bf16.mxu0 0
        %5295 = vmatpush1.bf16.msra.mxu0 0
        %5296 = vmatprep.subr.bf16.mxu0 0
        %5297 = vmatpush1.bf16.msra.mxu0 0
        %5298 = vmatprep.subr.bf16.mxu0 0
        %5299 = vmatpush1.bf16.msra.mxu0 0
        %5300 = vmatprep.subr.bf16.mxu0 0
        %5301 = vmatpush1.bf16.msra.mxu0 0
        %5302 = vmatprep.subr.bf16.mxu0 0
        %5303 = vmatpush1.bf16.msra.mxu0 0
        %5304 = vmatprep.subr.bf16.mxu0 0
        %5305 = vmatpush1.bf16.msra.mxu0 0
        %5306 = vmatprep.subr.bf16.mxu0 0
        %5307 = vmatpush1.bf16.msra.mxu0 0
        %5308 = vmatprep.subr.bf16.mxu0 0
        %5309 = vmatpush1.bf16.msra.mxu0 0
        %5310 = vmatprep.subr.bf16.mxu0 0
        %5311 = vmatpush1.bf16.msra.mxu0 0
        %5312 = vmatprep.subr.bf16.mxu0 0
        %5313 = vmatpush1.bf16.msra.mxu0 0
        %5314 = vmatprep.subr.bf16.mxu0 0
        %5315 = vmatpush1.bf16.msra.mxu0 0
        %5316 = vmatprep.subr.bf16.mxu0 0
        %5317 = vmatpush1.bf16.msra.mxu0 0
        %5318 = vmatprep.mubr.bf16.mxu0 0
        %5319 = vmatmul.mubr.bf16.gmra.mrb[0].mxu0 %v5263
        %v5320 = vpop.f32.mrb[0].mxu0
        %v5321 = vadd.f32 0.0, %v5320
        %v5322 = vpop.f32.mrb[0].mxu0
        %v5323 = vadd.f32 0.0, %v5322
        %v5324 = vpop.f32.mrb[0].mxu0
        %v5325 = vadd.f32 0.0, %v5324
        %v5326 = vpop.f32.mrb[0].mxu0
        %v5327 = vadd.f32 0.0, %v5326
        %5328 = vmatprep.mubr.bf16.mxu0 0
        %5329 = vmatmul.mubr.bf16.gmra.mrb[0].mxu0 %v5266
        %v5330 = vpop.f32.mrb[0].mxu0
        %v5331 = vadd.f32 0.0, %v5330
        %v5332 = vpop.f32.mrb[0].mxu0
        %v5333 = vadd.f32 0.0, %v5332
        %v5334 = vpop.f32.mrb[0].mxu0
        %v5335 = vadd.f32 0.0, %v5334
        %v5336 = vpop.f32.mrb[0].mxu0
        %v5337 = vadd.f32 0.0, %v5336
        %5338 = vmatprep.mubr.bf16.mxu0 0
        %5339 = vmatmul.mubr.bf16.gmra.mrb[0].mxu0 %v5269
        %v5340 = vpop.f32.mrb[0].mxu0
        %v5341 = vadd.f32 0.0, %v5340
        %v5342 = vpop.f32.mrb[0].mxu0
        %v5343 = vadd.f32 0.0, %v5342
        %v5344 = vpop.f32.mrb[0].mxu0
        %v5345 = vadd.f32 0.0, %v5344
        %v5346 = vpop.f32.mrb[0].mxu0
        %v5347 = vadd.f32 0.0, %v5346
        %5348 = vmatprep.mubr.bf16.mxu0 0
        %5349 = vmatmul.mubr.bf16.gmra.mrb[0].mxu0 %v5272
        %v5350 = vpop.f32.mrb[0].mxu0
        %v5351 = vadd.f32 0.0, %v5350
        %v5352 = vpop.f32.mrb[0].mxu0
        %v5353 = vadd.f32 0.0, %v5352
        %v5354 = vpop.f32.mrb[0].mxu0
        %v5355 = vadd.f32 0.0, %v5354
        %v5356 = vpop.f32.mrb[0].mxu0
        %v5357 = vadd.f32 0.0, %v5356
        %5358 = vmatprep.mubr.bf16.mxu0 0
        %5359 = vmatmul.mubr.bf16.gmra.mrb[0].mxu0 %v5275
        %v5360 = vpop.f32.mrb[0].mxu0
        %v5361 = vadd.f32 0.0, %v5360
        %v5362 = vpop.f32.mrb[0].mxu0
        %v5363 = vadd.f32 0.0, %v5362
        %v5364 = vpop.f32.mrb[0].mxu0
        %v5365 = vadd.f32 0.0, %v5364
        %v5366 = vpop.f32.mrb[0].mxu0
        %v5367 = vadd.f32 0.0, %v5366
        %5368 = vmatprep.mubr.bf16.mxu0 0
        %5369 = vmatmul.mubr.bf16.gmra.mrb[0].mxu0 %v5278
        %v5370 = vpop.f32.mrb[0].mxu0
        %v5371 = vadd.f32 0.0, %v5370
        %v5372 = vpop.f32.mrb[0].mxu0
        %v5373 = vadd.f32 0.0, %v5372
        %v5374 = vpop.f32.mrb[0].mxu0
        %v5375 = vadd.f32 0.0, %v5374
        %v5376 = vpop.f32.mrb[0].mxu0
        %v5377 = vadd.f32 0.0, %v5376
        %5378 = vmatprep.mubr.bf16.mxu0 0
        %5379 = vmatmul.mubr.bf16.gmra.mrb[0].mxu0 %v5281
        %v5380 = vpop.f32.mrb[0].mxu0
        %v5381 = vadd.f32 0.0, %v5380
        %v5382 = vpop.f32.mrb[0].mxu0
        %v5383 = vadd.f32 0.0, %v5382
        %v5384 = vpop.f32.mrb[0].mxu0
        %v5385 = vadd.f32 0.0, %v5384
        %v5386 = vpop.f32.mrb[0].mxu0
        %v5387 = vadd.f32 0.0, %v5386
        %5388 = vmatprep.mubr.bf16.mxu0 0
        %5389 = vmatmul.mubr.bf16.gmra.mrb[0].mxu0 %v5284
        %v5390 = vpop.f32.mrb[0].mxu0
        %v5391 = vadd.f32 0.0, %v5390
        %v5392 = vpop.f32.mrb[0].mxu0
        %v5393 = vadd.f32 0.0, %v5392
        %v5394 = vpop.f32.mrb[0].mxu0
        %v5395 = vadd.f32 0.0, %v5394
        %v5396 = vpop.f32.mrb[0].mxu0
        %v5397 = vadd.f32 0.0, %v5396
        %5398 = vdwg.mxu0
        %v5399 = vadd.f32 %v4584, %v5321
        %v5400 = vadd.f32 %v4586, %v5323
        %v5401 = vadd.f32 %v4588, %v5325
        %v5402 = vadd.f32 %v4590, %v5327
        %v5403 = vadd.f32 %v4594, %v5331
        %v5404 = vadd.f32 %v4596, %v5333
        %v5405 = vadd.f32 %v4598, %v5335
        %v5406 = vadd.f32 %v4600, %v5337
        %v5407 = vadd.f32 %v4604, %v5341
        %v5408 = vadd.f32 %v4606, %v5343
        %v5409 = vadd.f32 %v4608, %v5345
        %v5410 = vadd.f32 %v4610, %v5347
        %v5411 = vadd.f32 %v4614, %v5351
        %v5412 = vadd.f32 %v4616, %v5353
        %v5413 = vadd.f32 %v4618, %v5355
        %v5414 = vadd.f32 %v4620, %v5357
        %v5415 = vadd.f32 %v4624, %v5361
        %v5416 = vadd.f32 %v4626, %v5363
        %v5417 = vadd.f32 %v4628, %v5365
        %v5418 = vadd.f32 %v4630, %v5367
        %v5419 = vadd.f32 %v4634, %v5371
        %v5420 = vadd.f32 %v4636, %v5373
        %v5421 = vadd.f32 %v4638, %v5375
        %v5422 = vadd.f32 %v4640, %v5377
        %v5423 = vadd.f32 %v4644, %v5381
        %v5424 = vadd.f32 %v4646, %v5383
        %v5425 = vadd.f32 %v4648, %v5385
        %v5426 = vadd.f32 %v4650, %v5387
        %v5427 = vadd.f32 %v4654, %v5391
        %v5428 = vadd.f32 %v4656, %v5393
        %v5429 = vadd.f32 %v4658, %v5395
        %v5430 = vadd.f32 %v4660, %v5397
        %s5431 = sadd.s32 %s3189, 48
        %s5432 = smul.addr %s5431, 8
        %s5433 = scalar_lea.vmem [#allocation2], %s5432
        %v5434 = vld [vmem:[%s5433] sm:$0xff]
        %v5435 = vld [vmem:[%s5433 + $0x8] sm:$0xff]
        %v5436 = vld [vmem:[%s5433 + $0x10] sm:$0xff]
        %v5437 = vld [vmem:[%s5433 + $0x18] sm:$0xff]
        %v5438 = vld [vmem:[%s5433 + $0x20] sm:$0xff]
        %v5439 = vld [vmem:[%s5433 + $0x28] sm:$0xff]
        %v5440 = vld [vmem:[%s5433 + $0x30] sm:$0xff]
        %v5441 = vld [vmem:[%s5433 + $0x38] sm:$0xff]
        %s5442 = scalar_lea.vmem [#allocation3], 192
        %v5443 = vld [vmem:[%s5442] sm:$0xff]
        %v5444 = vld [vmem:[%s5442 + $0x8] sm:$0xff]
        %v5445 = vld [vmem:[%s5442 + $0x10] sm:$0xff]
        %v5446 = vld [vmem:[%s5442 + $0x18] sm:$0xff]
        %v5447 = vld [vmem:[%s5442 + $0x20] sm:$0xff]
        %v5448 = vld [vmem:[%s5442 + $0x28] sm:$0xff]
        %v5449 = vld [vmem:[%s5442 + $0x30] sm:$0xff]
        %v5450 = vld [vmem:[%s5442 + $0x38] sm:$0xff]
        %s5451 = scalar_lea.vmem %s408, 768 [#allocation8]
        %v5452 = vld [vmem:[%s5451] sm:$0xff]
        %v5453 = vld [vmem:[%s5451 + $0x8] sm:$0xff]
        %v5454 = vld [vmem:[%s5451 + $0x10] sm:$0xff]
        %v5455 = vld [vmem:[%s5451 + $0x18] sm:$0xff]
        %v5456 = vld [vmem:[%s5451 + $0x20] sm:$0xff]
        %v5457 = vld [vmem:[%s5451 + $0x28] sm:$0xff]
        %v5458 = vld [vmem:[%s5451 + $0x30] sm:$0xff]
        %v5459 = vld [vmem:[%s5451 + $0x38] sm:$0xff]
        %v5460 = vld [vmem:[%s5451 + $0x40] sm:$0xff]
        %v5461 = vld [vmem:[%s5451 + $0x48] sm:$0xff]
        %v5462 = vld [vmem:[%s5451 + $0x50] sm:$0xff]
        %v5463 = vld [vmem:[%s5451 + $0x58] sm:$0xff]
        %v5464 = vld [vmem:[%s5451 + $0x60] sm:$0xff]
        %v5465 = vld [vmem:[%s5451 + $0x68] sm:$0xff]
        %v5466 = vld [vmem:[%s5451 + $0x70] sm:$0xff]
        %v5467 = vld [vmem:[%s5451 + $0x78] sm:$0xff]
        %v5468 = vld [vmem:[%s5451 + $0x80] sm:$0xff]
        %v5469 = vld [vmem:[%s5451 + $0x88] sm:$0xff]
        %v5470 = vld [vmem:[%s5451 + $0x90] sm:$0xff]
        %v5471 = vld [vmem:[%s5451 + $0x98] sm:$0xff]
        %v5472 = vld [vmem:[%s5451 + $0xa0] sm:$0xff]
        %v5473 = vld [vmem:[%s5451 + $0xa8] sm:$0xff]
        %v5474 = vld [vmem:[%s5451 + $0xb0] sm:$0xff]
        %v5475 = vld [vmem:[%s5451 + $0xb8] sm:$0xff]
        %v5476 = vld [vmem:[%s5451 + $0xc0] sm:$0xff]
        %v5477 = vld [vmem:[%s5451 + $0xc8] sm:$0xff]
        %v5478 = vld [vmem:[%s5451 + $0xd0] sm:$0xff]
        %v5479 = vld [vmem:[%s5451 + $0xd8] sm:$0xff]
        %v5480 = vld [vmem:[%s5451 + $0xe0] sm:$0xff]
        %v5481 = vld [vmem:[%s5451 + $0xe8] sm:$0xff]
        %v5482 = vld [vmem:[%s5451 + $0xf0] sm:$0xff]
        %v5483 = vld [vmem:[%s5451 + $0xf8] sm:$0xff]
        %v5485 = vsel %vm3241, %v5434, 0
        %v5488 = vsel %vm3241, %v5435, 0
        %v5491 = vsel %vm3241, %v5436, 0
        %v5494 = vsel %vm3241, %v5437, 0
        %v5497 = vsel %vm3241, %v5438, 0
        %v5500 = vsel %vm3241, %v5439, 0
        %v5503 = vsel %vm3241, %v5440, 0
        %v5506 = vsel %vm3241, %v5441, 0
        %5508 = vmatprep.subr.bf16.mxu0 %v5444
        %5509 = vmatpush1.bf16.msra.mxu0 %v5443
        %5510 = vmatprep.subr.bf16.mxu0 %v5446
        %5511 = vmatpush1.bf16.msra.mxu0 %v5445
        %5512 = vmatprep.subr.bf16.mxu0 %v5448
        %5513 = vmatpush1.bf16.msra.mxu0 %v5447
        %5514 = vmatprep.subr.bf16.mxu0 %v5450
        %5515 = vmatpush1.bf16.msra.mxu0 %v5449
        %5516 = vmatprep.subr.bf16.mxu0 0
        %5517 = vmatpush1.bf16.msra.mxu0 0
        %5518 = vmatprep.subr.bf16.mxu0 0
        %5519 = vmatpush1.bf16.msra.mxu0 0
        %5520 = vmatprep.subr.bf16.mxu0 0
        %5521 = vmatpush1.bf16.msra.mxu0 0
        %5522 = vmatprep.subr.bf16.mxu0 0
        %5523 = vmatpush1.bf16.msra.mxu0 0
        %5524 = vmatprep.subr.bf16.mxu0 0
        %5525 = vmatpush1.bf16.msra.mxu0 0
        %5526 = vmatprep.subr.bf16.mxu0 0
        %5527 = vmatpush1.bf16.msra.mxu0 0
        %5528 = vmatprep.subr.bf16.mxu0 0
        %5529 = vmatpush1.bf16.msra.mxu0 0
        %5530 = vmatprep.subr.bf16.mxu0 0
        %5531 = vmatpush1.bf16.msra.mxu0 0
        %5532 = vmatprep.subr.bf16.mxu0 0
        %5533 = vmatpush1.bf16.msra.mxu0 0
        %5534 = vmatprep.subr.bf16.mxu0 0
        %5535 = vmatpush1.bf16.msra.mxu0 0
        %5536 = vmatprep.subr.bf16.mxu0 0
        %5537 = vmatpush1.bf16.msra.mxu0 0
        %5538 = vmatprep.subr.bf16.mxu0 0
        %5539 = vmatpush1.bf16.msra.mxu0 0
        %5540 = vmatprep.mubr.bf16.mxu0 0
        %5541 = vmatmul.mubr.bf16.gmra.mrb[0].mxu0 %v5485
        %v5542 = vpop.f32.mrb[0].mxu0
        %v5543 = vadd.f32 %v5452, %v5542
        %v5544 = vpop.f32.mrb[0].mxu0
        %v5545 = vadd.f32 %v5453, %v5544
        %v5546 = vpop.f32.mrb[0].mxu0
        %v5547 = vadd.f32 %v5454, %v5546
        %v5548 = vpop.f32.mrb[0].mxu0
        %v5549 = vadd.f32 %v5455, %v5548
        %5550 = vmatprep.mubr.bf16.mxu0 0
        %5551 = vmatmul.mubr.bf16.gmra.mrb[0].mxu0 %v5488
        %v5552 = vpop.f32.mrb[0].mxu0
        %v5553 = vadd.f32 %v5456, %v5552
        %v5554 = vpop.f32.mrb[0].mxu0
        %v5555 = vadd.f32 %v5457, %v5554
        %v5556 = vpop.f32.mrb[0].mxu0
        %v5557 = vadd.f32 %v5458, %v5556
        %v5558 = vpop.f32.mrb[0].mxu0
        %v5559 = vadd.f32 %v5459, %v5558
        %5560 = vmatprep.mubr.bf16.mxu0 0
        %5561 = vmatmul.mubr.bf16.gmra.mrb[0].mxu0 %v5491
        %v5562 = vpop.f32.mrb[0].mxu0
        %v5563 = vadd.f32 %v5460, %v5562
        %v5564 = vpop.f32.mrb[0].mxu0
        %v5565 = vadd.f32 %v5461, %v5564
        %v5566 = vpop.f32.mrb[0].mxu0
        %v5567 = vadd.f32 %v5462, %v5566
        %v5568 = vpop.f32.mrb[0].mxu0
        %v5569 = vadd.f32 %v5463, %v5568
        %5570 = vmatprep.mubr.bf16.mxu0 0
        %5571 = vmatmul.mubr.bf16.gmra.mrb[0].mxu0 %v5494
        %v5572 = vpop.f32.mrb[0].mxu0
        %v5573 = vadd.f32 %v5464, %v5572
        %v5574 = vpop.f32.mrb[0].mxu0
        %v5575 = vadd.f32 %v5465, %v5574
        %v5576 = vpop.f32.mrb[0].mxu0
        %v5577 = vadd.f32 %v5466, %v5576
        %v5578 = vpop.f32.mrb[0].mxu0
        %v5579 = vadd.f32 %v5467, %v5578
        %5580 = vmatprep.mubr.bf16.mxu0 0
        %5581 = vmatmul.mubr.bf16.gmra.mrb[0].mxu0 %v5497
        %v5582 = vpop.f32.mrb[0].mxu0
        %v5583 = vadd.f32 %v5468, %v5582
        %v5584 = vpop.f32.mrb[0].mxu0
        %v5585 = vadd.f32 %v5469, %v5584
        %v5586 = vpop.f32.mrb[0].mxu0
        %v5587 = vadd.f32 %v5470, %v5586
        %v5588 = vpop.f32.mrb[0].mxu0
        %v5589 = vadd.f32 %v5471, %v5588
        %5590 = vmatprep.mubr.bf16.mxu0 0
        %5591 = vmatmul.mubr.bf16.gmra.mrb[0].mxu0 %v5500
        %v5592 = vpop.f32.mrb[0].mxu0
        %v5593 = vadd.f32 %v5472, %v5592
        %v5594 = vpop.f32.mrb[0].mxu0
        %v5595 = vadd.f32 %v5473, %v5594
        %v5596 = vpop.f32.mrb[0].mxu0
        %v5597 = vadd.f32 %v5474, %v5596
        %v5598 = vpop.f32.mrb[0].mxu0
        %v5599 = vadd.f32 %v5475, %v5598
        %5600 = vmatprep.mubr.bf16.mxu0 0
        %5601 = vmatmul.mubr.bf16.gmra.mrb[0].mxu0 %v5503
        %v5602 = vpop.f32.mrb[0].mxu0
        %v5603 = vadd.f32 %v5476, %v5602
        %v5604 = vpop.f32.mrb[0].mxu0
        %v5605 = vadd.f32 %v5477, %v5604
        %v5606 = vpop.f32.mrb[0].mxu0
        %v5607 = vadd.f32 %v5478, %v5606
        %v5608 = vpop.f32.mrb[0].mxu0
        %v5609 = vadd.f32 %v5479, %v5608
        %5610 = vmatprep.mubr.bf16.mxu0 0
        %5611 = vmatmul.mubr.bf16.gmra.mrb[0].mxu0 %v5506
        %v5612 = vpop.f32.mrb[0].mxu0
        %v5613 = vadd.f32 %v5480, %v5612
        %v5614 = vpop.f32.mrb[0].mxu0
        %v5615 = vadd.f32 %v5481, %v5614
        %v5616 = vpop.f32.mrb[0].mxu0
        %v5617 = vadd.f32 %v5482, %v5616
        %v5618 = vpop.f32.mrb[0].mxu0
        %v5619 = vadd.f32 %v5483, %v5618
        %5620 = vdwg.mxu0
        %v5621 = vmax.f32 %v5543, %v5545
        %5622 = vmax.xlane.f32.xlu0 %v5621
        %v5623 = vpop.xlane.xlu0 %5622
        %v5624 = vmax.f32 %v5547, %v5549
        %5625 = vmax.xlane.f32.xlu0 %v5624
        %v5626 = vpop.xlane.xlu0 %5625
        %v5627 = vmax.f32 %v5553, %v5555
        %5628 = vmax.xlane.f32.xlu0 %v5627
        %v5629 = vpop.xlane.xlu0 %5628
        %v5630 = vmax.f32 %v5557, %v5559
        %5631 = vmax.xlane.f32.xlu0 %v5630
        %v5632 = vpop.xlane.xlu0 %5631
        %v5633 = vmax.f32 %v5563, %v5565
        %5634 = vmax.xlane.f32.xlu0 %v5633
        %v5635 = vpop.xlane.xlu0 %5634
        %v5636 = vmax.f32 %v5567, %v5569
        %5637 = vmax.xlane.f32.xlu0 %v5636
        %v5638 = vpop.xlane.xlu0 %5637
        %v5639 = vmax.f32 %v5573, %v5575
        %5640 = vmax.xlane.f32.xlu0 %v5639
        %v5641 = vpop.xlane.xlu0 %5640
        %v5642 = vmax.f32 %v5577, %v5579
        %5643 = vmax.xlane.f32.xlu0 %v5642
        %v5644 = vpop.xlane.xlu0 %5643
        %v5645 = vmax.f32 %v5583, %v5585
        %5646 = vmax.xlane.f32.xlu0 %v5645
        %v5647 = vpop.xlane.xlu0 %5646
        %v5648 = vmax.f32 %v5587, %v5589
        %5649 = vmax.xlane.f32.xlu0 %v5648
        %v5650 = vpop.xlane.xlu0 %5649
        %v5651 = vmax.f32 %v5593, %v5595
        %5652 = vmax.xlane.f32.xlu0 %v5651
        %v5653 = vpop.xlane.xlu0 %5652
        %v5654 = vmax.f32 %v5597, %v5599
        %5655 = vmax.xlane.f32.xlu0 %v5654
        %v5656 = vpop.xlane.xlu0 %5655
        %v5657 = vmax.f32 %v5603, %v5605
        %5658 = vmax.xlane.f32.xlu0 %v5657
        %v5659 = vpop.xlane.xlu0 %5658
        %v5660 = vmax.f32 %v5607, %v5609
        %5661 = vmax.xlane.f32.xlu0 %v5660
        %v5662 = vpop.xlane.xlu0 %5661
        %v5663 = vmax.f32 %v5613, %v5615
        %5664 = vmax.xlane.f32.xlu0 %v5663
        %v5665 = vpop.xlane.xlu0 %5664
        %v5666 = vmax.f32 %v5617, %v5619
        %5667 = vmax.xlane.f32.xlu0 %v5666
        %v5668 = vpop.xlane.xlu0 %5667
        %v5669 = vsub.f32 %v5543, %v5623
        %v5670 = vsub.f32 %v5545, %v5623
        %v5671 = vsub.f32 %v5547, %v5626
        %v5672 = vsub.f32 %v5549, %v5626
        %v5673 = vsub.f32 %v5553, %v5629
        %v5674 = vsub.f32 %v5555, %v5629
        %v5675 = vsub.f32 %v5557, %v5632
        %v5676 = vsub.f32 %v5559, %v5632
        %v5677 = vsub.f32 %v5563, %v5635
        %v5678 = vsub.f32 %v5565, %v5635
        %v5679 = vsub.f32 %v5567, %v5638
        %v5680 = vsub.f32 %v5569, %v5638
        %v5681 = vsub.f32 %v5573, %v5641
        %v5682 = vsub.f32 %v5575, %v5641
        %v5683 = vsub.f32 %v5577, %v5644
        %v5684 = vsub.f32 %v5579, %v5644
        %v5685 = vsub.f32 %v5583, %v5647
        %v5686 = vsub.f32 %v5585, %v5647
        %v5687 = vsub.f32 %v5587, %v5650
        %v5688 = vsub.f32 %v5589, %v5650
        %v5689 = vsub.f32 %v5593, %v5653
        %v5690 = vsub.f32 %v5595, %v5653
        %v5691 = vsub.f32 %v5597, %v5656
        %v5692 = vsub.f32 %v5599, %v5656
        %v5693 = vsub.f32 %v5603, %v5659
        %v5694 = vsub.f32 %v5605, %v5659
        %v5695 = vsub.f32 %v5607, %v5662
        %v5696 = vsub.f32 %v5609, %v5662
        %v5697 = vsub.f32 %v5613, %v5665
        %v5698 = vsub.f32 %v5615, %v5665
        %v5699 = vsub.f32 %v5617, %v5668
        %v5700 = vsub.f32 %v5619, %v5668
        %v5701 = vmul.f32 %v5669, 1.442695
        %v5702 = vpow.pop %v5701
        %v5703 = vmul.f32 %v5670, 1.442695
        %v5704 = vpow.pop %v5703
        %v5705 = vmul.f32 %v5671, 1.442695
        %v5706 = vpow.pop %v5705
        %v5707 = vmul.f32 %v5672, 1.442695
        %v5708 = vpow.pop %v5707
        %v5709 = vmul.f32 %v5673, 1.442695
        %v5710 = vpow.pop %v5709
        %v5711 = vmul.f32 %v5674, 1.442695
        %v5712 = vpow.pop %v5711
        %v5713 = vmul.f32 %v5675, 1.442695
        %v5714 = vpow.pop %v5713
        %v5715 = vmul.f32 %v5676, 1.442695
        %v5716 = vpow.pop %v5715
        %v5717 = vmul.f32 %v5677, 1.442695
        %v5718 = vpow.pop %v5717
        %v5719 = vmul.f32 %v5678, 1.442695
        %v5720 = vpow.pop %v5719
        %v5721 = vmul.f32 %v5679, 1.442695
        %v5722 = vpow.pop %v5721
        %v5723 = vmul.f32 %v5680, 1.442695
        %v5724 = vpow.pop %v5723
        %v5725 = vmul.f32 %v5681, 1.442695
        %v5726 = vpow.pop %v5725
        %v5727 = vmul.f32 %v5682, 1.442695
        %v5728 = vpow.pop %v5727
        %v5729 = vmul.f32 %v5683, 1.442695
        %v5730 = vpow.pop %v5729
        %v5731 = vmul.f32 %v5684, 1.442695
        %v5732 = vpow.pop %v5731
        %v5733 = vmul.f32 %v5685, 1.442695
        %v5734 = vpow.pop %v5733
        %v5735 = vmul.f32 %v5686, 1.442695
        %v5736 = vpow.pop %v5735
        %v5737 = vmul.f32 %v5687, 1.442695
        %v5738 = vpow.pop %v5737
        %v5739 = vmul.f32 %v5688, 1.442695
        %v5740 = vpow.pop %v5739
        %v5741 = vmul.f32 %v5689, 1.442695
        %v5742 = vpow.pop %v5741
        %v5743 = vmul.f32 %v5690, 1.442695
        %v5744 = vpow.pop %v5743
        %v5745 = vmul.f32 %v5691, 1.442695
        %v5746 = vpow.pop %v5745
        %v5747 = vmul.f32 %v5692, 1.442695
        %v5748 = vpow.pop %v5747
        %v5749 = vmul.f32 %v5693, 1.442695
        %v5750 = vpow.pop %v5749
        %v5751 = vmul.f32 %v5694, 1.442695
        %v5752 = vpow.pop %v5751
        %v5753 = vmul.f32 %v5695, 1.442695
        %v5754 = vpow.pop %v5753
        %v5755 = vmul.f32 %v5696, 1.442695
        %v5756 = vpow.pop %v5755
        %v5757 = vmul.f32 %v5697, 1.442695
        %v5758 = vpow.pop %v5757
        %v5759 = vmul.f32 %v5698, 1.442695
        %v5760 = vpow.pop %v5759
        %v5761 = vmul.f32 %v5699, 1.442695
        %v5762 = vpow.pop %v5761
        %v5763 = vmul.f32 %v5700, 1.442695
        %v5764 = vpow.pop %v5763
        %v5765 = vadd.f32 %v5702, %v5704
        %5766 = vadd.xlane.f32.xlu0 %v5765
        %v5767 = vpop.xlane.xlu0 %5766
        %v5768 = vadd.f32 %v5706, %v5708
        %5769 = vadd.xlane.f32.xlu0 %v5768
        %v5770 = vpop.xlane.xlu0 %5769
        %v5771 = vadd.f32 %v5710, %v5712
        %5772 = vadd.xlane.f32.xlu0 %v5771
        %v5773 = vpop.xlane.xlu0 %5772
        %v5774 = vadd.f32 %v5714, %v5716
        %5775 = vadd.xlane.f32.xlu0 %v5774
        %v5776 = vpop.xlane.xlu0 %5775
        %v5777 = vadd.f32 %v5718, %v5720
        %5778 = vadd.xlane.f32.xlu0 %v5777
        %v5779 = vpop.xlane.xlu0 %5778
        %v5780 = vadd.f32 %v5722, %v5724
        %5781 = vadd.xlane.f32.xlu0 %v5780
        %v5782 = vpop.xlane.xlu0 %5781
        %v5783 = vadd.f32 %v5726, %v5728
        %5784 = vadd.xlane.f32.xlu0 %v5783
        %v5785 = vpop.xlane.xlu0 %5784
        %v5786 = vadd.f32 %v5730, %v5732
        %5787 = vadd.xlane.f32.xlu0 %v5786
        %v5788 = vpop.xlane.xlu0 %5787
        %v5789 = vadd.f32 %v5734, %v5736
        %5790 = vadd.xlane.f32.xlu0 %v5789
        %v5791 = vpop.xlane.xlu0 %5790
        %v5792 = vadd.f32 %v5738, %v5740
        %5793 = vadd.xlane.f32.xlu0 %v5792
        %v5794 = vpop.xlane.xlu0 %5793
        %v5795 = vadd.f32 %v5742, %v5744
        %5796 = vadd.xlane.f32.xlu0 %v5795
        %v5797 = vpop.xlane.xlu0 %5796
        %v5798 = vadd.f32 %v5746, %v5748
        %5799 = vadd.xlane.f32.xlu0 %v5798
        %v5800 = vpop.xlane.xlu0 %5799
        %v5801 = vadd.f32 %v5750, %v5752
        %5802 = vadd.xlane.f32.xlu0 %v5801
        %v5803 = vpop.xlane.xlu0 %5802
        %v5804 = vadd.f32 %v5754, %v5756
        %5805 = vadd.xlane.f32.xlu0 %v5804
        %v5806 = vpop.xlane.xlu0 %5805
        %v5807 = vadd.f32 %v5758, %v5760
        %5808 = vadd.xlane.f32.xlu0 %v5807
        %v5809 = vpop.xlane.xlu0 %5808
        %v5810 = vadd.f32 %v5762, %v5764
        %5811 = vadd.xlane.f32.xlu0 %v5810
        %v5812 = vpop.xlane.xlu0 %5811
        %v5813 = vrcp.pop %v5767
        %v5814 = vrcp.pop %v5770
        %v5815 = vrcp.pop %v5773
        %v5816 = vrcp.pop %v5776
        %v5817 = vrcp.pop %v5779
        %v5818 = vrcp.pop %v5782
        %v5819 = vrcp.pop %v5785
        %v5820 = vrcp.pop %v5788
        %v5821 = vrcp.pop %v5791
        %v5822 = vrcp.pop %v5794
        %v5823 = vrcp.pop %v5797
        %v5824 = vrcp.pop %v5800
        %v5825 = vrcp.pop %v5803
        %v5826 = vrcp.pop %v5806
        %v5827 = vrcp.pop %v5809
        %v5828 = vrcp.pop %v5812
        %v5829 = vpack.c.bf16 %v5706, %v5702
        %v5830 = vpack.c.bf16 %v5708, %v5704
        %v5831 = vpack.c.bf16 %v5714, %v5710
        %v5832 = vpack.c.bf16 %v5716, %v5712
        %v5833 = vpack.c.bf16 %v5722, %v5718
        %v5834 = vpack.c.bf16 %v5724, %v5720
        %v5835 = vpack.c.bf16 %v5730, %v5726
        %v5836 = vpack.c.bf16 %v5732, %v5728
        %v5837 = vpack.c.bf16 %v5738, %v5734
        %v5838 = vpack.c.bf16 %v5740, %v5736
        %v5839 = vpack.c.bf16 %v5746, %v5742
        %v5840 = vpack.c.bf16 %v5748, %v5744
        %v5841 = vpack.c.bf16 %v5754, %v5750
        %v5842 = vpack.c.bf16 %v5756, %v5752
        %v5843 = vpack.c.bf16 %v5762, %v5758
        %v5844 = vpack.c.bf16 %v5764, %v5760
        %s5845 = scalar_lea.vmem [#allocation4], 384
        %v5846 = vld [vmem:[%s5845] sm:$0xff]
        %v5847 = vld [vmem:[%s5845 + $0x8] sm:$0xff]
        %v5848 = vld [vmem:[%s5845 + $0x10] sm:$0xff]
        %v5849 = vld [vmem:[%s5845 + $0x18] sm:$0xff]
        %v5850 = vld [vmem:[%s5845 + $0x20] sm:$0xff]
        %v5851 = vld [vmem:[%s5845 + $0x28] sm:$0xff]
        %v5852 = vld [vmem:[%s5845 + $0x30] sm:$0xff]
        %v5853 = vld [vmem:[%s5845 + $0x38] sm:$0xff]
        %v5854 = vld [vmem:[%s5845 + $0x40] sm:$0xff]
        %v5855 = vld [vmem:[%s5845 + $0x48] sm:$0xff]
        %v5856 = vld [vmem:[%s5845 + $0x50] sm:$0xff]
        %v5857 = vld [vmem:[%s5845 + $0x58] sm:$0xff]
        %v5858 = vld [vmem:[%s5845 + $0x60] sm:$0xff]
        %v5859 = vld [vmem:[%s5845 + $0x68] sm:$0xff]
        %v5860 = vld [vmem:[%s5845 + $0x70] sm:$0xff]
        %v5861 = vld [vmem:[%s5845 + $0x78] sm:$0xff]
        %5862 = vmatprep.subr.bf16.mxu0 0
        %5863 = vmatpush1.bf16.msra.mxu0 %v5846
        %5864 = vmatprep.subr.bf16.mxu0 0
        %5865 = vmatpush1.bf16.msra.mxu0 %v5847
        %5866 = vmatprep.subr.bf16.mxu0 0
        %5867 = vmatpush1.bf16.msra.mxu0 %v5848
        %5868 = vmatprep.subr.bf16.mxu0 0
        %5869 = vmatpush1.bf16.msra.mxu0 %v5849
        %5870 = vmatprep.subr.bf16.mxu0 0
        %5871 = vmatpush1.bf16.msra.mxu0 %v5850
        %5872 = vmatprep.subr.bf16.mxu0 0
        %5873 = vmatpush1.bf16.msra.mxu0 %v5851
        %5874 = vmatprep.subr.bf16.mxu0 0
        %5875 = vmatpush1.bf16.msra.mxu0 %v5852
        %5876 = vmatprep.subr.bf16.mxu0 0
        %5877 = vmatpush1.bf16.msra.mxu0 %v5853
        %5878 = vmatprep.subr.bf16.mxu0 0
        %5879 = vmatpush1.bf16.msra.mxu0 %v5854
        %5880 = vmatprep.subr.bf16.mxu0 0
        %5881 = vmatpush1.bf16.msra.mxu0 %v5855
        %5882 = vmatprep.subr.bf16.mxu0 0
        %5883 = vmatpush1.bf16.msra.mxu0 %v5856
        %5884 = vmatprep.subr.bf16.mxu0 0
        %5885 = vmatpush1.bf16.msra.mxu0 %v5857
        %5886 = vmatprep.subr.bf16.mxu0 0
        %5887 = vmatpush1.bf16.msra.mxu0 %v5858
        %5888 = vmatprep.subr.bf16.mxu0 0
        %5889 = vmatpush1.bf16.msra.mxu0 %v5859
        %5890 = vmatprep.subr.bf16.mxu0 0
        %5891 = vmatpush1.bf16.msra.mxu0 %v5860
        %5892 = vmatprep.subr.bf16.mxu0 0
        %5893 = vmatpush1.bf16.msra.mxu0 %v5861
        %5894 = vmatprep.mubr.bf16.mxu0 %v5830
        %5895 = vmatmul.mubr.bf16.gmra.mrb[0].mxu0 %v5829
        %v5896 = vpop.f32.mrb[0].mxu0
        %v5897 = vadd.f32 0.0, %v5896
        %v5898 = vpop.f32.mrb[0].mxu0
        %v5899 = vpop.f32.mrb[0].mxu0
        %v5900 = vadd.f32 0.0, %v5899
        %v5901 = vpop.f32.mrb[0].mxu0
        %5902 = vmatprep.mubr.bf16.mxu0 %v5832
        %5903 = vmatmul.mubr.bf16.gmra.mrb[0].mxu0 %v5831
        %v5904 = vpop.f32.mrb[0].mxu0
        %v5905 = vadd.f32 0.0, %v5904
        %v5906 = vpop.f32.mrb[0].mxu0
        %v5907 = vpop.f32.mrb[0].mxu0
        %v5908 = vadd.f32 0.0, %v5907
        %v5909 = vpop.f32.mrb[0].mxu0
        %5910 = vmatprep.mubr.bf16.mxu0 %v5834
        %5911 = vmatmul.mubr.bf16.gmra.mrb[0].mxu0 %v5833
        %v5912 = vpop.f32.mrb[0].mxu0
        %v5913 = vadd.f32 0.0, %v5912
        %v5914 = vpop.f32.mrb[0].mxu0
        %v5915 = vpop.f32.mrb[0].mxu0
        %v5916 = vadd.f32 0.0, %v5915
        %v5917 = vpop.f32.mrb[0].mxu0
        %5918 = vmatprep.mubr.bf16.mxu0 %v5836
        %5919 = vmatmul.mubr.bf16.gmra.mrb[0].mxu0 %v5835
        %v5920 = vpop.f32.mrb[0].mxu0
        %v5921 = vadd.f32 0.0, %v5920
        %v5922 = vpop.f32.mrb[0].mxu0
        %v5923 = vpop.f32.mrb[0].mxu0
        %v5924 = vadd.f32 0.0, %v5923
        %v5925 = vpop.f32.mrb[0].mxu0
        %5926 = vmatprep.mubr.bf16.mxu0 %v5838
        %5927 = vmatmul.mubr.bf16.gmra.mrb[0].mxu0 %v5837
        %v5928 = vpop.f32.mrb[0].mxu0
        %v5929 = vadd.f32 0.0, %v5928
        %v5930 = vpop.f32.mrb[0].mxu0
        %v5931 = vpop.f32.mrb[0].mxu0
        %v5932 = vadd.f32 0.0, %v5931
        %v5933 = vpop.f32.mrb[0].mxu0
        %5934 = vmatprep.mubr.bf16.mxu0 %v5840
        %5935 = vmatmul.mubr.bf16.gmra.mrb[0].mxu0 %v5839
        %v5936 = vpop.f32.mrb[0].mxu0
        %v5937 = vadd.f32 0.0, %v5936
        %v5938 = vpop.f32.mrb[0].mxu0
        %v5939 = vpop.f32.mrb[0].mxu0
        %v5940 = vadd.f32 0.0, %v5939
        %v5941 = vpop.f32.mrb[0].mxu0
        %5942 = vmatprep.mubr.bf16.mxu0 %v5842
        %5943 = vmatmul.mubr.bf16.gmra.mrb[0].mxu0 %v5841
        %v5944 = vpop.f32.mrb[0].mxu0
        %v5945 = vadd.f32 0.0, %v5944
        %v5946 = vpop.f32.mrb[0].mxu0
        %v5947 = vpop.f32.mrb[0].mxu0
        %v5948 = vadd.f32 0.0, %v5947
        %v5949 = vpop.f32.mrb[0].mxu0
        %5950 = vmatprep.mubr.bf16.mxu0 %v5844
        %5951 = vmatmul.mubr.bf16.gmra.mrb[0].mxu0 %v5843
        %v5952 = vpop.f32.mrb[0].mxu0
        %v5953 = vadd.f32 0.0, %v5952
        %v5954 = vpop.f32.mrb[0].mxu0
        %v5955 = vpop.f32.mrb[0].mxu0
        %v5956 = vadd.f32 0.0, %v5955
        %v5957 = vpop.f32.mrb[0].mxu0
        %5958 = vdwg.mxu0
        %v5959 = vmul.f32 %v5897, %v5813
        %v5960 = vmul.f32 %v5900, %v5814
        %v5961 = vmul.f32 %v5905, %v5815
        %v5962 = vmul.f32 %v5908, %v5816
        %v5963 = vmul.f32 %v5913, %v5817
        %v5964 = vmul.f32 %v5916, %v5818
        %v5965 = vmul.f32 %v5921, %v5819
        %v5966 = vmul.f32 %v5924, %v5820
        %v5967 = vmul.f32 %v5929, %v5821
        %v5968 = vmul.f32 %v5932, %v5822
        %v5969 = vmul.f32 %v5937, %v5823
        %v5970 = vmul.f32 %v5940, %v5824
        %v5971 = vmul.f32 %v5945, %v5825
        %v5972 = vmul.f32 %v5948, %v5826
        %v5973 = vmul.f32 %v5953, %v5827
        %v5974 = vmul.f32 %v5956, %v5828
        %v5975 = vpack.c.bf16 %v5960, %v5959
        %v5976 = vpack.c.bf16 %v5962, %v5961
        %v5977 = vpack.c.bf16 %v5964, %v5963
        %v5978 = vpack.c.bf16 %v5966, %v5965
        %v5979 = vpack.c.bf16 %v5968, %v5967
        %v5980 = vpack.c.bf16 %v5970, %v5969
        %v5981 = vpack.c.bf16 %v5972, %v5971
        %v5982 = vpack.c.bf16 %v5974, %v5973
        %v5983 = vld [vmem:[#allocation11 + $0xc0] sm:$0xff]
        %v5984 = vld [vmem:[#allocation11 + $0xc8] sm:$0xff]
        %v5985 = vld [vmem:[#allocation11 + $0xd0] sm:$0xff]
        %v5986 = vld [vmem:[#allocation11 + $0xd8] sm:$0xff]
        %v5987 = vld [vmem:[#allocation11 + $0xe0] sm:$0xff]
        %v5988 = vld [vmem:[#allocation11 + $0xe8] sm:$0xff]
        %v5989 = vld [vmem:[#allocation11 + $0xf0] sm:$0xff]
        %v5990 = vld [vmem:[#allocation11 + $0xf8] sm:$0xff]
        %v5999 = vunpack.c.l.b16 %v5983
        %v6000 = vunpack.c.h.b16 %v5983
        %v6001 = vunpack.c.l.b16 %v5984
        %v6002 = vunpack.c.h.b16 %v5984
        %v6003 = vunpack.c.l.b16 %v5985
        %v6004 = vunpack.c.h.b16 %v5985
        %v6005 = vunpack.c.l.b16 %v5986
        %v6006 = vunpack.c.h.b16 %v5986
        %v6007 = vunpack.c.l.b16 %v5987
        %v6008 = vunpack.c.h.b16 %v5987
        %v6009 = vunpack.c.l.b16 %v5988
        %v6010 = vunpack.c.h.b16 %v5988
        %v6011 = vunpack.c.l.b16 %v5989
        %v6012 = vunpack.c.h.b16 %v5989
        %v6013 = vunpack.c.l.b16 %v5990
        %v6014 = vunpack.c.h.b16 %v5990
        %v6015 = vpack.c.b16 %v6001, %v5999
        %v6016 = vpack.c.b16 %v6002, %v6000
        %v6017 = vpack.c.b16 %v6005, %v6003
        %v6018 = vpack.c.b16 %v6006, %v6004
        %v6019 = vpack.c.b16 %v6009, %v6007
        %v6020 = vpack.c.b16 %v6010, %v6008
        %v6021 = vpack.c.b16 %v6013, %v6011
        %v6022 = vpack.c.b16 %v6014, %v6012
        %v6032 = vsel %vm3241, %v5975, 0
        %v6035 = vsel %vm3241, %v5976, 0
        %v6038 = vsel %vm3241, %v5977, 0
        %v6041 = vsel %vm3241, %v5978, 0
        %v6044 = vsel %vm3241, %v5979, 0
        %v6047 = vsel %vm3241, %v5980, 0
        %v6050 = vsel %vm3241, %v5981, 0
        %v6053 = vsel %vm3241, %v5982, 0
        %6055 = vmatprep.subr.bf16.mxu0 %v6016
        %6056 = vmatpush1.bf16.msra.mxu0 %v6015
        %6057 = vmatprep.subr.bf16.mxu0 %v6018
        %6058 = vmatpush1.bf16.msra.mxu0 %v6017
        %6059 = vmatprep.subr.bf16.mxu0 %v6020
        %6060 = vmatpush1.bf16.msra.mxu0 %v6019
        %6061 = vmatprep.subr.bf16.mxu0 %v6022
        %6062 = vmatpush1.bf16.msra.mxu0 %v6021
        %6063 = vmatprep.subr.bf16.mxu0 0
        %6064 = vmatpush1.bf16.msra.mxu0 0
        %6065 = vmatprep.subr.bf16.mxu0 0
        %6066 = vmatpush1.bf16.msra.mxu0 0
        %6067 = vmatprep.subr.bf16.mxu0 0
        %6068 = vmatpush1.bf16.msra.mxu0 0
        %6069 = vmatprep.subr.bf16.mxu0 0
        %6070 = vmatpush1.bf16.msra.mxu0 0
        %6071 = vmatprep.subr.bf16.mxu0 0
        %6072 = vmatpush1.bf16.msra.mxu0 0
        %6073 = vmatprep.subr.bf16.mxu0 0
        %6074 = vmatpush1.bf16.msra.mxu0 0
        %6075 = vmatprep.subr.bf16.mxu0 0
        %6076 = vmatpush1.bf16.msra.mxu0 0
        %6077 = vmatprep.subr.bf16.mxu0 0
        %6078 = vmatpush1.bf16.msra.mxu0 0
        %6079 = vmatprep.subr.bf16.mxu0 0
        %6080 = vmatpush1.bf16.msra.mxu0 0
        %6081 = vmatprep.subr.bf16.mxu0 0
        %6082 = vmatpush1.bf16.msra.mxu0 0
        %6083 = vmatprep.subr.bf16.mxu0 0
        %6084 = vmatpush1.bf16.msra.mxu0 0
        %6085 = vmatprep.subr.bf16.mxu0 0
        %6086 = vmatpush1.bf16.msra.mxu0 0
        %6087 = vmatprep.mubr.bf16.mxu0 0
        %6088 = vmatmul.mubr.bf16.gmra.mrb[0].mxu0 %v6032
        %v6089 = vpop.f32.mrb[0].mxu0
        %v6090 = vadd.f32 0.0, %v6089
        %v6091 = vpop.f32.mrb[0].mxu0
        %v6092 = vadd.f32 0.0, %v6091
        %v6093 = vpop.f32.mrb[0].mxu0
        %v6094 = vadd.f32 0.0, %v6093
        %v6095 = vpop.f32.mrb[0].mxu0
        %v6096 = vadd.f32 0.0, %v6095
        %6097 = vmatprep.mubr.bf16.mxu0 0
        %6098 = vmatmul.mubr.bf16.gmra.mrb[0].mxu0 %v6035
        %v6099 = vpop.f32.mrb[0].mxu0
        %v6100 = vadd.f32 0.0, %v6099
        %v6101 = vpop.f32.mrb[0].mxu0
        %v6102 = vadd.f32 0.0, %v6101
        %v6103 = vpop.f32.mrb[0].mxu0
        %v6104 = vadd.f32 0.0, %v6103
        %v6105 = vpop.f32.mrb[0].mxu0
        %v6106 = vadd.f32 0.0, %v6105
        %6107 = vmatprep.mubr.bf16.mxu0 0
        %6108 = vmatmul.mubr.bf16.gmra.mrb[0].mxu0 %v6038
        %v6109 = vpop.f32.mrb[0].mxu0
        %v6110 = vadd.f32 0.0, %v6109
        %v6111 = vpop.f32.mrb[0].mxu0
        %v6112 = vadd.f32 0.0, %v6111
        %v6113 = vpop.f32.mrb[0].mxu0
        %v6114 = vadd.f32 0.0, %v6113
        %v6115 = vpop.f32.mrb[0].mxu0
        %v6116 = vadd.f32 0.0, %v6115
        %6117 = vmatprep.mubr.bf16.mxu0 0
        %6118 = vmatmul.mubr.bf16.gmra.mrb[0].mxu0 %v6041
        %v6119 = vpop.f32.mrb[0].mxu0
        %v6120 = vadd.f32 0.0, %v6119
        %v6121 = vpop.f32.mrb[0].mxu0
        %v6122 = vadd.f32 0.0, %v6121
        %v6123 = vpop.f32.mrb[0].mxu0
        %v6124 = vadd.f32 0.0, %v6123
        %v6125 = vpop.f32.mrb[0].mxu0
        %v6126 = vadd.f32 0.0, %v6125
        %6127 = vmatprep.mubr.bf16.mxu0 0
        %6128 = vmatmul.mubr.bf16.gmra.mrb[0].mxu0 %v6044
        %v6129 = vpop.f32.mrb[0].mxu0
        %v6130 = vadd.f32 0.0, %v6129
        %v6131 = vpop.f32.mrb[0].mxu0
        %v6132 = vadd.f32 0.0, %v6131
        %v6133 = vpop.f32.mrb[0].mxu0
        %v6134 = vadd.f32 0.0, %v6133
        %v6135 = vpop.f32.mrb[0].mxu0
        %v6136 = vadd.f32 0.0, %v6135
        %6137 = vmatprep.mubr.bf16.mxu0 0
        %6138 = vmatmul.mubr.bf16.gmra.mrb[0].mxu0 %v6047
        %v6139 = vpop.f32.mrb[0].mxu0
        %v6140 = vadd.f32 0.0, %v6139
        %v6141 = vpop.f32.mrb[0].mxu0
        %v6142 = vadd.f32 0.0, %v6141
        %v6143 = vpop.f32.mrb[0].mxu0
        %v6144 = vadd.f32 0.0, %v6143
        %v6145 = vpop.f32.mrb[0].mxu0
        %v6146 = vadd.f32 0.0, %v6145
        %6147 = vmatprep.mubr.bf16.mxu0 0
        %6148 = vmatmul.mubr.bf16.gmra.mrb[0].mxu0 %v6050
        %v6149 = vpop.f32.mrb[0].mxu0
        %v6150 = vadd.f32 0.0, %v6149
        %v6151 = vpop.f32.mrb[0].mxu0
        %v6152 = vadd.f32 0.0, %v6151
        %v6153 = vpop.f32.mrb[0].mxu0
        %v6154 = vadd.f32 0.0, %v6153
        %v6155 = vpop.f32.mrb[0].mxu0
        %v6156 = vadd.f32 0.0, %v6155
        %6157 = vmatprep.mubr.bf16.mxu0 0
        %6158 = vmatmul.mubr.bf16.gmra.mrb[0].mxu0 %v6053
        %v6159 = vpop.f32.mrb[0].mxu0
        %v6160 = vadd.f32 0.0, %v6159
        %v6161 = vpop.f32.mrb[0].mxu0
        %v6162 = vadd.f32 0.0, %v6161
        %v6163 = vpop.f32.mrb[0].mxu0
        %v6164 = vadd.f32 0.0, %v6163
        %v6165 = vpop.f32.mrb[0].mxu0
        %v6166 = vadd.f32 0.0, %v6165
        %6167 = vdwg.mxu0
        %v6168 = vadd.f32 %v5399, %v6090
        %v6169 = vadd.f32 %v5400, %v6092
        %v6170 = vadd.f32 %v5401, %v6094
        %v6171 = vadd.f32 %v5402, %v6096
        %v6172 = vadd.f32 %v5403, %v6100
        %v6173 = vadd.f32 %v5404, %v6102
        %v6174 = vadd.f32 %v5405, %v6104
        %v6175 = vadd.f32 %v5406, %v6106
        %v6176 = vadd.f32 %v5407, %v6110
        %v6177 = vadd.f32 %v5408, %v6112
        %v6178 = vadd.f32 %v5409, %v6114
        %v6179 = vadd.f32 %v5410, %v6116
        %v6180 = vadd.f32 %v5411, %v6120
        %v6181 = vadd.f32 %v5412, %v6122
        %v6182 = vadd.f32 %v5413, %v6124
        %v6183 = vadd.f32 %v5414, %v6126
        %v6184 = vadd.f32 %v5415, %v6130
        %v6185 = vadd.f32 %v5416, %v6132
        %v6186 = vadd.f32 %v5417, %v6134
        %v6187 = vadd.f32 %v5418, %v6136
        %v6188 = vadd.f32 %v5419, %v6140
        %v6189 = vadd.f32 %v5420, %v6142
        %v6190 = vadd.f32 %v5421, %v6144
        %v6191 = vadd.f32 %v5422, %v6146
        %v6192 = vadd.f32 %v5423, %v6150
        %v6193 = vadd.f32 %v5424, %v6152
        %v6194 = vadd.f32 %v5425, %v6154
        %v6195 = vadd.f32 %v5426, %v6156
        %v6196 = vadd.f32 %v5427, %v6160
        %v6197 = vadd.f32 %v5428, %v6162
        %v6198 = vadd.f32 %v5429, %v6164
        %v6199 = vadd.f32 %v5430, %v6166
        %v6200 = vadd.f32 %v3157, %v6168
        %v6201 = vadd.f32 %v3158, %v6169
        %v6202 = vadd.f32 %v3159, %v6170
        %v6203 = vadd.f32 %v3160, %v6171
        %v6204 = vadd.f32 %v3161, %v6172
        %v6205 = vadd.f32 %v3162, %v6173
        %v6206 = vadd.f32 %v3163, %v6174
        %v6207 = vadd.f32 %v3164, %v6175
        %v6208 = vadd.f32 %v3165, %v6176
        %v6209 = vadd.f32 %v3166, %v6177
        %v6210 = vadd.f32 %v3167, %v6178
        %v6211 = vadd.f32 %v3168, %v6179
        %v6212 = vadd.f32 %v3169, %v6180
        %v6213 = vadd.f32 %v3170, %v6181
        %v6214 = vadd.f32 %v3171, %v6182
        %v6215 = vadd.f32 %v3172, %v6183
        %v6216 = vadd.f32 %v3173, %v6184
        %v6217 = vadd.f32 %v3174, %v6185
        %v6218 = vadd.f32 %v3175, %v6186
        %v6219 = vadd.f32 %v3176, %v6187
        %v6220 = vadd.f32 %v3177, %v6188
        %v6221 = vadd.f32 %v3178, %v6189
        %v6222 = vadd.f32 %v3179, %v6190
        %v6223 = vadd.f32 %v3180, %v6191
        %v6224 = vadd.f32 %v3181, %v6192
        %v6225 = vadd.f32 %v3182, %v6193
        %v6226 = vadd.f32 %v3183, %v6194
        %v6227 = vadd.f32 %v3184, %v6195
        %v6228 = vadd.f32 %v3185, %v6196
        %v6229 = vadd.f32 %v3186, %v6197
        %v6230 = vadd.f32 %v3187, %v6198
        %v6231 = vadd.f32 %v3188, %v6199
        %v6232 = vld [vmem:[%s5] sm:$0x3]
        %v6233 = vmul.f32 %v6200, %v6200
        %v6234 = vmul.f32 %v6201, %v6201
        %v6235 = vmul.f32 %v6202, %v6202
        %v6236 = vmul.f32 %v6203, %v6203
        %v6237 = vmul.f32 %v6204, %v6204
        %v6238 = vmul.f32 %v6205, %v6205
        %v6239 = vmul.f32 %v6206, %v6206
        %v6240 = vmul.f32 %v6207, %v6207
        %v6241 = vmul.f32 %v6208, %v6208
        %v6242 = vmul.f32 %v6209, %v6209
        %v6243 = vmul.f32 %v6210, %v6210
        %v6244 = vmul.f32 %v6211, %v6211
        %v6245 = vmul.f32 %v6212, %v6212
        %v6246 = vmul.f32 %v6213, %v6213
        %v6247 = vmul.f32 %v6214, %v6214
        %v6248 = vmul.f32 %v6215, %v6215
        %v6249 = vmul.f32 %v6216, %v6216
        %v6250 = vmul.f32 %v6217, %v6217
        %v6251 = vmul.f32 %v6218, %v6218
        %v6252 = vmul.f32 %v6219, %v6219
        %v6253 = vmul.f32 %v6220, %v6220
        %v6254 = vmul.f32 %v6221, %v6221
        %v6255 = vmul.f32 %v6222, %v6222
        %v6256 = vmul.f32 %v6223, %v6223
        %v6257 = vmul.f32 %v6224, %v6224
        %v6258 = vmul.f32 %v6225, %v6225
        %v6259 = vmul.f32 %v6226, %v6226
        %v6260 = vmul.f32 %v6227, %v6227
        %v6261 = vmul.f32 %v6228, %v6228
        %v6262 = vmul.f32 %v6229, %v6229
        %v6263 = vmul.f32 %v6230, %v6230
        %v6264 = vmul.f32 %v6231, %v6231
        %v6265 = vadd.f32 %v6233, %v6234
        %6266 = vadd.xlane.f32.xlu0 %v6265
        %v6267 = vpop.xlane.xlu0 %6266
        %v6268 = vadd.f32 %v6235, %v6236
        %6269 = vadd.xlane.f32.xlu0 %v6268
        %v6270 = vpop.xlane.xlu0 %6269
        %v6271 = vadd.f32 %v6237, %v6238
        %6272 = vadd.xlane.f32.xlu0 %v6271
        %v6273 = vpop.xlane.xlu0 %6272
        %v6274 = vadd.f32 %v6239, %v6240
        %6275 = vadd.xlane.f32.xlu0 %v6274
        %v6276 = vpop.xlane.xlu0 %6275
        %v6277 = vadd.f32 %v6241, %v6242
        %6278 = vadd.xlane.f32.xlu0 %v6277
        %v6279 = vpop.xlane.xlu0 %6278
        %v6280 = vadd.f32 %v6243, %v6244
        %6281 = vadd.xlane.f32.xlu0 %v6280
        %v6282 = vpop.xlane.xlu0 %6281
        %v6283 = vadd.f32 %v6245, %v6246
        %6284 = vadd.xlane.f32.xlu0 %v6283
        %v6285 = vpop.xlane.xlu0 %6284
        %v6286 = vadd.f32 %v6247, %v6248
        %6287 = vadd.xlane.f32.xlu0 %v6286
        %v6288 = vpop.xlane.xlu0 %6287
        %v6289 = vadd.f32 %v6249, %v6250
        %6290 = vadd.xlane.f32.xlu0 %v6289
        %v6291 = vpop.xlane.xlu0 %6290
        %v6292 = vadd.f32 %v6251, %v6252
        %6293 = vadd.xlane.f32.xlu0 %v6292
        %v6294 = vpop.xlane.xlu0 %6293
        %v6295 = vadd.f32 %v6253, %v6254
        %6296 = vadd.xlane.f32.xlu0 %v6295
        %v6297 = vpop.xlane.xlu0 %6296
        %v6298 = vadd.f32 %v6255, %v6256
        %6299 = vadd.xlane.f32.xlu0 %v6298
        %v6300 = vpop.xlane.xlu0 %6299
        %v6301 = vadd.f32 %v6257, %v6258
        %6302 = vadd.xlane.f32.xlu0 %v6301
        %v6303 = vpop.xlane.xlu0 %6302
        %v6304 = vadd.f32 %v6259, %v6260
        %6305 = vadd.xlane.f32.xlu0 %v6304
        %v6306 = vpop.xlane.xlu0 %6305
        %v6307 = vadd.f32 %v6261, %v6262
        %6308 = vadd.xlane.f32.xlu0 %v6307
        %v6309 = vpop.xlane.xlu0 %6308
        %v6310 = vadd.f32 %v6263, %v6264
        %6311 = vadd.xlane.f32.xlu0 %v6310
        %v6312 = vpop.xlane.xlu0 %6311
        %v6313 = vrcp.pop 256.0
        %v6314 = vmul.f32 %v6267, %v6313
        %v6315 = vmul.f32 %v6270, %v6313
        %v6316 = vmul.f32 %v6273, %v6313
        %v6317 = vmul.f32 %v6276, %v6313
        %v6318 = vmul.f32 %v6279, %v6313
        %v6319 = vmul.f32 %v6282, %v6313
        %v6320 = vmul.f32 %v6285, %v6313
        %v6321 = vmul.f32 %v6288, %v6313
        %v6322 = vmul.f32 %v6291, %v6313
        %v6323 = vmul.f32 %v6294, %v6313
        %v6324 = vmul.f32 %v6297, %v6313
        %v6325 = vmul.f32 %v6300, %v6313
        %v6326 = vmul.f32 %v6303, %v6313
        %v6327 = vmul.f32 %v6306, %v6313
        %v6328 = vmul.f32 %v6309, %v6313
        %v6329 = vmul.f32 %v6312, %v6313
        %v6330 = vadd.f32 %v6314, 1e-06
        %v6331 = vadd.f32 %v6315, 1e-06
        %v6332 = vadd.f32 %v6316, 1e-06
        %v6333 = vadd.f32 %v6317, 1e-06
        %v6334 = vadd.f32 %v6318, 1e-06
        %v6335 = vadd.f32 %v6319, 1e-06
        %v6336 = vadd.f32 %v6320, 1e-06
        %v6337 = vadd.f32 %v6321, 1e-06
        %v6338 = vadd.f32 %v6322, 1e-06
        %v6339 = vadd.f32 %v6323, 1e-06
        %v6340 = vadd.f32 %v6324, 1e-06
        %v6341 = vadd.f32 %v6325, 1e-06
        %v6342 = vadd.f32 %v6326, 1e-06
        %v6343 = vadd.f32 %v6327, 1e-06
        %v6344 = vadd.f32 %v6328, 1e-06
        %v6345 = vadd.f32 %v6329, 1e-06
        %v6346 = vrsqrt.pop %v6330
        %v6347 = vrsqrt.pop %v6331
        %v6348 = vrsqrt.pop %v6332
        %v6349 = vrsqrt.pop %v6333
        %v6350 = vrsqrt.pop %v6334
        %v6351 = vrsqrt.pop %v6335
        %v6352 = vrsqrt.pop %v6336
        %v6353 = vrsqrt.pop %v6337
        %v6354 = vrsqrt.pop %v6338
        %v6355 = vrsqrt.pop %v6339
        %v6356 = vrsqrt.pop %v6340
        %v6357 = vrsqrt.pop %v6341
        %v6358 = vrsqrt.pop %v6342
        %v6359 = vrsqrt.pop %v6343
        %v6360 = vrsqrt.pop %v6344
        %v6361 = vrsqrt.pop %v6345
        %v6362 = vmul.f32 %v6200, %v6346
        %v6363 = vmul.f32 %v6201, %v6346
        %v6364 = vmul.f32 %v6202, %v6347
        %v6365 = vmul.f32 %v6203, %v6347
        %v6366 = vmul.f32 %v6204, %v6348
        %v6367 = vmul.f32 %v6205, %v6348
        %v6368 = vmul.f32 %v6206, %v6349
        %v6369 = vmul.f32 %v6207, %v6349
        %v6370 = vmul.f32 %v6208, %v6350
        %v6371 = vmul.f32 %v6209, %v6350
        %v6372 = vmul.f32 %v6210, %v6351
        %v6373 = vmul.f32 %v6211, %v6351
        %v6374 = vmul.f32 %v6212, %v6352
        %v6375 = vmul.f32 %v6213, %v6352
        %v6376 = vmul.f32 %v6214, %v6353
        %v6377 = vmul.f32 %v6215, %v6353
        %v6378 = vmul.f32 %v6216, %v6354
        %v6379 = vmul.f32 %v6217, %v6354
        %v6380 = vmul.f32 %v6218, %v6355
        %v6381 = vmul.f32 %v6219, %v6355
        %v6382 = vmul.f32 %v6220, %v6356
        %v6383 = vmul.f32 %v6221, %v6356
        %v6384 = vmul.f32 %v6222, %v6357
        %v6385 = vmul.f32 %v6223, %v6357
        %v6386 = vmul.f32 %v6224, %v6358
        %v6387 = vmul.f32 %v6225, %v6358
        %v6388 = vmul.f32 %v6226, %v6359
        %v6389 = vmul.f32 %v6227, %v6359
        %v6390 = vmul.f32 %v6228, %v6360
        %v6391 = vmul.f32 %v6229, %v6360
        %v6392 = vmul.f32 %v6230, %v6361
        %v6393 = vmul.f32 %v6231, %v6361
        %v6395 = vlaneseq
        %v6396 = vshrl.u32 %v6395, 7
        %v6397 = vsub.s32 0, %v6396
        %v6398 = vrot.slane %v6232, %v6397
        %v6399 = vlaneseq
        %v6400 = vshrl.u32 %v6399, 7
        %v6401 = vsub.s32 1, %v6400
        %v6402 = vrot.slane %v6232, %v6401
        %v6405 = vmul.f32 %v6362, %v6398
        %v6406 = vmul.f32 %v6363, %v6402
        %v6407 = vmul.f32 %v6364, %v6398
        %v6408 = vmul.f32 %v6365, %v6402
        %v6409 = vmul.f32 %v6366, %v6398
        %v6410 = vmul.f32 %v6367, %v6402
        %v6411 = vmul.f32 %v6368, %v6398
        %v6412 = vmul.f32 %v6369, %v6402
        %v6413 = vmul.f32 %v6370, %v6398
        %v6414 = vmul.f32 %v6371, %v6402
        %v6415 = vmul.f32 %v6372, %v6398
        %v6416 = vmul.f32 %v6373, %v6402
        %v6417 = vmul.f32 %v6374, %v6398
        %v6418 = vmul.f32 %v6375, %v6402
        %v6419 = vmul.f32 %v6376, %v6398
        %v6420 = vmul.f32 %v6377, %v6402
        %v6421 = vmul.f32 %v6378, %v6398
        %v6422 = vmul.f32 %v6379, %v6402
        %v6423 = vmul.f32 %v6380, %v6398
        %v6424 = vmul.f32 %v6381, %v6402
        %v6425 = vmul.f32 %v6382, %v6398
        %v6426 = vmul.f32 %v6383, %v6402
        %v6427 = vmul.f32 %v6384, %v6398
        %v6428 = vmul.f32 %v6385, %v6402
        %v6429 = vmul.f32 %v6386, %v6398
        %v6430 = vmul.f32 %v6387, %v6402
        %v6431 = vmul.f32 %v6388, %v6398
        %v6432 = vmul.f32 %v6389, %v6402
        %v6433 = vmul.f32 %v6390, %v6398
        %v6434 = vmul.f32 %v6391, %v6402
        %v6435 = vmul.f32 %v6392, %v6398
        %v6436 = vmul.f32 %v6393, %v6402
        %v6437 = vpack.c.bf16 %v6407, %v6405
        %v6438 = vpack.c.bf16 %v6408, %v6406
        %v6439 = vpack.c.bf16 %v6411, %v6409
        %v6440 = vpack.c.bf16 %v6412, %v6410
        %v6441 = vpack.c.bf16 %v6415, %v6413
        %v6442 = vpack.c.bf16 %v6416, %v6414
        %v6443 = vpack.c.bf16 %v6419, %v6417
        %v6444 = vpack.c.bf16 %v6420, %v6418
        %v6445 = vpack.c.bf16 %v6423, %v6421
        %v6446 = vpack.c.bf16 %v6424, %v6422
        %v6447 = vpack.c.bf16 %v6427, %v6425
        %v6448 = vpack.c.bf16 %v6428, %v6426
        %v6449 = vpack.c.bf16 %v6431, %v6429
        %v6450 = vpack.c.bf16 %v6432, %v6430
        %v6451 = vpack.c.bf16 %v6435, %v6433
        %v6452 = vpack.c.bf16 %v6436, %v6434
        %v6453 = vld [vmem:[#allocation13] sm:$0xff]
        %v6454 = vld [vmem:[#allocation13 + $0x8] sm:$0xff]
        %v6455 = vld [vmem:[#allocation13 + $0x10] sm:$0xff]
        %v6456 = vld [vmem:[#allocation13 + $0x18] sm:$0xff]
        %v6457 = vld [vmem:[#allocation13 + $0x20] sm:$0xff]
        %v6458 = vld [vmem:[#allocation13 + $0x28] sm:$0xff]
        %v6459 = vld [vmem:[#allocation13 + $0x30] sm:$0xff]
        %v6460 = vld [vmem:[#allocation13 + $0x38] sm:$0xff]
        %v6461 = vld [vmem:[#allocation13 + $0x40] sm:$0xff]
        %v6462 = vld [vmem:[#allocation13 + $0x48] sm:$0xff]
        %v6463 = vld [vmem:[#allocation13 + $0x50] sm:$0xff]
        %v6464 = vld [vmem:[#allocation13 + $0x58] sm:$0xff]
        %v6465 = vld [vmem:[#allocation13 + $0x60] sm:$0xff]
        %v6466 = vld [vmem:[#allocation13 + $0x68] sm:$0xff]
        %v6467 = vld [vmem:[#allocation13 + $0x70] sm:$0xff]
        %v6468 = vld [vmem:[#allocation13 + $0x78] sm:$0xff]
        %v6469 = vld [vmem:[#allocation13 + $0x80] sm:$0xff]
        %v6470 = vld [vmem:[#allocation13 + $0x88] sm:$0xff]
        %v6471 = vld [vmem:[#allocation13 + $0x90] sm:$0xff]
        %v6472 = vld [vmem:[#allocation13 + $0x98] sm:$0xff]
        %v6473 = vld [vmem:[#allocation13 + $0xa0] sm:$0xff]
        %v6474 = vld [vmem:[#allocation13 + $0xa8] sm:$0xff]
        %v6475 = vld [vmem:[#allocation13 + $0xb0] sm:$0xff]
        %v6476 = vld [vmem:[#allocation13 + $0xb8] sm:$0xff]
        %v6477 = vld [vmem:[#allocation13 + $0xc0] sm:$0xff]
        %v6478 = vld [vmem:[#allocation13 + $0xc8] sm:$0xff]
        %v6479 = vld [vmem:[#allocation13 + $0xd0] sm:$0xff]
        %v6480 = vld [vmem:[#allocation13 + $0xd8] sm:$0xff]
        %v6481 = vld [vmem:[#allocation13 + $0xe0] sm:$0xff]
        %v6482 = vld [vmem:[#allocation13 + $0xe8] sm:$0xff]
        %v6483 = vld [vmem:[#allocation13 + $0xf0] sm:$0xff]
        %v6484 = vld [vmem:[#allocation13 + $0xf8] sm:$0xff]
        %v6485 = vld [vmem:[#allocation13 + $0x100] sm:$0xff]
        %v6486 = vld [vmem:[#allocation13 + $0x108] sm:$0xff]
        %v6487 = vld [vmem:[#allocation13 + $0x110] sm:$0xff]
        %v6488 = vld [vmem:[#allocation13 + $0x118] sm:$0xff]
        %v6489 = vld [vmem:[#allocation13 + $0x120] sm:$0xff]
        %v6490 = vld [vmem:[#allocation13 + $0x128] sm:$0xff]
        %v6491 = vld [vmem:[#allocation13 + $0x130] sm:$0xff]
        %v6492 = vld [vmem:[#allocation13 + $0x138] sm:$0xff]
        %v6493 = vld [vmem:[#allocation13 + $0x140] sm:$0xff]
        %v6494 = vld [vmem:[#allocation13 + $0x148] sm:$0xff]
        %v6495 = vld [vmem:[#allocation13 + $0x150] sm:$0xff]
        %v6496 = vld [vmem:[#allocation13 + $0x158] sm:$0xff]
        %v6497 = vld [vmem:[#allocation13 + $0x160] sm:$0xff]
        %v6498 = vld [vmem:[#allocation13 + $0x168] sm:$0xff]
        %v6499 = vld [vmem:[#allocation13 + $0x170] sm:$0xff]
        %v6500 = vld [vmem:[#allocation13 + $0x178] sm:$0xff]
        %v6501 = vld [vmem:[#allocation13 + $0x180] sm:$0xff]
        %v6502 = vld [vmem:[#allocation13 + $0x188] sm:$0xff]
        %v6503 = vld [vmem:[#allocation13 + $0x190] sm:$0xff]
        %v6504 = vld [vmem:[#allocation13 + $0x198] sm:$0xff]
        %v6505 = vld [vmem:[#allocation13 + $0x1a0] sm:$0xff]
        %v6506 = vld [vmem:[#allocation13 + $0x1a8] sm:$0xff]
        %v6507 = vld [vmem:[#allocation13 + $0x1b0] sm:$0xff]
        %v6508 = vld [vmem:[#allocation13 + $0x1b8] sm:$0xff]
        %v6509 = vld [vmem:[#allocation13 + $0x1c0] sm:$0xff]
        %v6510 = vld [vmem:[#allocation13 + $0x1c8] sm:$0xff]
        %v6511 = vld [vmem:[#allocation13 + $0x1d0] sm:$0xff]
        %v6512 = vld [vmem:[#allocation13 + $0x1d8] sm:$0xff]
        %v6513 = vld [vmem:[#allocation13 + $0x1e0] sm:$0xff]
        %v6514 = vld [vmem:[#allocation13 + $0x1e8] sm:$0xff]
        %v6515 = vld [vmem:[#allocation13 + $0x1f0] sm:$0xff]
        %v6516 = vld [vmem:[#allocation13 + $0x1f8] sm:$0xff]
        %v6517 = vld [vmem:[#allocation13 + $0x200] sm:$0xff]
        %v6518 = vld [vmem:[#allocation13 + $0x208] sm:$0xff]
        %v6519 = vld [vmem:[#allocation13 + $0x210] sm:$0xff]
        %v6520 = vld [vmem:[#allocation13 + $0x218] sm:$0xff]
        %v6521 = vld [vmem:[#allocation13 + $0x220] sm:$0xff]
        %v6522 = vld [vmem:[#allocation13 + $0x228] sm:$0xff]
        %v6523 = vld [vmem:[#allocation13 + $0x230] sm:$0xff]
        %v6524 = vld [vmem:[#allocation13 + $0x238] sm:$0xff]
        %v6525 = vld [vmem:[#allocation13 + $0x240] sm:$0xff]
        %v6526 = vld [vmem:[#allocation13 + $0x248] sm:$0xff]
        %v6527 = vld [vmem:[#allocation13 + $0x250] sm:$0xff]
        %v6528 = vld [vmem:[#allocation13 + $0x258] sm:$0xff]
        %v6529 = vld [vmem:[#allocation13 + $0x260] sm:$0xff]
        %v6530 = vld [vmem:[#allocation13 + $0x268] sm:$0xff]
        %v6531 = vld [vmem:[#allocation13 + $0x270] sm:$0xff]
        %v6532 = vld [vmem:[#allocation13 + $0x278] sm:$0xff]
        %v6533 = vld [vmem:[#allocation13 + $0x280] sm:$0xff]
        %v6534 = vld [vmem:[#allocation13 + $0x288] sm:$0xff]
        %v6535 = vld [vmem:[#allocation13 + $0x290] sm:$0xff]
        %v6536 = vld [vmem:[#allocation13 + $0x298] sm:$0xff]
        %v6537 = vld [vmem:[#allocation13 + $0x2a0] sm:$0xff]
        %v6538 = vld [vmem:[#allocation13 + $0x2a8] sm:$0xff]
        %v6539 = vld [vmem:[#allocation13 + $0x2b0] sm:$0xff]
        %v6540 = vld [vmem:[#allocation13 + $0x2b8] sm:$0xff]
        %v6541 = vld [vmem:[#allocation13 + $0x2c0] sm:$0xff]
        %v6542 = vld [vmem:[#allocation13 + $0x2c8] sm:$0xff]
        %v6543 = vld [vmem:[#allocation13 + $0x2d0] sm:$0xff]
        %v6544 = vld [vmem:[#allocation13 + $0x2d8] sm:$0xff]
        %v6545 = vld [vmem:[#allocation13 + $0x2e0] sm:$0xff]
        %v6546 = vld [vmem:[#allocation13 + $0x2e8] sm:$0xff]
        %v6547 = vld [vmem:[#allocation13 + $0x2f0] sm:$0xff]
        %v6548 = vld [vmem:[#allocation13 + $0x2f8] sm:$0xff]
        %v6549 = vld [vmem:[#allocation13 + $0x300] sm:$0xff]
        %v6550 = vld [vmem:[#allocation13 + $0x308] sm:$0xff]
        %v6551 = vld [vmem:[#allocation13 + $0x310] sm:$0xff]
        %v6552 = vld [vmem:[#allocation13 + $0x318] sm:$0xff]
        %v6553 = vld [vmem:[#allocation13 + $0x320] sm:$0xff]
        %v6554 = vld [vmem:[#allocation13 + $0x328] sm:$0xff]
        %v6555 = vld [vmem:[#allocation13 + $0x330] sm:$0xff]
        %v6556 = vld [vmem:[#allocation13 + $0x338] sm:$0xff]
        %v6557 = vld [vmem:[#allocation13 + $0x340] sm:$0xff]
        %v6558 = vld [vmem:[#allocation13 + $0x348] sm:$0xff]
        %v6559 = vld [vmem:[#allocation13 + $0x350] sm:$0xff]
        %v6560 = vld [vmem:[#allocation13 + $0x358] sm:$0xff]
        %v6561 = vld [vmem:[#allocation13 + $0x360] sm:$0xff]
        %v6562 = vld [vmem:[#allocation13 + $0x368] sm:$0xff]
        %v6563 = vld [vmem:[#allocation13 + $0x370] sm:$0xff]
        %v6564 = vld [vmem:[#allocation13 + $0x378] sm:$0xff]
        %v6565 = vld [vmem:[#allocation13 + $0x380] sm:$0xff]
        %v6566 = vld [vmem:[#allocation13 + $0x388] sm:$0xff]
        %v6567 = vld [vmem:[#allocation13 + $0x390] sm:$0xff]
        %v6568 = vld [vmem:[#allocation13 + $0x398] sm:$0xff]
        %v6569 = vld [vmem:[#allocation13 + $0x3a0] sm:$0xff]
        %v6570 = vld [vmem:[#allocation13 + $0x3a8] sm:$0xff]
        %v6571 = vld [vmem:[#allocation13 + $0x3b0] sm:$0xff]
        %v6572 = vld [vmem:[#allocation13 + $0x3b8] sm:$0xff]
        %v6573 = vld [vmem:[#allocation13 + $0x3c0] sm:$0xff]
        %v6574 = vld [vmem:[#allocation13 + $0x3c8] sm:$0xff]
        %v6575 = vld [vmem:[#allocation13 + $0x3d0] sm:$0xff]
        %v6576 = vld [vmem:[#allocation13 + $0x3d8] sm:$0xff]
        %v6577 = vld [vmem:[#allocation13 + $0x3e0] sm:$0xff]
        %v6578 = vld [vmem:[#allocation13 + $0x3e8] sm:$0xff]
        %v6579 = vld [vmem:[#allocation13 + $0x3f0] sm:$0xff]
        %v6580 = vld [vmem:[#allocation13 + $0x3f8] sm:$0xff]
        %v6709 = vunpack.c.l.b16 %v6453
        %v6710 = vunpack.c.h.b16 %v6453
        %v6711 = vunpack.c.l.b16 %v6454
        %v6712 = vunpack.c.h.b16 %v6454
        %v6713 = vunpack.c.l.b16 %v6455
        %v6714 = vunpack.c.h.b16 %v6455
        %v6715 = vunpack.c.l.b16 %v6456
        %v6716 = vunpack.c.h.b16 %v6456
        %v6717 = vunpack.c.l.b16 %v6457
        %v6718 = vunpack.c.h.b16 %v6457
        %v6719 = vunpack.c.l.b16 %v6458
        %v6720 = vunpack.c.h.b16 %v6458
        %v6721 = vunpack.c.l.b16 %v6459
        %v6722 = vunpack.c.h.b16 %v6459
        %v6723 = vunpack.c.l.b16 %v6460
        %v6724 = vunpack.c.h.b16 %v6460
        %v6725 = vunpack.c.l.b16 %v6461
        %v6726 = vunpack.c.h.b16 %v6461
        %v6727 = vunpack.c.l.b16 %v6462
        %v6728 = vunpack.c.h.b16 %v6462
        %v6729 = vunpack.c.l.b16 %v6463
        %v6730 = vunpack.c.h.b16 %v6463
        %v6731 = vunpack.c.l.b16 %v6464
        %v6732 = vunpack.c.h.b16 %v6464
        %v6733 = vunpack.c.l.b16 %v6465
        %v6734 = vunpack.c.h.b16 %v6465
        %v6735 = vunpack.c.l.b16 %v6466
        %v6736 = vunpack.c.h.b16 %v6466
        %v6737 = vunpack.c.l.b16 %v6467
        %v6738 = vunpack.c.h.b16 %v6467
        %v6739 = vunpack.c.l.b16 %v6468
        %v6740 = vunpack.c.h.b16 %v6468
        %v6741 = vunpack.c.l.b16 %v6469
        %v6742 = vunpack.c.h.b16 %v6469
        %v6743 = vunpack.c.l.b16 %v6470
        %v6744 = vunpack.c.h.b16 %v6470
        %v6745 = vunpack.c.l.b16 %v6471
        %v6746 = vunpack.c.h.b16 %v6471
        %v6747 = vunpack.c.l.b16 %v6472
        %v6748 = vunpack.c.h.b16 %v6472
        %v6749 = vunpack.c.l.b16 %v6473
        %v6750 = vunpack.c.h.b16 %v6473
        %v6751 = vunpack.c.l.b16 %v6474
        %v6752 = vunpack.c.h.b16 %v6474
        %v6753 = vunpack.c.l.b16 %v6475
        %v6754 = vunpack.c.h.b16 %v6475
        %v6755 = vunpack.c.l.b16 %v6476
        %v6756 = vunpack.c.h.b16 %v6476
        %v6757 = vunpack.c.l.b16 %v6477
        %v6758 = vunpack.c.h.b16 %v6477
        %v6759 = vunpack.c.l.b16 %v6478
        %v6760 = vunpack.c.h.b16 %v6478
        %v6761 = vunpack.c.l.b16 %v6479
        %v6762 = vunpack.c.h.b16 %v6479
        %v6763 = vunpack.c.l.b16 %v6480
        %v6764 = vunpack.c.h.b16 %v6480
        %v6765 = vunpack.c.l.b16 %v6481
        %v6766 = vunpack.c.h.b16 %v6481
        %v6767 = vunpack.c.l.b16 %v6482
        %v6768 = vunpack.c.h.b16 %v6482
        %v6769 = vunpack.c.l.b16 %v6483
        %v6770 = vunpack.c.h.b16 %v6483
        %v6771 = vunpack.c.l.b16 %v6484
        %v6772 = vunpack.c.h.b16 %v6484
        %v6773 = vunpack.c.l.b16 %v6485
        %v6774 = vunpack.c.h.b16 %v6485
        %v6775 = vunpack.c.l.b16 %v6486
        %v6776 = vunpack.c.h.b16 %v6486
        %v6777 = vunpack.c.l.b16 %v6487
        %v6778 = vunpack.c.h.b16 %v6487
        %v6779 = vunpack.c.l.b16 %v6488
        %v6780 = vunpack.c.h.b16 %v6488
        %v6781 = vunpack.c.l.b16 %v6489
        %v6782 = vunpack.c.h.b16 %v6489
        %v6783 = vunpack.c.l.b16 %v6490
        %v6784 = vunpack.c.h.b16 %v6490
        %v6785 = vunpack.c.l.b16 %v6491
        %v6786 = vunpack.c.h.b16 %v6491
        %v6787 = vunpack.c.l.b16 %v6492
        %v6788 = vunpack.c.h.b16 %v6492
        %v6789 = vunpack.c.l.b16 %v6493
        %v6790 = vunpack.c.h.b16 %v6493
        %v6791 = vunpack.c.l.b16 %v6494
        %v6792 = vunpack.c.h.b16 %v6494
        %v6793 = vunpack.c.l.b16 %v6495
        %v6794 = vunpack.c.h.b16 %v6495
        %v6795 = vunpack.c.l.b16 %v6496
        %v6796 = vunpack.c.h.b16 %v6496
        %v6797 = vunpack.c.l.b16 %v6497
        %v6798 = vunpack.c.h.b16 %v6497
        %v6799 = vunpack.c.l.b16 %v6498
        %v6800 = vunpack.c.h.b16 %v6498
        %v6801 = vunpack.c.l.b16 %v6499
        %v6802 = vunpack.c.h.b16 %v6499
        %v6803 = vunpack.c.l.b16 %v6500
        %v6804 = vunpack.c.h.b16 %v6500
        %v6805 = vunpack.c.l.b16 %v6501
        %v6806 = vunpack.c.h.b16 %v6501
        %v6807 = vunpack.c.l.b16 %v6502
        %v6808 = vunpack.c.h.b16 %v6502
        %v6809 = vunpack.c.l.b16 %v6503
        %v6810 = vunpack.c.h.b16 %v6503
        %v6811 = vunpack.c.l.b16 %v6504
        %v6812 = vunpack.c.h.b16 %v6504
        %v6813 = vunpack.c.l.b16 %v6505
        %v6814 = vunpack.c.h.b16 %v6505
        %v6815 = vunpack.c.l.b16 %v6506
        %v6816 = vunpack.c.h.b16 %v6506
        %v6817 = vunpack.c.l.b16 %v6507
        %v6818 = vunpack.c.h.b16 %v6507
        %v6819 = vunpack.c.l.b16 %v6508
        %v6820 = vunpack.c.h.b16 %v6508
        %v6821 = vunpack.c.l.b16 %v6509
        %v6822 = vunpack.c.h.b16 %v6509
        %v6823 = vunpack.c.l.b16 %v6510
        %v6824 = vunpack.c.h.b16 %v6510
        %v6825 = vunpack.c.l.b16 %v6511
        %v6826 = vunpack.c.h.b16 %v6511
        %v6827 = vunpack.c.l.b16 %v6512
        %v6828 = vunpack.c.h.b16 %v6512
        %v6829 = vunpack.c.l.b16 %v6513
        %v6830 = vunpack.c.h.b16 %v6513
        %v6831 = vunpack.c.l.b16 %v6514
        %v6832 = vunpack.c.h.b16 %v6514
        %v6833 = vunpack.c.l.b16 %v6515
        %v6834 = vunpack.c.h.b16 %v6515
        %v6835 = vunpack.c.l.b16 %v6516
        %v6836 = vunpack.c.h.b16 %v6516
        %v6837 = vunpack.c.l.b16 %v6517
        %v6838 = vunpack.c.h.b16 %v6517
        %v6839 = vunpack.c.l.b16 %v6518
        %v6840 = vunpack.c.h.b16 %v6518
        %v6841 = vunpack.c.l.b16 %v6519
        %v6842 = vunpack.c.h.b16 %v6519
        %v6843 = vunpack.c.l.b16 %v6520
        %v6844 = vunpack.c.h.b16 %v6520
        %v6845 = vunpack.c.l.b16 %v6521
        %v6846 = vunpack.c.h.b16 %v6521
        %v6847 = vunpack.c.l.b16 %v6522
        %v6848 = vunpack.c.h.b16 %v6522
        %v6849 = vunpack.c.l.b16 %v6523
        %v6850 = vunpack.c.h.b16 %v6523
        %v6851 = vunpack.c.l.b16 %v6524
        %v6852 = vunpack.c.h.b16 %v6524
        %v6853 = vunpack.c.l.b16 %v6525
        %v6854 = vunpack.c.h.b16 %v6525
        %v6855 = vunpack.c.l.b16 %v6526
        %v6856 = vunpack.c.h.b16 %v6526
        %v6857 = vunpack.c.l.b16 %v6527
        %v6858 = vunpack.c.h.b16 %v6527
        %v6859 = vunpack.c.l.b16 %v6528
        %v6860 = vunpack.c.h.b16 %v6528
        %v6861 = vunpack.c.l.b16 %v6529
        %v6862 = vunpack.c.h.b16 %v6529
        %v6863 = vunpack.c.l.b16 %v6530
        %v6864 = vunpack.c.h.b16 %v6530
        %v6865 = vunpack.c.l.b16 %v6531
        %v6866 = vunpack.c.h.b16 %v6531
        %v6867 = vunpack.c.l.b16 %v6532
        %v6868 = vunpack.c.h.b16 %v6532
        %v6869 = vunpack.c.l.b16 %v6533
        %v6870 = vunpack.c.h.b16 %v6533
        %v6871 = vunpack.c.l.b16 %v6534
        %v6872 = vunpack.c.h.b16 %v6534
        %v6873 = vunpack.c.l.b16 %v6535
        %v6874 = vunpack.c.h.b16 %v6535
        %v6875 = vunpack.c.l.b16 %v6536
        %v6876 = vunpack.c.h.b16 %v6536
        %v6877 = vunpack.c.l.b16 %v6537
        %v6878 = vunpack.c.h.b16 %v6537
        %v6879 = vunpack.c.l.b16 %v6538
        %v6880 = vunpack.c.h.b16 %v6538
        %v6881 = vunpack.c.l.b16 %v6539
        %v6882 = vunpack.c.h.b16 %v6539
        %v6883 = vunpack.c.l.b16 %v6540
        %v6884 = vunpack.c.h.b16 %v6540
        %v6885 = vunpack.c.l.b16 %v6541
        %v6886 = vunpack.c.h.b16 %v6541
        %v6887 = vunpack.c.l.b16 %v6542
        %v6888 = vunpack.c.h.b16 %v6542
        %v6889 = vunpack.c.l.b16 %v6543
        %v6890 = vunpack.c.h.b16 %v6543
        %v6891 = vunpack.c.l.b16 %v6544
        %v6892 = vunpack.c.h.b16 %v6544
        %v6893 = vunpack.c.l.b16 %v6545
        %v6894 = vunpack.c.h.b16 %v6545
        %v6895 = vunpack.c.l.b16 %v6546
        %v6896 = vunpack.c.h.b16 %v6546
        %v6897 = vunpack.c.l.b16 %v6547
        %v6898 = vunpack.c.h.b16 %v6547
        %v6899 = vunpack.c.l.b16 %v6548
        %v6900 = vunpack.c.h.b16 %v6548
        %v6901 = vunpack.c.l.b16 %v6549
        %v6902 = vunpack.c.h.b16 %v6549
        %v6903 = vunpack.c.l.b16 %v6550
        %v6904 = vunpack.c.h.b16 %v6550
        %v6905 = vunpack.c.l.b16 %v6551
        %v6906 = vunpack.c.h.b16 %v6551
        %v6907 = vunpack.c.l.b16 %v6552
        %v6908 = vunpack.c.h.b16 %v6552
        %v6909 = vunpack.c.l.b16 %v6553
        %v6910 = vunpack.c.h.b16 %v6553
        %v6911 = vunpack.c.l.b16 %v6554
        %v6912 = vunpack.c.h.b16 %v6554
        %v6913 = vunpack.c.l.b16 %v6555
        %v6914 = vunpack.c.h.b16 %v6555
        %v6915 = vunpack.c.l.b16 %v6556
        %v6916 = vunpack.c.h.b16 %v6556
        %v6917 = vunpack.c.l.b16 %v6557
        %v6918 = vunpack.c.h.b16 %v6557
        %v6919 = vunpack.c.l.b16 %v6558
        %v6920 = vunpack.c.h.b16 %v6558
        %v6921 = vunpack.c.l.b16 %v6559
        %v6922 = vunpack.c.h.b16 %v6559
        %v6923 = vunpack.c.l.b16 %v6560
        %v6924 = vunpack.c.h.b16 %v6560
        %v6925 = vunpack.c.l.b16 %v6561
        %v6926 = vunpack.c.h.b16 %v6561
        %v6927 = vunpack.c.l.b16 %v6562
        %v6928 = vunpack.c.h.b16 %v6562
        %v6929 = vunpack.c.l.b16 %v6563
        %v6930 = vunpack.c.h.b16 %v6563
        %v6931 = vunpack.c.l.b16 %v6564
        %v6932 = vunpack.c.h.b16 %v6564
        %v6933 = vunpack.c.l.b16 %v6565
        %v6934 = vunpack.c.h.b16 %v6565
        %v6935 = vunpack.c.l.b16 %v6566
        %v6936 = vunpack.c.h.b16 %v6566
        %v6937 = vunpack.c.l.b16 %v6567
        %v6938 = vunpack.c.h.b16 %v6567
        %v6939 = vunpack.c.l.b16 %v6568
        %v6940 = vunpack.c.h.b16 %v6568
        %v6941 = vunpack.c.l.b16 %v6569
        %v6942 = vunpack.c.h.b16 %v6569
        %v6943 = vunpack.c.l.b16 %v6570
        %v6944 = vunpack.c.h.b16 %v6570
        %v6945 = vunpack.c.l.b16 %v6571
        %v6946 = vunpack.c.h.b16 %v6571
        %v6947 = vunpack.c.l.b16 %v6572
        %v6948 = vunpack.c.h.b16 %v6572
        %v6949 = vunpack.c.l.b16 %v6573
        %v6950 = vunpack.c.h.b16 %v6573
        %v6951 = vunpack.c.l.b16 %v6574
        %v6952 = vunpack.c.h.b16 %v6574
        %v6953 = vunpack.c.l.b16 %v6575
        %v6954 = vunpack.c.h.b16 %v6575
        %v6955 = vunpack.c.l.b16 %v6576
        %v6956 = vunpack.c.h.b16 %v6576
        %v6957 = vunpack.c.l.b16 %v6577
        %v6958 = vunpack.c.h.b16 %v6577
        %v6959 = vunpack.c.l.b16 %v6578
        %v6960 = vunpack.c.h.b16 %v6578
        %v6961 = vunpack.c.l.b16 %v6579
        %v6962 = vunpack.c.h.b16 %v6579
        %v6963 = vunpack.c.l.b16 %v6580
        %v6964 = vunpack.c.h.b16 %v6580
        %v6965 = vpack.c.b16 %v6717, %v6709
        %v6966 = vpack.c.b16 %v6718, %v6710
        %v6967 = vpack.c.b16 %v6719, %v6711
        %v6968 = vpack.c.b16 %v6720, %v6712
        %v6969 = vpack.c.b16 %v6721, %v6713
        %v6970 = vpack.c.b16 %v6722, %v6714
        %v6971 = vpack.c.b16 %v6723, %v6715
        %v6972 = vpack.c.b16 %v6724, %v6716
        %v6973 = vpack.c.b16 %v6733, %v6725
        %v6974 = vpack.c.b16 %v6734, %v6726
        %v6975 = vpack.c.b16 %v6735, %v6727
        %v6976 = vpack.c.b16 %v6736, %v6728
        %v6977 = vpack.c.b16 %v6737, %v6729
        %v6978 = vpack.c.b16 %v6738, %v6730
        %v6979 = vpack.c.b16 %v6739, %v6731
        %v6980 = vpack.c.b16 %v6740, %v6732
        %v6981 = vpack.c.b16 %v6749, %v6741
        %v6982 = vpack.c.b16 %v6750, %v6742
        %v6983 = vpack.c.b16 %v6751, %v6743
        %v6984 = vpack.c.b16 %v6752, %v6744
        %v6985 = vpack.c.b16 %v6753, %v6745
        %v6986 = vpack.c.b16 %v6754, %v6746
        %v6987 = vpack.c.b16 %v6755, %v6747
        %v6988 = vpack.c.b16 %v6756, %v6748
        %v6989 = vpack.c.b16 %v6765, %v6757
        %v6990 = vpack.c.b16 %v6766, %v6758
        %v6991 = vpack.c.b16 %v6767, %v6759
        %v6992 = vpack.c.b16 %v6768, %v6760
        %v6993 = vpack.c.b16 %v6769, %v6761
        %v6994 = vpack.c.b16 %v6770, %v6762
        %v6995 = vpack.c.b16 %v6771, %v6763
        %v6996 = vpack.c.b16 %v6772, %v6764
        %v6997 = vpack.c.b16 %v6781, %v6773
        %v6998 = vpack.c.b16 %v6782, %v6774
        %v6999 = vpack.c.b16 %v6783, %v6775
        %v7000 = vpack.c.b16 %v6784, %v6776
        %v7001 = vpack.c.b16 %v6785, %v6777
        %v7002 = vpack.c.b16 %v6786, %v6778
        %v7003 = vpack.c.b16 %v6787, %v6779
        %v7004 = vpack.c.b16 %v6788, %v6780
        %v7005 = vpack.c.b16 %v6797, %v6789
        %v7006 = vpack.c.b16 %v6798, %v6790
        %v7007 = vpack.c.b16 %v6799, %v6791
        %v7008 = vpack.c.b16 %v6800, %v6792
        %v7009 = vpack.c.b16 %v6801, %v6793
        %v7010 = vpack.c.b16 %v6802, %v6794
        %v7011 = vpack.c.b16 %v6803, %v6795
        %v7012 = vpack.c.b16 %v6804, %v6796
        %v7013 = vpack.c.b16 %v6813, %v6805
        %v7014 = vpack.c.b16 %v6814, %v6806
        %v7015 = vpack.c.b16 %v6815, %v6807
        %v7016 = vpack.c.b16 %v6816, %v6808
        %v7017 = vpack.c.b16 %v6817, %v6809
        %v7018 = vpack.c.b16 %v6818, %v6810
        %v7019 = vpack.c.b16 %v6819, %v6811
        %v7020 = vpack.c.b16 %v6820, %v6812
        %v7021 = vpack.c.b16 %v6829, %v6821
        %v7022 = vpack.c.b16 %v6830, %v6822
        %v7023 = vpack.c.b16 %v6831, %v6823
        %v7024 = vpack.c.b16 %v6832, %v6824
        %v7025 = vpack.c.b16 %v6833, %v6825
        %v7026 = vpack.c.b16 %v6834, %v6826
        %v7027 = vpack.c.b16 %v6835, %v6827
        %v7028 = vpack.c.b16 %v6836, %v6828
        %v7029 = vpack.c.b16 %v6845, %v6837
        %v7030 = vpack.c.b16 %v6846, %v6838
        %v7031 = vpack.c.b16 %v6847, %v6839
        %v7032 = vpack.c.b16 %v6848, %v6840
        %v7033 = vpack.c.b16 %v6849, %v6841
        %v7034 = vpack.c.b16 %v6850, %v6842
        %v7035 = vpack.c.b16 %v6851, %v6843
        %v7036 = vpack.c.b16 %v6852, %v6844
        %v7037 = vpack.c.b16 %v6861, %v6853
        %v7038 = vpack.c.b16 %v6862, %v6854
        %v7039 = vpack.c.b16 %v6863, %v6855
        %v7040 = vpack.c.b16 %v6864, %v6856
        %v7041 = vpack.c.b16 %v6865, %v6857
        %v7042 = vpack.c.b16 %v6866, %v6858
        %v7043 = vpack.c.b16 %v6867, %v6859
        %v7044 = vpack.c.b16 %v6868, %v6860
        %v7045 = vpack.c.b16 %v6877, %v6869
        %v7046 = vpack.c.b16 %v6878, %v6870
        %v7047 = vpack.c.b16 %v6879, %v6871
        %v7048 = vpack.c.b16 %v6880, %v6872
        %v7049 = vpack.c.b16 %v6881, %v6873
        %v7050 = vpack.c.b16 %v6882, %v6874
        %v7051 = vpack.c.b16 %v6883, %v6875
        %v7052 = vpack.c.b16 %v6884, %v6876
        %v7053 = vpack.c.b16 %v6893, %v6885
        %v7054 = vpack.c.b16 %v6894, %v6886
        %v7055 = vpack.c.b16 %v6895, %v6887
        %v7056 = vpack.c.b16 %v6896, %v6888
        %v7057 = vpack.c.b16 %v6897, %v6889
        %v7058 = vpack.c.b16 %v6898, %v6890
        %v7059 = vpack.c.b16 %v6899, %v6891
        %v7060 = vpack.c.b16 %v6900, %v6892
        %v7061 = vpack.c.b16 %v6909, %v6901
        %v7062 = vpack.c.b16 %v6910, %v6902
        %v7063 = vpack.c.b16 %v6911, %v6903
        %v7064 = vpack.c.b16 %v6912, %v6904
        %v7065 = vpack.c.b16 %v6913, %v6905
        %v7066 = vpack.c.b16 %v6914, %v6906
        %v7067 = vpack.c.b16 %v6915, %v6907
        %v7068 = vpack.c.b16 %v6916, %v6908
        %v7069 = vpack.c.b16 %v6925, %v6917
        %v7070 = vpack.c.b16 %v6926, %v6918
        %v7071 = vpack.c.b16 %v6927, %v6919
        %v7072 = vpack.c.b16 %v6928, %v6920
        %v7073 = vpack.c.b16 %v6929, %v6921
        %v7074 = vpack.c.b16 %v6930, %v6922
        %v7075 = vpack.c.b16 %v6931, %v6923
        %v7076 = vpack.c.b16 %v6932, %v6924
        %v7077 = vpack.c.b16 %v6941, %v6933
        %v7078 = vpack.c.b16 %v6942, %v6934
        %v7079 = vpack.c.b16 %v6943, %v6935
        %v7080 = vpack.c.b16 %v6944, %v6936
        %v7081 = vpack.c.b16 %v6945, %v6937
        %v7082 = vpack.c.b16 %v6946, %v6938
        %v7083 = vpack.c.b16 %v6947, %v6939
        %v7084 = vpack.c.b16 %v6948, %v6940
        %v7085 = vpack.c.b16 %v6957, %v6949
        %v7086 = vpack.c.b16 %v6958, %v6950
        %v7087 = vpack.c.b16 %v6959, %v6951
        %v7088 = vpack.c.b16 %v6960, %v6952
        %v7089 = vpack.c.b16 %v6961, %v6953
        %v7090 = vpack.c.b16 %v6962, %v6954
        %v7091 = vpack.c.b16 %v6963, %v6955
        %v7092 = vpack.c.b16 %v6964, %v6956
        %7221 = vmatprep.subr.bf16.mxu0 %v6966
        %7222 = vmatpush1.bf16.msra.mxu0 %v6965
        %7223 = vmatprep.subr.bf16.mxu0 %v6974
        %7224 = vmatpush1.bf16.msra.mxu0 %v6973
        %7225 = vmatprep.subr.bf16.mxu0 %v6982
        %7226 = vmatpush1.bf16.msra.mxu0 %v6981
        %7227 = vmatprep.subr.bf16.mxu0 %v6990
        %7228 = vmatpush1.bf16.msra.mxu0 %v6989
        %7229 = vmatprep.subr.bf16.mxu0 %v6998
        %7230 = vmatpush1.bf16.msra.mxu0 %v6997
        %7231 = vmatprep.subr.bf16.mxu0 %v7006
        %7232 = vmatpush1.bf16.msra.mxu0 %v7005
        %7233 = vmatprep.subr.bf16.mxu0 %v7014
        %7234 = vmatpush1.bf16.msra.mxu0 %v7013
        %7235 = vmatprep.subr.bf16.mxu0 %v7022
        %7236 = vmatpush1.bf16.msra.mxu0 %v7021
        %7237 = vmatprep.subr.bf16.mxu0 %v7030
        %7238 = vmatpush1.bf16.msra.mxu0 %v7029
        %7239 = vmatprep.subr.bf16.mxu0 %v7038
        %7240 = vmatpush1.bf16.msra.mxu0 %v7037
        %7241 = vmatprep.subr.bf16.mxu0 %v7046
        %7242 = vmatpush1.bf16.msra.mxu0 %v7045
        %7243 = vmatprep.subr.bf16.mxu0 %v7054
        %7244 = vmatpush1.bf16.msra.mxu0 %v7053
        %7245 = vmatprep.subr.bf16.mxu0 %v7062
        %7246 = vmatpush1.bf16.msra.mxu0 %v7061
        %7247 = vmatprep.subr.bf16.mxu0 %v7070
        %7248 = vmatpush1.bf16.msra.mxu0 %v7069
        %7249 = vmatprep.subr.bf16.mxu0 %v7078
        %7250 = vmatpush1.bf16.msra.mxu0 %v7077
        %7251 = vmatprep.subr.bf16.mxu0 %v7086
        %7252 = vmatpush1.bf16.msra.mxu0 %v7085
        %7253 = vmatprep.mubr.bf16.mxu0 %v6438
        %7254 = vmatmul.mubr.bf16.gmra.mrb[0].mxu0 %v6437
        %v7255 = vpop.f32.mrb[0].mxu0
        %v7256 = vadd.f32 0.0, %v7255
        %v7257 = vpop.f32.mrb[0].mxu0
        %v7258 = vadd.f32 0.0, %v7257
        %v7259 = vpop.f32.mrb[0].mxu0
        %v7260 = vadd.f32 0.0, %v7259
        %v7261 = vpop.f32.mrb[0].mxu0
        %v7262 = vadd.f32 0.0, %v7261
        %7263 = vmatprep.mubr.bf16.mxu0 %v6440
        %7264 = vmatmul.mubr.bf16.gmra.mrb[0].mxu0 %v6439
        %v7265 = vpop.f32.mrb[0].mxu0
        %v7266 = vadd.f32 0.0, %v7265
        %v7267 = vpop.f32.mrb[0].mxu0
        %v7268 = vadd.f32 0.0, %v7267
        %v7269 = vpop.f32.mrb[0].mxu0
        %v7270 = vadd.f32 0.0, %v7269
        %v7271 = vpop.f32.mrb[0].mxu0
        %v7272 = vadd.f32 0.0, %v7271
        %7273 = vmatprep.mubr.bf16.mxu0 %v6442
        %7274 = vmatmul.mubr.bf16.gmra.mrb[0].mxu0 %v6441
        %v7275 = vpop.f32.mrb[0].mxu0
        %v7276 = vadd.f32 0.0, %v7275
        %v7277 = vpop.f32.mrb[0].mxu0
        %v7278 = vadd.f32 0.0, %v7277
        %v7279 = vpop.f32.mrb[0].mxu0
        %v7280 = vadd.f32 0.0, %v7279
        %v7281 = vpop.f32.mrb[0].mxu0
        %v7282 = vadd.f32 0.0, %v7281
        %7283 = vmatprep.mubr.bf16.mxu0 %v6444
        %7284 = vmatmul.mubr.bf16.gmra.mrb[0].mxu0 %v6443
        %v7285 = vpop.f32.mrb[0].mxu0
        %v7286 = vadd.f32 0.0, %v7285
        %v7287 = vpop.f32.mrb[0].mxu0
        %v7288 = vadd.f32 0.0, %v7287
        %v7289 = vpop.f32.mrb[0].mxu0
        %v7290 = vadd.f32 0.0, %v7289
        %v7291 = vpop.f32.mrb[0].mxu0
        %v7292 = vadd.f32 0.0, %v7291
        %7293 = vmatprep.mubr.bf16.mxu0 %v6446
        %7294 = vmatmul.mubr.bf16.gmra.mrb[0].mxu0 %v6445
        %v7295 = vpop.f32.mrb[0].mxu0
        %v7296 = vadd.f32 0.0, %v7295
        %v7297 = vpop.f32.mrb[0].mxu0
        %v7298 = vadd.f32 0.0, %v7297
        %v7299 = vpop.f32.mrb[0].mxu0
        %v7300 = vadd.f32 0.0, %v7299
        %v7301 = vpop.f32.mrb[0].mxu0
        %v7302 = vadd.f32 0.0, %v7301
        %7303 = vmatprep.mubr.bf16.mxu0 %v6448
        %7304 = vmatmul.mubr.bf16.gmra.mrb[0].mxu0 %v6447
        %v7305 = vpop.f32.mrb[0].mxu0
        %v7306 = vadd.f32 0.0, %v7305
        %v7307 = vpop.f32.mrb[0].mxu0
        %v7308 = vadd.f32 0.0, %v7307
        %v7309 = vpop.f32.mrb[0].mxu0
        %v7310 = vadd.f32 0.0, %v7309
        %v7311 = vpop.f32.mrb[0].mxu0
        %v7312 = vadd.f32 0.0, %v7311
        %7313 = vmatprep.mubr.bf16.mxu0 %v6450
        %7314 = vmatmul.mubr.bf16.gmra.mrb[0].mxu0 %v6449
        %v7315 = vpop.f32.mrb[0].mxu0
        %v7316 = vadd.f32 0.0, %v7315
        %v7317 = vpop.f32.mrb[0].mxu0
        %v7318 = vadd.f32 0.0, %v7317
        %v7319 = vpop.f32.mrb[0].mxu0
        %v7320 = vadd.f32 0.0, %v7319
        %v7321 = vpop.f32.mrb[0].mxu0
        %v7322 = vadd.f32 0.0, %v7321
        %7323 = vmatprep.mubr.bf16.mxu0 %v6452
        %7324 = vmatmul.mubr.bf16.gmra.mrb[0].mxu0 %v6451
        %v7325 = vpop.f32.mrb[0].mxu0
        %v7326 = vadd.f32 0.0, %v7325
        %v7327 = vpop.f32.mrb[0].mxu0
        %v7328 = vadd.f32 0.0, %v7327
        %v7329 = vpop.f32.mrb[0].mxu0
        %v7330 = vadd.f32 0.0, %v7329
        %v7331 = vpop.f32.mrb[0].mxu0
        %v7332 = vadd.f32 0.0, %v7331
        %7333 = vdwg.mxu0
        %7334 = vmatprep.subr.bf16.mxu0 %v6968
        %7335 = vmatpush1.bf16.msra.mxu0 %v6967
        %7336 = vmatprep.subr.bf16.mxu0 %v6976
        %7337 = vmatpush1.bf16.msra.mxu0 %v6975
        %7338 = vmatprep.subr.bf16.mxu0 %v6984
        %7339 = vmatpush1.bf16.msra.mxu0 %v6983
        %7340 = vmatprep.subr.bf16.mxu0 %v6992
        %7341 = vmatpush1.bf16.msra.mxu0 %v6991
        %7342 = vmatprep.subr.bf16.mxu0 %v7000
        %7343 = vmatpush1.bf16.msra.mxu0 %v6999
        %7344 = vmatprep.subr.bf16.mxu0 %v7008
        %7345 = vmatpush1.bf16.msra.mxu0 %v7007
        %7346 = vmatprep.subr.bf16.mxu0 %v7016
        %7347 = vmatpush1.bf16.msra.mxu0 %v7015
        %7348 = vmatprep.subr.bf16.mxu0 %v7024
        %7349 = vmatpush1.bf16.msra.mxu0 %v7023
        %7350 = vmatprep.subr.bf16.mxu0 %v7032
        %7351 = vmatpush1.bf16.msra.mxu0 %v7031
        %7352 = vmatprep.subr.bf16.mxu0 %v7040
        %7353 = vmatpush1.bf16.msra.mxu0 %v7039
        %7354 = vmatprep.subr.bf16.mxu0 %v7048
        %7355 = vmatpush1.bf16.msra.mxu0 %v7047
        %7356 = vmatprep.subr.bf16.mxu0 %v7056
        %7357 = vmatpush1.bf16.msra.mxu0 %v7055
        %7358 = vmatprep.subr.bf16.mxu0 %v7064
        %7359 = vmatpush1.bf16.msra.mxu0 %v7063
        %7360 = vmatprep.subr.bf16.mxu0 %v7072
        %7361 = vmatpush1.bf16.msra.mxu0 %v7071
        %7362 = vmatprep.subr.bf16.mxu0 %v7080
        %7363 = vmatpush1.bf16.msra.mxu0 %v7079
        %7364 = vmatprep.subr.bf16.mxu0 %v7088
        %7365 = vmatpush1.bf16.msra.mxu0 %v7087
        %7366 = vmatprep.mubr.bf16.mxu0 %v6438
        %7367 = vmatmul.mubr.bf16.gmra.mrb[0].mxu0 %v6437
        %v7368 = vpop.f32.mrb[0].mxu0
        %v7369 = vadd.f32 0.0, %v7368
        %v7370 = vpop.f32.mrb[0].mxu0
        %v7371 = vadd.f32 0.0, %v7370
        %v7372 = vpop.f32.mrb[0].mxu0
        %v7373 = vadd.f32 0.0, %v7372
        %v7374 = vpop.f32.mrb[0].mxu0
        %v7375 = vadd.f32 0.0, %v7374
        %7376 = vmatprep.mubr.bf16.mxu0 %v6440
        %7377 = vmatmul.mubr.bf16.gmra.mrb[0].mxu0 %v6439
        %v7378 = vpop.f32.mrb[0].mxu0
        %v7379 = vadd.f32 0.0, %v7378
        %v7380 = vpop.f32.mrb[0].mxu0
        %v7381 = vadd.f32 0.0, %v7380
        %v7382 = vpop.f32.mrb[0].mxu0
        %v7383 = vadd.f32 0.0, %v7382
        %v7384 = vpop.f32.mrb[0].mxu0
        %v7385 = vadd.f32 0.0, %v7384
        %7386 = vmatprep.mubr.bf16.mxu0 %v6442
        %7387 = vmatmul.mubr.bf16.gmra.mrb[0].mxu0 %v6441
        %v7388 = vpop.f32.mrb[0].mxu0
        %v7389 = vadd.f32 0.0, %v7388
        %v7390 = vpop.f32.mrb[0].mxu0
        %v7391 = vadd.f32 0.0, %v7390
        %v7392 = vpop.f32.mrb[0].mxu0
        %v7393 = vadd.f32 0.0, %v7392
        %v7394 = vpop.f32.mrb[0].mxu0
        %v7395 = vadd.f32 0.0, %v7394
        %7396 = vmatprep.mubr.bf16.mxu0 %v6444
        %7397 = vmatmul.mubr.bf16.gmra.mrb[0].mxu0 %v6443
        %v7398 = vpop.f32.mrb[0].mxu0
        %v7399 = vadd.f32 0.0, %v7398
        %v7400 = vpop.f32.mrb[0].mxu0
        %v7401 = vadd.f32 0.0, %v7400
        %v7402 = vpop.f32.mrb[0].mxu0
        %v7403 = vadd.f32 0.0, %v7402
        %v7404 = vpop.f32.mrb[0].mxu0
        %v7405 = vadd.f32 0.0, %v7404
        %7406 = vmatprep.mubr.bf16.mxu0 %v6446
        %7407 = vmatmul.mubr.bf16.gmra.mrb[0].mxu0 %v6445
        %v7408 = vpop.f32.mrb[0].mxu0
        %v7409 = vadd.f32 0.0, %v7408
        %v7410 = vpop.f32.mrb[0].mxu0
        %v7411 = vadd.f32 0.0, %v7410
        %v7412 = vpop.f32.mrb[0].mxu0
        %v7413 = vadd.f32 0.0, %v7412
        %v7414 = vpop.f32.mrb[0].mxu0
        %v7415 = vadd.f32 0.0, %v7414
        %7416 = vmatprep.mubr.bf16.mxu0 %v6448
        %7417 = vmatmul.mubr.bf16.gmra.mrb[0].mxu0 %v6447
        %v7418 = vpop.f32.mrb[0].mxu0
        %v7419 = vadd.f32 0.0, %v7418
        %v7420 = vpop.f32.mrb[0].mxu0
        %v7421 = vadd.f32 0.0, %v7420
        %v7422 = vpop.f32.mrb[0].mxu0
        %v7423 = vadd.f32 0.0, %v7422
        %v7424 = vpop.f32.mrb[0].mxu0
        %v7425 = vadd.f32 0.0, %v7424
        %7426 = vmatprep.mubr.bf16.mxu0 %v6450
        %7427 = vmatmul.mubr.bf16.gmra.mrb[0].mxu0 %v6449
        %v7428 = vpop.f32.mrb[0].mxu0
        %v7429 = vadd.f32 0.0, %v7428
        %v7430 = vpop.f32.mrb[0].mxu0
        %v7431 = vadd.f32 0.0, %v7430
        %v7432 = vpop.f32.mrb[0].mxu0
        %v7433 = vadd.f32 0.0, %v7432
        %v7434 = vpop.f32.mrb[0].mxu0
        %v7435 = vadd.f32 0.0, %v7434
        %7436 = vmatprep.mubr.bf16.mxu0 %v6452
        %7437 = vmatmul.mubr.bf16.gmra.mrb[0].mxu0 %v6451
        %v7438 = vpop.f32.mrb[0].mxu0
        %v7439 = vadd.f32 0.0, %v7438
        %v7440 = vpop.f32.mrb[0].mxu0
        %v7441 = vadd.f32 0.0, %v7440
        %v7442 = vpop.f32.mrb[0].mxu0
        %v7443 = vadd.f32 0.0, %v7442
        %v7444 = vpop.f32.mrb[0].mxu0
        %v7445 = vadd.f32 0.0, %v7444
        %7446 = vdwg.mxu0
        %7447 = vmatprep.subr.bf16.mxu0 %v6970
        %7448 = vmatpush1.bf16.msra.mxu0 %v6969
        %7449 = vmatprep.subr.bf16.mxu0 %v6978
        %7450 = vmatpush1.bf16.msra.mxu0 %v6977
        %7451 = vmatprep.subr.bf16.mxu0 %v6986
        %7452 = vmatpush1.bf16.msra.mxu0 %v6985
        %7453 = vmatprep.subr.bf16.mxu0 %v6994
        %7454 = vmatpush1.bf16.msra.mxu0 %v6993
        %7455 = vmatprep.subr.bf16.mxu0 %v7002
        %7456 = vmatpush1.bf16.msra.mxu0 %v7001
        %7457 = vmatprep.subr.bf16.mxu0 %v7010
        %7458 = vmatpush1.bf16.msra.mxu0 %v7009
        %7459 = vmatprep.subr.bf16.mxu0 %v7018
        %7460 = vmatpush1.bf16.msra.mxu0 %v7017
        %7461 = vmatprep.subr.bf16.mxu0 %v7026
        %7462 = vmatpush1.bf16.msra.mxu0 %v7025
        %7463 = vmatprep.subr.bf16.mxu0 %v7034
        %7464 = vmatpush1.bf16.msra.mxu0 %v7033
        %7465 = vmatprep.subr.bf16.mxu0 %v7042
        %7466 = vmatpush1.bf16.msra.mxu0 %v7041
        %7467 = vmatprep.subr.bf16.mxu0 %v7050
        %7468 = vmatpush1.bf16.msra.mxu0 %v7049
        %7469 = vmatprep.subr.bf16.mxu0 %v7058
        %7470 = vmatpush1.bf16.msra.mxu0 %v7057
        %7471 = vmatprep.subr.bf16.mxu0 %v7066
        %7472 = vmatpush1.bf16.msra.mxu0 %v7065
        %7473 = vmatprep.subr.bf16.mxu0 %v7074
        %7474 = vmatpush1.bf16.msra.mxu0 %v7073
        %7475 = vmatprep.subr.bf16.mxu0 %v7082
        %7476 = vmatpush1.bf16.msra.mxu0 %v7081
        %7477 = vmatprep.subr.bf16.mxu0 %v7090
        %7478 = vmatpush1.bf16.msra.mxu0 %v7089
        %7479 = vmatprep.mubr.bf16.mxu0 %v6438
        %7480 = vmatmul.mubr.bf16.gmra.mrb[0].mxu0 %v6437
        %v7481 = vpop.f32.mrb[0].mxu0
        %v7482 = vadd.f32 0.0, %v7481
        %v7483 = vpop.f32.mrb[0].mxu0
        %v7484 = vadd.f32 0.0, %v7483
        %v7485 = vpop.f32.mrb[0].mxu0
        %v7486 = vadd.f32 0.0, %v7485
        %v7487 = vpop.f32.mrb[0].mxu0
        %v7488 = vadd.f32 0.0, %v7487
        %7489 = vmatprep.mubr.bf16.mxu0 %v6440
        %7490 = vmatmul.mubr.bf16.gmra.mrb[0].mxu0 %v6439
        %v7491 = vpop.f32.mrb[0].mxu0
        %v7492 = vadd.f32 0.0, %v7491
        %v7493 = vpop.f32.mrb[0].mxu0
        %v7494 = vadd.f32 0.0, %v7493
        %v7495 = vpop.f32.mrb[0].mxu0
        %v7496 = vadd.f32 0.0, %v7495
        %v7497 = vpop.f32.mrb[0].mxu0
        %v7498 = vadd.f32 0.0, %v7497
        %7499 = vmatprep.mubr.bf16.mxu0 %v6442
        %7500 = vmatmul.mubr.bf16.gmra.mrb[0].mxu0 %v6441
        %v7501 = vpop.f32.mrb[0].mxu0
        %v7502 = vadd.f32 0.0, %v7501
        %v7503 = vpop.f32.mrb[0].mxu0
        %v7504 = vadd.f32 0.0, %v7503
        %v7505 = vpop.f32.mrb[0].mxu0
        %v7506 = vadd.f32 0.0, %v7505
        %v7507 = vpop.f32.mrb[0].mxu0
        %v7508 = vadd.f32 0.0, %v7507
        %7509 = vmatprep.mubr.bf16.mxu0 %v6444
        %7510 = vmatmul.mubr.bf16.gmra.mrb[0].mxu0 %v6443
        %v7511 = vpop.f32.mrb[0].mxu0
        %v7512 = vadd.f32 0.0, %v7511
        %v7513 = vpop.f32.mrb[0].mxu0
        %v7514 = vadd.f32 0.0, %v7513
        %v7515 = vpop.f32.mrb[0].mxu0
        %v7516 = vadd.f32 0.0, %v7515
        %v7517 = vpop.f32.mrb[0].mxu0
        %v7518 = vadd.f32 0.0, %v7517
        %7519 = vmatprep.mubr.bf16.mxu0 %v6446
        %7520 = vmatmul.mubr.bf16.gmra.mrb[0].mxu0 %v6445
        %v7521 = vpop.f32.mrb[0].mxu0
        %v7522 = vadd.f32 0.0, %v7521
        %v7523 = vpop.f32.mrb[0].mxu0
        %v7524 = vadd.f32 0.0, %v7523
        %v7525 = vpop.f32.mrb[0].mxu0
        %v7526 = vadd.f32 0.0, %v7525
        %v7527 = vpop.f32.mrb[0].mxu0
        %v7528 = vadd.f32 0.0, %v7527
        %7529 = vmatprep.mubr.bf16.mxu0 %v6448
        %7530 = vmatmul.mubr.bf16.gmra.mrb[0].mxu0 %v6447
        %v7531 = vpop.f32.mrb[0].mxu0
        %v7532 = vadd.f32 0.0, %v7531
        %v7533 = vpop.f32.mrb[0].mxu0
        %v7534 = vadd.f32 0.0, %v7533
        %v7535 = vpop.f32.mrb[0].mxu0
        %v7536 = vadd.f32 0.0, %v7535
        %v7537 = vpop.f32.mrb[0].mxu0
        %v7538 = vadd.f32 0.0, %v7537
        %7539 = vmatprep.mubr.bf16.mxu0 %v6450
        %7540 = vmatmul.mubr.bf16.gmra.mrb[0].mxu0 %v6449
        %v7541 = vpop.f32.mrb[0].mxu0
        %v7542 = vadd.f32 0.0, %v7541
        %v7543 = vpop.f32.mrb[0].mxu0
        %v7544 = vadd.f32 0.0, %v7543
        %v7545 = vpop.f32.mrb[0].mxu0
        %v7546 = vadd.f32 0.0, %v7545
        %v7547 = vpop.f32.mrb[0].mxu0
        %v7548 = vadd.f32 0.0, %v7547
        %7549 = vmatprep.mubr.bf16.mxu0 %v6452
        %7550 = vmatmul.mubr.bf16.gmra.mrb[0].mxu0 %v6451
        %v7551 = vpop.f32.mrb[0].mxu0
        %v7552 = vadd.f32 0.0, %v7551
        %v7553 = vpop.f32.mrb[0].mxu0
        %v7554 = vadd.f32 0.0, %v7553
        %v7555 = vpop.f32.mrb[0].mxu0
        %v7556 = vadd.f32 0.0, %v7555
        %v7557 = vpop.f32.mrb[0].mxu0
        %v7558 = vadd.f32 0.0, %v7557
        %7559 = vdwg.mxu0
        %7560 = vmatprep.subr.bf16.mxu0 %v6972
        %7561 = vmatpush1.bf16.msra.mxu0 %v6971
        %7562 = vmatprep.subr.bf16.mxu0 %v6980
        %7563 = vmatpush1.bf16.msra.mxu0 %v6979
        %7564 = vmatprep.subr.bf16.mxu0 %v6988
        %7565 = vmatpush1.bf16.msra.mxu0 %v6987
        %7566 = vmatprep.subr.bf16.mxu0 %v6996
        %7567 = vmatpush1.bf16.msra.mxu0 %v6995
        %7568 = vmatprep.subr.bf16.mxu0 %v7004
        %7569 = vmatpush1.bf16.msra.mxu0 %v7003
        %7570 = vmatprep.subr.bf16.mxu0 %v7012
        %7571 = vmatpush1.bf16.msra.mxu0 %v7011
        %7572 = vmatprep.subr.bf16.mxu0 %v7020
        %7573 = vmatpush1.bf16.msra.mxu0 %v7019
        %7574 = vmatprep.subr.bf16.mxu0 %v7028
        %7575 = vmatpush1.bf16.msra.mxu0 %v7027
        %7576 = vmatprep.subr.bf16.mxu0 %v7036
        %7577 = vmatpush1.bf16.msra.mxu0 %v7035
        %7578 = vmatprep.subr.bf16.mxu0 %v7044
        %7579 = vmatpush1.bf16.msra.mxu0 %v7043
        %7580 = vmatprep.subr.bf16.mxu0 %v7052
        %7581 = vmatpush1.bf16.msra.mxu0 %v7051
        %7582 = vmatprep.subr.bf16.mxu0 %v7060
        %7583 = vmatpush1.bf16.msra.mxu0 %v7059
        %7584 = vmatprep.subr.bf16.mxu0 %v7068
        %7585 = vmatpush1.bf16.msra.mxu0 %v7067
        %7586 = vmatprep.subr.bf16.mxu0 %v7076
        %7587 = vmatpush1.bf16.msra.mxu0 %v7075
        %7588 = vmatprep.subr.bf16.mxu0 %v7084
        %7589 = vmatpush1.bf16.msra.mxu0 %v7083
        %7590 = vmatprep.subr.bf16.mxu0 %v7092
        %7591 = vmatpush1.bf16.msra.mxu0 %v7091
        %7592 = vmatprep.mubr.bf16.mxu0 %v6438
        %7593 = vmatmul.mubr.bf16.gmra.mrb[0].mxu0 %v6437
        %v7594 = vpop.f32.mrb[0].mxu0
        %v7595 = vadd.f32 0.0, %v7594
        %v7596 = vpop.f32.mrb[0].mxu0
        %v7597 = vadd.f32 0.0, %v7596
        %v7598 = vpop.f32.mrb[0].mxu0
        %v7599 = vadd.f32 0.0, %v7598
        %v7600 = vpop.f32.mrb[0].mxu0
        %v7601 = vadd.f32 0.0, %v7600
        %7602 = vmatprep.mubr.bf16.mxu0 %v6440
        %7603 = vmatmul.mubr.bf16.gmra.mrb[0].mxu0 %v6439
        %v7604 = vpop.f32.mrb[0].mxu0
        %v7605 = vadd.f32 0.0, %v7604
        %v7606 = vpop.f32.mrb[0].mxu0
        %v7607 = vadd.f32 0.0, %v7606
        %v7608 = vpop.f32.mrb[0].mxu0
        %v7609 = vadd.f32 0.0, %v7608
        %v7610 = vpop.f32.mrb[0].mxu0
        %v7611 = vadd.f32 0.0, %v7610
        %7612 = vmatprep.mubr.bf16.mxu0 %v6442
        %7613 = vmatmul.mubr.bf16.gmra.mrb[0].mxu0 %v6441
        %v7614 = vpop.f32.mrb[0].mxu0
        %v7615 = vadd.f32 0.0, %v7614
        %v7616 = vpop.f32.mrb[0].mxu0
        %v7617 = vadd.f32 0.0, %v7616
        %v7618 = vpop.f32.mrb[0].mxu0
        %v7619 = vadd.f32 0.0, %v7618
        %v7620 = vpop.f32.mrb[0].mxu0
        %v7621 = vadd.f32 0.0, %v7620
        %7622 = vmatprep.mubr.bf16.mxu0 %v6444
        %7623 = vmatmul.mubr.bf16.gmra.mrb[0].mxu0 %v6443
        %v7624 = vpop.f32.mrb[0].mxu0
        %v7625 = vadd.f32 0.0, %v7624
        %v7626 = vpop.f32.mrb[0].mxu0
        %v7627 = vadd.f32 0.0, %v7626
        %v7628 = vpop.f32.mrb[0].mxu0
        %v7629 = vadd.f32 0.0, %v7628
        %v7630 = vpop.f32.mrb[0].mxu0
        %v7631 = vadd.f32 0.0, %v7630
        %7632 = vmatprep.mubr.bf16.mxu0 %v6446
        %7633 = vmatmul.mubr.bf16.gmra.mrb[0].mxu0 %v6445
        %v7634 = vpop.f32.mrb[0].mxu0
        %v7635 = vadd.f32 0.0, %v7634
        %v7636 = vpop.f32.mrb[0].mxu0
        %v7637 = vadd.f32 0.0, %v7636
        %v7638 = vpop.f32.mrb[0].mxu0
        %v7639 = vadd.f32 0.0, %v7638
        %v7640 = vpop.f32.mrb[0].mxu0
        %v7641 = vadd.f32 0.0, %v7640
        %7642 = vmatprep.mubr.bf16.mxu0 %v6448
        %7643 = vmatmul.mubr.bf16.gmra.mrb[0].mxu0 %v6447
        %v7644 = vpop.f32.mrb[0].mxu0
        %v7645 = vadd.f32 0.0, %v7644
        %v7646 = vpop.f32.mrb[0].mxu0
        %v7647 = vadd.f32 0.0, %v7646
        %v7648 = vpop.f32.mrb[0].mxu0
        %v7649 = vadd.f32 0.0, %v7648
        %v7650 = vpop.f32.mrb[0].mxu0
        %v7651 = vadd.f32 0.0, %v7650
        %7652 = vmatprep.mubr.bf16.mxu0 %v6450
        %7653 = vmatmul.mubr.bf16.gmra.mrb[0].mxu0 %v6449
        %v7654 = vpop.f32.mrb[0].mxu0
        %v7655 = vadd.f32 0.0, %v7654
        %v7656 = vpop.f32.mrb[0].mxu0
        %v7657 = vadd.f32 0.0, %v7656
        %v7658 = vpop.f32.mrb[0].mxu0
        %v7659 = vadd.f32 0.0, %v7658
        %v7660 = vpop.f32.mrb[0].mxu0
        %v7661 = vadd.f32 0.0, %v7660
        %7662 = vmatprep.mubr.bf16.mxu0 %v6452
        %7663 = vmatmul.mubr.bf16.gmra.mrb[0].mxu0 %v6451
        %v7664 = vpop.f32.mrb[0].mxu0
        %v7665 = vadd.f32 0.0, %v7664
        %v7666 = vpop.f32.mrb[0].mxu0
        %v7667 = vadd.f32 0.0, %v7666
        %v7668 = vpop.f32.mrb[0].mxu0
        %v7669 = vadd.f32 0.0, %v7668
        %v7670 = vpop.f32.mrb[0].mxu0
        %v7671 = vadd.f32 0.0, %v7670
        %7672 = vdwg.mxu0
        %v7673 = vmul.f32 %v7256, 0.5
        %v7674 = vmul.f32 %v7258, 0.5
        %v7675 = vmul.f32 %v7369, 0.5
        %v7676 = vmul.f32 %v7371, 0.5
        %v7677 = vmul.f32 %v7260, 0.5
        %v7678 = vmul.f32 %v7262, 0.5
        %v7679 = vmul.f32 %v7373, 0.5
        %v7680 = vmul.f32 %v7375, 0.5
        %v7681 = vmul.f32 %v7266, 0.5
        %v7682 = vmul.f32 %v7268, 0.5
        %v7683 = vmul.f32 %v7379, 0.5
        %v7684 = vmul.f32 %v7381, 0.5
        %v7685 = vmul.f32 %v7270, 0.5
        %v7686 = vmul.f32 %v7272, 0.5
        %v7687 = vmul.f32 %v7383, 0.5
        %v7688 = vmul.f32 %v7385, 0.5
        %v7689 = vmul.f32 %v7276, 0.5
        %v7690 = vmul.f32 %v7278, 0.5
        %v7691 = vmul.f32 %v7389, 0.5
        %v7692 = vmul.f32 %v7391, 0.5
        %v7693 = vmul.f32 %v7280, 0.5
        %v7694 = vmul.f32 %v7282, 0.5
        %v7695 = vmul.f32 %v7393, 0.5
        %v7696 = vmul.f32 %v7395, 0.5
        %v7697 = vmul.f32 %v7286, 0.5
        %v7698 = vmul.f32 %v7288, 0.5
        %v7699 = vmul.f32 %v7399, 0.5
        %v7700 = vmul.f32 %v7401, 0.5
        %v7701 = vmul.f32 %v7290, 0.5
        %v7702 = vmul.f32 %v7292, 0.5
        %v7703 = vmul.f32 %v7403, 0.5
        %v7704 = vmul.f32 %v7405, 0.5
        %v7705 = vmul.f32 %v7296, 0.5
        %v7706 = vmul.f32 %v7298, 0.5
        %v7707 = vmul.f32 %v7409, 0.5
        %v7708 = vmul.f32 %v7411, 0.5
        %v7709 = vmul.f32 %v7300, 0.5
        %v7710 = vmul.f32 %v7302, 0.5
        %v7711 = vmul.f32 %v7413, 0.5
        %v7712 = vmul.f32 %v7415, 0.5
        %v7713 = vmul.f32 %v7306, 0.5
        %v7714 = vmul.f32 %v7308, 0.5
        %v7715 = vmul.f32 %v7419, 0.5
        %v7716 = vmul.f32 %v7421, 0.5
        %v7717 = vmul.f32 %v7310, 0.5
        %v7718 = vmul.f32 %v7312, 0.5
        %v7719 = vmul.f32 %v7423, 0.5
        %v7720 = vmul.f32 %v7425, 0.5
        %v7721 = vmul.f32 %v7316, 0.5
        %v7722 = vmul.f32 %v7318, 0.5
        %v7723 = vmul.f32 %v7429, 0.5
        %v7724 = vmul.f32 %v7431, 0.5
        %v7725 = vmul.f32 %v7320, 0.5
        %v7726 = vmul.f32 %v7322, 0.5
        %v7727 = vmul.f32 %v7433, 0.5
        %v7728 = vmul.f32 %v7435, 0.5
        %v7729 = vmul.f32 %v7326, 0.5
        %v7730 = vmul.f32 %v7328, 0.5
        %v7731 = vmul.f32 %v7439, 0.5
        %v7732 = vmul.f32 %v7441, 0.5
        %v7733 = vmul.f32 %v7330, 0.5
        %v7734 = vmul.f32 %v7332, 0.5
        %v7735 = vmul.f32 %v7443, 0.5
        %v7736 = vmul.f32 %v7445, 0.5
        %v7737 = vmul.f32 %v7256, 0.044715
        %v7738 = vmul.f32 %v7258, 0.044715
        %v7739 = vmul.f32 %v7369, 0.044715
        %v7740 = vmul.f32 %v7371, 0.044715
        %v7741 = vmul.f32 %v7260, 0.044715
        %v7742 = vmul.f32 %v7262, 0.044715
        %v7743 = vmul.f32 %v7373, 0.044715
        %v7744 = vmul.f32 %v7375, 0.044715
        %v7745 = vmul.f32 %v7266, 0.044715
        %v7746 = vmul.f32 %v7268, 0.044715
        %v7747 = vmul.f32 %v7379, 0.044715
        %v7748 = vmul.f32 %v7381, 0.044715
        %v7749 = vmul.f32 %v7270, 0.044715
        %v7750 = vmul.f32 %v7272, 0.044715
        %v7751 = vmul.f32 %v7383, 0.044715
        %v7752 = vmul.f32 %v7385, 0.044715
        %v7753 = vmul.f32 %v7276, 0.044715
        %v7754 = vmul.f32 %v7278, 0.044715
        %v7755 = vmul.f32 %v7389, 0.044715
        %v7756 = vmul.f32 %v7391, 0.044715
        %v7757 = vmul.f32 %v7280, 0.044715
        %v7758 = vmul.f32 %v7282, 0.044715
        %v7759 = vmul.f32 %v7393, 0.044715
        %v7760 = vmul.f32 %v7395, 0.044715
        %v7761 = vmul.f32 %v7286, 0.044715
        %v7762 = vmul.f32 %v7288, 0.044715
        %v7763 = vmul.f32 %v7399, 0.044715
        %v7764 = vmul.f32 %v7401, 0.044715
        %v7765 = vmul.f32 %v7290, 0.044715
        %v7766 = vmul.f32 %v7292, 0.044715
        %v7767 = vmul.f32 %v7403, 0.044715
        %v7768 = vmul.f32 %v7405, 0.044715
        %v7769 = vmul.f32 %v7296, 0.044715
        %v7770 = vmul.f32 %v7298, 0.044715
        %v7771 = vmul.f32 %v7409, 0.044715
        %v7772 = vmul.f32 %v7411, 0.044715
        %v7773 = vmul.f32 %v7300, 0.044715
        %v7774 = vmul.f32 %v7302, 0.044715
        %v7775 = vmul.f32 %v7413, 0.044715
        %v7776 = vmul.f32 %v7415, 0.044715
        %v7777 = vmul.f32 %v7306, 0.044715
        %v7778 = vmul.f32 %v7308, 0.044715
        %v7779 = vmul.f32 %v7419, 0.044715
        %v7780 = vmul.f32 %v7421, 0.044715
        %v7781 = vmul.f32 %v7310, 0.044715
        %v7782 = vmul.f32 %v7312, 0.044715
        %v7783 = vmul.f32 %v7423, 0.044715
        %v7784 = vmul.f32 %v7425, 0.044715
        %v7785 = vmul.f32 %v7316, 0.044715
        %v7786 = vmul.f32 %v7318, 0.044715
        %v7787 = vmul.f32 %v7429, 0.044715
        %v7788 = vmul.f32 %v7431, 0.044715
        %v7789 = vmul.f32 %v7320, 0.044715
        %v7790 = vmul.f32 %v7322, 0.044715
        %v7791 = vmul.f32 %v7433, 0.044715
        %v7792 = vmul.f32 %v7435, 0.044715
        %v7793 = vmul.f32 %v7326, 0.044715
        %v7794 = vmul.f32 %v7328, 0.044715
        %v7795 = vmul.f32 %v7439, 0.044715
        %v7796 = vmul.f32 %v7441, 0.044715
        %v7797 = vmul.f32 %v7330, 0.044715
        %v7798 = vmul.f32 %v7332, 0.044715
        %v7799 = vmul.f32 %v7443, 0.044715
        %v7800 = vmul.f32 %v7445, 0.044715
        %v7801 = vmul.f32 %v7737, %v7256
        %v7802 = vmul.f32 %v7738, %v7258
        %v7803 = vmul.f32 %v7739, %v7369
        %v7804 = vmul.f32 %v7740, %v7371
        %v7805 = vmul.f32 %v7741, %v7260
        %v7806 = vmul.f32 %v7742, %v7262
        %v7807 = vmul.f32 %v7743, %v7373
        %v7808 = vmul.f32 %v7744, %v7375
        %v7809 = vmul.f32 %v7745, %v7266
        %v7810 = vmul.f32 %v7746, %v7268
        %v7811 = vmul.f32 %v7747, %v7379
        %v7812 = vmul.f32 %v7748, %v7381
        %v7813 = vmul.f32 %v7749, %v7270
        %v7814 = vmul.f32 %v7750, %v7272
        %v7815 = vmul.f32 %v7751, %v7383
        %v7816 = vmul.f32 %v7752, %v7385
        %v7817 = vmul.f32 %v7753, %v7276
        %v7818 = vmul.f32 %v7754, %v7278
        %v7819 = vmul.f32 %v7755, %v7389
        %v7820 = vmul.f32 %v7756, %v7391
        %v7821 = vmul.f32 %v7757, %v7280
        %v7822 = vmul.f32 %v7758, %v7282
        %v7823 = vmul.f32 %v7759, %v7393
        %v7824 = vmul.f32 %v7760, %v7395
        %v7825 = vmul.f32 %v7761, %v7286
        %v7826 = vmul.f32 %v7762, %v7288
        %v7827 = vmul.f32 %v7763, %v7399
        %v7828 = vmul.f32 %v7764, %v7401
        %v7829 = vmul.f32 %v7765, %v7290
        %v7830 = vmul.f32 %v7766, %v7292
        %v7831 = vmul.f32 %v7767, %v7403
        %v7832 = vmul.f32 %v7768, %v7405
        %v7833 = vmul.f32 %v7769, %v7296
        %v7834 = vmul.f32 %v7770, %v7298
        %v7835 = vmul.f32 %v7771, %v7409
        %v7836 = vmul.f32 %v7772, %v7411
        %v7837 = vmul.f32 %v7773, %v7300
        %v7838 = vmul.f32 %v7774, %v7302
        %v7839 = vmul.f32 %v7775, %v7413
        %v7840 = vmul.f32 %v7776, %v7415
        %v7841 = vmul.f32 %v7777, %v7306
        %v7842 = vmul.f32 %v7778, %v7308
        %v7843 = vmul.f32 %v7779, %v7419
        %v7844 = vmul.f32 %v7780, %v7421
        %v7845 = vmul.f32 %v7781, %v7310
        %v7846 = vmul.f32 %v7782, %v7312
        %v7847 = vmul.f32 %v7783, %v7423
        %v7848 = vmul.f32 %v7784, %v7425
        %v7849 = vmul.f32 %v7785, %v7316
        %v7850 = vmul.f32 %v7786, %v7318
        %v7851 = vmul.f32 %v7787, %v7429
        %v7852 = vmul.f32 %v7788, %v7431
        %v7853 = vmul.f32 %v7789, %v7320
        %v7854 = vmul.f32 %v7790, %v7322
        %v7855 = vmul.f32 %v7791, %v7433
        %v7856 = vmul.f32 %v7792, %v7435
        %v7857 = vmul.f32 %v7793, %v7326
        %v7858 = vmul.f32 %v7794, %v7328
        %v7859 = vmul.f32 %v7795, %v7439
        %v7860 = vmul.f32 %v7796, %v7441
        %v7861 = vmul.f32 %v7797, %v7330
        %v7862 = vmul.f32 %v7798, %v7332
        %v7863 = vmul.f32 %v7799, %v7443
        %v7864 = vmul.f32 %v7800, %v7445
        %v7865 = vmul.f32 %v7801, %v7256
        %v7866 = vmul.f32 %v7802, %v7258
        %v7867 = vmul.f32 %v7803, %v7369
        %v7868 = vmul.f32 %v7804, %v7371
        %v7869 = vmul.f32 %v7805, %v7260
        %v7870 = vmul.f32 %v7806, %v7262
        %v7871 = vmul.f32 %v7807, %v7373
        %v7872 = vmul.f32 %v7808, %v7375
        %v7873 = vmul.f32 %v7809, %v7266
        %v7874 = vmul.f32 %v7810, %v7268
        %v7875 = vmul.f32 %v7811, %v7379
        %v7876 = vmul.f32 %v7812, %v7381
        %v7877 = vmul.f32 %v7813, %v7270
        %v7878 = vmul.f32 %v7814, %v7272
        %v7879 = vmul.f32 %v7815, %v7383
        %v7880 = vmul.f32 %v7816, %v7385
        %v7881 = vmul.f32 %v7817, %v7276
        %v7882 = vmul.f32 %v7818, %v7278
        %v7883 = vmul.f32 %v7819, %v7389
        %v7884 = vmul.f32 %v7820, %v7391
        %v7885 = vmul.f32 %v7821, %v7280
        %v7886 = vmul.f32 %v7822, %v7282
        %v7887 = vmul.f32 %v7823, %v7393
        %v7888 = vmul.f32 %v7824, %v7395
        %v7889 = vmul.f32 %v7825, %v7286
        %v7890 = vmul.f32 %v7826, %v7288
        %v7891 = vmul.f32 %v7827, %v7399
        %v7892 = vmul.f32 %v7828, %v7401
        %v7893 = vmul.f32 %v7829, %v7290
        %v7894 = vmul.f32 %v7830, %v7292
        %v7895 = vmul.f32 %v7831, %v7403
        %v7896 = vmul.f32 %v7832, %v7405
        %v7897 = vmul.f32 %v7833, %v7296
        %v7898 = vmul.f32 %v7834, %v7298
        %v7899 = vmul.f32 %v7835, %v7409
        %v7900 = vmul.f32 %v7836, %v7411
        %v7901 = vmul.f32 %v7837, %v7300
        %v7902 = vmul.f32 %v7838, %v7302
        %v7903 = vmul.f32 %v7839, %v7413
        %v7904 = vmul.f32 %v7840, %v7415
        %v7905 = vmul.f32 %v7841, %v7306
        %v7906 = vmul.f32 %v7842, %v7308
        %v7907 = vmul.f32 %v7843, %v7419
        %v7908 = vmul.f32 %v7844, %v7421
        %v7909 = vmul.f32 %v7845, %v7310
        %v7910 = vmul.f32 %v7846, %v7312
        %v7911 = vmul.f32 %v7847, %v7423
        %v7912 = vmul.f32 %v7848, %v7425
        %v7913 = vmul.f32 %v7849, %v7316
        %v7914 = vmul.f32 %v7850, %v7318
        %v7915 = vmul.f32 %v7851, %v7429
        %v7916 = vmul.f32 %v7852, %v7431
        %v7917 = vmul.f32 %v7853, %v7320
        %v7918 = vmul.f32 %v7854, %v7322
        %v7919 = vmul.f32 %v7855, %v7433
        %v7920 = vmul.f32 %v7856, %v7435
        %v7921 = vmul.f32 %v7857, %v7326
        %v7922 = vmul.f32 %v7858, %v7328
        %v7923 = vmul.f32 %v7859, %v7439
        %v7924 = vmul.f32 %v7860, %v7441
        %v7925 = vmul.f32 %v7861, %v7330
        %v7926 = vmul.f32 %v7862, %v7332
        %v7927 = vmul.f32 %v7863, %v7443
        %v7928 = vmul.f32 %v7864, %v7445
        %v7929 = vadd.f32 %v7256, %v7865
        %v7930 = vadd.f32 %v7258, %v7866
        %v7931 = vadd.f32 %v7369, %v7867
        %v7932 = vadd.f32 %v7371, %v7868
        %v7933 = vadd.f32 %v7260, %v7869
        %v7934 = vadd.f32 %v7262, %v7870
        %v7935 = vadd.f32 %v7373, %v7871
        %v7936 = vadd.f32 %v7375, %v7872
        %v7937 = vadd.f32 %v7266, %v7873
        %v7938 = vadd.f32 %v7268, %v7874
        %v7939 = vadd.f32 %v7379, %v7875
        %v7940 = vadd.f32 %v7381, %v7876
        %v7941 = vadd.f32 %v7270, %v7877
        %v7942 = vadd.f32 %v7272, %v7878
        %v7943 = vadd.f32 %v7383, %v7879
        %v7944 = vadd.f32 %v7385, %v7880
        %v7945 = vadd.f32 %v7276, %v7881
        %v7946 = vadd.f32 %v7278, %v7882
        %v7947 = vadd.f32 %v7389, %v7883
        %v7948 = vadd.f32 %v7391, %v7884
        %v7949 = vadd.f32 %v7280, %v7885
        %v7950 = vadd.f32 %v7282, %v7886
        %v7951 = vadd.f32 %v7393, %v7887
        %v7952 = vadd.f32 %v7395, %v7888
        %v7953 = vadd.f32 %v7286, %v7889
        %v7954 = vadd.f32 %v7288, %v7890
        %v7955 = vadd.f32 %v7399, %v7891
        %v7956 = vadd.f32 %v7401, %v7892
        %v7957 = vadd.f32 %v7290, %v7893
        %v7958 = vadd.f32 %v7292, %v7894
        %v7959 = vadd.f32 %v7403, %v7895
        %v7960 = vadd.f32 %v7405, %v7896
        %v7961 = vadd.f32 %v7296, %v7897
        %v7962 = vadd.f32 %v7298, %v7898
        %v7963 = vadd.f32 %v7409, %v7899
        %v7964 = vadd.f32 %v7411, %v7900
        %v7965 = vadd.f32 %v7300, %v7901
        %v7966 = vadd.f32 %v7302, %v7902
        %v7967 = vadd.f32 %v7413, %v7903
        %v7968 = vadd.f32 %v7415, %v7904
        %v7969 = vadd.f32 %v7306, %v7905
        %v7970 = vadd.f32 %v7308, %v7906
        %v7971 = vadd.f32 %v7419, %v7907
        %v7972 = vadd.f32 %v7421, %v7908
        %v7973 = vadd.f32 %v7310, %v7909
        %v7974 = vadd.f32 %v7312, %v7910
        %v7975 = vadd.f32 %v7423, %v7911
        %v7976 = vadd.f32 %v7425, %v7912
        %v7977 = vadd.f32 %v7316, %v7913
        %v7978 = vadd.f32 %v7318, %v7914
        %v7979 = vadd.f32 %v7429, %v7915
        %v7980 = vadd.f32 %v7431, %v7916
        %v7981 = vadd.f32 %v7320, %v7917
        %v7982 = vadd.f32 %v7322, %v7918
        %v7983 = vadd.f32 %v7433, %v7919
        %v7984 = vadd.f32 %v7435, %v7920
        %v7985 = vadd.f32 %v7326, %v7921
        %v7986 = vadd.f32 %v7328, %v7922
        %v7987 = vadd.f32 %v7439, %v7923
        %v7988 = vadd.f32 %v7441, %v7924
        %v7989 = vadd.f32 %v7330, %v7925
        %v7990 = vadd.f32 %v7332, %v7926
        %v7991 = vadd.f32 %v7443, %v7927
        %v7992 = vadd.f32 %v7445, %v7928
        %v7993 = vmul.f32 %v7929, 0.7978846
        %v7994 = vmul.f32 %v7930, 0.7978846
        %v7995 = vmul.f32 %v7931, 0.7978846
        %v7996 = vmul.f32 %v7932, 0.7978846
        %v7997 = vmul.f32 %v7933, 0.7978846
        %v7998 = vmul.f32 %v7934, 0.7978846
        %v7999 = vmul.f32 %v7935, 0.7978846
        %v8000 = vmul.f32 %v7936, 0.7978846
        %v8001 = vmul.f32 %v7937, 0.7978846
        %v8002 = vmul.f32 %v7938, 0.7978846
        %v8003 = vmul.f32 %v7939, 0.7978846
        %v8004 = vmul.f32 %v7940, 0.7978846
        %v8005 = vmul.f32 %v7941, 0.7978846
        %v8006 = vmul.f32 %v7942, 0.7978846
        %v8007 = vmul.f32 %v7943, 0.7978846
        %v8008 = vmul.f32 %v7944, 0.7978846
        %v8009 = vmul.f32 %v7945, 0.7978846
        %v8010 = vmul.f32 %v7946, 0.7978846
        %v8011 = vmul.f32 %v7947, 0.7978846
        %v8012 = vmul.f32 %v7948, 0.7978846
        %v8013 = vmul.f32 %v7949, 0.7978846
        %v8014 = vmul.f32 %v7950, 0.7978846
        %v8015 = vmul.f32 %v7951, 0.7978846
        %v8016 = vmul.f32 %v7952, 0.7978846
        %v8017 = vmul.f32 %v7953, 0.7978846
        %v8018 = vmul.f32 %v7954, 0.7978846
        %v8019 = vmul.f32 %v7955, 0.7978846
        %v8020 = vmul.f32 %v7956, 0.7978846
        %v8021 = vmul.f32 %v7957, 0.7978846
        %v8022 = vmul.f32 %v7958, 0.7978846
        %v8023 = vmul.f32 %v7959, 0.7978846
        %v8024 = vmul.f32 %v7960, 0.7978846
        %v8025 = vmul.f32 %v7961, 0.7978846
        %v8026 = vmul.f32 %v7962, 0.7978846
        %v8027 = vmul.f32 %v7963, 0.7978846
        %v8028 = vmul.f32 %v7964, 0.7978846
        %v8029 = vmul.f32 %v7965, 0.7978846
        %v8030 = vmul.f32 %v7966, 0.7978846
        %v8031 = vmul.f32 %v7967, 0.7978846
        %v8032 = vmul.f32 %v7968, 0.7978846
        %v8033 = vmul.f32 %v7969, 0.7978846
        %v8034 = vmul.f32 %v7970, 0.7978846
        %v8035 = vmul.f32 %v7971, 0.7978846
        %v8036 = vmul.f32 %v7972, 0.7978846
        %v8037 = vmul.f32 %v7973, 0.7978846
        %v8038 = vmul.f32 %v7974, 0.7978846
        %v8039 = vmul.f32 %v7975, 0.7978846
        %v8040 = vmul.f32 %v7976, 0.7978846
        %v8041 = vmul.f32 %v7977, 0.7978846
        %v8042 = vmul.f32 %v7978, 0.7978846
        %v8043 = vmul.f32 %v7979, 0.7978846
        %v8044 = vmul.f32 %v7980, 0.7978846
        %v8045 = vmul.f32 %v7981, 0.7978846
        %v8046 = vmul.f32 %v7982, 0.7978846
        %v8047 = vmul.f32 %v7983, 0.7978846
        %v8048 = vmul.f32 %v7984, 0.7978846
        %v8049 = vmul.f32 %v7985, 0.7978846
        %v8050 = vmul.f32 %v7986, 0.7978846
        %v8051 = vmul.f32 %v7987, 0.7978846
        %v8052 = vmul.f32 %v7988, 0.7978846
        %v8053 = vmul.f32 %v7989, 0.7978846
        %v8054 = vmul.f32 %v7990, 0.7978846
        %v8055 = vmul.f32 %v7991, 0.7978846
        %v8056 = vmul.f32 %v7992, 0.7978846
        %v8057 = vtanh.pop %v7993
        %v8058 = vtanh.pop %v7994
        %v8059 = vtanh.pop %v7995
        %v8060 = vtanh.pop %v7996
        %v8061 = vtanh.pop %v7997
        %v8062 = vtanh.pop %v7998
        %v8063 = vtanh.pop %v7999
        %v8064 = vtanh.pop %v8000
        %v8065 = vtanh.pop %v8001
        %v8066 = vtanh.pop %v8002
        %v8067 = vtanh.pop %v8003
        %v8068 = vtanh.pop %v8004
        %v8069 = vtanh.pop %v8005
        %v8070 = vtanh.pop %v8006
        %v8071 = vtanh.pop %v8007
        %v8072 = vtanh.pop %v8008
        %v8073 = vtanh.pop %v8009
        %v8074 = vtanh.pop %v8010
        %v8075 = vtanh.pop %v8011
        %v8076 = vtanh.pop %v8012
        %v8077 = vtanh.pop %v8013
        %v8078 = vtanh.pop %v8014
        %v8079 = vtanh.pop %v8015
        %v8080 = vtanh.pop %v8016
        %v8081 = vtanh.pop %v8017
        %v8082 = vtanh.pop %v8018
        %v8083 = vtanh.pop %v8019
        %v8084 = vtanh.pop %v8020
        %v8085 = vtanh.pop %v8021
        %v8086 = vtanh.pop %v8022
        %v8087 = vtanh.pop %v8023
        %v8088 = vtanh.pop %v8024
        %v8089 = vtanh.pop %v8025
        %v8090 = vtanh.pop %v8026
        %v8091 = vtanh.pop %v8027
        %v8092 = vtanh.pop %v8028
        %v8093 = vtanh.pop %v8029
        %v8094 = vtanh.pop %v8030
        %v8095 = vtanh.pop %v8031
        %v8096 = vtanh.pop %v8032
        %v8097 = vtanh.pop %v8033
        %v8098 = vtanh.pop %v8034
        %v8099 = vtanh.pop %v8035
        %v8100 = vtanh.pop %v8036
        %v8101 = vtanh.pop %v8037
        %v8102 = vtanh.pop %v8038
        %v8103 = vtanh.pop %v8039
        %v8104 = vtanh.pop %v8040
        %v8105 = vtanh.pop %v8041
        %v8106 = vtanh.pop %v8042
        %v8107 = vtanh.pop %v8043
        %v8108 = vtanh.pop %v8044
        %v8109 = vtanh.pop %v8045
        %v8110 = vtanh.pop %v8046
        %v8111 = vtanh.pop %v8047
        %v8112 = vtanh.pop %v8048
        %v8113 = vtanh.pop %v8049
        %v8114 = vtanh.pop %v8050
        %v8115 = vtanh.pop %v8051
        %v8116 = vtanh.pop %v8052
        %v8117 = vtanh.pop %v8053
        %v8118 = vtanh.pop %v8054
        %v8119 = vtanh.pop %v8055
        %v8120 = vtanh.pop %v8056
        %v8121 = vadd.f32 %v8057, 1.0
        %v8122 = vadd.f32 %v8058, 1.0
        %v8123 = vadd.f32 %v8059, 1.0
        %v8124 = vadd.f32 %v8060, 1.0
        %v8125 = vadd.f32 %v8061, 1.0
        %v8126 = vadd.f32 %v8062, 1.0
        %v8127 = vadd.f32 %v8063, 1.0
        %v8128 = vadd.f32 %v8064, 1.0
        %v8129 = vadd.f32 %v8065, 1.0
        %v8130 = vadd.f32 %v8066, 1.0
        %v8131 = vadd.f32 %v8067, 1.0
        %v8132 = vadd.f32 %v8068, 1.0
        %v8133 = vadd.f32 %v8069, 1.0
        %v8134 = vadd.f32 %v8070, 1.0
        %v8135 = vadd.f32 %v8071, 1.0
        %v8136 = vadd.f32 %v8072, 1.0
        %v8137 = vadd.f32 %v8073, 1.0
        %v8138 = vadd.f32 %v8074, 1.0
        %v8139 = vadd.f32 %v8075, 1.0
        %v8140 = vadd.f32 %v8076, 1.0
        %v8141 = vadd.f32 %v8077, 1.0
        %v8142 = vadd.f32 %v8078, 1.0
        %v8143 = vadd.f32 %v8079, 1.0
        %v8144 = vadd.f32 %v8080, 1.0
        %v8145 = vadd.f32 %v8081, 1.0
        %v8146 = vadd.f32 %v8082, 1.0
        %v8147 = vadd.f32 %v8083, 1.0
        %v8148 = vadd.f32 %v8084, 1.0
        %v8149 = vadd.f32 %v8085, 1.0
        %v8150 = vadd.f32 %v8086, 1.0
        %v8151 = vadd.f32 %v8087, 1.0
        %v8152 = vadd.f32 %v8088, 1.0
        %v8153 = vadd.f32 %v8089, 1.0
        %v8154 = vadd.f32 %v8090, 1.0
        %v8155 = vadd.f32 %v8091, 1.0
        %v8156 = vadd.f32 %v8092, 1.0
        %v8157 = vadd.f32 %v8093, 1.0
        %v8158 = vadd.f32 %v8094, 1.0
        %v8159 = vadd.f32 %v8095, 1.0
        %v8160 = vadd.f32 %v8096, 1.0
        %v8161 = vadd.f32 %v8097, 1.0
        %v8162 = vadd.f32 %v8098, 1.0
        %v8163 = vadd.f32 %v8099, 1.0
        %v8164 = vadd.f32 %v8100, 1.0
        %v8165 = vadd.f32 %v8101, 1.0
        %v8166 = vadd.f32 %v8102, 1.0
        %v8167 = vadd.f32 %v8103, 1.0
        %v8168 = vadd.f32 %v8104, 1.0
        %v8169 = vadd.f32 %v8105, 1.0
        %v8170 = vadd.f32 %v8106, 1.0
        %v8171 = vadd.f32 %v8107, 1.0
        %v8172 = vadd.f32 %v8108, 1.0
        %v8173 = vadd.f32 %v8109, 1.0
        %v8174 = vadd.f32 %v8110, 1.0
        %v8175 = vadd.f32 %v8111, 1.0
        %v8176 = vadd.f32 %v8112, 1.0
        %v8177 = vadd.f32 %v8113, 1.0
        %v8178 = vadd.f32 %v8114, 1.0
        %v8179 = vadd.f32 %v8115, 1.0
        %v8180 = vadd.f32 %v8116, 1.0
        %v8181 = vadd.f32 %v8117, 1.0
        %v8182 = vadd.f32 %v8118, 1.0
        %v8183 = vadd.f32 %v8119, 1.0
        %v8184 = vadd.f32 %v8120, 1.0
        %v8185 = vmul.f32 %v7673, %v8121
        %v8186 = vmul.f32 %v7674, %v8122
        %v8187 = vmul.f32 %v7675, %v8123
        %v8188 = vmul.f32 %v7676, %v8124
        %v8189 = vmul.f32 %v7677, %v8125
        %v8190 = vmul.f32 %v7678, %v8126
        %v8191 = vmul.f32 %v7679, %v8127
        %v8192 = vmul.f32 %v7680, %v8128
        %v8193 = vmul.f32 %v7681, %v8129
        %v8194 = vmul.f32 %v7682, %v8130
        %v8195 = vmul.f32 %v7683, %v8131
        %v8196 = vmul.f32 %v7684, %v8132
        %v8197 = vmul.f32 %v7685, %v8133
        %v8198 = vmul.f32 %v7686, %v8134
        %v8199 = vmul.f32 %v7687, %v8135
        %v8200 = vmul.f32 %v7688, %v8136
        %v8201 = vmul.f32 %v7689, %v8137
        %v8202 = vmul.f32 %v7690, %v8138
        %v8203 = vmul.f32 %v7691, %v8139
        %v8204 = vmul.f32 %v7692, %v8140
        %v8205 = vmul.f32 %v7693, %v8141
        %v8206 = vmul.f32 %v7694, %v8142
        %v8207 = vmul.f32 %v7695, %v8143
        %v8208 = vmul.f32 %v7696, %v8144
        %v8209 = vmul.f32 %v7697, %v8145
        %v8210 = vmul.f32 %v7698, %v8146
        %v8211 = vmul.f32 %v7699, %v8147
        %v8212 = vmul.f32 %v7700, %v8148
        %v8213 = vmul.f32 %v7701, %v8149
        %v8214 = vmul.f32 %v7702, %v8150
        %v8215 = vmul.f32 %v7703, %v8151
        %v8216 = vmul.f32 %v7704, %v8152
        %v8217 = vmul.f32 %v7705, %v8153
        %v8218 = vmul.f32 %v7706, %v8154
        %v8219 = vmul.f32 %v7707, %v8155
        %v8220 = vmul.f32 %v7708, %v8156
        %v8221 = vmul.f32 %v7709, %v8157
        %v8222 = vmul.f32 %v7710, %v8158
        %v8223 = vmul.f32 %v7711, %v8159
        %v8224 = vmul.f32 %v7712, %v8160
        %v8225 = vmul.f32 %v7713, %v8161
        %v8226 = vmul.f32 %v7714, %v8162
        %v8227 = vmul.f32 %v7715, %v8163
        %v8228 = vmul.f32 %v7716, %v8164
        %v8229 = vmul.f32 %v7717, %v8165
        %v8230 = vmul.f32 %v7718, %v8166
        %v8231 = vmul.f32 %v7719, %v8167
        %v8232 = vmul.f32 %v7720, %v8168
        %v8233 = vmul.f32 %v7721, %v8169
        %v8234 = vmul.f32 %v7722, %v8170
        %v8235 = vmul.f32 %v7723, %v8171
        %v8236 = vmul.f32 %v7724, %v8172
        %v8237 = vmul.f32 %v7725, %v8173
        %v8238 = vmul.f32 %v7726, %v8174
        %v8239 = vmul.f32 %v7727, %v8175
        %v8240 = vmul.f32 %v7728, %v8176
        %v8241 = vmul.f32 %v7729, %v8177
        %v8242 = vmul.f32 %v7730, %v8178
        %v8243 = vmul.f32 %v7731, %v8179
        %v8244 = vmul.f32 %v7732, %v8180
        %v8245 = vmul.f32 %v7733, %v8181
        %v8246 = vmul.f32 %v7734, %v8182
        %v8247 = vmul.f32 %v7735, %v8183
        %v8248 = vmul.f32 %v7736, %v8184
        %v8249 = vmul.f32 %v8185, %v7482
        %v8250 = vmul.f32 %v8186, %v7484
        %v8251 = vmul.f32 %v8187, %v7595
        %v8252 = vmul.f32 %v8188, %v7597
        %v8253 = vmul.f32 %v8189, %v7486
        %v8254 = vmul.f32 %v8190, %v7488
        %v8255 = vmul.f32 %v8191, %v7599
        %v8256 = vmul.f32 %v8192, %v7601
        %v8257 = vmul.f32 %v8193, %v7492
        %v8258 = vmul.f32 %v8194, %v7494
        %v8259 = vmul.f32 %v8195, %v7605
        %v8260 = vmul.f32 %v8196, %v7607
        %v8261 = vmul.f32 %v8197, %v7496
        %v8262 = vmul.f32 %v8198, %v7498
        %v8263 = vmul.f32 %v8199, %v7609
        %v8264 = vmul.f32 %v8200, %v7611
        %v8265 = vmul.f32 %v8201, %v7502
        %v8266 = vmul.f32 %v8202, %v7504
        %v8267 = vmul.f32 %v8203, %v7615
        %v8268 = vmul.f32 %v8204, %v7617
        %v8269 = vmul.f32 %v8205, %v7506
        %v8270 = vmul.f32 %v8206, %v7508
        %v8271 = vmul.f32 %v8207, %v7619
        %v8272 = vmul.f32 %v8208, %v7621
        %v8273 = vmul.f32 %v8209, %v7512
        %v8274 = vmul.f32 %v8210, %v7514
        %v8275 = vmul.f32 %v8211, %v7625
        %v8276 = vmul.f32 %v8212, %v7627
        %v8277 = vmul.f32 %v8213, %v7516
        %v8278 = vmul.f32 %v8214, %v7518
        %v8279 = vmul.f32 %v8215, %v7629
        %v8280 = vmul.f32 %v8216, %v7631
        %v8281 = vmul.f32 %v8217, %v7522
        %v8282 = vmul.f32 %v8218, %v7524
        %v8283 = vmul.f32 %v8219, %v7635
        %v8284 = vmul.f32 %v8220, %v7637
        %v8285 = vmul.f32 %v8221, %v7526
        %v8286 = vmul.f32 %v8222, %v7528
        %v8287 = vmul.f32 %v8223, %v7639
        %v8288 = vmul.f32 %v8224, %v7641
        %v8289 = vmul.f32 %v8225, %v7532
        %v8290 = vmul.f32 %v8226, %v7534
        %v8291 = vmul.f32 %v8227, %v7645
        %v8292 = vmul.f32 %v8228, %v7647
        %v8293 = vmul.f32 %v8229, %v7536
        %v8294 = vmul.f32 %v8230, %v7538
        %v8295 = vmul.f32 %v8231, %v7649
        %v8296 = vmul.f32 %v8232, %v7651
        %v8297 = vmul.f32 %v8233, %v7542
        %v8298 = vmul.f32 %v8234, %v7544
        %v8299 = vmul.f32 %v8235, %v7655
        %v8300 = vmul.f32 %v8236, %v7657
        %v8301 = vmul.f32 %v8237, %v7546
        %v8302 = vmul.f32 %v8238, %v7548
        %v8303 = vmul.f32 %v8239, %v7659
        %v8304 = vmul.f32 %v8240, %v7661
        %v8305 = vmul.f32 %v8241, %v7552
        %v8306 = vmul.f32 %v8242, %v7554
        %v8307 = vmul.f32 %v8243, %v7665
        %v8308 = vmul.f32 %v8244, %v7667
        %v8309 = vmul.f32 %v8245, %v7556
        %v8310 = vmul.f32 %v8246, %v7558
        %v8311 = vmul.f32 %v8247, %v7669
        %v8312 = vmul.f32 %v8248, %v7671
        %v8313 = vpack.c.bf16 %v8253, %v8249
        %v8314 = vpack.c.bf16 %v8254, %v8250
        %v8315 = vpack.c.bf16 %v8255, %v8251
        %v8316 = vpack.c.bf16 %v8256, %v8252
        %v8317 = vpack.c.bf16 %v8261, %v8257
        %v8318 = vpack.c.bf16 %v8262, %v8258
        %v8319 = vpack.c.bf16 %v8263, %v8259
        %v8320 = vpack.c.bf16 %v8264, %v8260
        %v8321 = vpack.c.bf16 %v8269, %v8265
        %v8322 = vpack.c.bf16 %v8270, %v8266
        %v8323 = vpack.c.bf16 %v8271, %v8267
        %v8324 = vpack.c.bf16 %v8272, %v8268
        %v8325 = vpack.c.bf16 %v8277, %v8273
        %v8326 = vpack.c.bf16 %v8278, %v8274
        %v8327 = vpack.c.bf16 %v8279, %v8275
        %v8328 = vpack.c.bf16 %v8280, %v8276
        %v8329 = vpack.c.bf16 %v8285, %v8281
        %v8330 = vpack.c.bf16 %v8286, %v8282
        %v8331 = vpack.c.bf16 %v8287, %v8283
        %v8332 = vpack.c.bf16 %v8288, %v8284
        %v8333 = vpack.c.bf16 %v8293, %v8289
        %v8334 = vpack.c.bf16 %v8294, %v8290
        %v8335 = vpack.c.bf16 %v8295, %v8291
        %v8336 = vpack.c.bf16 %v8296, %v8292
        %v8337 = vpack.c.bf16 %v8301, %v8297
        %v8338 = vpack.c.bf16 %v8302, %v8298
        %v8339 = vpack.c.bf16 %v8303, %v8299
        %v8340 = vpack.c.bf16 %v8304, %v8300
        %v8341 = vpack.c.bf16 %v8309, %v8305
        %v8342 = vpack.c.bf16 %v8310, %v8306
        %v8343 = vpack.c.bf16 %v8311, %v8307
        %v8344 = vpack.c.bf16 %v8312, %v8308
        %v8345 = vld [vmem:[#allocation14] sm:$0xff]
        %v8346 = vld [vmem:[#allocation14 + $0x8] sm:$0xff]
        %v8347 = vld [vmem:[#allocation14 + $0x10] sm:$0xff]
        %v8348 = vld [vmem:[#allocation14 + $0x18] sm:$0xff]
        %v8349 = vld [vmem:[#allocation14 + $0x20] sm:$0xff]
        %v8350 = vld [vmem:[#allocation14 + $0x28] sm:$0xff]
        %v8351 = vld [vmem:[#allocation14 + $0x30] sm:$0xff]
        %v8352 = vld [vmem:[#allocation14 + $0x38] sm:$0xff]
        %v8353 = vld [vmem:[#allocation14 + $0x40] sm:$0xff]
        %v8354 = vld [vmem:[#allocation14 + $0x48] sm:$0xff]
        %v8355 = vld [vmem:[#allocation14 + $0x50] sm:$0xff]
        %v8356 = vld [vmem:[#allocation14 + $0x58] sm:$0xff]
        %v8357 = vld [vmem:[#allocation14 + $0x60] sm:$0xff]
        %v8358 = vld [vmem:[#allocation14 + $0x68] sm:$0xff]
        %v8359 = vld [vmem:[#allocation14 + $0x70] sm:$0xff]
        %v8360 = vld [vmem:[#allocation14 + $0x78] sm:$0xff]
        %v8361 = vld [vmem:[#allocation14 + $0x80] sm:$0xff]
        %v8362 = vld [vmem:[#allocation14 + $0x88] sm:$0xff]
        %v8363 = vld [vmem:[#allocation14 + $0x90] sm:$0xff]
        %v8364 = vld [vmem:[#allocation14 + $0x98] sm:$0xff]
        %v8365 = vld [vmem:[#allocation14 + $0xa0] sm:$0xff]
        %v8366 = vld [vmem:[#allocation14 + $0xa8] sm:$0xff]
        %v8367 = vld [vmem:[#allocation14 + $0xb0] sm:$0xff]
        %v8368 = vld [vmem:[#allocation14 + $0xb8] sm:$0xff]
        %v8369 = vld [vmem:[#allocation14 + $0xc0] sm:$0xff]
        %v8370 = vld [vmem:[#allocation14 + $0xc8] sm:$0xff]
        %v8371 = vld [vmem:[#allocation14 + $0xd0] sm:$0xff]
        %v8372 = vld [vmem:[#allocation14 + $0xd8] sm:$0xff]
        %v8373 = vld [vmem:[#allocation14 + $0xe0] sm:$0xff]
        %v8374 = vld [vmem:[#allocation14 + $0xe8] sm:$0xff]
        %v8375 = vld [vmem:[#allocation14 + $0xf0] sm:$0xff]
        %v8376 = vld [vmem:[#allocation14 + $0xf8] sm:$0xff]
        %v8377 = vld [vmem:[#allocation14 + $0x100] sm:$0xff]
        %v8378 = vld [vmem:[#allocation14 + $0x108] sm:$0xff]
        %v8379 = vld [vmem:[#allocation14 + $0x110] sm:$0xff]
        %v8380 = vld [vmem:[#allocation14 + $0x118] sm:$0xff]
        %v8381 = vld [vmem:[#allocation14 + $0x120] sm:$0xff]
        %v8382 = vld [vmem:[#allocation14 + $0x128] sm:$0xff]
        %v8383 = vld [vmem:[#allocation14 + $0x130] sm:$0xff]
        %v8384 = vld [vmem:[#allocation14 + $0x138] sm:$0xff]
        %v8385 = vld [vmem:[#allocation14 + $0x140] sm:$0xff]
        %v8386 = vld [vmem:[#allocation14 + $0x148] sm:$0xff]
        %v8387 = vld [vmem:[#allocation14 + $0x150] sm:$0xff]
        %v8388 = vld [vmem:[#allocation14 + $0x158] sm:$0xff]
        %v8389 = vld [vmem:[#allocation14 + $0x160] sm:$0xff]
        %v8390 = vld [vmem:[#allocation14 + $0x168] sm:$0xff]
        %v8391 = vld [vmem:[#allocation14 + $0x170] sm:$0xff]
        %v8392 = vld [vmem:[#allocation14 + $0x178] sm:$0xff]
        %v8393 = vld [vmem:[#allocation14 + $0x180] sm:$0xff]
        %v8394 = vld [vmem:[#allocation14 + $0x188] sm:$0xff]
        %v8395 = vld [vmem:[#allocation14 + $0x190] sm:$0xff]
        %v8396 = vld [vmem:[#allocation14 + $0x198] sm:$0xff]
        %v8397 = vld [vmem:[#allocation14 + $0x1a0] sm:$0xff]
        %v8398 = vld [vmem:[#allocation14 + $0x1a8] sm:$0xff]
        %v8399 = vld [vmem:[#allocation14 + $0x1b0] sm:$0xff]
        %v8400 = vld [vmem:[#allocation14 + $0x1b8] sm:$0xff]
        %v8401 = vld [vmem:[#allocation14 + $0x1c0] sm:$0xff]
        %v8402 = vld [vmem:[#allocation14 + $0x1c8] sm:$0xff]
        %v8403 = vld [vmem:[#allocation14 + $0x1d0] sm:$0xff]
        %v8404 = vld [vmem:[#allocation14 + $0x1d8] sm:$0xff]
        %v8405 = vld [vmem:[#allocation14 + $0x1e0] sm:$0xff]
        %v8406 = vld [vmem:[#allocation14 + $0x1e8] sm:$0xff]
        %v8407 = vld [vmem:[#allocation14 + $0x1f0] sm:$0xff]
        %v8408 = vld [vmem:[#allocation14 + $0x1f8] sm:$0xff]
        %v8473 = vunpack.c.l.b16 %v8345
        %v8474 = vunpack.c.h.b16 %v8345
        %v8475 = vunpack.c.l.b16 %v8346
        %v8476 = vunpack.c.h.b16 %v8346
        %v8477 = vunpack.c.l.b16 %v8347
        %v8478 = vunpack.c.h.b16 %v8347
        %v8479 = vunpack.c.l.b16 %v8348
        %v8480 = vunpack.c.h.b16 %v8348
        %v8481 = vunpack.c.l.b16 %v8349
        %v8482 = vunpack.c.h.b16 %v8349
        %v8483 = vunpack.c.l.b16 %v8350
        %v8484 = vunpack.c.h.b16 %v8350
        %v8485 = vunpack.c.l.b16 %v8351
        %v8486 = vunpack.c.h.b16 %v8351
        %v8487 = vunpack.c.l.b16 %v8352
        %v8488 = vunpack.c.h.b16 %v8352
        %v8489 = vunpack.c.l.b16 %v8353
        %v8490 = vunpack.c.h.b16 %v8353
        %v8491 = vunpack.c.l.b16 %v8354
        %v8492 = vunpack.c.h.b16 %v8354
        %v8493 = vunpack.c.l.b16 %v8355
        %v8494 = vunpack.c.h.b16 %v8355
        %v8495 = vunpack.c.l.b16 %v8356
        %v8496 = vunpack.c.h.b16 %v8356
        %v8497 = vunpack.c.l.b16 %v8357
        %v8498 = vunpack.c.h.b16 %v8357
        %v8499 = vunpack.c.l.b16 %v8358
        %v8500 = vunpack.c.h.b16 %v8358
        %v8501 = vunpack.c.l.b16 %v8359
        %v8502 = vunpack.c.h.b16 %v8359
        %v8503 = vunpack.c.l.b16 %v8360
        %v8504 = vunpack.c.h.b16 %v8360
        %v8505 = vunpack.c.l.b16 %v8361
        %v8506 = vunpack.c.h.b16 %v8361
        %v8507 = vunpack.c.l.b16 %v8362
        %v8508 = vunpack.c.h.b16 %v8362
        %v8509 = vunpack.c.l.b16 %v8363
        %v8510 = vunpack.c.h.b16 %v8363
        %v8511 = vunpack.c.l.b16 %v8364
        %v8512 = vunpack.c.h.b16 %v8364
        %v8513 = vunpack.c.l.b16 %v8365
        %v8514 = vunpack.c.h.b16 %v8365
        %v8515 = vunpack.c.l.b16 %v8366
        %v8516 = vunpack.c.h.b16 %v8366
        %v8517 = vunpack.c.l.b16 %v8367
        %v8518 = vunpack.c.h.b16 %v8367
        %v8519 = vunpack.c.l.b16 %v8368
        %v8520 = vunpack.c.h.b16 %v8368
        %v8521 = vunpack.c.l.b16 %v8369
        %v8522 = vunpack.c.h.b16 %v8369
        %v8523 = vunpack.c.l.b16 %v8370
        %v8524 = vunpack.c.h.b16 %v8370
        %v8525 = vunpack.c.l.b16 %v8371
        %v8526 = vunpack.c.h.b16 %v8371
        %v8527 = vunpack.c.l.b16 %v8372
        %v8528 = vunpack.c.h.b16 %v8372
        %v8529 = vunpack.c.l.b16 %v8373
        %v8530 = vunpack.c.h.b16 %v8373
        %v8531 = vunpack.c.l.b16 %v8374
        %v8532 = vunpack.c.h.b16 %v8374
        %v8533 = vunpack.c.l.b16 %v8375
        %v8534 = vunpack.c.h.b16 %v8375
        %v8535 = vunpack.c.l.b16 %v8376
        %v8536 = vunpack.c.h.b16 %v8376
        %v8537 = vunpack.c.l.b16 %v8377
        %v8538 = vunpack.c.h.b16 %v8377
        %v8539 = vunpack.c.l.b16 %v8378
        %v8540 = vunpack.c.h.b16 %v8378
        %v8541 = vunpack.c.l.b16 %v8379
        %v8542 = vunpack.c.h.b16 %v8379
        %v8543 = vunpack.c.l.b16 %v8380
        %v8544 = vunpack.c.h.b16 %v8380
        %v8545 = vunpack.c.l.b16 %v8381
        %v8546 = vunpack.c.h.b16 %v8381
        %v8547 = vunpack.c.l.b16 %v8382
        %v8548 = vunpack.c.h.b16 %v8382
        %v8549 = vunpack.c.l.b16 %v8383
        %v8550 = vunpack.c.h.b16 %v8383
        %v8551 = vunpack.c.l.b16 %v8384
        %v8552 = vunpack.c.h.b16 %v8384
        %v8553 = vunpack.c.l.b16 %v8385
        %v8554 = vunpack.c.h.b16 %v8385
        %v8555 = vunpack.c.l.b16 %v8386
        %v8556 = vunpack.c.h.b16 %v8386
        %v8557 = vunpack.c.l.b16 %v8387
        %v8558 = vunpack.c.h.b16 %v8387
        %v8559 = vunpack.c.l.b16 %v8388
        %v8560 = vunpack.c.h.b16 %v8388
        %v8561 = vunpack.c.l.b16 %v8389
        %v8562 = vunpack.c.h.b16 %v8389
        %v8563 = vunpack.c.l.b16 %v8390
        %v8564 = vunpack.c.h.b16 %v8390
        %v8565 = vunpack.c.l.b16 %v8391
        %v8566 = vunpack.c.h.b16 %v8391
        %v8567 = vunpack.c.l.b16 %v8392
        %v8568 = vunpack.c.h.b16 %v8392
        %v8569 = vunpack.c.l.b16 %v8393
        %v8570 = vunpack.c.h.b16 %v8393
        %v8571 = vunpack.c.l.b16 %v8394
        %v8572 = vunpack.c.h.b16 %v8394
        %v8573 = vunpack.c.l.b16 %v8395
        %v8574 = vunpack.c.h.b16 %v8395
        %v8575 = vunpack.c.l.b16 %v8396
        %v8576 = vunpack.c.h.b16 %v8396
        %v8577 = vunpack.c.l.b16 %v8397
        %v8578 = vunpack.c.h.b16 %v8397
        %v8579 = vunpack.c.l.b16 %v8398
        %v8580 = vunpack.c.h.b16 %v8398
        %v8581 = vunpack.c.l.b16 %v8399
        %v8582 = vunpack.c.h.b16 %v8399
        %v8583 = vunpack.c.l.b16 %v8400
        %v8584 = vunpack.c.h.b16 %v8400
        %v8585 = vunpack.c.l.b16 %v8401
        %v8586 = vunpack.c.h.b16 %v8401
        %v8587 = vunpack.c.l.b16 %v8402
        %v8588 = vunpack.c.h.b16 %v8402
        %v8589 = vunpack.c.l.b16 %v8403
        %v8590 = vunpack.c.h.b16 %v8403
        %v8591 = vunpack.c.l.b16 %v8404
        %v8592 = vunpack.c.h.b16 %v8404
        %v8593 = vunpack.c.l.b16 %v8405
        %v8594 = vunpack.c.h.b16 %v8405
        %v8595 = vunpack.c.l.b16 %v8406
        %v8596 = vunpack.c.h.b16 %v8406
        %v8597 = vunpack.c.l.b16 %v8407
        %v8598 = vunpack.c.h.b16 %v8407
        %v8599 = vunpack.c.l.b16 %v8408
        %v8600 = vunpack.c.h.b16 %v8408
        %v8601 = vpack.c.b16 %v8475, %v8473
        %v8602 = vpack.c.b16 %v8476, %v8474
        %v8603 = vpack.c.b16 %v8479, %v8477
        %v8604 = vpack.c.b16 %v8480, %v8478
        %v8605 = vpack.c.b16 %v8483, %v8481
        %v8606 = vpack.c.b16 %v8484, %v8482
        %v8607 = vpack.c.b16 %v8487, %v8485
        %v8608 = vpack.c.b16 %v8488, %v8486
        %v8609 = vpack.c.b16 %v8491, %v8489
        %v8610 = vpack.c.b16 %v8492, %v8490
        %v8611 = vpack.c.b16 %v8495, %v8493
        %v8612 = vpack.c.b16 %v8496, %v8494
        %v8613 = vpack.c.b16 %v8499, %v8497
        %v8614 = vpack.c.b16 %v8500, %v8498
        %v8615 = vpack.c.b16 %v8503, %v8501
        %v8616 = vpack.c.b16 %v8504, %v8502
        %v8617 = vpack.c.b16 %v8507, %v8505
        %v8618 = vpack.c.b16 %v8508, %v8506
        %v8619 = vpack.c.b16 %v8511, %v8509
        %v8620 = vpack.c.b16 %v8512, %v8510
        %v8621 = vpack.c.b16 %v8515, %v8513
        %v8622 = vpack.c.b16 %v8516, %v8514
        %v8623 = vpack.c.b16 %v8519, %v8517
        %v8624 = vpack.c.b16 %v8520, %v8518
        %v8625 = vpack.c.b16 %v8523, %v8521
        %v8626 = vpack.c.b16 %v8524, %v8522
        %v8627 = vpack.c.b16 %v8527, %v8525
        %v8628 = vpack.c.b16 %v8528, %v8526
        %v8629 = vpack.c.b16 %v8531, %v8529
        %v8630 = vpack.c.b16 %v8532, %v8530
        %v8631 = vpack.c.b16 %v8535, %v8533
        %v8632 = vpack.c.b16 %v8536, %v8534
        %v8633 = vpack.c.b16 %v8539, %v8537
        %v8634 = vpack.c.b16 %v8540, %v8538
        %v8635 = vpack.c.b16 %v8543, %v8541
        %v8636 = vpack.c.b16 %v8544, %v8542
        %v8637 = vpack.c.b16 %v8547, %v8545
        %v8638 = vpack.c.b16 %v8548, %v8546
        %v8639 = vpack.c.b16 %v8551, %v8549
        %v8640 = vpack.c.b16 %v8552, %v8550
        %v8641 = vpack.c.b16 %v8555, %v8553
        %v8642 = vpack.c.b16 %v8556, %v8554
        %v8643 = vpack.c.b16 %v8559, %v8557
        %v8644 = vpack.c.b16 %v8560, %v8558
        %v8645 = vpack.c.b16 %v8563, %v8561
        %v8646 = vpack.c.b16 %v8564, %v8562
        %v8647 = vpack.c.b16 %v8567, %v8565
        %v8648 = vpack.c.b16 %v8568, %v8566
        %v8649 = vpack.c.b16 %v8571, %v8569
        %v8650 = vpack.c.b16 %v8572, %v8570
        %v8651 = vpack.c.b16 %v8575, %v8573
        %v8652 = vpack.c.b16 %v8576, %v8574
        %v8653 = vpack.c.b16 %v8579, %v8577
        %v8654 = vpack.c.b16 %v8580, %v8578
        %v8655 = vpack.c.b16 %v8583, %v8581
        %v8656 = vpack.c.b16 %v8584, %v8582
        %v8657 = vpack.c.b16 %v8587, %v8585
        %v8658 = vpack.c.b16 %v8588, %v8586
        %v8659 = vpack.c.b16 %v8591, %v8589
        %v8660 = vpack.c.b16 %v8592, %v8590
        %v8661 = vpack.c.b16 %v8595, %v8593
        %v8662 = vpack.c.b16 %v8596, %v8594
        %v8663 = vpack.c.b16 %v8599, %v8597
        %v8664 = vpack.c.b16 %v8600, %v8598
        %8729 = vmatprep.subr.bf16.mxu0 %v8602
        %8730 = vmatpush1.bf16.msra.mxu0 %v8601
        %8731 = vmatprep.subr.bf16.mxu0 %v8604
        %8732 = vmatpush1.bf16.msra.mxu0 %v8603
        %8733 = vmatprep.subr.bf16.mxu0 %v8606
        %8734 = vmatpush1.bf16.msra.mxu0 %v8605
        %8735 = vmatprep.subr.bf16.mxu0 %v8608
        %8736 = vmatpush1.bf16.msra.mxu0 %v8607
        %8737 = vmatprep.subr.bf16.mxu0 %v8610
        %8738 = vmatpush1.bf16.msra.mxu0 %v8609
        %8739 = vmatprep.subr.bf16.mxu0 %v8612
        %8740 = vmatpush1.bf16.msra.mxu0 %v8611
        %8741 = vmatprep.subr.bf16.mxu0 %v8614
        %8742 = vmatpush1.bf16.msra.mxu0 %v8613
        %8743 = vmatprep.subr.bf16.mxu0 %v8616
        %8744 = vmatpush1.bf16.msra.mxu0 %v8615
        %8745 = vmatprep.subr.bf16.mxu0 %v8618
        %8746 = vmatpush1.bf16.msra.mxu0 %v8617
        %8747 = vmatprep.subr.bf16.mxu0 %v8620
        %8748 = vmatpush1.bf16.msra.mxu0 %v8619
        %8749 = vmatprep.subr.bf16.mxu0 %v8622
        %8750 = vmatpush1.bf16.msra.mxu0 %v8621
        %8751 = vmatprep.subr.bf16.mxu0 %v8624
        %8752 = vmatpush1.bf16.msra.mxu0 %v8623
        %8753 = vmatprep.subr.bf16.mxu0 %v8626
        %8754 = vmatpush1.bf16.msra.mxu0 %v8625
        %8755 = vmatprep.subr.bf16.mxu0 %v8628
        %8756 = vmatpush1.bf16.msra.mxu0 %v8627
        %8757 = vmatprep.subr.bf16.mxu0 %v8630
        %8758 = vmatpush1.bf16.msra.mxu0 %v8629
        %8759 = vmatprep.subr.bf16.mxu0 %v8632
        %8760 = vmatpush1.bf16.msra.mxu0 %v8631
        %8761 = vmatprep.mubr.bf16.mxu0 %v8314
        %8762 = vmatmul.mubr.bf16.gmra.mrb[0].mxu0 %v8313
        %v8763 = vpop.f32.mrb[0].mxu0
        %v8764 = vadd.f32 0.0, %v8763
        %v8765 = vpop.f32.mrb[0].mxu0
        %v8766 = vadd.f32 0.0, %v8765
        %v8767 = vpop.f32.mrb[0].mxu0
        %v8768 = vadd.f32 0.0, %v8767
        %v8769 = vpop.f32.mrb[0].mxu0
        %v8770 = vadd.f32 0.0, %v8769
        %8771 = vmatprep.mubr.bf16.mxu0 %v8318
        %8772 = vmatmul.mubr.bf16.gmra.mrb[0].mxu0 %v8317
        %v8773 = vpop.f32.mrb[0].mxu0
        %v8774 = vadd.f32 0.0, %v8773
        %v8775 = vpop.f32.mrb[0].mxu0
        %v8776 = vadd.f32 0.0, %v8775
        %v8777 = vpop.f32.mrb[0].mxu0
        %v8778 = vadd.f32 0.0, %v8777
        %v8779 = vpop.f32.mrb[0].mxu0
        %v8780 = vadd.f32 0.0, %v8779
        %8781 = vmatprep.mubr.bf16.mxu0 %v8322
        %8782 = vmatmul.mubr.bf16.gmra.mrb[0].mxu0 %v8321
        %v8783 = vpop.f32.mrb[0].mxu0
        %v8784 = vadd.f32 0.0, %v8783
        %v8785 = vpop.f32.mrb[0].mxu0
        %v8786 = vadd.f32 0.0, %v8785
        %v8787 = vpop.f32.mrb[0].mxu0
        %v8788 = vadd.f32 0.0, %v8787
        %v8789 = vpop.f32.mrb[0].mxu0
        %v8790 = vadd.f32 0.0, %v8789
        %8791 = vmatprep.mubr.bf16.mxu0 %v8326
        %8792 = vmatmul.mubr.bf16.gmra.mrb[0].mxu0 %v8325
        %v8793 = vpop.f32.mrb[0].mxu0
        %v8794 = vadd.f32 0.0, %v8793
        %v8795 = vpop.f32.mrb[0].mxu0
        %v8796 = vadd.f32 0.0, %v8795
        %v8797 = vpop.f32.mrb[0].mxu0
        %v8798 = vadd.f32 0.0, %v8797
        %v8799 = vpop.f32.mrb[0].mxu0
        %v8800 = vadd.f32 0.0, %v8799
        %8801 = vmatprep.mubr.bf16.mxu0 %v8330
        %8802 = vmatmul.mubr.bf16.gmra.mrb[0].mxu0 %v8329
        %v8803 = vpop.f32.mrb[0].mxu0
        %v8804 = vadd.f32 0.0, %v8803
        %v8805 = vpop.f32.mrb[0].mxu0
        %v8806 = vadd.f32 0.0, %v8805
        %v8807 = vpop.f32.mrb[0].mxu0
        %v8808 = vadd.f32 0.0, %v8807
        %v8809 = vpop.f32.mrb[0].mxu0
        %v8810 = vadd.f32 0.0, %v8809
        %8811 = vmatprep.mubr.bf16.mxu0 %v8334
        %8812 = vmatmul.mubr.bf16.gmra.mrb[0].mxu0 %v8333
        %v8813 = vpop.f32.mrb[0].mxu0
        %v8814 = vadd.f32 0.0, %v8813
        %v8815 = vpop.f32.mrb[0].mxu0
        %v8816 = vadd.f32 0.0, %v8815
        %v8817 = vpop.f32.mrb[0].mxu0
        %v8818 = vadd.f32 0.0, %v8817
        %v8819 = vpop.f32.mrb[0].mxu0
        %v8820 = vadd.f32 0.0, %v8819
        %8821 = vmatprep.mubr.bf16.mxu0 %v8338
        %8822 = vmatmul.mubr.bf16.gmra.mrb[0].mxu0 %v8337
        %v8823 = vpop.f32.mrb[0].mxu0
        %v8824 = vadd.f32 0.0, %v8823
        %v8825 = vpop.f32.mrb[0].mxu0
        %v8826 = vadd.f32 0.0, %v8825
        %v8827 = vpop.f32.mrb[0].mxu0
        %v8828 = vadd.f32 0.0, %v8827
        %v8829 = vpop.f32.mrb[0].mxu0
        %v8830 = vadd.f32 0.0, %v8829
        %8831 = vmatprep.mubr.bf16.mxu0 %v8342
        %8832 = vmatmul.mubr.bf16.gmra.mrb[0].mxu0 %v8341
        %v8833 = vpop.f32.mrb[0].mxu0
        %v8834 = vadd.f32 0.0, %v8833
        %v8835 = vpop.f32.mrb[0].mxu0
        %v8836 = vadd.f32 0.0, %v8835
        %v8837 = vpop.f32.mrb[0].mxu0
        %v8838 = vadd.f32 0.0, %v8837
        %v8839 = vpop.f32.mrb[0].mxu0
        %v8840 = vadd.f32 0.0, %v8839
        %8841 = vdwg.mxu0
        %8842 = vmatprep.subr.bf16.mxu0 %v8634
        %8843 = vmatpush1.bf16.msra.mxu0 %v8633
        %8844 = vmatprep.subr.bf16.mxu0 %v8636
        %8845 = vmatpush1.bf16.msra.mxu0 %v8635
        %8846 = vmatprep.subr.bf16.mxu0 %v8638
        %8847 = vmatpush1.bf16.msra.mxu0 %v8637
        %8848 = vmatprep.subr.bf16.mxu0 %v8640
        %8849 = vmatpush1.bf16.msra.mxu0 %v8639
        %8850 = vmatprep.subr.bf16.mxu0 %v8642
        %8851 = vmatpush1.bf16.msra.mxu0 %v8641
        %8852 = vmatprep.subr.bf16.mxu0 %v8644
        %8853 = vmatpush1.bf16.msra.mxu0 %v8643
        %8854 = vmatprep.subr.bf16.mxu0 %v8646
        %8855 = vmatpush1.bf16.msra.mxu0 %v8645
        %8856 = vmatprep.subr.bf16.mxu0 %v8648
        %8857 = vmatpush1.bf16.msra.mxu0 %v8647
        %8858 = vmatprep.subr.bf16.mxu0 %v8650
        %8859 = vmatpush1.bf16.msra.mxu0 %v8649
        %8860 = vmatprep.subr.bf16.mxu0 %v8652
        %8861 = vmatpush1.bf16.msra.mxu0 %v8651
        %8862 = vmatprep.subr.bf16.mxu0 %v8654
        %8863 = vmatpush1.bf16.msra.mxu0 %v8653
        %8864 = vmatprep.subr.bf16.mxu0 %v8656
        %8865 = vmatpush1.bf16.msra.mxu0 %v8655
        %8866 = vmatprep.subr.bf16.mxu0 %v8658
        %8867 = vmatpush1.bf16.msra.mxu0 %v8657
        %8868 = vmatprep.subr.bf16.mxu0 %v8660
        %8869 = vmatpush1.bf16.msra.mxu0 %v8659
        %8870 = vmatprep.subr.bf16.mxu0 %v8662
        %8871 = vmatpush1.bf16.msra.mxu0 %v8661
        %8872 = vmatprep.subr.bf16.mxu0 %v8664
        %8873 = vmatpush1.bf16.msra.mxu0 %v8663
        %8874 = vmatprep.mubr.bf16.mxu0 %v8316
        %8875 = vmatmul.mubr.bf16.gmra.mrb[0].mxu0 %v8315
        %v8876 = vpop.f32.mrb[0].mxu0
        %v8877 = vadd.f32 %v8764, %v8876
        %v8878 = vpop.f32.mrb[0].mxu0
        %v8879 = vadd.f32 %v8766, %v8878
        %v8880 = vpop.f32.mrb[0].mxu0
        %v8881 = vadd.f32 %v8768, %v8880
        %v8882 = vpop.f32.mrb[0].mxu0
        %v8883 = vadd.f32 %v8770, %v8882
        %8884 = vmatprep.mubr.bf16.mxu0 %v8320
        %8885 = vmatmul.mubr.bf16.gmra.mrb[0].mxu0 %v8319
        %v8886 = vpop.f32.mrb[0].mxu0
        %v8887 = vadd.f32 %v8774, %v8886
        %v8888 = vpop.f32.mrb[0].mxu0
        %v8889 = vadd.f32 %v8776, %v8888
        %v8890 = vpop.f32.mrb[0].mxu0
        %v8891 = vadd.f32 %v8778, %v8890
        %v8892 = vpop.f32.mrb[0].mxu0
        %v8893 = vadd.f32 %v8780, %v8892
        %8894 = vmatprep.mubr.bf16.mxu0 %v8324
        %8895 = vmatmul.mubr.bf16.gmra.mrb[0].mxu0 %v8323
        %v8896 = vpop.f32.mrb[0].mxu0
        %v8897 = vadd.f32 %v8784, %v8896
        %v8898 = vpop.f32.mrb[0].mxu0
        %v8899 = vadd.f32 %v8786, %v8898
        %v8900 = vpop.f32.mrb[0].mxu0
        %v8901 = vadd.f32 %v8788, %v8900
        %v8902 = vpop.f32.mrb[0].mxu0
        %v8903 = vadd.f32 %v8790, %v8902
        %8904 = vmatprep.mubr.bf16.mxu0 %v8328
        %8905 = vmatmul.mubr.bf16.gmra.mrb[0].mxu0 %v8327
        %v8906 = vpop.f32.mrb[0].mxu0
        %v8907 = vadd.f32 %v8794, %v8906
        %v8908 = vpop.f32.mrb[0].mxu0
        %v8909 = vadd.f32 %v8796, %v8908
        %v8910 = vpop.f32.mrb[0].mxu0
        %v8911 = vadd.f32 %v8798, %v8910
        %v8912 = vpop.f32.mrb[0].mxu0
        %v8913 = vadd.f32 %v8800, %v8912
        %8914 = vmatprep.mubr.bf16.mxu0 %v8332
        %8915 = vmatmul.mubr.bf16.gmra.mrb[0].mxu0 %v8331
        %v8916 = vpop.f32.mrb[0].mxu0
        %v8917 = vadd.f32 %v8804, %v8916
        %v8918 = vpop.f32.mrb[0].mxu0
        %v8919 = vadd.f32 %v8806, %v8918
        %v8920 = vpop.f32.mrb[0].mxu0
        %v8921 = vadd.f32 %v8808, %v8920
        %v8922 = vpop.f32.mrb[0].mxu0
        %v8923 = vadd.f32 %v8810, %v8922
        %8924 = vmatprep.mubr.bf16.mxu0 %v8336
        %8925 = vmatmul.mubr.bf16.gmra.mrb[0].mxu0 %v8335
        %v8926 = vpop.f32.mrb[0].mxu0
        %v8927 = vadd.f32 %v8814, %v8926
        %v8928 = vpop.f32.mrb[0].mxu0
        %v8929 = vadd.f32 %v8816, %v8928
        %v8930 = vpop.f32.mrb[0].mxu0
        %v8931 = vadd.f32 %v8818, %v8930
        %v8932 = vpop.f32.mrb[0].mxu0
        %v8933 = vadd.f32 %v8820, %v8932
        %8934 = vmatprep.mubr.bf16.mxu0 %v8340
        %8935 = vmatmul.mubr.bf16.gmra.mrb[0].mxu0 %v8339
        %v8936 = vpop.f32.mrb[0].mxu0
        %v8937 = vadd.f32 %v8824, %v8936
        %v8938 = vpop.f32.mrb[0].mxu0
        %v8939 = vadd.f32 %v8826, %v8938
        %v8940 = vpop.f32.mrb[0].mxu0
        %v8941 = vadd.f32 %v8828, %v8940
        %v8942 = vpop.f32.mrb[0].mxu0
        %v8943 = vadd.f32 %v8830, %v8942
        %8944 = vmatprep.mubr.bf16.mxu0 %v8344
        %8945 = vmatmul.mubr.bf16.gmra.mrb[0].mxu0 %v8343
        %v8946 = vpop.f32.mrb[0].mxu0
        %v8947 = vadd.f32 %v8834, %v8946
        %v8948 = vpop.f32.mrb[0].mxu0
        %v8949 = vadd.f32 %v8836, %v8948
        %v8950 = vpop.f32.mrb[0].mxu0
        %v8951 = vadd.f32 %v8838, %v8950
        %v8952 = vpop.f32.mrb[0].mxu0
        %v8953 = vadd.f32 %v8840, %v8952
        %8954 = vdwg.mxu0
        %v8955 = vadd.f32 %v6200, %v8877
        %v8956 = vadd.f32 %v6201, %v8879
        %v8957 = vadd.f32 %v6202, %v8881
        %v8958 = vadd.f32 %v6203, %v8883
        %v8959 = vadd.f32 %v6204, %v8887
        %v8960 = vadd.f32 %v6205, %v8889
        %v8961 = vadd.f32 %v6206, %v8891
        %v8962 = vadd.f32 %v6207, %v8893
        %v8963 = vadd.f32 %v6208, %v8897
        %v8964 = vadd.f32 %v6209, %v8899
        %v8965 = vadd.f32 %v6210, %v8901
        %v8966 = vadd.f32 %v6211, %v8903
        %v8967 = vadd.f32 %v6212, %v8907
        %v8968 = vadd.f32 %v6213, %v8909
        %v8969 = vadd.f32 %v6214, %v8911
        %v8970 = vadd.f32 %v6215, %v8913
        %v8971 = vadd.f32 %v6216, %v8917
        %v8972 = vadd.f32 %v6217, %v8919
        %v8973 = vadd.f32 %v6218, %v8921
        %v8974 = vadd.f32 %v6219, %v8923
        %v8975 = vadd.f32 %v6220, %v8927
        %v8976 = vadd.f32 %v6221, %v8929
        %v8977 = vadd.f32 %v6222, %v8931
        %v8978 = vadd.f32 %v6223, %v8933
        %v8979 = vadd.f32 %v6224, %v8937
        %v8980 = vadd.f32 %v6225, %v8939
        %v8981 = vadd.f32 %v6226, %v8941
        %v8982 = vadd.f32 %v6227, %v8943
        %v8983 = vadd.f32 %v6228, %v8947
        %v8984 = vadd.f32 %v6229, %v8949
        %v8985 = vadd.f32 %v6230, %v8951
        %v8986 = vadd.f32 %v6231, %v8953
        %8987 = vst [vmem:[%s461] sm:$0xff] %v8955
        %8988 = vst [vmem:[%s461 + $0x8] sm:$0xff] %v8956
        %8989 = vst [vmem:[%s461 + $0x10] sm:$0xff] %v8957
        %8990 = vst [vmem:[%s461 + $0x18] sm:$0xff] %v8958
        %8991 = vst [vmem:[%s461 + $0x20] sm:$0xff] %v8959
        %8992 = vst [vmem:[%s461 + $0x28] sm:$0xff] %v8960
        %8993 = vst [vmem:[%s461 + $0x30] sm:$0xff] %v8961
        %8994 = vst [vmem:[%s461 + $0x38] sm:$0xff] %v8962
        %8995 = vst [vmem:[%s461 + $0x40] sm:$0xff] %v8963
        %8996 = vst [vmem:[%s461 + $0x48] sm:$0xff] %v8964
        %8997 = vst [vmem:[%s461 + $0x50] sm:$0xff] %v8965
        %8998 = vst [vmem:[%s461 + $0x58] sm:$0xff] %v8966
        %8999 = vst [vmem:[%s461 + $0x60] sm:$0xff] %v8967
        %9000 = vst [vmem:[%s461 + $0x68] sm:$0xff] %v8968
        %9001 = vst [vmem:[%s461 + $0x70] sm:$0xff] %v8969
        %9002 = vst [vmem:[%s461 + $0x78] sm:$0xff] %v8970
        %9003 = vst [vmem:[%s461 + $0x80] sm:$0xff] %v8971
        %9004 = vst [vmem:[%s461 + $0x88] sm:$0xff] %v8972
        %9005 = vst [vmem:[%s461 + $0x90] sm:$0xff] %v8973
        %9006 = vst [vmem:[%s461 + $0x98] sm:$0xff] %v8974
        %9007 = vst [vmem:[%s461 + $0xa0] sm:$0xff] %v8975
        %9008 = vst [vmem:[%s461 + $0xa8] sm:$0xff] %v8976
        %9009 = vst [vmem:[%s461 + $0xb0] sm:$0xff] %v8977
        %9010 = vst [vmem:[%s461 + $0xb8] sm:$0xff] %v8978
        %9011 = vst [vmem:[%s461 + $0xc0] sm:$0xff] %v8979
        %9012 = vst [vmem:[%s461 + $0xc8] sm:$0xff] %v8980
        %9013 = vst [vmem:[%s461 + $0xd0] sm:$0xff] %v8981
        %9014 = vst [vmem:[%s461 + $0xd8] sm:$0xff] %v8982
        %9015 = vst [vmem:[%s461 + $0xe0] sm:$0xff] %v8983
        %9016 = vst [vmem:[%s461 + $0xe8] sm:$0xff] %v8984
        %9017 = vst [vmem:[%s461 + $0xf0] sm:$0xff] %v8985
        %9018 = vst [vmem:[%s461 + $0xf8] sm:$0xff] %v8986
        %s9019 = sand.u32 %s230, 1
        %s9020 = scalar_lea.sflag [#allocation7], %s9019
        %s9021 = sand.u32 %s230, 1
        %s9022 = smul.addr %s9021, 256
        %s9023 = scalar_lea.vmem [#allocation16], %s9022
        // Predicated region
        $region81: #{tpu_custom_call.1} parent=51 // pred_check
          %p9024 = pneg %p240
        $region82: #{tpu_custom_call.1} parent=51 // pred_check_branch
          %9026 = sbr.rel (%p9024) target = $region84
        $region83: #{tpu_custom_call.1} parent=51 // pred_region
          %s9027 = smul.u32 16, %s35
          %s9029 = ssub.s32 4096, 4096
          %9030 = vsyncadd %s9020, %s9029
          %s9031 = smul.addr %s9027, 2
          %s9032 = smul.addr %s34, 64
          %s9033 = sadd.s32 %s9031, %s9032
          %s9034 = smul.addr %s9033, 128
          %s9035 = scalar_lea.hbm %s8, %s9034
          %s9036 = sshll.u32 %s9023, 4
          %s9037 = int_to_ptr.vmem [resolvable:$true] %s9036
          %9042 = dma.vmem_to_hbm [thread:$0]  %s9037, 4096, %s9035, %s9020, 256, 256, 16
        $region84: #{tpu_custom_call.1} parent=51 // pred_fallthru
          _
      $region52: #{tpu_custom_call.1} parent=5 // pred_fallthru
        _
      %p9043 = scmp.le.s32.totalorder 2, %s25
      // Predicated region
      $region85: #{tpu_custom_call.1} parent=5 // pred_check
        %p9044 = pneg %p9043
      $region86: #{tpu_custom_call.1} parent=5 // pred_check_branch
        %9046 = sbr.rel (%p9044) target = $region88
      $region87: #{tpu_custom_call.1} parent=5 // pred_region
        %s9047 = ssub.s32 %s25, 2
        // Predicated region
        $region89: #{tpu_custom_call.1} parent=87 // pred_check
          %p9048 = pneg %p246
        $region90: #{tpu_custom_call.1} parent=87 // pred_check_branch
          %9050 = sbr.rel (%p9048) target = $region92
        $region91: #{tpu_custom_call.1} parent=87 // pred_region
          %s9051 = sand.u32 %s231, 1
          %s9052 = scalar_lea.sflag [#allocation7], %s9051
          %s9053 = sand.u32 %s231, 1
          %s9054 = smul.addr %s9053, 256
          %s9055 = scalar_lea.vmem [#allocation16], %s9054
          %9056 = dma.done %s9052, 4096
        $region92: #{tpu_custom_call.1} parent=87 // pred_fallthru
          _
      $region88: #{tpu_custom_call.1} parent=5 // pred_fallthru
        _
    $region6: #{tpu_custom_call.1} parent=1 // loop_footer
      %s29 = sadd.s32 1, %s25
    $region7: #{tpu_custom_call.1} parent=1 // loop_footer_branch
      %24 = sbr.rel target = $region3
    $region8: #{tpu_custom_call.1} parent=1 // loop_exit
      _
    %9057 = vsyncpa [#allocation6], 1
    %s9058 = scalar_lea.sflag [#allocation6], 1
    %9059 = vsyncpa %s9058, 1
    %9060 = vsyncpa [#allocation9], 1
    %s9061 = scalar_lea.sflag [#allocation9], 1
    %9062 = vsyncpa %s9061, 1
    %9063 = vsyncpa [#allocation12], 1
    %9064 = vsyncpa [#allocation15], 1
    %9065 = vsyncpa [#allocation7], 1
    %s9066 = scalar_lea.sflag [#allocation7], 1
    %9067 = vsyncpa %s9066, 1

</llo_original>
